<compile_context>
chip_gen: v6e
topology: v6e:2x2x1
jax: 0.10.0
libtpu: 0.0.40
codegen_flags: <defaults>
</compile_context>

<pallas_src>
import jax
import jax.numpy as jnp
from jax.experimental import pallas as pl
from jax.experimental.pallas import tpu as pltpu

NEG_SLOPE = 0.3

# (name, cout, cin, K) for every Conv+BN, in forward order.
LAYERS = [
    ("e1_c0", 7, 2, 3),    # encoder1.conv1x3_bn
    ("e1_c1", 7, 7, 9),    # encoder1.conv1x9_bn(1)
    ("e1_c2", 7, 7, 9),    # encoder1.conv1x9_bn(2)   (+ relu1 outside)
    ("e2_c0", 7, 2, 3),    # encoder2.conv1x3_bn(1)
    ("e2_c1", 7, 7, 3),    # encoder2.conv1x3_bn(2)   (+ relu2 outside)
    ("final", 2, 14, 1),   # encoder_conv.conv1x1_bn  (+ relu inside)
]


def _leaky(v):
    return jnp.where(v > 0, v, NEG_SLOPE * v)


# ----------------------------------------------------------------------------
# Pallas kernel: one block of rows, everything as MXU matmuls.
# ----------------------------------------------------------------------------
def fencoder_kernel(x_ref,
                    t10_ref, b10_ref, t11_ref, b11_ref, t12_ref, b12_ref,
                    t20_ref, b20_ref, t21_ref, b21_ref,
                    tfa_ref, tfb_ref, bf_ref,
                    o_ref):
    """x_ref: (2*W, Rb) lane-dense block of rows; o_ref: (2*W, Rb)."""

    def layer(t_ref, b_ref, h):
        y = jnp.dot(t_ref[...], h,
                    precision=jax.lax.Precision.HIGHEST,
                    preferred_element_type=jnp.float32)
        return _leaky(y + b_ref[...])

    x = x_ref[...]

    # encoder1: 1x3 -> 1x9 -> 1x9 (each conv + folded BN + leaky)
    h1 = layer(t10_ref, b10_ref, x)
    h1 = layer(t11_ref, b11_ref, h1)
    out1 = layer(t12_ref, b12_ref, h1)

    # encoder2: 1x3 -> 1x3
    h2 = layer(t20_ref, b20_ref, x)
    out2 = layer(t21_ref, b21_ref, h2)

    # channel concat + 1x1 conv == split matmul (no in-kernel concat)
    y = (jnp.dot(tfa_ref[...], out1, precision=jax.lax.Precision.HIGHEST,
                 preferred_element_type=jnp.float32)
         + jnp.dot(tfb_ref[...], out2, precision=jax.lax.Precision.HIGHEST,
                   preferred_element_type=jnp.float32)
         + bf_ref[...])
    o_ref[...] = _leaky(y)


# ----------------------------------------------------------------------------
# Wrapper-side operand construction (tiny, one-time).
# ----------------------------------------------------------------------------
def _toeplitz(w_fold, W):
    """(cout, cin, K) folded conv weight -> (cout*W, cin*W) banded matrix.

    out[(co, ow)] = sum_{ci, iw} T[(co, ow), (ci, iw)] * x[(ci, iw)]
    with 'same' padding baked in (invalid taps are zero).
    """
    cout, cin, K = w_fold.shape
    pad = (K - 1) // 2
    ow = jnp.arange(W)[:, None]            # (W, 1)
    iw = jnp.arange(W)[None, :]            # (1, W)
    k = iw - ow + pad                      # tap index, (W, W)
    valid = (k >= 0) & (k < K)
    k_c = jnp.clip(k, 0, K - 1)
    t = w_fold[:, :, k_c]                  # (cout, cin, W, W)
    t = t * valid[None, None].astype(w_fold.dtype)
    t = jnp.transpose(t, (0, 2, 1, 3)).reshape(cout * W, cin * W)
    return t.astype(jnp.float32)


def _bias_rows(b, W):
    # per-channel BN bias broadcast over width -> (cout*W, 1)
    return jnp.repeat(b.astype(jnp.float32), W)[:, None]


def build_kernel_operands(params, W):
    ops = []
    for name in ["e1_c0", "e1_c1", "e1_c2", "e2_c0", "e2_c1"]:
        w, b = params[name]
        ops.append(_toeplitz(w, W))
        ops.append(_bias_rows(b, W))
    w, b = params["final"]
    t = _toeplitz(w, W)                    # (2*W, 14*W)
    ops.append(t[:, : 7 * W])              # half acting on encoder1 output
    ops.append(t[:, 7 * W:])               # half acting on encoder2 output
    ops.append(_bias_rows(b, W))
    return ops


def fencoder_forward(x_nchw, params, rb_target=1024):
    N, C, H, W = x_nchw.shape
    assert C == 2
    R = N * H

    # Lane-dense layout: (channel, width) merged on sublanes, rows on lanes.
    x_cols = (jnp.transpose(x_nchw, (1, 3, 0, 2))
              .reshape(C * W, R).astype(jnp.float32))

    ops = build_kernel_operands(params, W)

    if R <= rb_target:
        rb = R                                      # single grid step
    else:
        rb = max(128, (rb_target // 128) * 128)     # lane-aligned blocks

    def const_spec(shape):
        return pl.BlockSpec(shape, lambda i: (0, 0))

    out_cols = pl.pallas_call(
        fencoder_kernel,
        out_shape=jax.ShapeDtypeStruct((2 * W, R), jnp.float32),
        grid=(pl.cdiv(R, rb),),
        in_specs=[pl.BlockSpec((C * W, rb), lambda i: (0, i))]
                 + [const_spec(op.shape) for op in ops],
        out_specs=pl.BlockSpec((2 * W, rb), lambda i: (0, i)),
        compiler_params=pltpu.CompilerParams(
            dimension_semantics=("parallel",)),
    )(x_cols, *ops)

    # (2*W, N*H) -> NCHW (wrapper-side layout plumbing only)
    return out_cols.reshape(2, W, N, H).transpose(2, 0, 3, 1)


# ----------------------------------------------------------------------------
# Parameter construction and pure-JAX reference.
# ----------------------------------------------------------------------------
def build_params(key):
    """Deterministic conv + BN params, BN (eval) folded into (weight, bias)."""
    params = {}
    for name, cout, cin, K in LAYERS:
        key, k1, k2, k3, k4, k5 = jax.random.split(key, 6)
        w = 0.2 * jax.random.normal(k1, (cout, cin, K), jnp.float32)
        gamma = 1.0 + 0.1 * jax.random.normal(k2, (cout,), jnp.float32)
        beta = 0.1 * jax.random.normal(k3, (cout,), jnp.float32)
        mean = 0.1 * jax.random.normal(k4, (cout,), jnp.float32)
        var = 1.0 + 0.1 * jax.random.uniform(k5, (cout,), jnp.float32)
        scale = gamma / jnp.sqrt(var + 1e-5)
        params[name] = (w * scale[:, None, None], beta - mean * scale)
    return params


def ref_forward(x, params):
    """Pure-JAX NCHW reference with the same folded-BN semantics."""
    def conv(x, name):
        w, b = params[name]
        K = w.shape[-1]
        pad = (K - 1) // 2
        Wd = x.shape[-1]
        xp = jnp.pad(x, ((0, 0), (0, 0), (0, 0), (pad, pad)))
        out = sum(jnp.einsum("nchw,oc->nohw", xp[..., k:k + Wd], w[..., k])
                  for k in range(K))
        out = out + b[None, :, None, None]
        return _leaky(out)

    out1 = conv(conv(conv(x, "e1_c0"), "e1_c1"), "e1_c2")
    out2 = conv(conv(x, "e2_c0"), "e2_c1")
    cat = jnp.concatenate([out1, out2], axis=1)
    return conv(cat, "final")


if __name__ == "__main__":
    key = jax.random.PRNGKey(0)
    kx, kp = jax.random.split(key)

    N, C, H, W = 2, 2, 16, 16
    x = jax.random.normal(kx, (N, C, H, W), jnp.float32)

    params = build_params(kp)

    out = fencoder_forward(x, params)
    out = jax.block_until_ready(out)

    ref = ref_forward(x, params)
    assert out.shape == (N, 2, H, W), out.shape
    assert jnp.allclose(out, ref, atol=2e-3, rtol=2e-3), (
        float(jnp.max(jnp.abs(out - ref))))

    print("KERNEL_OK")
</pallas_src>

<mosaic_0001>
module attributes {stable_mosaic.version = 11 : i64} {
  func.func @fencoder_kernel(%arg0: i32, %arg1: memref<32x32xf32, #tpu.memory_space<vmem>>, %arg2: memref<112x32xf32, #tpu.memory_space<vmem>>, %arg3: memref<112x1xf32, #tpu.memory_space<vmem>>, %arg4: memref<112x112xf32, #tpu.memory_space<vmem>>, %arg5: memref<112x1xf32, #tpu.memory_space<vmem>>, %arg6: memref<112x112xf32, #tpu.memory_space<vmem>>, %arg7: memref<112x1xf32, #tpu.memory_space<vmem>>, %arg8: memref<112x32xf32, #tpu.memory_space<vmem>>, %arg9: memref<112x1xf32, #tpu.memory_space<vmem>>, %arg10: memref<112x112xf32, #tpu.memory_space<vmem>>, %arg11: memref<112x1xf32, #tpu.memory_space<vmem>>, %arg12: memref<32x112xf32, #tpu.memory_space<vmem>>, %arg13: memref<32x112xf32, #tpu.memory_space<vmem>>, %arg14: memref<32x1xf32, #tpu.memory_space<vmem>>, %arg15: memref<32x32xf32, #tpu.memory_space<vmem>>) attributes {dimension_semantics = [#tpu.dimension_semantics<parallel>], iteration_bounds = array<i64: 1>, scalar_prefetch = 0 : i64, scratch_operands = 0 : i64, tpu.core_type = #tpu.core_type<tc>, window_params = [{transform_indices = @transform_0, window_bounds = array<i64: 32, 32>}, {pipeline_mode = #tpu.pipeline_mode<synchronous>, transform_indices = @transform_1, window_bounds = array<i64: 112, 32>}, {pipeline_mode = #tpu.pipeline_mode<synchronous>, transform_indices = @transform_2, window_bounds = array<i64: 112, 1>}, {pipeline_mode = #tpu.pipeline_mode<synchronous>, transform_indices = @transform_3, window_bounds = array<i64: 112, 112>}, {pipeline_mode = #tpu.pipeline_mode<synchronous>, transform_indices = @transform_4, window_bounds = array<i64: 112, 1>}, {pipeline_mode = #tpu.pipeline_mode<synchronous>, transform_indices = @transform_5, window_bounds = array<i64: 112, 112>}, {pipeline_mode = #tpu.pipeline_mode<synchronous>, transform_indices = @transform_6, window_bounds = array<i64: 112, 1>}, {pipeline_mode = #tpu.pipeline_mode<synchronous>, transform_indices = @transform_7, window_bounds = array<i64: 112, 32>}, {pipeline_mode = #tpu.pipeline_mode<synchronous>, transform_indices = @transform_8, window_bounds = array<i64: 112, 1>}, {pipeline_mode = #tpu.pipeline_mode<synchronous>, transform_indices = @transform_9, window_bounds = array<i64: 112, 112>}, {pipeline_mode = #tpu.pipeline_mode<synchronous>, transform_indices = @transform_10, window_bounds = array<i64: 112, 1>}, {pipeline_mode = #tpu.pipeline_mode<synchronous>, transform_indices = @transform_11, window_bounds = array<i64: 32, 112>}, {pipeline_mode = #tpu.pipeline_mode<synchronous>, transform_indices = @transform_12, window_bounds = array<i64: 32, 112>}, {pipeline_mode = #tpu.pipeline_mode<synchronous>, transform_indices = @transform_13, window_bounds = array<i64: 32, 1>}, {transform_indices = @transform_14, window_bounds = array<i64: 32, 32>}]} {
    %c0 = arith.constant 0 : index
    %c0_0 = arith.constant 0 : index
    %0 = vector.load %arg1[%c0, %c0_0] : memref<32x32xf32, #tpu.memory_space<vmem>>, vector<32x32xf32>
    %c0_1 = arith.constant 0 : index
    %c0_2 = arith.constant 0 : index
    %1 = vector.load %arg2[%c0_1, %c0_2] : memref<112x32xf32, #tpu.memory_space<vmem>>, vector<112x32xf32>
    %cst = arith.constant dense<0.000000e+00> : vector<112x32xf32>
    %2 = tpu.matmul %1, %0, %cst {dimension_numbers = #tpu.dot_dimension_numbers<[1], [0], [0], [1], [0, 0, 1, 1], [], []>, precision = #tpu.contract_precision<fp32>} : vector<112x32xf32>, vector<32x32xf32>, vector<112x32xf32> -> vector<112x32xf32>
    %c0_3 = arith.constant 0 : index
    %c0_4 = arith.constant 0 : index
    %3 = vector.load %arg3[%c0_3, %c0_4] : memref<112x1xf32, #tpu.memory_space<vmem>>, vector<112x1xf32>
    %4 = vector.broadcast %3 : vector<112x1xf32> to vector<112x32xf32>
    %5 = arith.addf %2, %4 : vector<112x32xf32>
    %cst_5 = arith.constant 0.000000e+00 : f32
    %6 = vector.broadcast %cst_5 : f32 to vector<112x32xf32>
    %7 = arith.cmpf ogt, %5, %6 : vector<112x32xf32>
    %cst_6 = arith.constant 3.000000e-01 : f32
    %8 = vector.broadcast %cst_6 : f32 to vector<112x32xf32>
    %9 = arith.mulf %8, %5 : vector<112x32xf32>
    %10 = arith.select %7, %5, %9 : vector<112x32xi1>, vector<112x32xf32>
    %c0_7 = arith.constant 0 : index
    %c0_8 = arith.constant 0 : index
    %11 = vector.load %arg4[%c0_7, %c0_8] : memref<112x112xf32, #tpu.memory_space<vmem>>, vector<112x112xf32>
    %cst_9 = arith.constant dense<0.000000e+00> : vector<112x32xf32>
    %12 = tpu.matmul %11, %10, %cst_9 {dimension_numbers = #tpu.dot_dimension_numbers<[1], [0], [0], [1], [0, 0, 1, 1], [], []>, precision = #tpu.contract_precision<fp32>} : vector<112x112xf32>, vector<112x32xf32>, vector<112x32xf32> -> vector<112x32xf32>
    %c0_10 = arith.constant 0 : index
    %c0_11 = arith.constant 0 : index
    %13 = vector.load %arg5[%c0_10, %c0_11] : memref<112x1xf32, #tpu.memory_space<vmem>>, vector<112x1xf32>
    %14 = vector.broadcast %13 : vector<112x1xf32> to vector<112x32xf32>
    %15 = arith.addf %12, %14 : vector<112x32xf32>
    %cst_12 = arith.constant 0.000000e+00 : f32
    %16 = vector.broadcast %cst_12 : f32 to vector<112x32xf32>
    %17 = arith.cmpf ogt, %15, %16 : vector<112x32xf32>
    %cst_13 = arith.constant 3.000000e-01 : f32
    %18 = vector.broadcast %cst_13 : f32 to vector<112x32xf32>
    %19 = arith.mulf %18, %15 : vector<112x32xf32>
    %20 = arith.select %17, %15, %19 : vector<112x32xi1>, vector<112x32xf32>
    %c0_14 = arith.constant 0 : index
    %c0_15 = arith.constant 0 : index
    %21 = vector.load %arg6[%c0_14, %c0_15] : memref<112x112xf32, #tpu.memory_space<vmem>>, vector<112x112xf32>
    %cst_16 = arith.constant dense<0.000000e+00> : vector<112x32xf32>
    %22 = tpu.matmul %21, %20, %cst_16 {dimension_numbers = #tpu.dot_dimension_numbers<[1], [0], [0], [1], [0, 0, 1, 1], [], []>, precision = #tpu.contract_precision<fp32>} : vector<112x112xf32>, vector<112x32xf32>, vector<112x32xf32> -> vector<112x32xf32>
    %c0_17 = arith.constant 0 : index
    %c0_18 = arith.constant 0 : index
    %23 = vector.load %arg7[%c0_17, %c0_18] : memref<112x1xf32, #tpu.memory_space<vmem>>, vector<112x1xf32>
    %24 = vector.broadcast %23 : vector<112x1xf32> to vector<112x32xf32>
    %25 = arith.addf %22, %24 : vector<112x32xf32>
    %cst_19 = arith.constant 0.000000e+00 : f32
    %26 = vector.broadcast %cst_19 : f32 to vector<112x32xf32>
    %27 = arith.cmpf ogt, %25, %26 : vector<112x32xf32>
    %cst_20 = arith.constant 3.000000e-01 : f32
    %28 = vector.broadcast %cst_20 : f32 to vector<112x32xf32>
    %29 = arith.mulf %28, %25 : vector<112x32xf32>
    %30 = arith.select %27, %25, %29 : vector<112x32xi1>, vector<112x32xf32>
    %c0_21 = arith.constant 0 : index
    %c0_22 = arith.constant 0 : index
    %31 = vector.load %arg8[%c0_21, %c0_22] : memref<112x32xf32, #tpu.memory_space<vmem>>, vector<112x32xf32>
    %cst_23 = arith.constant dense<0.000000e+00> : vector<112x32xf32>
    %32 = tpu.matmul %31, %0, %cst_23 {dimension_numbers = #tpu.dot_dimension_numbers<[1], [0], [0], [1], [0, 0, 1, 1], [], []>, precision = #tpu.contract_precision<fp32>} : vector<112x32xf32>, vector<32x32xf32>, vector<112x32xf32> -> vector<112x32xf32>
    %c0_24 = arith.constant 0 : index
    %c0_25 = arith.constant 0 : index
    %33 = vector.load %arg9[%c0_24, %c0_25] : memref<112x1xf32, #tpu.memory_space<vmem>>, vector<112x1xf32>
    %34 = vector.broadcast %33 : vector<112x1xf32> to vector<112x32xf32>
    %35 = arith.addf %32, %34 : vector<112x32xf32>
    %cst_26 = arith.constant 0.000000e+00 : f32
    %36 = vector.broadcast %cst_26 : f32 to vector<112x32xf32>
    %37 = arith.cmpf ogt, %35, %36 : vector<112x32xf32>
    %cst_27 = arith.constant 3.000000e-01 : f32
    %38 = vector.broadcast %cst_27 : f32 to vector<112x32xf32>
    %39 = arith.mulf %38, %35 : vector<112x32xf32>
    %40 = arith.select %37, %35, %39 : vector<112x32xi1>, vector<112x32xf32>
    %c0_28 = arith.constant 0 : index
    %c0_29 = arith.constant 0 : index
    %41 = vector.load %arg10[%c0_28, %c0_29] : memref<112x112xf32, #tpu.memory_space<vmem>>, vector<112x112xf32>
    %cst_30 = arith.constant dense<0.000000e+00> : vector<112x32xf32>
    %42 = tpu.matmul %41, %40, %cst_30 {dimension_numbers = #tpu.dot_dimension_numbers<[1], [0], [0], [1], [0, 0, 1, 1], [], []>, precision = #tpu.contract_precision<fp32>} : vector<112x112xf32>, vector<112x32xf32>, vector<112x32xf32> -> vector<112x32xf32>
    %c0_31 = arith.constant 0 : index
    %c0_32 = arith.constant 0 : index
    %43 = vector.load %arg11[%c0_31, %c0_32] : memref<112x1xf32, #tpu.memory_space<vmem>>, vector<112x1xf32>
    %44 = vector.broadcast %43 : vector<112x1xf32> to vector<112x32xf32>
    %45 = arith.addf %42, %44 : vector<112x32xf32>
    %cst_33 = arith.constant 0.000000e+00 : f32
    %46 = vector.broadcast %cst_33 : f32 to vector<112x32xf32>
    %47 = arith.cmpf ogt, %45, %46 : vector<112x32xf32>
    %cst_34 = arith.constant 3.000000e-01 : f32
    %48 = vector.broadcast %cst_34 : f32 to vector<112x32xf32>
    %49 = arith.mulf %48, %45 : vector<112x32xf32>
    %50 = arith.select %47, %45, %49 : vector<112x32xi1>, vector<112x32xf32>
    %c0_35 = arith.constant 0 : index
    %c0_36 = arith.constant 0 : index
    %51 = vector.load %arg12[%c0_35, %c0_36] : memref<32x112xf32, #tpu.memory_space<vmem>>, vector<32x112xf32>
    %cst_37 = arith.constant dense<0.000000e+00> : vector<32x32xf32>
    %52 = tpu.matmul %51, %30, %cst_37 {dimension_numbers = #tpu.dot_dimension_numbers<[1], [0], [0], [1], [0, 0, 1, 1], [], []>, precision = #tpu.contract_precision<fp32>} : vector<32x112xf32>, vector<112x32xf32>, vector<32x32xf32> -> vector<32x32xf32>
    %c0_38 = arith.constant 0 : index
    %c0_39 = arith.constant 0 : index
    %53 = vector.load %arg13[%c0_38, %c0_39] : memref<32x112xf32, #tpu.memory_space<vmem>>, vector<32x112xf32>
    %cst_40 = arith.constant dense<0.000000e+00> : vector<32x32xf32>
    %54 = tpu.matmul %53, %50, %cst_40 {dimension_numbers = #tpu.dot_dimension_numbers<[1], [0], [0], [1], [0, 0, 1, 1], [], []>, precision = #tpu.contract_precision<fp32>} : vector<32x112xf32>, vector<112x32xf32>, vector<32x32xf32> -> vector<32x32xf32>
    %55 = arith.addf %52, %54 : vector<32x32xf32>
    %c0_41 = arith.constant 0 : index
    %c0_42 = arith.constant 0 : index
    %56 = vector.load %arg14[%c0_41, %c0_42] : memref<32x1xf32, #tpu.memory_space<vmem>>, vector<32x1xf32>
    %57 = vector.broadcast %56 : vector<32x1xf32> to vector<32x32xf32>
    %58 = arith.addf %55, %57 : vector<32x32xf32>
    %cst_43 = arith.constant 0.000000e+00 : f32
    %59 = vector.broadcast %cst_43 : f32 to vector<32x32xf32>
    %60 = arith.cmpf ogt, %58, %59 : vector<32x32xf32>
    %cst_44 = arith.constant 3.000000e-01 : f32
    %61 = vector.broadcast %cst_44 : f32 to vector<32x32xf32>
    %62 = arith.mulf %61, %58 : vector<32x32xf32>
    %63 = arith.select %60, %58, %62 : vector<32x32xi1>, vector<32x32xf32>
    %c0_45 = arith.constant 0 : index
    %c0_46 = arith.constant 0 : index
    %64 = vector.load %arg15[%c0_45, %c0_46] : memref<32x32xf32, #tpu.memory_space<vmem>>, vector<32x32xf32>
    tpu.vector_store %arg15[%c0_45, %c0_46], %63 {strides = array<i32>} : memref<32x32xf32, #tpu.memory_space<vmem>>, vector<32x32xf32>,
    return
  }
  func.func @transform_0(%arg0: i32) -> (i32, i32) {
    %c0_i32 = arith.constant 0 : i32
    %c0_i32_0 = arith.constant 0 : i32
    return %c0_i32, %arg0 : i32, i32
  }
  func.func @transform_1(%arg0: i32) -> (i32, i32) {
    %c0_i32 = arith.constant 0 : i32
    %c0_i32_0 = arith.constant 0 : i32
    %c0_i32_1 = arith.constant 0 : i32
    return %c0_i32, %c0_i32_0 : i32, i32
  }
  func.func @transform_2(%arg0: i32) -> (i32, i32) {
    %c0_i32 = arith.constant 0 : i32
    %c0_i32_0 = arith.constant 0 : i32
    %c0_i32_1 = arith.constant 0 : i32
    return %c0_i32, %c0_i32_0 : i32, i32
  }
  func.func @transform_3(%arg0: i32) -> (i32, i32) {
    %c0_i32 = arith.constant 0 : i32
    %c0_i32_0 = arith.constant 0 : i32
    %c0_i32_1 = arith.constant 0 : i32
    return %c0_i32, %c0_i32_0 : i32, i32
  }
  func.func @transform_4(%arg0: i32) -> (i32, i32) {
    %c0_i32 = arith.constant 0 : i32
    %c0_i32_0 = arith.constant 0 : i32
    %c0_i32_1 = arith.constant 0 : i32
    return %c0_i32, %c0_i32_0 : i32, i32
  }
  func.func @transform_5(%arg0: i32) -> (i32, i32) {
    %c0_i32 = arith.constant 0 : i32
    %c0_i32_0 = arith.constant 0 : i32
    %c0_i32_1 = arith.constant 0 : i32
    return %c0_i32, %c0_i32_0 : i32, i32
  }
  func.func @transform_6(%arg0: i32) -> (i32, i32) {
    %c0_i32 = arith.constant 0 : i32
    %c0_i32_0 = arith.constant 0 : i32
    %c0_i32_1 = arith.constant 0 : i32
    return %c0_i32, %c0_i32_0 : i32, i32
  }
  func.func @transform_7(%arg0: i32) -> (i32, i32) {
    %c0_i32 = arith.constant 0 : i32
    %c0_i32_0 = arith.constant 0 : i32
    %c0_i32_1 = arith.constant 0 : i32
    return %c0_i32, %c0_i32_0 : i32, i32
  }
  func.func @transform_8(%arg0: i32) -> (i32, i32) {
    %c0_i32 = arith.constant 0 : i32
    %c0_i32_0 = arith.constant 0 : i32
    %c0_i32_1 = arith.constant 0 : i32
    return %c0_i32, %c0_i32_0 : i32, i32
  }
  func.func @transform_9(%arg0: i32) -> (i32, i32) {
    %c0_i32 = arith.constant 0 : i32
    %c0_i32_0 = arith.constant 0 : i32
    %c0_i32_1 = arith.constant 0 : i32
    return %c0_i32, %c0_i32_0 : i32, i32
  }
  func.func @transform_10(%arg0: i32) -> (i32, i32) {
    %c0_i32 = arith.constant 0 : i32
    %c0_i32_0 = arith.constant 0 : i32
    %c0_i32_1 = arith.constant 0 : i32
    return %c0_i32, %c0_i32_0 : i32, i32
  }
  func.func @transform_11(%arg0: i32) -> (i32, i32) {
    %c0_i32 = arith.constant 0 : i32
    %c0_i32_0 = arith.constant 0 : i32
    %c0_i32_1 = arith.constant 0 : i32
    return %c0_i32, %c0_i32_0 : i32, i32
  }
  func.func @transform_12(%arg0: i32) -> (i32, i32) {
    %c0_i32 = arith.constant 0 : i32
    %c0_i32_0 = arith.constant 0 : i32
    %c0_i32_1 = arith.constant 0 : i32
    return %c0_i32, %c0_i32_0 : i32, i32
  }
  func.func @transform_13(%arg0: i32) -> (i32, i32) {
    %c0_i32 = arith.constant 0 : i32
    %c0_i32_0 = arith.constant 0 : i32
    %c0_i32_1 = arith.constant 0 : i32
    return %c0_i32, %c0_i32_0 : i32, i32
  }
  func.func @transform_14(%arg0: i32) -> (i32, i32) {
    %c0_i32 = arith.constant 0 : i32
    %c0_i32_0 = arith.constant 0 : i32
    return %c0_i32, %arg0 : i32, i32
  }
}

</mosaic_0001>

<llo_original>
// kernel: tpu_custom_call.1
$region0: #{tpu_custom_call.1}
  #allocation0 [shape = 'u32[]', space=smem, size = 0x4, offset = 0x4, fixed_abs, tag = 'smem constant byte address 0x4 - core index']
  #allocation1 [shape = 'u32[144,128]{1,0:T(1,128)}', space=vmem, size = 0x12000, scoped, tag = 'internal scratch']
  %s0 = inlined_call_operand.vmem [shape: f32[32,32], index: 0, kind: input, shape index: {}]
  %s1 = inlined_call_operand.vmem [shape: f32[112,32], index: 1, kind: input, shape index: {}]
  %s2 = inlined_call_operand.vmem [shape: f32[112,1], index: 2, kind: input, shape index: {}]
  %s3 = inlined_call_operand.vmem [shape: f32[112,112], index: 3, kind: input, shape index: {}]
  %s4 = inlined_call_operand.vmem [shape: f32[112,1], index: 4, kind: input, shape index: {}]
  %s5 = inlined_call_operand.vmem [shape: f32[112,112], index: 5, kind: input, shape index: {}]
  %s6 = inlined_call_operand.vmem [shape: f32[112,1], index: 6, kind: input, shape index: {}]
  %s7 = inlined_call_operand.vmem [shape: f32[112,32], index: 7, kind: input, shape index: {}]
  %s8 = inlined_call_operand.vmem [shape: f32[112,1], index: 8, kind: input, shape index: {}]
  %s9 = inlined_call_operand.vmem [shape: f32[112,112], index: 9, kind: input, shape index: {}]
  %s10 = inlined_call_operand.vmem [shape: f32[112,1], index: 10, kind: input, shape index: {}]
  %s11 = inlined_call_operand.vmem [shape: f32[32,112], index: 11, kind: input, shape index: {}]
  %s12 = inlined_call_operand.vmem [shape: f32[32,112], index: 12, kind: input, shape index: {}]
  %s13 = inlined_call_operand.vmem [shape: f32[32,1], index: 13, kind: input, shape index: {}]
  %s14 = inlined_call_operand.hbm [shape: f32[32,32], index: 14, kind: output, shape index: {}]
  %s15 = sld [smem:[#allocation0]]
  $region66: #{tpu_custom_call.1} parent=0
    _
  %s17 = ssub.s32 1, %s15
  %s18 = scalar_select 0, %s17, %s15
  $region1: #{tpu_custom_call.1} parent=0
    #allocation2 [shape = 'u8[16384]{0}', space=vmem, size = 0x4000, scoped, tag = 'output window, operand 0, single buffered']
    #allocation3 [shape = 's32[1]{0}', space=sflag, size = 0x4, scoped, tag = 'scoped memory for tpu_custom_call.1']
    %19 = vsyncpa [#allocation3], 0
    // Predicated region
    $region2: #{tpu_custom_call.1} parent=1 // pred_check
      _
    $region3: #{tpu_custom_call.1} parent=1 // pred_check_branch
      %21 = sbr.rel (0) target = $region5
    $region4: #{tpu_custom_call.1} parent=1 // pred_region
      _
    $region5: #{tpu_custom_call.1} parent=1 // pred_fallthru
      _
    // Predicated region
    $region6: #{tpu_custom_call.1} parent=1 // pred_check
      _
    $region7: #{tpu_custom_call.1} parent=1 // pred_check_branch
      %23 = sbr.rel (0) target = $region9
    $region8: #{tpu_custom_call.1} parent=1 // pred_region
      _
    $region9: #{tpu_custom_call.1} parent=1 // pred_fallthru
      _
    // Predicated region
    $region10: #{tpu_custom_call.1} parent=1 // pred_check
      _
    $region11: #{tpu_custom_call.1} parent=1 // pred_check_branch
      %25 = sbr.rel (0) target = $region13
    $region12: #{tpu_custom_call.1} parent=1 // pred_region
      _
    $region13: #{tpu_custom_call.1} parent=1 // pred_fallthru
      _
    // Predicated region
    $region14: #{tpu_custom_call.1} parent=1 // pred_check
      _
    $region15: #{tpu_custom_call.1} parent=1 // pred_check_branch
      %27 = sbr.rel (0) target = $region17
    $region16: #{tpu_custom_call.1} parent=1 // pred_region
      _
    $region17: #{tpu_custom_call.1} parent=1 // pred_fallthru
      _
    // Predicated region
    $region18: #{tpu_custom_call.1} parent=1 // pred_check
      _
    $region19: #{tpu_custom_call.1} parent=1 // pred_check_branch
      %29 = sbr.rel (0) target = $region21
    $region20: #{tpu_custom_call.1} parent=1 // pred_region
      _
    $region21: #{tpu_custom_call.1} parent=1 // pred_fallthru
      _
    // Predicated region
    $region22: #{tpu_custom_call.1} parent=1 // pred_check
      _
    $region23: #{tpu_custom_call.1} parent=1 // pred_check_branch
      %31 = sbr.rel (0) target = $region25
    $region24: #{tpu_custom_call.1} parent=1 // pred_region
      _
    $region25: #{tpu_custom_call.1} parent=1 // pred_fallthru
      _
    // Predicated region
    $region26: #{tpu_custom_call.1} parent=1 // pred_check
      _
    $region27: #{tpu_custom_call.1} parent=1 // pred_check_branch
      %33 = sbr.rel (0) target = $region29
    $region28: #{tpu_custom_call.1} parent=1 // pred_region
      _
    $region29: #{tpu_custom_call.1} parent=1 // pred_fallthru
      _
    // Predicated region
    $region30: #{tpu_custom_call.1} parent=1 // pred_check
      _
    $region31: #{tpu_custom_call.1} parent=1 // pred_check_branch
      %35 = sbr.rel (0) target = $region33
    $region32: #{tpu_custom_call.1} parent=1 // pred_region
      _
    $region33: #{tpu_custom_call.1} parent=1 // pred_fallthru
      _
    // Predicated region
    $region34: #{tpu_custom_call.1} parent=1 // pred_check
      _
    $region35: #{tpu_custom_call.1} parent=1 // pred_check_branch
      %37 = sbr.rel (0) target = $region37
    $region36: #{tpu_custom_call.1} parent=1 // pred_region
      _
    $region37: #{tpu_custom_call.1} parent=1 // pred_fallthru
      _
    // Predicated region
    $region38: #{tpu_custom_call.1} parent=1 // pred_check
      _
    $region39: #{tpu_custom_call.1} parent=1 // pred_check_branch
      %39 = sbr.rel (0) target = $region41
    $region40: #{tpu_custom_call.1} parent=1 // pred_region
      _
    $region41: #{tpu_custom_call.1} parent=1 // pred_fallthru
      _
    // Predicated region
    $region42: #{tpu_custom_call.1} parent=1 // pred_check
      _
    $region43: #{tpu_custom_call.1} parent=1 // pred_check_branch
      %41 = sbr.rel (0) target = $region45
    $region44: #{tpu_custom_call.1} parent=1 // pred_region
      _
    $region45: #{tpu_custom_call.1} parent=1 // pred_fallthru
      _
    // Predicated region
    $region46: #{tpu_custom_call.1} parent=1 // pred_check
      _
    $region47: #{tpu_custom_call.1} parent=1 // pred_check_branch
      %43 = sbr.rel (0) target = $region49
    $region48: #{tpu_custom_call.1} parent=1 // pred_region
      _
    $region49: #{tpu_custom_call.1} parent=1 // pred_fallthru
      _
    // Predicated region
    $region50: #{tpu_custom_call.1} parent=1 // pred_check
      _
    $region51: #{tpu_custom_call.1} parent=1 // pred_check_branch
      %45 = sbr.rel (0) target = $region53
    $region52: #{tpu_custom_call.1} parent=1 // pred_region
      _
    $region53: #{tpu_custom_call.1} parent=1 // pred_fallthru
      _
    // Predicated region
    $region54: #{tpu_custom_call.1} parent=1 // pred_check
      _
    $region55: #{tpu_custom_call.1} parent=1 // pred_check_branch
      %47 = sbr.rel (0) target = $region57
    $region56: #{tpu_custom_call.1} parent=1 // pred_region
      _
    $region57: #{tpu_custom_call.1} parent=1 // pred_fallthru
      _
    %v48 = vld [vmem:[%s0] sm:$0xff]
    %v49 = vld [vmem:[%s0 + $0x8] sm:$0xff]
    %v50 = vld [vmem:[%s0 + $0x10] sm:$0xff]
    %v51 = vld [vmem:[%s0 + $0x18] sm:$0xff]
    %v52 = vld [vmem:[%s1] sm:$0xff]
    %v53 = vld [vmem:[%s1 + $0x8] sm:$0xff]
    %v54 = vld [vmem:[%s1 + $0x10] sm:$0xff]
    %v55 = vld [vmem:[%s1 + $0x18] sm:$0xff]
    %v56 = vld [vmem:[%s1 + $0x20] sm:$0xff]
    %v57 = vld [vmem:[%s1 + $0x28] sm:$0xff]
    %v58 = vld [vmem:[%s1 + $0x30] sm:$0xff]
    %v59 = vld [vmem:[%s1 + $0x38] sm:$0xff]
    %v60 = vld [vmem:[%s1 + $0x40] sm:$0xff]
    %v61 = vld [vmem:[%s1 + $0x48] sm:$0xff]
    %v62 = vld [vmem:[%s1 + $0x50] sm:$0xff]
    %v63 = vld [vmem:[%s1 + $0x58] sm:$0xff]
    %v64 = vld [vmem:[%s1 + $0x60] sm:$0xff]
    %v65 = vld [vmem:[%s1 + $0x68] sm:$0xff]
    %v66 = vld [vmem:[%s2] sm:$0xff]
    %v67 = vld [vmem:[%s2 + $0x8] sm:$0xff]
    %v68 = vld [vmem:[%s2 + $0x10] sm:$0xff]
    %v69 = vld [vmem:[%s2 + $0x18] sm:$0xff]
    %v70 = vld [vmem:[%s2 + $0x20] sm:$0xff]
    %v71 = vld [vmem:[%s2 + $0x28] sm:$0xff]
    %v72 = vld [vmem:[%s2 + $0x30] sm:$0xff]
    %v73 = vld [vmem:[%s2 + $0x38] sm:$0xff]
    %v74 = vld [vmem:[%s2 + $0x40] sm:$0xff]
    %v75 = vld [vmem:[%s2 + $0x48] sm:$0xff]
    %v76 = vld [vmem:[%s2 + $0x50] sm:$0xff]
    %v77 = vld [vmem:[%s2 + $0x58] sm:$0xff]
    %v78 = vld [vmem:[%s2 + $0x60] sm:$0xff]
    %v79 = vld [vmem:[%s2 + $0x68] sm:$0xff]
    %81 = vset.pattern.permute.xlu0 0
    %82 = vperm.xlu0 %81, %v66
    %v83 = vpop.permute.xlu0 %82
    %86 = vset.pattern.permute.xlu0 0
    %87 = vperm.xlu0 %86, %v67
    %v88 = vpop.permute.xlu0 %87
    %91 = vset.pattern.permute.xlu0 0
    %92 = vperm.xlu0 %91, %v68
    %v93 = vpop.permute.xlu0 %92
    %96 = vset.pattern.permute.xlu0 0
    %97 = vperm.xlu0 %96, %v69
    %v98 = vpop.permute.xlu0 %97
    %101 = vset.pattern.permute.xlu0 0
    %102 = vperm.xlu0 %101, %v70
    %v103 = vpop.permute.xlu0 %102
    %106 = vset.pattern.permute.xlu0 0
    %107 = vperm.xlu0 %106, %v71
    %v108 = vpop.permute.xlu0 %107
    %111 = vset.pattern.permute.xlu0 0
    %112 = vperm.xlu0 %111, %v72
    %v113 = vpop.permute.xlu0 %112
    %116 = vset.pattern.permute.xlu0 0
    %117 = vperm.xlu0 %116, %v73
    %v118 = vpop.permute.xlu0 %117
    %121 = vset.pattern.permute.xlu0 0
    %122 = vperm.xlu0 %121, %v74
    %v123 = vpop.permute.xlu0 %122
    %126 = vset.pattern.permute.xlu0 0
    %127 = vperm.xlu0 %126, %v75
    %v128 = vpop.permute.xlu0 %127
    %131 = vset.pattern.permute.xlu0 0
    %132 = vperm.xlu0 %131, %v76
    %v133 = vpop.permute.xlu0 %132
    %136 = vset.pattern.permute.xlu0 0
    %137 = vperm.xlu0 %136, %v77
    %v138 = vpop.permute.xlu0 %137
    %141 = vset.pattern.permute.xlu0 0
    %142 = vperm.xlu0 %141, %v78
    %v143 = vpop.permute.xlu0 %142
    %146 = vset.pattern.permute.xlu0 0
    %147 = vperm.xlu0 %146, %v79
    %v148 = vpop.permute.xlu0 %147
    %vm150 = vcmask 261120
    %v152 = vsel %vm150, %v52, 0
    %v155 = vsel %vm150, %v53, 0
    %v158 = vsel %vm150, %v54, 0
    %v161 = vsel %vm150, %v55, 0
    %v164 = vsel %vm150, %v56, 0
    %v167 = vsel %vm150, %v57, 0
    %v170 = vsel %vm150, %v58, 0
    %v173 = vsel %vm150, %v59, 0
    %v176 = vsel %vm150, %v60, 0
    %v179 = vsel %vm150, %v61, 0
    %v182 = vsel %vm150, %v62, 0
    %v185 = vsel %vm150, %v63, 0
    %v188 = vsel %vm150, %v64, 0
    %v191 = vsel %vm150, %v65, 0
    %193 = vmatprep.subr.mxu0 0.0
    %194 = vmatpush1.msra.mxu0 0.0
    %195 = vmatprep.subr.mxu0 0.0
    %196 = vmatpush1.msra.mxu0 0.0
    %197 = vmatprep.subr.mxu0 0.0
    %198 = vmatpush1.msra.mxu0 0.0
    %199 = vmatprep.subr.mxu0 0.0
    %200 = vmatpush1.msra.mxu0 0.0
    %201 = vmatprep.subr.mxu0 0.0
    %202 = vmatpush1.msra.mxu0 0.0
    %203 = vmatprep.subr.mxu0 0.0
    %204 = vmatpush1.msra.mxu0 0.0
    %205 = vmatprep.subr.mxu0 0.0
    %206 = vmatpush1.msra.mxu0 0.0
    %207 = vmatprep.subr.mxu0 0.0
    %208 = vmatpush1.msra.mxu0 0.0
    %209 = vmatprep.subr.mxu0 0.0
    %210 = vmatpush1.msra.mxu0 0.0
    %211 = vmatprep.subr.mxu0 0.0
    %212 = vmatpush1.msra.mxu0 0.0
    %213 = vmatprep.subr.mxu0 0.0
    %214 = vmatpush1.msra.mxu0 0.0
    %215 = vmatprep.subr.mxu0 0.0
    %216 = vmatpush1.msra.mxu0 0.0
    %217 = vmatprep.subr.mxu0 0.0
    %v218 = vand.u32 %v51, 4294901760
    %219 = vmatpush1.msra.mxu0 %v218
    %220 = vmatprep.subr.mxu0 0.0
    %v221 = vand.u32 %v50, 4294901760
    %222 = vmatpush1.msra.mxu0 %v221
    %223 = vmatprep.subr.mxu0 0.0
    %v224 = vand.u32 %v49, 4294901760
    %225 = vmatpush1.msra.mxu0 %v224
    %226 = vmatprep.subr.mxu0 0.0
    %v227 = vand.u32 %v48, 4294901760
    %228 = vmatpush1.msra.mxu0 %v227
    %229 = vmatprep.subr.mxu0 0.0
    %230 = vmatpush2.msra.mxu0 0.0
    %231 = vmatprep.subr.mxu0 0.0
    %232 = vmatpush2.msra.mxu0 0.0
    %233 = vmatprep.subr.mxu0 0.0
    %234 = vmatpush2.msra.mxu0 0.0
    %235 = vmatprep.subr.mxu0 0.0
    %236 = vmatpush2.msra.mxu0 0.0
    %237 = vmatprep.subr.mxu0 0.0
    %238 = vmatpush2.msra.mxu0 0.0
    %239 = vmatprep.subr.mxu0 0.0
    %240 = vmatpush2.msra.mxu0 0.0
    %241 = vmatprep.subr.mxu0 0.0
    %242 = vmatpush2.msra.mxu0 0.0
    %243 = vmatprep.subr.mxu0 0.0
    %244 = vmatpush2.msra.mxu0 0.0
    %245 = vmatprep.subr.mxu0 0.0
    %246 = vmatpush2.msra.mxu0 0.0
    %247 = vmatprep.subr.mxu0 0.0
    %248 = vmatpush2.msra.mxu0 0.0
    %249 = vmatprep.subr.mxu0 0.0
    %250 = vmatpush2.msra.mxu0 0.0
    %251 = vmatprep.subr.mxu0 0.0
    %252 = vmatpush2.msra.mxu0 0.0
    %253 = vmatprep.subr.mxu0 0.0
    %254 = vmatpush2.msra.mxu0 0.0
    %255 = vmatprep.subr.mxu0 0.0
    %256 = vmatpush2.msra.mxu0 0.0
    %257 = vmatprep.subr.mxu0 0.0
    %258 = vmatpush2.msra.mxu0 0.0
    %259 = vmatprep.subr.mxu0 0.0
    %260 = vmatpush2.msra.mxu0 0.0
    %261 = vmatprep.mubr.f32.mxu0 0.0
    %v262 = vand.u32 %v152, 4294901760
    %v263 = vsub.f32 %v152, %v262
    %v264 = vand.u32 %v263, 4294901760
    %v265 = vsub.f32 %v263, %v264
    %v266 = vand.u32 %v265, 4294901760
    %267 = vmatmul.mubr.f32.gmra.mxu0 %v266
    %v268 = vpop.f32.mrf.mxu0
    %v269 = vadd.f32 %v83, %v268
    %v270 = vpop.f32.mrf.mxu0
    %271 = vmatprep.mubr.f32.mxu0 0.0
    %v272 = vand.u32 %v155, 4294901760
    %v273 = vsub.f32 %v155, %v272
    %v274 = vand.u32 %v273, 4294901760
    %v275 = vsub.f32 %v273, %v274
    %v276 = vand.u32 %v275, 4294901760
    %277 = vmatmul.mubr.f32.gmra.mxu0 %v276
    %v278 = vpop.f32.mrf.mxu0
    %v279 = vadd.f32 %v88, %v278
    %v280 = vpop.f32.mrf.mxu0
    %281 = vmatprep.mubr.f32.mxu0 0.0
    %v282 = vand.u32 %v158, 4294901760
    %v283 = vsub.f32 %v158, %v282
    %v284 = vand.u32 %v283, 4294901760
    %v285 = vsub.f32 %v283, %v284
    %v286 = vand.u32 %v285, 4294901760
    %287 = vmatmul.mubr.f32.gmra.mxu0 %v286
    %v288 = vpop.f32.mrf.mxu0
    %v289 = vadd.f32 %v93, %v288
    %v290 = vpop.f32.mrf.mxu0
    %291 = vmatprep.mubr.f32.mxu0 0.0
    %v292 = vand.u32 %v161, 4294901760
    %v293 = vsub.f32 %v161, %v292
    %v294 = vand.u32 %v293, 4294901760
    %v295 = vsub.f32 %v293, %v294
    %v296 = vand.u32 %v295, 4294901760
    %297 = vmatmul.mubr.f32.gmra.mxu0 %v296
    %v298 = vpop.f32.mrf.mxu0
    %v299 = vadd.f32 %v98, %v298
    %v300 = vpop.f32.mrf.mxu0
    %301 = vmatprep.mubr.f32.mxu0 0.0
    %v302 = vand.u32 %v164, 4294901760
    %v303 = vsub.f32 %v164, %v302
    %v304 = vand.u32 %v303, 4294901760
    %v305 = vsub.f32 %v303, %v304
    %v306 = vand.u32 %v305, 4294901760
    %307 = vmatmul.mubr.f32.gmra.mxu0 %v306
    %v308 = vpop.f32.mrf.mxu0
    %v309 = vadd.f32 %v103, %v308
    %v310 = vpop.f32.mrf.mxu0
    %311 = vmatprep.mubr.f32.mxu0 0.0
    %v312 = vand.u32 %v167, 4294901760
    %v313 = vsub.f32 %v167, %v312
    %v314 = vand.u32 %v313, 4294901760
    %v315 = vsub.f32 %v313, %v314
    %v316 = vand.u32 %v315, 4294901760
    %317 = vmatmul.mubr.f32.gmra.mxu0 %v316
    %v318 = vpop.f32.mrf.mxu0
    %v319 = vadd.f32 %v108, %v318
    %v320 = vpop.f32.mrf.mxu0
    %321 = vmatprep.mubr.f32.mxu0 0.0
    %v322 = vand.u32 %v170, 4294901760
    %v323 = vsub.f32 %v170, %v322
    %v324 = vand.u32 %v323, 4294901760
    %v325 = vsub.f32 %v323, %v324
    %v326 = vand.u32 %v325, 4294901760
    %327 = vmatmul.mubr.f32.gmra.mxu0 %v326
    %v328 = vpop.f32.mrf.mxu0
    %v329 = vadd.f32 %v113, %v328
    %v330 = vpop.f32.mrf.mxu0
    %331 = vmatprep.mubr.f32.mxu0 0.0
    %v332 = vand.u32 %v173, 4294901760
    %v333 = vsub.f32 %v173, %v332
    %v334 = vand.u32 %v333, 4294901760
    %v335 = vsub.f32 %v333, %v334
    %v336 = vand.u32 %v335, 4294901760
    %337 = vmatmul.mubr.f32.gmra.mxu0 %v336
    %v338 = vpop.f32.mrf.mxu0
    %v339 = vadd.f32 %v118, %v338
    %v340 = vpop.f32.mrf.mxu0
    %341 = vmatprep.mubr.f32.mxu0 0.0
    %v342 = vand.u32 %v176, 4294901760
    %v343 = vsub.f32 %v176, %v342
    %v344 = vand.u32 %v343, 4294901760
    %v345 = vsub.f32 %v343, %v344
    %v346 = vand.u32 %v345, 4294901760
    %347 = vmatmul.mubr.f32.gmra.mxu0 %v346
    %v348 = vpop.f32.mrf.mxu0
    %v349 = vadd.f32 %v123, %v348
    %v350 = vpop.f32.mrf.mxu0
    %351 = vmatprep.mubr.f32.mxu0 0.0
    %v352 = vand.u32 %v179, 4294901760
    %v353 = vsub.f32 %v179, %v352
    %v354 = vand.u32 %v353, 4294901760
    %v355 = vsub.f32 %v353, %v354
    %v356 = vand.u32 %v355, 4294901760
    %357 = vmatmul.mubr.f32.gmra.mxu0 %v356
    %v358 = vpop.f32.mrf.mxu0
    %v359 = vadd.f32 %v128, %v358
    %v360 = vpop.f32.mrf.mxu0
    %361 = vmatprep.mubr.f32.mxu0 0.0
    %v362 = vand.u32 %v182, 4294901760
    %v363 = vsub.f32 %v182, %v362
    %v364 = vand.u32 %v363, 4294901760
    %v365 = vsub.f32 %v363, %v364
    %v366 = vand.u32 %v365, 4294901760
    %367 = vmatmul.mubr.f32.gmra.mxu0 %v366
    %v368 = vpop.f32.mrf.mxu0
    %v369 = vadd.f32 %v133, %v368
    %v370 = vpop.f32.mrf.mxu0
    %371 = vmatprep.mubr.f32.mxu0 0.0
    %v372 = vand.u32 %v185, 4294901760
    %v373 = vsub.f32 %v185, %v372
    %v374 = vand.u32 %v373, 4294901760
    %v375 = vsub.f32 %v373, %v374
    %v376 = vand.u32 %v375, 4294901760
    %377 = vmatmul.mubr.f32.gmra.mxu0 %v376
    %v378 = vpop.f32.mrf.mxu0
    %v379 = vadd.f32 %v138, %v378
    %v380 = vpop.f32.mrf.mxu0
    %381 = vmatprep.mubr.f32.mxu0 0.0
    %v382 = vand.u32 %v188, 4294901760
    %v383 = vsub.f32 %v188, %v382
    %v384 = vand.u32 %v383, 4294901760
    %v385 = vsub.f32 %v383, %v384
    %v386 = vand.u32 %v385, 4294901760
    %387 = vmatmul.mubr.f32.gmra.mxu0 %v386
    %v388 = vpop.f32.mrf.mxu0
    %v389 = vadd.f32 %v143, %v388
    %v390 = vpop.f32.mrf.mxu0
    %391 = vmatprep.mubr.f32.mxu0 0.0
    %v392 = vand.u32 %v191, 4294901760
    %v393 = vsub.f32 %v191, %v392
    %v394 = vand.u32 %v393, 4294901760
    %v395 = vsub.f32 %v393, %v394
    %v396 = vand.u32 %v395, 4294901760
    %397 = vmatmul.mubr.f32.gmra.mxu0 %v396
    %v398 = vpop.f32.mrf.mxu0
    %v399 = vadd.f32 %v148, %v398
    %v400 = vpop.f32.mrf.mxu0
    %401 = vdwg.mxu0
    %402 = vmatprep.subr.mxu0 0.0
    %403 = vmatpush1.msra.mxu0 0.0
    %404 = vmatprep.subr.mxu0 0.0
    %405 = vmatpush1.msra.mxu0 0.0
    %406 = vmatprep.subr.mxu0 0.0
    %407 = vmatpush1.msra.mxu0 0.0
    %408 = vmatprep.subr.mxu0 0.0
    %409 = vmatpush1.msra.mxu0 0.0
    %410 = vmatprep.subr.mxu0 0.0
    %411 = vmatpush1.msra.mxu0 0.0
    %412 = vmatprep.subr.mxu0 0.0
    %413 = vmatpush1.msra.mxu0 0.0
    %414 = vmatprep.subr.mxu0 0.0
    %415 = vmatpush1.msra.mxu0 0.0
    %416 = vmatprep.subr.mxu0 0.0
    %417 = vmatpush1.msra.mxu0 0.0
    %418 = vmatprep.subr.mxu0 0.0
    %419 = vmatpush1.msra.mxu0 0.0
    %420 = vmatprep.subr.mxu0 0.0
    %421 = vmatpush1.msra.mxu0 0.0
    %422 = vmatprep.subr.mxu0 0.0
    %423 = vmatpush1.msra.mxu0 0.0
    %424 = vmatprep.subr.mxu0 0.0
    %425 = vmatpush1.msra.mxu0 0.0
    %426 = vmatprep.subr.mxu0 0.0
    %v427 = vand.u32 %v51, 4294901760
    %v428 = vsub.f32 %v51, %v427
    %v429 = vand.u32 %v428, 4294901760
    %v430 = vsub.f32 %v428, %v429
    %v431 = vand.u32 %v430, 4294901760
    %432 = vmatpush1.msra.mxu0 %v431
    %433 = vmatprep.subr.mxu0 0.0
    %v434 = vand.u32 %v50, 4294901760
    %v435 = vsub.f32 %v50, %v434
    %v436 = vand.u32 %v435, 4294901760
    %v437 = vsub.f32 %v435, %v436
    %v438 = vand.u32 %v437, 4294901760
    %439 = vmatpush1.msra.mxu0 %v438
    %440 = vmatprep.subr.mxu0 0.0
    %v441 = vand.u32 %v49, 4294901760
    %v442 = vsub.f32 %v49, %v441
    %v443 = vand.u32 %v442, 4294901760
    %v444 = vsub.f32 %v442, %v443
    %v445 = vand.u32 %v444, 4294901760
    %446 = vmatpush1.msra.mxu0 %v445
    %447 = vmatprep.subr.mxu0 0.0
    %v448 = vand.u32 %v48, 4294901760
    %v449 = vsub.f32 %v48, %v448
    %v450 = vand.u32 %v449, 4294901760
    %v451 = vsub.f32 %v449, %v450
    %v452 = vand.u32 %v451, 4294901760
    %453 = vmatpush1.msra.mxu0 %v452
    %454 = vmatprep.subr.mxu0 0.0
    %455 = vmatpush2.msra.mxu0 0.0
    %456 = vmatprep.subr.mxu0 0.0
    %457 = vmatpush2.msra.mxu0 0.0
    %458 = vmatprep.subr.mxu0 0.0
    %459 = vmatpush2.msra.mxu0 0.0
    %460 = vmatprep.subr.mxu0 0.0
    %461 = vmatpush2.msra.mxu0 0.0
    %462 = vmatprep.subr.mxu0 0.0
    %463 = vmatpush2.msra.mxu0 0.0
    %464 = vmatprep.subr.mxu0 0.0
    %465 = vmatpush2.msra.mxu0 0.0
    %466 = vmatprep.subr.mxu0 0.0
    %467 = vmatpush2.msra.mxu0 0.0
    %468 = vmatprep.subr.mxu0 0.0
    %469 = vmatpush2.msra.mxu0 0.0
    %470 = vmatprep.subr.mxu0 0.0
    %471 = vmatpush2.msra.mxu0 0.0
    %472 = vmatprep.subr.mxu0 0.0
    %473 = vmatpush2.msra.mxu0 0.0
    %474 = vmatprep.subr.mxu0 0.0
    %475 = vmatpush2.msra.mxu0 0.0
    %476 = vmatprep.subr.mxu0 0.0
    %477 = vmatpush2.msra.mxu0 0.0
    %478 = vmatprep.subr.mxu0 0.0
    %479 = vmatpush2.msra.mxu0 0.0
    %480 = vmatprep.subr.mxu0 0.0
    %481 = vmatpush2.msra.mxu0 0.0
    %482 = vmatprep.subr.mxu0 0.0
    %483 = vmatpush2.msra.mxu0 0.0
    %484 = vmatprep.subr.mxu0 0.0
    %485 = vmatpush2.msra.mxu0 0.0
    %486 = vmatprep.mubr.f32.mxu0 0.0
    %v487 = vand.u32 %v152, 4294901760
    %488 = vmatmul.mubr.f32.gmra.mxu0 %v487
    %v489 = vpop.f32.mrf.mxu0
    %v490 = vadd.f32 %v269, %v489
    %v491 = vpop.f32.mrf.mxu0
    %492 = vmatprep.mubr.f32.mxu0 0.0
    %v493 = vand.u32 %v155, 4294901760
    %494 = vmatmul.mubr.f32.gmra.mxu0 %v493
    %v495 = vpop.f32.mrf.mxu0
    %v496 = vadd.f32 %v279, %v495
    %v497 = vpop.f32.mrf.mxu0
    %498 = vmatprep.mubr.f32.mxu0 0.0
    %v499 = vand.u32 %v158, 4294901760
    %500 = vmatmul.mubr.f32.gmra.mxu0 %v499
    %v501 = vpop.f32.mrf.mxu0
    %v502 = vadd.f32 %v289, %v501
    %v503 = vpop.f32.mrf.mxu0
    %504 = vmatprep.mubr.f32.mxu0 0.0
    %v505 = vand.u32 %v161, 4294901760
    %506 = vmatmul.mubr.f32.gmra.mxu0 %v505
    %v507 = vpop.f32.mrf.mxu0
    %v508 = vadd.f32 %v299, %v507
    %v509 = vpop.f32.mrf.mxu0
    %510 = vmatprep.mubr.f32.mxu0 0.0
    %v511 = vand.u32 %v164, 4294901760
    %512 = vmatmul.mubr.f32.gmra.mxu0 %v511
    %v513 = vpop.f32.mrf.mxu0
    %v514 = vadd.f32 %v309, %v513
    %v515 = vpop.f32.mrf.mxu0
    %516 = vmatprep.mubr.f32.mxu0 0.0
    %v517 = vand.u32 %v167, 4294901760
    %518 = vmatmul.mubr.f32.gmra.mxu0 %v517
    %v519 = vpop.f32.mrf.mxu0
    %v520 = vadd.f32 %v319, %v519
    %v521 = vpop.f32.mrf.mxu0
    %522 = vmatprep.mubr.f32.mxu0 0.0
    %v523 = vand.u32 %v170, 4294901760
    %524 = vmatmul.mubr.f32.gmra.mxu0 %v523
    %v525 = vpop.f32.mrf.mxu0
    %v526 = vadd.f32 %v329, %v525
    %v527 = vpop.f32.mrf.mxu0
    %528 = vmatprep.mubr.f32.mxu0 0.0
    %v529 = vand.u32 %v173, 4294901760
    %530 = vmatmul.mubr.f32.gmra.mxu0 %v529
    %v531 = vpop.f32.mrf.mxu0
    %v532 = vadd.f32 %v339, %v531
    %v533 = vpop.f32.mrf.mxu0
    %534 = vmatprep.mubr.f32.mxu0 0.0
    %v535 = vand.u32 %v176, 4294901760
    %536 = vmatmul.mubr.f32.gmra.mxu0 %v535
    %v537 = vpop.f32.mrf.mxu0
    %v538 = vadd.f32 %v349, %v537
    %v539 = vpop.f32.mrf.mxu0
    %540 = vmatprep.mubr.f32.mxu0 0.0
    %v541 = vand.u32 %v179, 4294901760
    %542 = vmatmul.mubr.f32.gmra.mxu0 %v541
    %v543 = vpop.f32.mrf.mxu0
    %v544 = vadd.f32 %v359, %v543
    %v545 = vpop.f32.mrf.mxu0
    %546 = vmatprep.mubr.f32.mxu0 0.0
    %v547 = vand.u32 %v182, 4294901760
    %548 = vmatmul.mubr.f32.gmra.mxu0 %v547
    %v549 = vpop.f32.mrf.mxu0
    %v550 = vadd.f32 %v369, %v549
    %v551 = vpop.f32.mrf.mxu0
    %552 = vmatprep.mubr.f32.mxu0 0.0
    %v553 = vand.u32 %v185, 4294901760
    %554 = vmatmul.mubr.f32.gmra.mxu0 %v553
    %v555 = vpop.f32.mrf.mxu0
    %v556 = vadd.f32 %v379, %v555
    %v557 = vpop.f32.mrf.mxu0
    %558 = vmatprep.mubr.f32.mxu0 0.0
    %v559 = vand.u32 %v188, 4294901760
    %560 = vmatmul.mubr.f32.gmra.mxu0 %v559
    %v561 = vpop.f32.mrf.mxu0
    %v562 = vadd.f32 %v389, %v561
    %v563 = vpop.f32.mrf.mxu0
    %564 = vmatprep.mubr.f32.mxu0 0.0
    %v565 = vand.u32 %v191, 4294901760
    %566 = vmatmul.mubr.f32.gmra.mxu0 %v565
    %v567 = vpop.f32.mrf.mxu0
    %v568 = vadd.f32 %v399, %v567
    %v569 = vpop.f32.mrf.mxu0
    %570 = vdwg.mxu0
    %571 = vmatprep.subr.mxu0 0.0
    %572 = vmatpush1.msra.mxu0 0.0
    %573 = vmatprep.subr.mxu0 0.0
    %574 = vmatpush1.msra.mxu0 0.0
    %575 = vmatprep.subr.mxu0 0.0
    %576 = vmatpush1.msra.mxu0 0.0
    %577 = vmatprep.subr.mxu0 0.0
    %578 = vmatpush1.msra.mxu0 0.0
    %579 = vmatprep.subr.mxu0 0.0
    %580 = vmatpush1.msra.mxu0 0.0
    %581 = vmatprep.subr.mxu0 0.0
    %582 = vmatpush1.msra.mxu0 0.0
    %583 = vmatprep.subr.mxu0 0.0
    %584 = vmatpush1.msra.mxu0 0.0
    %585 = vmatprep.subr.mxu0 0.0
    %586 = vmatpush1.msra.mxu0 0.0
    %587 = vmatprep.subr.mxu0 0.0
    %588 = vmatpush1.msra.mxu0 0.0
    %589 = vmatprep.subr.mxu0 0.0
    %590 = vmatpush1.msra.mxu0 0.0
    %591 = vmatprep.subr.mxu0 0.0
    %592 = vmatpush1.msra.mxu0 0.0
    %593 = vmatprep.subr.mxu0 0.0
    %594 = vmatpush1.msra.mxu0 0.0
    %595 = vmatprep.subr.mxu0 0.0
    %v596 = vand.u32 %v51, 4294901760
    %v597 = vsub.f32 %v51, %v596
    %598 = vmatpush1.msra.mxu0 %v597
    %599 = vmatprep.subr.mxu0 0.0
    %v600 = vand.u32 %v50, 4294901760
    %v601 = vsub.f32 %v50, %v600
    %602 = vmatpush1.msra.mxu0 %v601
    %603 = vmatprep.subr.mxu0 0.0
    %v604 = vand.u32 %v49, 4294901760
    %v605 = vsub.f32 %v49, %v604
    %606 = vmatpush1.msra.mxu0 %v605
    %607 = vmatprep.subr.mxu0 0.0
    %v608 = vand.u32 %v48, 4294901760
    %v609 = vsub.f32 %v48, %v608
    %610 = vmatpush1.msra.mxu0 %v609
    %611 = vmatprep.subr.mxu0 0.0
    %612 = vmatpush2.msra.mxu0 0.0
    %613 = vmatprep.subr.mxu0 0.0
    %614 = vmatpush2.msra.mxu0 0.0
    %615 = vmatprep.subr.mxu0 0.0
    %616 = vmatpush2.msra.mxu0 0.0
    %617 = vmatprep.subr.mxu0 0.0
    %618 = vmatpush2.msra.mxu0 0.0
    %619 = vmatprep.subr.mxu0 0.0
    %620 = vmatpush2.msra.mxu0 0.0
    %621 = vmatprep.subr.mxu0 0.0
    %622 = vmatpush2.msra.mxu0 0.0
    %623 = vmatprep.subr.mxu0 0.0
    %624 = vmatpush2.msra.mxu0 0.0
    %625 = vmatprep.subr.mxu0 0.0
    %626 = vmatpush2.msra.mxu0 0.0
    %627 = vmatprep.subr.mxu0 0.0
    %628 = vmatpush2.msra.mxu0 0.0
    %629 = vmatprep.subr.mxu0 0.0
    %630 = vmatpush2.msra.mxu0 0.0
    %631 = vmatprep.subr.mxu0 0.0
    %632 = vmatpush2.msra.mxu0 0.0
    %633 = vmatprep.subr.mxu0 0.0
    %634 = vmatpush2.msra.mxu0 0.0
    %635 = vmatprep.subr.mxu0 0.0
    %636 = vmatpush2.msra.mxu0 0.0
    %637 = vmatprep.subr.mxu0 0.0
    %638 = vmatpush2.msra.mxu0 0.0
    %639 = vmatprep.subr.mxu0 0.0
    %640 = vmatpush2.msra.mxu0 0.0
    %641 = vmatprep.subr.mxu0 0.0
    %642 = vmatpush2.msra.mxu0 0.0
    %643 = vmatprep.mubr.f32.mxu0 0.0
    %v644 = vand.u32 %v152, 4294901760
    %v645 = vsub.f32 %v152, %v644
    %646 = vmatmul.mubr.f32.gmra.mxu0 %v645
    %v647 = vpop.f32.mrf.mxu0
    %v648 = vadd.f32 %v490, %v647
    %v649 = vpop.f32.mrf.mxu0
    %650 = vmatprep.mubr.f32.mxu0 0.0
    %v651 = vand.u32 %v155, 4294901760
    %v652 = vsub.f32 %v155, %v651
    %653 = vmatmul.mubr.f32.gmra.mxu0 %v652
    %v654 = vpop.f32.mrf.mxu0
    %v655 = vadd.f32 %v496, %v654
    %v656 = vpop.f32.mrf.mxu0
    %657 = vmatprep.mubr.f32.mxu0 0.0
    %v658 = vand.u32 %v158, 4294901760
    %v659 = vsub.f32 %v158, %v658
    %660 = vmatmul.mubr.f32.gmra.mxu0 %v659
    %v661 = vpop.f32.mrf.mxu0
    %v662 = vadd.f32 %v502, %v661
    %v663 = vpop.f32.mrf.mxu0
    %664 = vmatprep.mubr.f32.mxu0 0.0
    %v665 = vand.u32 %v161, 4294901760
    %v666 = vsub.f32 %v161, %v665
    %667 = vmatmul.mubr.f32.gmra.mxu0 %v666
    %v668 = vpop.f32.mrf.mxu0
    %v669 = vadd.f32 %v508, %v668
    %v670 = vpop.f32.mrf.mxu0
    %671 = vmatprep.mubr.f32.mxu0 0.0
    %v672 = vand.u32 %v164, 4294901760
    %v673 = vsub.f32 %v164, %v672
    %674 = vmatmul.mubr.f32.gmra.mxu0 %v673
    %v675 = vpop.f32.mrf.mxu0
    %v676 = vadd.f32 %v514, %v675
    %v677 = vpop.f32.mrf.mxu0
    %678 = vmatprep.mubr.f32.mxu0 0.0
    %v679 = vand.u32 %v167, 4294901760
    %v680 = vsub.f32 %v167, %v679
    %681 = vmatmul.mubr.f32.gmra.mxu0 %v680
    %v682 = vpop.f32.mrf.mxu0
    %v683 = vadd.f32 %v520, %v682
    %v684 = vpop.f32.mrf.mxu0
    %685 = vmatprep.mubr.f32.mxu0 0.0
    %v686 = vand.u32 %v170, 4294901760
    %v687 = vsub.f32 %v170, %v686
    %688 = vmatmul.mubr.f32.gmra.mxu0 %v687
    %v689 = vpop.f32.mrf.mxu0
    %v690 = vadd.f32 %v526, %v689
    %v691 = vpop.f32.mrf.mxu0
    %692 = vmatprep.mubr.f32.mxu0 0.0
    %v693 = vand.u32 %v173, 4294901760
    %v694 = vsub.f32 %v173, %v693
    %695 = vmatmul.mubr.f32.gmra.mxu0 %v694
    %v696 = vpop.f32.mrf.mxu0
    %v697 = vadd.f32 %v532, %v696
    %v698 = vpop.f32.mrf.mxu0
    %699 = vmatprep.mubr.f32.mxu0 0.0
    %v700 = vand.u32 %v176, 4294901760
    %v701 = vsub.f32 %v176, %v700
    %702 = vmatmul.mubr.f32.gmra.mxu0 %v701
    %v703 = vpop.f32.mrf.mxu0
    %v704 = vadd.f32 %v538, %v703
    %v705 = vpop.f32.mrf.mxu0
    %706 = vmatprep.mubr.f32.mxu0 0.0
    %v707 = vand.u32 %v179, 4294901760
    %v708 = vsub.f32 %v179, %v707
    %709 = vmatmul.mubr.f32.gmra.mxu0 %v708
    %v710 = vpop.f32.mrf.mxu0
    %v711 = vadd.f32 %v544, %v710
    %v712 = vpop.f32.mrf.mxu0
    %713 = vmatprep.mubr.f32.mxu0 0.0
    %v714 = vand.u32 %v182, 4294901760
    %v715 = vsub.f32 %v182, %v714
    %716 = vmatmul.mubr.f32.gmra.mxu0 %v715
    %v717 = vpop.f32.mrf.mxu0
    %v718 = vadd.f32 %v550, %v717
    %v719 = vpop.f32.mrf.mxu0
    %720 = vmatprep.mubr.f32.mxu0 0.0
    %v721 = vand.u32 %v185, 4294901760
    %v722 = vsub.f32 %v185, %v721
    %723 = vmatmul.mubr.f32.gmra.mxu0 %v722
    %v724 = vpop.f32.mrf.mxu0
    %v725 = vadd.f32 %v556, %v724
    %v726 = vpop.f32.mrf.mxu0
    %727 = vmatprep.mubr.f32.mxu0 0.0
    %v728 = vand.u32 %v188, 4294901760
    %v729 = vsub.f32 %v188, %v728
    %730 = vmatmul.mubr.f32.gmra.mxu0 %v729
    %v731 = vpop.f32.mrf.mxu0
    %v732 = vadd.f32 %v562, %v731
    %v733 = vpop.f32.mrf.mxu0
    %734 = vmatprep.mubr.f32.mxu0 0.0
    %v735 = vand.u32 %v191, 4294901760
    %v736 = vsub.f32 %v191, %v735
    %737 = vmatmul.mubr.f32.gmra.mxu0 %v736
    %v738 = vpop.f32.mrf.mxu0
    %v739 = vadd.f32 %v568, %v738
    %v740 = vpop.f32.mrf.mxu0
    %741 = vdwg.mxu0
    %742 = vmatprep.subr.mxu0 0.0
    %743 = vmatpush1.msra.mxu0 0.0
    %744 = vmatprep.subr.mxu0 0.0
    %745 = vmatpush1.msra.mxu0 0.0
    %746 = vmatprep.subr.mxu0 0.0
    %747 = vmatpush1.msra.mxu0 0.0
    %748 = vmatprep.subr.mxu0 0.0
    %749 = vmatpush1.msra.mxu0 0.0
    %750 = vmatprep.subr.mxu0 0.0
    %751 = vmatpush1.msra.mxu0 0.0
    %752 = vmatprep.subr.mxu0 0.0
    %753 = vmatpush1.msra.mxu0 0.0
    %754 = vmatprep.subr.mxu0 0.0
    %755 = vmatpush1.msra.mxu0 0.0
    %756 = vmatprep.subr.mxu0 0.0
    %757 = vmatpush1.msra.mxu0 0.0
    %758 = vmatprep.subr.mxu0 0.0
    %759 = vmatpush1.msra.mxu0 0.0
    %760 = vmatprep.subr.mxu0 0.0
    %761 = vmatpush1.msra.mxu0 0.0
    %762 = vmatprep.subr.mxu0 0.0
    %763 = vmatpush1.msra.mxu0 0.0
    %764 = vmatprep.subr.mxu0 0.0
    %765 = vmatpush1.msra.mxu0 0.0
    %766 = vmatprep.subr.mxu0 0.0
    %v767 = vand.u32 %v51, 4294901760
    %768 = vmatpush1.msra.mxu0 %v767
    %769 = vmatprep.subr.mxu0 0.0
    %v770 = vand.u32 %v50, 4294901760
    %771 = vmatpush1.msra.mxu0 %v770
    %772 = vmatprep.subr.mxu0 0.0
    %v773 = vand.u32 %v49, 4294901760
    %774 = vmatpush1.msra.mxu0 %v773
    %775 = vmatprep.subr.mxu0 0.0
    %v776 = vand.u32 %v48, 4294901760
    %777 = vmatpush1.msra.mxu0 %v776
    %778 = vmatprep.subr.mxu0 0.0
    %779 = vmatpush2.msra.mxu0 0.0
    %780 = vmatprep.subr.mxu0 0.0
    %781 = vmatpush2.msra.mxu0 0.0
    %782 = vmatprep.subr.mxu0 0.0
    %783 = vmatpush2.msra.mxu0 0.0
    %784 = vmatprep.subr.mxu0 0.0
    %785 = vmatpush2.msra.mxu0 0.0
    %786 = vmatprep.subr.mxu0 0.0
    %787 = vmatpush2.msra.mxu0 0.0
    %788 = vmatprep.subr.mxu0 0.0
    %789 = vmatpush2.msra.mxu0 0.0
    %790 = vmatprep.subr.mxu0 0.0
    %791 = vmatpush2.msra.mxu0 0.0
    %792 = vmatprep.subr.mxu0 0.0
    %793 = vmatpush2.msra.mxu0 0.0
    %794 = vmatprep.subr.mxu0 0.0
    %795 = vmatpush2.msra.mxu0 0.0
    %796 = vmatprep.subr.mxu0 0.0
    %797 = vmatpush2.msra.mxu0 0.0
    %798 = vmatprep.subr.mxu0 0.0
    %799 = vmatpush2.msra.mxu0 0.0
    %800 = vmatprep.subr.mxu0 0.0
    %801 = vmatpush2.msra.mxu0 0.0
    %802 = vmatprep.subr.mxu0 0.0
    %803 = vmatpush2.msra.mxu0 0.0
    %804 = vmatprep.subr.mxu0 0.0
    %805 = vmatpush2.msra.mxu0 0.0
    %806 = vmatprep.subr.mxu0 0.0
    %807 = vmatpush2.msra.mxu0 0.0
    %808 = vmatprep.subr.mxu0 0.0
    %809 = vmatpush2.msra.mxu0 0.0
    %810 = vmatprep.mubr.f32.mxu0 0.0
    %v811 = vand.u32 %v152, 4294901760
    %v812 = vsub.f32 %v152, %v811
    %v813 = vand.u32 %v812, 4294901760
    %814 = vmatmul.mubr.f32.gmra.mxu0 %v813
    %v815 = vpop.f32.mrf.mxu0
    %v816 = vadd.f32 %v648, %v815
    %v817 = vpop.f32.mrf.mxu0
    %818 = vmatprep.mubr.f32.mxu0 0.0
    %v819 = vand.u32 %v155, 4294901760
    %v820 = vsub.f32 %v155, %v819
    %v821 = vand.u32 %v820, 4294901760
    %822 = vmatmul.mubr.f32.gmra.mxu0 %v821
    %v823 = vpop.f32.mrf.mxu0
    %v824 = vadd.f32 %v655, %v823
    %v825 = vpop.f32.mrf.mxu0
    %826 = vmatprep.mubr.f32.mxu0 0.0
    %v827 = vand.u32 %v158, 4294901760
    %v828 = vsub.f32 %v158, %v827
    %v829 = vand.u32 %v828, 4294901760
    %830 = vmatmul.mubr.f32.gmra.mxu0 %v829
    %v831 = vpop.f32.mrf.mxu0
    %v832 = vadd.f32 %v662, %v831
    %v833 = vpop.f32.mrf.mxu0
    %834 = vmatprep.mubr.f32.mxu0 0.0
    %v835 = vand.u32 %v161, 4294901760
    %v836 = vsub.f32 %v161, %v835
    %v837 = vand.u32 %v836, 4294901760
    %838 = vmatmul.mubr.f32.gmra.mxu0 %v837
    %v839 = vpop.f32.mrf.mxu0
    %v840 = vadd.f32 %v669, %v839
    %v841 = vpop.f32.mrf.mxu0
    %842 = vmatprep.mubr.f32.mxu0 0.0
    %v843 = vand.u32 %v164, 4294901760
    %v844 = vsub.f32 %v164, %v843
    %v845 = vand.u32 %v844, 4294901760
    %846 = vmatmul.mubr.f32.gmra.mxu0 %v845
    %v847 = vpop.f32.mrf.mxu0
    %v848 = vadd.f32 %v676, %v847
    %v849 = vpop.f32.mrf.mxu0
    %850 = vmatprep.mubr.f32.mxu0 0.0
    %v851 = vand.u32 %v167, 4294901760
    %v852 = vsub.f32 %v167, %v851
    %v853 = vand.u32 %v852, 4294901760
    %854 = vmatmul.mubr.f32.gmra.mxu0 %v853
    %v855 = vpop.f32.mrf.mxu0
    %v856 = vadd.f32 %v683, %v855
    %v857 = vpop.f32.mrf.mxu0
    %858 = vmatprep.mubr.f32.mxu0 0.0
    %v859 = vand.u32 %v170, 4294901760
    %v860 = vsub.f32 %v170, %v859
    %v861 = vand.u32 %v860, 4294901760
    %862 = vmatmul.mubr.f32.gmra.mxu0 %v861
    %v863 = vpop.f32.mrf.mxu0
    %v864 = vadd.f32 %v690, %v863
    %v865 = vpop.f32.mrf.mxu0
    %866 = vmatprep.mubr.f32.mxu0 0.0
    %v867 = vand.u32 %v173, 4294901760
    %v868 = vsub.f32 %v173, %v867
    %v869 = vand.u32 %v868, 4294901760
    %870 = vmatmul.mubr.f32.gmra.mxu0 %v869
    %v871 = vpop.f32.mrf.mxu0
    %v872 = vadd.f32 %v697, %v871
    %v873 = vpop.f32.mrf.mxu0
    %874 = vmatprep.mubr.f32.mxu0 0.0
    %v875 = vand.u32 %v176, 4294901760
    %v876 = vsub.f32 %v176, %v875
    %v877 = vand.u32 %v876, 4294901760
    %878 = vmatmul.mubr.f32.gmra.mxu0 %v877
    %v879 = vpop.f32.mrf.mxu0
    %v880 = vadd.f32 %v704, %v879
    %v881 = vpop.f32.mrf.mxu0
    %882 = vmatprep.mubr.f32.mxu0 0.0
    %v883 = vand.u32 %v179, 4294901760
    %v884 = vsub.f32 %v179, %v883
    %v885 = vand.u32 %v884, 4294901760
    %886 = vmatmul.mubr.f32.gmra.mxu0 %v885
    %v887 = vpop.f32.mrf.mxu0
    %v888 = vadd.f32 %v711, %v887
    %v889 = vpop.f32.mrf.mxu0
    %890 = vmatprep.mubr.f32.mxu0 0.0
    %v891 = vand.u32 %v182, 4294901760
    %v892 = vsub.f32 %v182, %v891
    %v893 = vand.u32 %v892, 4294901760
    %894 = vmatmul.mubr.f32.gmra.mxu0 %v893
    %v895 = vpop.f32.mrf.mxu0
    %v896 = vadd.f32 %v718, %v895
    %v897 = vpop.f32.mrf.mxu0
    %898 = vmatprep.mubr.f32.mxu0 0.0
    %v899 = vand.u32 %v185, 4294901760
    %v900 = vsub.f32 %v185, %v899
    %v901 = vand.u32 %v900, 4294901760
    %902 = vmatmul.mubr.f32.gmra.mxu0 %v901
    %v903 = vpop.f32.mrf.mxu0
    %v904 = vadd.f32 %v725, %v903
    %v905 = vpop.f32.mrf.mxu0
    %906 = vmatprep.mubr.f32.mxu0 0.0
    %v907 = vand.u32 %v188, 4294901760
    %v908 = vsub.f32 %v188, %v907
    %v909 = vand.u32 %v908, 4294901760
    %910 = vmatmul.mubr.f32.gmra.mxu0 %v909
    %v911 = vpop.f32.mrf.mxu0
    %v912 = vadd.f32 %v732, %v911
    %v913 = vpop.f32.mrf.mxu0
    %914 = vmatprep.mubr.f32.mxu0 0.0
    %v915 = vand.u32 %v191, 4294901760
    %v916 = vsub.f32 %v191, %v915
    %v917 = vand.u32 %v916, 4294901760
    %918 = vmatmul.mubr.f32.gmra.mxu0 %v917
    %v919 = vpop.f32.mrf.mxu0
    %v920 = vadd.f32 %v739, %v919
    %v921 = vpop.f32.mrf.mxu0
    %922 = vdwg.mxu0
    %923 = vmatprep.subr.mxu0 0.0
    %924 = vmatpush1.msra.mxu0 0.0
    %925 = vmatprep.subr.mxu0 0.0
    %926 = vmatpush1.msra.mxu0 0.0
    %927 = vmatprep.subr.mxu0 0.0
    %928 = vmatpush1.msra.mxu0 0.0
    %929 = vmatprep.subr.mxu0 0.0
    %930 = vmatpush1.msra.mxu0 0.0
    %931 = vmatprep.subr.mxu0 0.0
    %932 = vmatpush1.msra.mxu0 0.0
    %933 = vmatprep.subr.mxu0 0.0
    %934 = vmatpush1.msra.mxu0 0.0
    %935 = vmatprep.subr.mxu0 0.0
    %936 = vmatpush1.msra.mxu0 0.0
    %937 = vmatprep.subr.mxu0 0.0
    %938 = vmatpush1.msra.mxu0 0.0
    %939 = vmatprep.subr.mxu0 0.0
    %940 = vmatpush1.msra.mxu0 0.0
    %941 = vmatprep.subr.mxu0 0.0
    %942 = vmatpush1.msra.mxu0 0.0
    %943 = vmatprep.subr.mxu0 0.0
    %944 = vmatpush1.msra.mxu0 0.0
    %945 = vmatprep.subr.mxu0 0.0
    %946 = vmatpush1.msra.mxu0 0.0
    %947 = vmatprep.subr.mxu0 0.0
    %v948 = vand.u32 %v51, 4294901760
    %v949 = vsub.f32 %v51, %v948
    %v950 = vand.u32 %v949, 4294901760
    %951 = vmatpush1.msra.mxu0 %v950
    %952 = vmatprep.subr.mxu0 0.0
    %v953 = vand.u32 %v50, 4294901760
    %v954 = vsub.f32 %v50, %v953
    %v955 = vand.u32 %v954, 4294901760
    %956 = vmatpush1.msra.mxu0 %v955
    %957 = vmatprep.subr.mxu0 0.0
    %v958 = vand.u32 %v49, 4294901760
    %v959 = vsub.f32 %v49, %v958
    %v960 = vand.u32 %v959, 4294901760
    %961 = vmatpush1.msra.mxu0 %v960
    %962 = vmatprep.subr.mxu0 0.0
    %v963 = vand.u32 %v48, 4294901760
    %v964 = vsub.f32 %v48, %v963
    %v965 = vand.u32 %v964, 4294901760
    %966 = vmatpush1.msra.mxu0 %v965
    %967 = vmatprep.subr.mxu0 0.0
    %968 = vmatpush2.msra.mxu0 0.0
    %969 = vmatprep.subr.mxu0 0.0
    %970 = vmatpush2.msra.mxu0 0.0
    %971 = vmatprep.subr.mxu0 0.0
    %972 = vmatpush2.msra.mxu0 0.0
    %973 = vmatprep.subr.mxu0 0.0
    %974 = vmatpush2.msra.mxu0 0.0
    %975 = vmatprep.subr.mxu0 0.0
    %976 = vmatpush2.msra.mxu0 0.0
    %977 = vmatprep.subr.mxu0 0.0
    %978 = vmatpush2.msra.mxu0 0.0
    %979 = vmatprep.subr.mxu0 0.0
    %980 = vmatpush2.msra.mxu0 0.0
    %981 = vmatprep.subr.mxu0 0.0
    %982 = vmatpush2.msra.mxu0 0.0
    %983 = vmatprep.subr.mxu0 0.0
    %984 = vmatpush2.msra.mxu0 0.0
    %985 = vmatprep.subr.mxu0 0.0
    %986 = vmatpush2.msra.mxu0 0.0
    %987 = vmatprep.subr.mxu0 0.0
    %988 = vmatpush2.msra.mxu0 0.0
    %989 = vmatprep.subr.mxu0 0.0
    %990 = vmatpush2.msra.mxu0 0.0
    %991 = vmatprep.subr.mxu0 0.0
    %992 = vmatpush2.msra.mxu0 0.0
    %993 = vmatprep.subr.mxu0 0.0
    %994 = vmatpush2.msra.mxu0 0.0
    %995 = vmatprep.subr.mxu0 0.0
    %996 = vmatpush2.msra.mxu0 0.0
    %997 = vmatprep.subr.mxu0 0.0
    %998 = vmatpush2.msra.mxu0 0.0
    %999 = vmatprep.mubr.f32.mxu0 0.0
    %v1000 = vand.u32 %v152, 4294901760
    %1001 = vmatmul.mubr.f32.gmra.mxu0 %v1000
    %v1002 = vpop.f32.mrf.mxu0
    %v1003 = vadd.f32 %v816, %v1002
    %v1004 = vpop.f32.mrf.mxu0
    %1005 = vmatprep.mubr.f32.mxu0 0.0
    %v1006 = vand.u32 %v155, 4294901760
    %1007 = vmatmul.mubr.f32.gmra.mxu0 %v1006
    %v1008 = vpop.f32.mrf.mxu0
    %v1009 = vadd.f32 %v824, %v1008
    %v1010 = vpop.f32.mrf.mxu0
    %1011 = vmatprep.mubr.f32.mxu0 0.0
    %v1012 = vand.u32 %v158, 4294901760
    %1013 = vmatmul.mubr.f32.gmra.mxu0 %v1012
    %v1014 = vpop.f32.mrf.mxu0
    %v1015 = vadd.f32 %v832, %v1014
    %v1016 = vpop.f32.mrf.mxu0
    %1017 = vmatprep.mubr.f32.mxu0 0.0
    %v1018 = vand.u32 %v161, 4294901760
    %1019 = vmatmul.mubr.f32.gmra.mxu0 %v1018
    %v1020 = vpop.f32.mrf.mxu0
    %v1021 = vadd.f32 %v840, %v1020
    %v1022 = vpop.f32.mrf.mxu0
    %1023 = vmatprep.mubr.f32.mxu0 0.0
    %v1024 = vand.u32 %v164, 4294901760
    %1025 = vmatmul.mubr.f32.gmra.mxu0 %v1024
    %v1026 = vpop.f32.mrf.mxu0
    %v1027 = vadd.f32 %v848, %v1026
    %v1028 = vpop.f32.mrf.mxu0
    %1029 = vmatprep.mubr.f32.mxu0 0.0
    %v1030 = vand.u32 %v167, 4294901760
    %1031 = vmatmul.mubr.f32.gmra.mxu0 %v1030
    %v1032 = vpop.f32.mrf.mxu0
    %v1033 = vadd.f32 %v856, %v1032
    %v1034 = vpop.f32.mrf.mxu0
    %1035 = vmatprep.mubr.f32.mxu0 0.0
    %v1036 = vand.u32 %v170, 4294901760
    %1037 = vmatmul.mubr.f32.gmra.mxu0 %v1036
    %v1038 = vpop.f32.mrf.mxu0
    %v1039 = vadd.f32 %v864, %v1038
    %v1040 = vpop.f32.mrf.mxu0
    %1041 = vmatprep.mubr.f32.mxu0 0.0
    %v1042 = vand.u32 %v173, 4294901760
    %1043 = vmatmul.mubr.f32.gmra.mxu0 %v1042
    %v1044 = vpop.f32.mrf.mxu0
    %v1045 = vadd.f32 %v872, %v1044
    %v1046 = vpop.f32.mrf.mxu0
    %1047 = vmatprep.mubr.f32.mxu0 0.0
    %v1048 = vand.u32 %v176, 4294901760
    %1049 = vmatmul.mubr.f32.gmra.mxu0 %v1048
    %v1050 = vpop.f32.mrf.mxu0
    %v1051 = vadd.f32 %v880, %v1050
    %v1052 = vpop.f32.mrf.mxu0
    %1053 = vmatprep.mubr.f32.mxu0 0.0
    %v1054 = vand.u32 %v179, 4294901760
    %1055 = vmatmul.mubr.f32.gmra.mxu0 %v1054
    %v1056 = vpop.f32.mrf.mxu0
    %v1057 = vadd.f32 %v888, %v1056
    %v1058 = vpop.f32.mrf.mxu0
    %1059 = vmatprep.mubr.f32.mxu0 0.0
    %v1060 = vand.u32 %v182, 4294901760
    %1061 = vmatmul.mubr.f32.gmra.mxu0 %v1060
    %v1062 = vpop.f32.mrf.mxu0
    %v1063 = vadd.f32 %v896, %v1062
    %v1064 = vpop.f32.mrf.mxu0
    %1065 = vmatprep.mubr.f32.mxu0 0.0
    %v1066 = vand.u32 %v185, 4294901760
    %1067 = vmatmul.mubr.f32.gmra.mxu0 %v1066
    %v1068 = vpop.f32.mrf.mxu0
    %v1069 = vadd.f32 %v904, %v1068
    %v1070 = vpop.f32.mrf.mxu0
    %1071 = vmatprep.mubr.f32.mxu0 0.0
    %v1072 = vand.u32 %v188, 4294901760
    %1073 = vmatmul.mubr.f32.gmra.mxu0 %v1072
    %v1074 = vpop.f32.mrf.mxu0
    %v1075 = vadd.f32 %v912, %v1074
    %v1076 = vpop.f32.mrf.mxu0
    %1077 = vmatprep.mubr.f32.mxu0 0.0
    %v1078 = vand.u32 %v191, 4294901760
    %1079 = vmatmul.mubr.f32.gmra.mxu0 %v1078
    %v1080 = vpop.f32.mrf.mxu0
    %v1081 = vadd.f32 %v920, %v1080
    %v1082 = vpop.f32.mrf.mxu0
    %1083 = vdwg.mxu0
    %1084 = vmatprep.subr.mxu0 0.0
    %1085 = vmatpush1.msra.mxu0 0.0
    %1086 = vmatprep.subr.mxu0 0.0
    %1087 = vmatpush1.msra.mxu0 0.0
    %1088 = vmatprep.subr.mxu0 0.0
    %1089 = vmatpush1.msra.mxu0 0.0
    %1090 = vmatprep.subr.mxu0 0.0
    %1091 = vmatpush1.msra.mxu0 0.0
    %1092 = vmatprep.subr.mxu0 0.0
    %1093 = vmatpush1.msra.mxu0 0.0
    %1094 = vmatprep.subr.mxu0 0.0
    %1095 = vmatpush1.msra.mxu0 0.0
    %1096 = vmatprep.subr.mxu0 0.0
    %1097 = vmatpush1.msra.mxu0 0.0
    %1098 = vmatprep.subr.mxu0 0.0
    %1099 = vmatpush1.msra.mxu0 0.0
    %1100 = vmatprep.subr.mxu0 0.0
    %1101 = vmatpush1.msra.mxu0 0.0
    %1102 = vmatprep.subr.mxu0 0.0
    %1103 = vmatpush1.msra.mxu0 0.0
    %1104 = vmatprep.subr.mxu0 0.0
    %1105 = vmatpush1.msra.mxu0 0.0
    %1106 = vmatprep.subr.mxu0 0.0
    %1107 = vmatpush1.msra.mxu0 0.0
    %1108 = vmatprep.subr.mxu0 0.0
    %v1109 = vand.u32 %v51, 4294901760
    %1110 = vmatpush1.msra.mxu0 %v1109
    %1111 = vmatprep.subr.mxu0 0.0
    %v1112 = vand.u32 %v50, 4294901760
    %1113 = vmatpush1.msra.mxu0 %v1112
    %1114 = vmatprep.subr.mxu0 0.0
    %v1115 = vand.u32 %v49, 4294901760
    %1116 = vmatpush1.msra.mxu0 %v1115
    %1117 = vmatprep.subr.mxu0 0.0
    %v1118 = vand.u32 %v48, 4294901760
    %1119 = vmatpush1.msra.mxu0 %v1118
    %1120 = vmatprep.subr.mxu0 0.0
    %1121 = vmatpush2.msra.mxu0 0.0
    %1122 = vmatprep.subr.mxu0 0.0
    %1123 = vmatpush2.msra.mxu0 0.0
    %1124 = vmatprep.subr.mxu0 0.0
    %1125 = vmatpush2.msra.mxu0 0.0
    %1126 = vmatprep.subr.mxu0 0.0
    %1127 = vmatpush2.msra.mxu0 0.0
    %1128 = vmatprep.subr.mxu0 0.0
    %1129 = vmatpush2.msra.mxu0 0.0
    %1130 = vmatprep.subr.mxu0 0.0
    %1131 = vmatpush2.msra.mxu0 0.0
    %1132 = vmatprep.subr.mxu0 0.0
    %1133 = vmatpush2.msra.mxu0 0.0
    %1134 = vmatprep.subr.mxu0 0.0
    %1135 = vmatpush2.msra.mxu0 0.0
    %1136 = vmatprep.subr.mxu0 0.0
    %1137 = vmatpush2.msra.mxu0 0.0
    %1138 = vmatprep.subr.mxu0 0.0
    %1139 = vmatpush2.msra.mxu0 0.0
    %1140 = vmatprep.subr.mxu0 0.0
    %1141 = vmatpush2.msra.mxu0 0.0
    %1142 = vmatprep.subr.mxu0 0.0
    %1143 = vmatpush2.msra.mxu0 0.0
    %1144 = vmatprep.subr.mxu0 0.0
    %1145 = vmatpush2.msra.mxu0 0.0
    %1146 = vmatprep.subr.mxu0 0.0
    %1147 = vmatpush2.msra.mxu0 0.0
    %1148 = vmatprep.subr.mxu0 0.0
    %1149 = vmatpush2.msra.mxu0 0.0
    %1150 = vmatprep.subr.mxu0 0.0
    %1151 = vmatpush2.msra.mxu0 0.0
    %1152 = vmatprep.mubr.f32.mxu0 0.0
    %v1153 = vand.u32 %v152, 4294901760
    %1154 = vmatmul.mubr.f32.gmra.mxu0 %v1153
    %v1155 = vpop.f32.mrf.mxu0
    %v1156 = vadd.f32 %v1003, %v1155
    %v1157 = vpop.f32.mrf.mxu0
    %1158 = vmatprep.mubr.f32.mxu0 0.0
    %v1159 = vand.u32 %v155, 4294901760
    %1160 = vmatmul.mubr.f32.gmra.mxu0 %v1159
    %v1161 = vpop.f32.mrf.mxu0
    %v1162 = vadd.f32 %v1009, %v1161
    %v1163 = vpop.f32.mrf.mxu0
    %1164 = vmatprep.mubr.f32.mxu0 0.0
    %v1165 = vand.u32 %v158, 4294901760
    %1166 = vmatmul.mubr.f32.gmra.mxu0 %v1165
    %v1167 = vpop.f32.mrf.mxu0
    %v1168 = vadd.f32 %v1015, %v1167
    %v1169 = vpop.f32.mrf.mxu0
    %1170 = vmatprep.mubr.f32.mxu0 0.0
    %v1171 = vand.u32 %v161, 4294901760
    %1172 = vmatmul.mubr.f32.gmra.mxu0 %v1171
    %v1173 = vpop.f32.mrf.mxu0
    %v1174 = vadd.f32 %v1021, %v1173
    %v1175 = vpop.f32.mrf.mxu0
    %1176 = vmatprep.mubr.f32.mxu0 0.0
    %v1177 = vand.u32 %v164, 4294901760
    %1178 = vmatmul.mubr.f32.gmra.mxu0 %v1177
    %v1179 = vpop.f32.mrf.mxu0
    %v1180 = vadd.f32 %v1027, %v1179
    %v1181 = vpop.f32.mrf.mxu0
    %1182 = vmatprep.mubr.f32.mxu0 0.0
    %v1183 = vand.u32 %v167, 4294901760
    %1184 = vmatmul.mubr.f32.gmra.mxu0 %v1183
    %v1185 = vpop.f32.mrf.mxu0
    %v1186 = vadd.f32 %v1033, %v1185
    %v1187 = vpop.f32.mrf.mxu0
    %1188 = vmatprep.mubr.f32.mxu0 0.0
    %v1189 = vand.u32 %v170, 4294901760
    %1190 = vmatmul.mubr.f32.gmra.mxu0 %v1189
    %v1191 = vpop.f32.mrf.mxu0
    %v1192 = vadd.f32 %v1039, %v1191
    %v1193 = vpop.f32.mrf.mxu0
    %1194 = vmatprep.mubr.f32.mxu0 0.0
    %v1195 = vand.u32 %v173, 4294901760
    %1196 = vmatmul.mubr.f32.gmra.mxu0 %v1195
    %v1197 = vpop.f32.mrf.mxu0
    %v1198 = vadd.f32 %v1045, %v1197
    %v1199 = vpop.f32.mrf.mxu0
    %1200 = vmatprep.mubr.f32.mxu0 0.0
    %v1201 = vand.u32 %v176, 4294901760
    %1202 = vmatmul.mubr.f32.gmra.mxu0 %v1201
    %v1203 = vpop.f32.mrf.mxu0
    %v1204 = vadd.f32 %v1051, %v1203
    %v1205 = vpop.f32.mrf.mxu0
    %1206 = vmatprep.mubr.f32.mxu0 0.0
    %v1207 = vand.u32 %v179, 4294901760
    %1208 = vmatmul.mubr.f32.gmra.mxu0 %v1207
    %v1209 = vpop.f32.mrf.mxu0
    %v1210 = vadd.f32 %v1057, %v1209
    %v1211 = vpop.f32.mrf.mxu0
    %1212 = vmatprep.mubr.f32.mxu0 0.0
    %v1213 = vand.u32 %v182, 4294901760
    %1214 = vmatmul.mubr.f32.gmra.mxu0 %v1213
    %v1215 = vpop.f32.mrf.mxu0
    %v1216 = vadd.f32 %v1063, %v1215
    %v1217 = vpop.f32.mrf.mxu0
    %1218 = vmatprep.mubr.f32.mxu0 0.0
    %v1219 = vand.u32 %v185, 4294901760
    %1220 = vmatmul.mubr.f32.gmra.mxu0 %v1219
    %v1221 = vpop.f32.mrf.mxu0
    %v1222 = vadd.f32 %v1069, %v1221
    %v1223 = vpop.f32.mrf.mxu0
    %1224 = vmatprep.mubr.f32.mxu0 0.0
    %v1225 = vand.u32 %v188, 4294901760
    %1226 = vmatmul.mubr.f32.gmra.mxu0 %v1225
    %v1227 = vpop.f32.mrf.mxu0
    %v1228 = vadd.f32 %v1075, %v1227
    %v1229 = vpop.f32.mrf.mxu0
    %1230 = vmatprep.mubr.f32.mxu0 0.0
    %v1231 = vand.u32 %v191, 4294901760
    %1232 = vmatmul.mubr.f32.gmra.mxu0 %v1231
    %v1233 = vpop.f32.mrf.mxu0
    %v1234 = vadd.f32 %v1081, %v1233
    %v1235 = vpop.f32.mrf.mxu0
    %1236 = vdwg.mxu0
    %vm1237 = vcmp.gt.f32.partialorder %v1156, 0.0
    %vm1238 = vcmp.gt.f32.partialorder %v1162, 0.0
    %vm1239 = vcmp.gt.f32.partialorder %v1168, 0.0
    %vm1240 = vcmp.gt.f32.partialorder %v1174, 0.0
    %vm1241 = vcmp.gt.f32.partialorder %v1180, 0.0
    %vm1242 = vcmp.gt.f32.partialorder %v1186, 0.0
    %vm1243 = vcmp.gt.f32.partialorder %v1192, 0.0
    %vm1244 = vcmp.gt.f32.partialorder %v1198, 0.0
    %vm1245 = vcmp.gt.f32.partialorder %v1204, 0.0
    %vm1246 = vcmp.gt.f32.partialorder %v1210, 0.0
    %vm1247 = vcmp.gt.f32.partialorder %v1216, 0.0
    %vm1248 = vcmp.gt.f32.partialorder %v1222, 0.0
    %vm1249 = vcmp.gt.f32.partialorder %v1228, 0.0
    %vm1250 = vcmp.gt.f32.partialorder %v1234, 0.0
    %v1251 = vmul.f32 %v1156, 0.3
    %v1252 = vmul.f32 %v1162, 0.3
    %v1253 = vmul.f32 %v1168, 0.3
    %v1254 = vmul.f32 %v1174, 0.3
    %v1255 = vmul.f32 %v1180, 0.3
    %v1256 = vmul.f32 %v1186, 0.3
    %v1257 = vmul.f32 %v1192, 0.3
    %v1258 = vmul.f32 %v1198, 0.3
    %v1259 = vmul.f32 %v1204, 0.3
    %v1260 = vmul.f32 %v1210, 0.3
    %v1261 = vmul.f32 %v1216, 0.3
    %v1262 = vmul.f32 %v1222, 0.3
    %v1263 = vmul.f32 %v1228, 0.3
    %v1264 = vmul.f32 %v1234, 0.3
    %v1265 = vsel %vm1237, %v1156, %v1251
    %v1266 = vsel %vm1238, %v1162, %v1252
    %v1267 = vsel %vm1239, %v1168, %v1253
    %v1268 = vsel %vm1240, %v1174, %v1254
    %v1269 = vsel %vm1241, %v1180, %v1255
    %v1270 = vsel %vm1242, %v1186, %v1256
    %v1271 = vsel %vm1243, %v1192, %v1257
    %v1272 = vsel %vm1244, %v1198, %v1258
    %v1273 = vsel %vm1245, %v1204, %v1259
    %v1274 = vsel %vm1246, %v1210, %v1260
    %v1275 = vsel %vm1247, %v1216, %v1261
    %v1276 = vsel %vm1248, %v1222, %v1262
    %v1277 = vsel %vm1249, %v1228, %v1263
    %v1278 = vsel %vm1250, %v1234, %v1264
    %v1279 = vld [vmem:[%s3] sm:$0xff]
    %v1280 = vld [vmem:[%s3 + $0x8] sm:$0xff]
    %v1281 = vld [vmem:[%s3 + $0x10] sm:$0xff]
    %v1282 = vld [vmem:[%s3 + $0x18] sm:$0xff]
    %v1283 = vld [vmem:[%s3 + $0x20] sm:$0xff]
    %v1284 = vld [vmem:[%s3 + $0x28] sm:$0xff]
    %v1285 = vld [vmem:[%s3 + $0x30] sm:$0xff]
    %v1286 = vld [vmem:[%s3 + $0x38] sm:$0xff]
    %v1287 = vld [vmem:[%s3 + $0x40] sm:$0xff]
    %v1288 = vld [vmem:[%s3 + $0x48] sm:$0xff]
    %v1289 = vld [vmem:[%s3 + $0x50] sm:$0xff]
    %v1290 = vld [vmem:[%s3 + $0x58] sm:$0xff]
    %v1291 = vld [vmem:[%s3 + $0x60] sm:$0xff]
    %v1292 = vld [vmem:[%s3 + $0x68] sm:$0xff]
    %v1293 = vld [vmem:[%s4] sm:$0xff]
    %v1294 = vld [vmem:[%s4 + $0x8] sm:$0xff]
    %v1295 = vld [vmem:[%s4 + $0x10] sm:$0xff]
    %v1296 = vld [vmem:[%s4 + $0x18] sm:$0xff]
    %v1297 = vld [vmem:[%s4 + $0x20] sm:$0xff]
    %v1298 = vld [vmem:[%s4 + $0x28] sm:$0xff]
    %v1299 = vld [vmem:[%s4 + $0x30] sm:$0xff]
    %v1300 = vld [vmem:[%s4 + $0x38] sm:$0xff]
    %v1301 = vld [vmem:[%s4 + $0x40] sm:$0xff]
    %v1302 = vld [vmem:[%s4 + $0x48] sm:$0xff]
    %v1303 = vld [vmem:[%s4 + $0x50] sm:$0xff]
    %v1304 = vld [vmem:[%s4 + $0x58] sm:$0xff]
    %v1305 = vld [vmem:[%s4 + $0x60] sm:$0xff]
    %v1306 = vld [vmem:[%s4 + $0x68] sm:$0xff]
    %1308 = vset.pattern.permute.xlu0 0
    %1309 = vperm.xlu0 %1308, %v1293
    %v1310 = vpop.permute.xlu0 %1309
    %1313 = vset.pattern.permute.xlu0 0
    %1314 = vperm.xlu0 %1313, %v1294
    %v1315 = vpop.permute.xlu0 %1314
    %1318 = vset.pattern.permute.xlu0 0
    %1319 = vperm.xlu0 %1318, %v1295
    %v1320 = vpop.permute.xlu0 %1319
    %1323 = vset.pattern.permute.xlu0 0
    %1324 = vperm.xlu0 %1323, %v1296
    %v1325 = vpop.permute.xlu0 %1324
    %1328 = vset.pattern.permute.xlu0 0
    %1329 = vperm.xlu0 %1328, %v1297
    %v1330 = vpop.permute.xlu0 %1329
    %1333 = vset.pattern.permute.xlu0 0
    %1334 = vperm.xlu0 %1333, %v1298
    %v1335 = vpop.permute.xlu0 %1334
    %1338 = vset.pattern.permute.xlu0 0
    %1339 = vperm.xlu0 %1338, %v1299
    %v1340 = vpop.permute.xlu0 %1339
    %1343 = vset.pattern.permute.xlu0 0
    %1344 = vperm.xlu0 %1343, %v1300
    %v1345 = vpop.permute.xlu0 %1344
    %1348 = vset.pattern.permute.xlu0 0
    %1349 = vperm.xlu0 %1348, %v1301
    %v1350 = vpop.permute.xlu0 %1349
    %1353 = vset.pattern.permute.xlu0 0
    %1354 = vperm.xlu0 %1353, %v1302
    %v1355 = vpop.permute.xlu0 %1354
    %1358 = vset.pattern.permute.xlu0 0
    %1359 = vperm.xlu0 %1358, %v1303
    %v1360 = vpop.permute.xlu0 %1359
    %1363 = vset.pattern.permute.xlu0 0
    %1364 = vperm.xlu0 %1363, %v1304
    %v1365 = vpop.permute.xlu0 %1364
    %1368 = vset.pattern.permute.xlu0 0
    %1369 = vperm.xlu0 %1368, %v1305
    %v1370 = vpop.permute.xlu0 %1369
    %1373 = vset.pattern.permute.xlu0 0
    %1374 = vperm.xlu0 %1373, %v1306
    %v1375 = vpop.permute.xlu0 %1374
    %vm1377 = vcmask 916480
    %v1379 = vsel %vm1377, %v1279, 0
    %v1382 = vsel %vm1377, %v1280, 0
    %v1385 = vsel %vm1377, %v1281, 0
    %v1388 = vsel %vm1377, %v1282, 0
    %v1391 = vsel %vm1377, %v1283, 0
    %v1394 = vsel %vm1377, %v1284, 0
    %v1397 = vsel %vm1377, %v1285, 0
    %v1400 = vsel %vm1377, %v1286, 0
    %v1403 = vsel %vm1377, %v1287, 0
    %v1406 = vsel %vm1377, %v1288, 0
    %v1409 = vsel %vm1377, %v1289, 0
    %v1412 = vsel %vm1377, %v1290, 0
    %v1415 = vsel %vm1377, %v1291, 0
    %v1418 = vsel %vm1377, %v1292, 0
    %1420 = vmatprep.subr.mxu0 0.0
    %1421 = vmatpush1.msra.mxu0 0.0
    %1422 = vmatprep.subr.mxu0 0.0
    %1423 = vmatpush1.msra.mxu0 0.0
    %1424 = vmatprep.subr.mxu0 0.0
    %v1425 = vand.u32 %v1278, 4294901760
    %1426 = vmatpush1.msra.mxu0 %v1425
    %1427 = vmatprep.subr.mxu0 0.0
    %v1428 = vand.u32 %v1277, 4294901760
    %1429 = vmatpush1.msra.mxu0 %v1428
    %1430 = vmatprep.subr.mxu0 0.0
    %v1431 = vand.u32 %v1276, 4294901760
    %1432 = vmatpush1.msra.mxu0 %v1431
    %1433 = vmatprep.subr.mxu0 0.0
    %v1434 = vand.u32 %v1275, 4294901760
    %1435 = vmatpush1.msra.mxu0 %v1434
    %1436 = vmatprep.subr.mxu0 0.0
    %v1437 = vand.u32 %v1274, 4294901760
    %1438 = vmatpush1.msra.mxu0 %v1437
    %1439 = vmatprep.subr.mxu0 0.0
    %v1440 = vand.u32 %v1273, 4294901760
    %1441 = vmatpush1.msra.mxu0 %v1440
    %1442 = vmatprep.subr.mxu0 0.0
    %v1443 = vand.u32 %v1272, 4294901760
    %1444 = vmatpush1.msra.mxu0 %v1443
    %1445 = vmatprep.subr.mxu0 0.0
    %v1446 = vand.u32 %v1271, 4294901760
    %1447 = vmatpush1.msra.mxu0 %v1446
    %1448 = vmatprep.subr.mxu0 0.0
    %v1449 = vand.u32 %v1270, 4294901760
    %1450 = vmatpush1.msra.mxu0 %v1449
    %1451 = vmatprep.subr.mxu0 0.0
    %v1452 = vand.u32 %v1269, 4294901760
    %1453 = vmatpush1.msra.mxu0 %v1452
    %1454 = vmatprep.subr.mxu0 0.0
    %v1455 = vand.u32 %v1268, 4294901760
    %1456 = vmatpush1.msra.mxu0 %v1455
    %1457 = vmatprep.subr.mxu0 0.0
    %v1458 = vand.u32 %v1267, 4294901760
    %1459 = vmatpush1.msra.mxu0 %v1458
    %1460 = vmatprep.subr.mxu0 0.0
    %v1461 = vand.u32 %v1266, 4294901760
    %1462 = vmatpush1.msra.mxu0 %v1461
    %1463 = vmatprep.subr.mxu0 0.0
    %v1464 = vand.u32 %v1265, 4294901760
    %1465 = vmatpush1.msra.mxu0 %v1464
    %1466 = vmatprep.subr.mxu0 0.0
    %1467 = vmatpush2.msra.mxu0 0.0
    %1468 = vmatprep.subr.mxu0 0.0
    %1469 = vmatpush2.msra.mxu0 0.0
    %1470 = vmatprep.subr.mxu0 0.0
    %1471 = vmatpush2.msra.mxu0 0.0
    %1472 = vmatprep.subr.mxu0 0.0
    %1473 = vmatpush2.msra.mxu0 0.0
    %1474 = vmatprep.subr.mxu0 0.0
    %1475 = vmatpush2.msra.mxu0 0.0
    %1476 = vmatprep.subr.mxu0 0.0
    %1477 = vmatpush2.msra.mxu0 0.0
    %1478 = vmatprep.subr.mxu0 0.0
    %1479 = vmatpush2.msra.mxu0 0.0
    %1480 = vmatprep.subr.mxu0 0.0
    %1481 = vmatpush2.msra.mxu0 0.0
    %1482 = vmatprep.subr.mxu0 0.0
    %1483 = vmatpush2.msra.mxu0 0.0
    %1484 = vmatprep.subr.mxu0 0.0
    %1485 = vmatpush2.msra.mxu0 0.0
    %1486 = vmatprep.subr.mxu0 0.0
    %1487 = vmatpush2.msra.mxu0 0.0
    %1488 = vmatprep.subr.mxu0 0.0
    %1489 = vmatpush2.msra.mxu0 0.0
    %1490 = vmatprep.subr.mxu0 0.0
    %1491 = vmatpush2.msra.mxu0 0.0
    %1492 = vmatprep.subr.mxu0 0.0
    %1493 = vmatpush2.msra.mxu0 0.0
    %1494 = vmatprep.subr.mxu0 0.0
    %1495 = vmatpush2.msra.mxu0 0.0
    %1496 = vmatprep.subr.mxu0 0.0
    %1497 = vmatpush2.msra.mxu0 0.0
    %1498 = vmatprep.mubr.f32.mxu0 0.0
    %v1499 = vand.u32 %v1379, 4294901760
    %v1500 = vsub.f32 %v1379, %v1499
    %v1501 = vand.u32 %v1500, 4294901760
    %v1502 = vsub.f32 %v1500, %v1501
    %v1503 = vand.u32 %v1502, 4294901760
    %1504 = vmatmul.mubr.f32.gmra.mxu0 %v1503
    %v1505 = vpop.f32.mrf.mxu0
    %v1506 = vadd.f32 %v1310, %v1505
    %v1507 = vpop.f32.mrf.mxu0
    %1508 = vmatprep.mubr.f32.mxu0 0.0
    %v1509 = vand.u32 %v1382, 4294901760
    %v1510 = vsub.f32 %v1382, %v1509
    %v1511 = vand.u32 %v1510, 4294901760
    %v1512 = vsub.f32 %v1510, %v1511
    %v1513 = vand.u32 %v1512, 4294901760
    %1514 = vmatmul.mubr.f32.gmra.mxu0 %v1513
    %v1515 = vpop.f32.mrf.mxu0
    %v1516 = vadd.f32 %v1315, %v1515
    %v1517 = vpop.f32.mrf.mxu0
    %1518 = vmatprep.mubr.f32.mxu0 0.0
    %v1519 = vand.u32 %v1385, 4294901760
    %v1520 = vsub.f32 %v1385, %v1519
    %v1521 = vand.u32 %v1520, 4294901760
    %v1522 = vsub.f32 %v1520, %v1521
    %v1523 = vand.u32 %v1522, 4294901760
    %1524 = vmatmul.mubr.f32.gmra.mxu0 %v1523
    %v1525 = vpop.f32.mrf.mxu0
    %v1526 = vadd.f32 %v1320, %v1525
    %v1527 = vpop.f32.mrf.mxu0
    %1528 = vmatprep.mubr.f32.mxu0 0.0
    %v1529 = vand.u32 %v1388, 4294901760
    %v1530 = vsub.f32 %v1388, %v1529
    %v1531 = vand.u32 %v1530, 4294901760
    %v1532 = vsub.f32 %v1530, %v1531
    %v1533 = vand.u32 %v1532, 4294901760
    %1534 = vmatmul.mubr.f32.gmra.mxu0 %v1533
    %v1535 = vpop.f32.mrf.mxu0
    %v1536 = vadd.f32 %v1325, %v1535
    %v1537 = vpop.f32.mrf.mxu0
    %1538 = vmatprep.mubr.f32.mxu0 0.0
    %v1539 = vand.u32 %v1391, 4294901760
    %v1540 = vsub.f32 %v1391, %v1539
    %v1541 = vand.u32 %v1540, 4294901760
    %v1542 = vsub.f32 %v1540, %v1541
    %v1543 = vand.u32 %v1542, 4294901760
    %1544 = vmatmul.mubr.f32.gmra.mxu0 %v1543
    %v1545 = vpop.f32.mrf.mxu0
    %v1546 = vadd.f32 %v1330, %v1545
    %v1547 = vpop.f32.mrf.mxu0
    %1548 = vmatprep.mubr.f32.mxu0 0.0
    %v1549 = vand.u32 %v1394, 4294901760
    %v1550 = vsub.f32 %v1394, %v1549
    %v1551 = vand.u32 %v1550, 4294901760
    %v1552 = vsub.f32 %v1550, %v1551
    %v1553 = vand.u32 %v1552, 4294901760
    %1554 = vmatmul.mubr.f32.gmra.mxu0 %v1553
    %v1555 = vpop.f32.mrf.mxu0
    %v1556 = vadd.f32 %v1335, %v1555
    %v1557 = vpop.f32.mrf.mxu0
    %1558 = vmatprep.mubr.f32.mxu0 0.0
    %v1559 = vand.u32 %v1397, 4294901760
    %v1560 = vsub.f32 %v1397, %v1559
    %v1561 = vand.u32 %v1560, 4294901760
    %v1562 = vsub.f32 %v1560, %v1561
    %v1563 = vand.u32 %v1562, 4294901760
    %1564 = vmatmul.mubr.f32.gmra.mxu0 %v1563
    %v1565 = vpop.f32.mrf.mxu0
    %v1566 = vadd.f32 %v1340, %v1565
    %v1567 = vpop.f32.mrf.mxu0
    %1568 = vmatprep.mubr.f32.mxu0 0.0
    %v1569 = vand.u32 %v1400, 4294901760
    %v1570 = vsub.f32 %v1400, %v1569
    %v1571 = vand.u32 %v1570, 4294901760
    %v1572 = vsub.f32 %v1570, %v1571
    %v1573 = vand.u32 %v1572, 4294901760
    %1574 = vmatmul.mubr.f32.gmra.mxu0 %v1573
    %v1575 = vpop.f32.mrf.mxu0
    %v1576 = vadd.f32 %v1345, %v1575
    %v1577 = vpop.f32.mrf.mxu0
    %1578 = vmatprep.mubr.f32.mxu0 0.0
    %v1579 = vand.u32 %v1403, 4294901760
    %v1580 = vsub.f32 %v1403, %v1579
    %v1581 = vand.u32 %v1580, 4294901760
    %v1582 = vsub.f32 %v1580, %v1581
    %v1583 = vand.u32 %v1582, 4294901760
    %1584 = vmatmul.mubr.f32.gmra.mxu0 %v1583
    %v1585 = vpop.f32.mrf.mxu0
    %v1586 = vadd.f32 %v1350, %v1585
    %v1587 = vpop.f32.mrf.mxu0
    %1588 = vmatprep.mubr.f32.mxu0 0.0
    %v1589 = vand.u32 %v1406, 4294901760
    %v1590 = vsub.f32 %v1406, %v1589
    %v1591 = vand.u32 %v1590, 4294901760
    %v1592 = vsub.f32 %v1590, %v1591
    %v1593 = vand.u32 %v1592, 4294901760
    %1594 = vmatmul.mubr.f32.gmra.mxu0 %v1593
    %v1595 = vpop.f32.mrf.mxu0
    %v1596 = vadd.f32 %v1355, %v1595
    %v1597 = vpop.f32.mrf.mxu0
    %1598 = vmatprep.mubr.f32.mxu0 0.0
    %v1599 = vand.u32 %v1409, 4294901760
    %v1600 = vsub.f32 %v1409, %v1599
    %v1601 = vand.u32 %v1600, 4294901760
    %v1602 = vsub.f32 %v1600, %v1601
    %v1603 = vand.u32 %v1602, 4294901760
    %1604 = vmatmul.mubr.f32.gmra.mxu0 %v1603
    %v1605 = vpop.f32.mrf.mxu0
    %v1606 = vadd.f32 %v1360, %v1605
    %v1607 = vpop.f32.mrf.mxu0
    %1608 = vmatprep.mubr.f32.mxu0 0.0
    %v1609 = vand.u32 %v1412, 4294901760
    %v1610 = vsub.f32 %v1412, %v1609
    %v1611 = vand.u32 %v1610, 4294901760
    %v1612 = vsub.f32 %v1610, %v1611
    %v1613 = vand.u32 %v1612, 4294901760
    %1614 = vmatmul.mubr.f32.gmra.mxu0 %v1613
    %v1615 = vpop.f32.mrf.mxu0
    %v1616 = vadd.f32 %v1365, %v1615
    %v1617 = vpop.f32.mrf.mxu0
    %1618 = vmatprep.mubr.f32.mxu0 0.0
    %v1619 = vand.u32 %v1415, 4294901760
    %v1620 = vsub.f32 %v1415, %v1619
    %v1621 = vand.u32 %v1620, 4294901760
    %v1622 = vsub.f32 %v1620, %v1621
    %v1623 = vand.u32 %v1622, 4294901760
    %1624 = vmatmul.mubr.f32.gmra.mxu0 %v1623
    %v1625 = vpop.f32.mrf.mxu0
    %v1626 = vadd.f32 %v1370, %v1625
    %v1627 = vpop.f32.mrf.mxu0
    %1628 = vmatprep.mubr.f32.mxu0 0.0
    %v1629 = vand.u32 %v1418, 4294901760
    %v1630 = vsub.f32 %v1418, %v1629
    %v1631 = vand.u32 %v1630, 4294901760
    %v1632 = vsub.f32 %v1630, %v1631
    %v1633 = vand.u32 %v1632, 4294901760
    %1634 = vmatmul.mubr.f32.gmra.mxu0 %v1633
    %v1635 = vpop.f32.mrf.mxu0
    %v1636 = vadd.f32 %v1375, %v1635
    %v1637 = vpop.f32.mrf.mxu0
    %1638 = vdwg.mxu0
    %1639 = vmatprep.subr.mxu0 0.0
    %1640 = vmatpush1.msra.mxu0 0.0
    %1641 = vmatprep.subr.mxu0 0.0
    %1642 = vmatpush1.msra.mxu0 0.0
    %1643 = vmatprep.subr.mxu0 0.0
    %v1644 = vand.u32 %v1278, 4294901760
    %v1645 = vsub.f32 %v1278, %v1644
    %v1646 = vand.u32 %v1645, 4294901760
    %v1647 = vsub.f32 %v1645, %v1646
    %v1648 = vand.u32 %v1647, 4294901760
    %1649 = vmatpush1.msra.mxu0 %v1648
    %1650 = vmatprep.subr.mxu0 0.0
    %v1651 = vand.u32 %v1277, 4294901760
    %v1652 = vsub.f32 %v1277, %v1651
    %v1653 = vand.u32 %v1652, 4294901760
    %v1654 = vsub.f32 %v1652, %v1653
    %v1655 = vand.u32 %v1654, 4294901760
    %1656 = vmatpush1.msra.mxu0 %v1655
    %1657 = vmatprep.subr.mxu0 0.0
    %v1658 = vand.u32 %v1276, 4294901760
    %v1659 = vsub.f32 %v1276, %v1658
    %v1660 = vand.u32 %v1659, 4294901760
    %v1661 = vsub.f32 %v1659, %v1660
    %v1662 = vand.u32 %v1661, 4294901760
    %1663 = vmatpush1.msra.mxu0 %v1662
    %1664 = vmatprep.subr.mxu0 0.0
    %v1665 = vand.u32 %v1275, 4294901760
    %v1666 = vsub.f32 %v1275, %v1665
    %v1667 = vand.u32 %v1666, 4294901760
    %v1668 = vsub.f32 %v1666, %v1667
    %v1669 = vand.u32 %v1668, 4294901760
    %1670 = vmatpush1.msra.mxu0 %v1669
    %1671 = vmatprep.subr.mxu0 0.0
    %v1672 = vand.u32 %v1274, 4294901760
    %v1673 = vsub.f32 %v1274, %v1672
    %v1674 = vand.u32 %v1673, 4294901760
    %v1675 = vsub.f32 %v1673, %v1674
    %v1676 = vand.u32 %v1675, 4294901760
    %1677 = vmatpush1.msra.mxu0 %v1676
    %1678 = vmatprep.subr.mxu0 0.0
    %v1679 = vand.u32 %v1273, 4294901760
    %v1680 = vsub.f32 %v1273, %v1679
    %v1681 = vand.u32 %v1680, 4294901760
    %v1682 = vsub.f32 %v1680, %v1681
    %v1683 = vand.u32 %v1682, 4294901760
    %1684 = vmatpush1.msra.mxu0 %v1683
    %1685 = vmatprep.subr.mxu0 0.0
    %v1686 = vand.u32 %v1272, 4294901760
    %v1687 = vsub.f32 %v1272, %v1686
    %v1688 = vand.u32 %v1687, 4294901760
    %v1689 = vsub.f32 %v1687, %v1688
    %v1690 = vand.u32 %v1689, 4294901760
    %1691 = vmatpush1.msra.mxu0 %v1690
    %1692 = vmatprep.subr.mxu0 0.0
    %v1693 = vand.u32 %v1271, 4294901760
    %v1694 = vsub.f32 %v1271, %v1693
    %v1695 = vand.u32 %v1694, 4294901760
    %v1696 = vsub.f32 %v1694, %v1695
    %v1697 = vand.u32 %v1696, 4294901760
    %1698 = vmatpush1.msra.mxu0 %v1697
    %1699 = vmatprep.subr.mxu0 0.0
    %v1700 = vand.u32 %v1270, 4294901760
    %v1701 = vsub.f32 %v1270, %v1700
    %v1702 = vand.u32 %v1701, 4294901760
    %v1703 = vsub.f32 %v1701, %v1702
    %v1704 = vand.u32 %v1703, 4294901760
    %1705 = vmatpush1.msra.mxu0 %v1704
    %1706 = vmatprep.subr.mxu0 0.0
    %v1707 = vand.u32 %v1269, 4294901760
    %v1708 = vsub.f32 %v1269, %v1707
    %v1709 = vand.u32 %v1708, 4294901760
    %v1710 = vsub.f32 %v1708, %v1709
    %v1711 = vand.u32 %v1710, 4294901760
    %1712 = vmatpush1.msra.mxu0 %v1711
    %1713 = vmatprep.subr.mxu0 0.0
    %v1714 = vand.u32 %v1268, 4294901760
    %v1715 = vsub.f32 %v1268, %v1714
    %v1716 = vand.u32 %v1715, 4294901760
    %v1717 = vsub.f32 %v1715, %v1716
    %v1718 = vand.u32 %v1717, 4294901760
    %1719 = vmatpush1.msra.mxu0 %v1718
    %1720 = vmatprep.subr.mxu0 0.0
    %v1721 = vand.u32 %v1267, 4294901760
    %v1722 = vsub.f32 %v1267, %v1721
    %v1723 = vand.u32 %v1722, 4294901760
    %v1724 = vsub.f32 %v1722, %v1723
    %v1725 = vand.u32 %v1724, 4294901760
    %1726 = vmatpush1.msra.mxu0 %v1725
    %1727 = vmatprep.subr.mxu0 0.0
    %v1728 = vand.u32 %v1266, 4294901760
    %v1729 = vsub.f32 %v1266, %v1728
    %v1730 = vand.u32 %v1729, 4294901760
    %v1731 = vsub.f32 %v1729, %v1730
    %v1732 = vand.u32 %v1731, 4294901760
    %1733 = vmatpush1.msra.mxu0 %v1732
    %1734 = vmatprep.subr.mxu0 0.0
    %v1735 = vand.u32 %v1265, 4294901760
    %v1736 = vsub.f32 %v1265, %v1735
    %v1737 = vand.u32 %v1736, 4294901760
    %v1738 = vsub.f32 %v1736, %v1737
    %v1739 = vand.u32 %v1738, 4294901760
    %1740 = vmatpush1.msra.mxu0 %v1739
    %1741 = vmatprep.subr.mxu0 0.0
    %1742 = vmatpush2.msra.mxu0 0.0
    %1743 = vmatprep.subr.mxu0 0.0
    %1744 = vmatpush2.msra.mxu0 0.0
    %1745 = vmatprep.subr.mxu0 0.0
    %1746 = vmatpush2.msra.mxu0 0.0
    %1747 = vmatprep.subr.mxu0 0.0
    %1748 = vmatpush2.msra.mxu0 0.0
    %1749 = vmatprep.subr.mxu0 0.0
    %1750 = vmatpush2.msra.mxu0 0.0
    %1751 = vmatprep.subr.mxu0 0.0
    %1752 = vmatpush2.msra.mxu0 0.0
    %1753 = vmatprep.subr.mxu0 0.0
    %1754 = vmatpush2.msra.mxu0 0.0
    %1755 = vmatprep.subr.mxu0 0.0
    %1756 = vmatpush2.msra.mxu0 0.0
    %1757 = vmatprep.subr.mxu0 0.0
    %1758 = vmatpush2.msra.mxu0 0.0
    %1759 = vmatprep.subr.mxu0 0.0
    %1760 = vmatpush2.msra.mxu0 0.0
    %1761 = vmatprep.subr.mxu0 0.0
    %1762 = vmatpush2.msra.mxu0 0.0
    %1763 = vmatprep.subr.mxu0 0.0
    %1764 = vmatpush2.msra.mxu0 0.0
    %1765 = vmatprep.subr.mxu0 0.0
    %1766 = vmatpush2.msra.mxu0 0.0
    %1767 = vmatprep.subr.mxu0 0.0
    %1768 = vmatpush2.msra.mxu0 0.0
    %1769 = vmatprep.subr.mxu0 0.0
    %1770 = vmatpush2.msra.mxu0 0.0
    %1771 = vmatprep.subr.mxu0 0.0
    %1772 = vmatpush2.msra.mxu0 0.0
    %1773 = vmatprep.mubr.f32.mxu0 0.0
    %v1774 = vand.u32 %v1379, 4294901760
    %1775 = vmatmul.mubr.f32.gmra.mxu0 %v1774
    %v1776 = vpop.f32.mrf.mxu0
    %v1777 = vadd.f32 %v1506, %v1776
    %v1778 = vpop.f32.mrf.mxu0
    %1779 = vmatprep.mubr.f32.mxu0 0.0
    %v1780 = vand.u32 %v1382, 4294901760
    %1781 = vmatmul.mubr.f32.gmra.mxu0 %v1780
    %v1782 = vpop.f32.mrf.mxu0
    %v1783 = vadd.f32 %v1516, %v1782
    %v1784 = vpop.f32.mrf.mxu0
    %1785 = vmatprep.mubr.f32.mxu0 0.0
    %v1786 = vand.u32 %v1385, 4294901760
    %1787 = vmatmul.mubr.f32.gmra.mxu0 %v1786
    %v1788 = vpop.f32.mrf.mxu0
    %v1789 = vadd.f32 %v1526, %v1788
    %v1790 = vpop.f32.mrf.mxu0
    %1791 = vmatprep.mubr.f32.mxu0 0.0
    %v1792 = vand.u32 %v1388, 4294901760
    %1793 = vmatmul.mubr.f32.gmra.mxu0 %v1792
    %v1794 = vpop.f32.mrf.mxu0
    %v1795 = vadd.f32 %v1536, %v1794
    %v1796 = vpop.f32.mrf.mxu0
    %1797 = vmatprep.mubr.f32.mxu0 0.0
    %v1798 = vand.u32 %v1391, 4294901760
    %1799 = vmatmul.mubr.f32.gmra.mxu0 %v1798
    %v1800 = vpop.f32.mrf.mxu0
    %v1801 = vadd.f32 %v1546, %v1800
    %v1802 = vpop.f32.mrf.mxu0
    %1803 = vmatprep.mubr.f32.mxu0 0.0
    %v1804 = vand.u32 %v1394, 4294901760
    %1805 = vmatmul.mubr.f32.gmra.mxu0 %v1804
    %v1806 = vpop.f32.mrf.mxu0
    %v1807 = vadd.f32 %v1556, %v1806
    %v1808 = vpop.f32.mrf.mxu0
    %1809 = vmatprep.mubr.f32.mxu0 0.0
    %v1810 = vand.u32 %v1397, 4294901760
    %1811 = vmatmul.mubr.f32.gmra.mxu0 %v1810
    %v1812 = vpop.f32.mrf.mxu0
    %v1813 = vadd.f32 %v1566, %v1812
    %v1814 = vpop.f32.mrf.mxu0
    %1815 = vmatprep.mubr.f32.mxu0 0.0
    %v1816 = vand.u32 %v1400, 4294901760
    %1817 = vmatmul.mubr.f32.gmra.mxu0 %v1816
    %v1818 = vpop.f32.mrf.mxu0
    %v1819 = vadd.f32 %v1576, %v1818
    %v1820 = vpop.f32.mrf.mxu0
    %1821 = vmatprep.mubr.f32.mxu0 0.0
    %v1822 = vand.u32 %v1403, 4294901760
    %1823 = vmatmul.mubr.f32.gmra.mxu0 %v1822
    %v1824 = vpop.f32.mrf.mxu0
    %v1825 = vadd.f32 %v1586, %v1824
    %v1826 = vpop.f32.mrf.mxu0
    %1827 = vmatprep.mubr.f32.mxu0 0.0
    %v1828 = vand.u32 %v1406, 4294901760
    %1829 = vmatmul.mubr.f32.gmra.mxu0 %v1828
    %v1830 = vpop.f32.mrf.mxu0
    %v1831 = vadd.f32 %v1596, %v1830
    %v1832 = vpop.f32.mrf.mxu0
    %1833 = vmatprep.mubr.f32.mxu0 0.0
    %v1834 = vand.u32 %v1409, 4294901760
    %1835 = vmatmul.mubr.f32.gmra.mxu0 %v1834
    %v1836 = vpop.f32.mrf.mxu0
    %v1837 = vadd.f32 %v1606, %v1836
    %v1838 = vpop.f32.mrf.mxu0
    %1839 = vmatprep.mubr.f32.mxu0 0.0
    %v1840 = vand.u32 %v1412, 4294901760
    %1841 = vmatmul.mubr.f32.gmra.mxu0 %v1840
    %v1842 = vpop.f32.mrf.mxu0
    %v1843 = vadd.f32 %v1616, %v1842
    %v1844 = vpop.f32.mrf.mxu0
    %1845 = vmatprep.mubr.f32.mxu0 0.0
    %v1846 = vand.u32 %v1415, 4294901760
    %1847 = vmatmul.mubr.f32.gmra.mxu0 %v1846
    %v1848 = vpop.f32.mrf.mxu0
    %v1849 = vadd.f32 %v1626, %v1848
    %v1850 = vpop.f32.mrf.mxu0
    %1851 = vmatprep.mubr.f32.mxu0 0.0
    %v1852 = vand.u32 %v1418, 4294901760
    %1853 = vmatmul.mubr.f32.gmra.mxu0 %v1852
    %v1854 = vpop.f32.mrf.mxu0
    %v1855 = vadd.f32 %v1636, %v1854
    %v1856 = vpop.f32.mrf.mxu0
    %1857 = vdwg.mxu0
    %1858 = vmatprep.subr.mxu0 0.0
    %1859 = vmatpush1.msra.mxu0 0.0
    %1860 = vmatprep.subr.mxu0 0.0
    %1861 = vmatpush1.msra.mxu0 0.0
    %1862 = vmatprep.subr.mxu0 0.0
    %v1863 = vand.u32 %v1278, 4294901760
    %v1864 = vsub.f32 %v1278, %v1863
    %1865 = vmatpush1.msra.mxu0 %v1864
    %1866 = vmatprep.subr.mxu0 0.0
    %v1867 = vand.u32 %v1277, 4294901760
    %v1868 = vsub.f32 %v1277, %v1867
    %1869 = vmatpush1.msra.mxu0 %v1868
    %1870 = vmatprep.subr.mxu0 0.0
    %v1871 = vand.u32 %v1276, 4294901760
    %v1872 = vsub.f32 %v1276, %v1871
    %1873 = vmatpush1.msra.mxu0 %v1872
    %1874 = vmatprep.subr.mxu0 0.0
    %v1875 = vand.u32 %v1275, 4294901760
    %v1876 = vsub.f32 %v1275, %v1875
    %1877 = vmatpush1.msra.mxu0 %v1876
    %1878 = vmatprep.subr.mxu0 0.0
    %v1879 = vand.u32 %v1274, 4294901760
    %v1880 = vsub.f32 %v1274, %v1879
    %1881 = vmatpush1.msra.mxu0 %v1880
    %1882 = vmatprep.subr.mxu0 0.0
    %v1883 = vand.u32 %v1273, 4294901760
    %v1884 = vsub.f32 %v1273, %v1883
    %1885 = vmatpush1.msra.mxu0 %v1884
    %1886 = vmatprep.subr.mxu0 0.0
    %v1887 = vand.u32 %v1272, 4294901760
    %v1888 = vsub.f32 %v1272, %v1887
    %1889 = vmatpush1.msra.mxu0 %v1888
    %1890 = vmatprep.subr.mxu0 0.0
    %v1891 = vand.u32 %v1271, 4294901760
    %v1892 = vsub.f32 %v1271, %v1891
    %1893 = vmatpush1.msra.mxu0 %v1892
    %1894 = vmatprep.subr.mxu0 0.0
    %v1895 = vand.u32 %v1270, 4294901760
    %v1896 = vsub.f32 %v1270, %v1895
    %1897 = vmatpush1.msra.mxu0 %v1896
    %1898 = vmatprep.subr.mxu0 0.0
    %v1899 = vand.u32 %v1269, 4294901760
    %v1900 = vsub.f32 %v1269, %v1899
    %1901 = vmatpush1.msra.mxu0 %v1900
    %1902 = vmatprep.subr.mxu0 0.0
    %v1903 = vand.u32 %v1268, 4294901760
    %v1904 = vsub.f32 %v1268, %v1903
    %1905 = vmatpush1.msra.mxu0 %v1904
    %1906 = vmatprep.subr.mxu0 0.0
    %v1907 = vand.u32 %v1267, 4294901760
    %v1908 = vsub.f32 %v1267, %v1907
    %1909 = vmatpush1.msra.mxu0 %v1908
    %1910 = vmatprep.subr.mxu0 0.0
    %v1911 = vand.u32 %v1266, 4294901760
    %v1912 = vsub.f32 %v1266, %v1911
    %1913 = vmatpush1.msra.mxu0 %v1912
    %1914 = vmatprep.subr.mxu0 0.0
    %v1915 = vand.u32 %v1265, 4294901760
    %v1916 = vsub.f32 %v1265, %v1915
    %1917 = vmatpush1.msra.mxu0 %v1916
    %1918 = vmatprep.subr.mxu0 0.0
    %1919 = vmatpush2.msra.mxu0 0.0
    %1920 = vmatprep.subr.mxu0 0.0
    %1921 = vmatpush2.msra.mxu0 0.0
    %1922 = vmatprep.subr.mxu0 0.0
    %1923 = vmatpush2.msra.mxu0 0.0
    %1924 = vmatprep.subr.mxu0 0.0
    %1925 = vmatpush2.msra.mxu0 0.0
    %1926 = vmatprep.subr.mxu0 0.0
    %1927 = vmatpush2.msra.mxu0 0.0
    %1928 = vmatprep.subr.mxu0 0.0
    %1929 = vmatpush2.msra.mxu0 0.0
    %1930 = vmatprep.subr.mxu0 0.0
    %1931 = vmatpush2.msra.mxu0 0.0
    %1932 = vmatprep.subr.mxu0 0.0
    %1933 = vmatpush2.msra.mxu0 0.0
    %1934 = vmatprep.subr.mxu0 0.0
    %1935 = vmatpush2.msra.mxu0 0.0
    %1936 = vmatprep.subr.mxu0 0.0
    %1937 = vmatpush2.msra.mxu0 0.0
    %1938 = vmatprep.subr.mxu0 0.0
    %1939 = vmatpush2.msra.mxu0 0.0
    %1940 = vmatprep.subr.mxu0 0.0
    %1941 = vmatpush2.msra.mxu0 0.0
    %1942 = vmatprep.subr.mxu0 0.0
    %1943 = vmatpush2.msra.mxu0 0.0
    %1944 = vmatprep.subr.mxu0 0.0
    %1945 = vmatpush2.msra.mxu0 0.0
    %1946 = vmatprep.subr.mxu0 0.0
    %1947 = vmatpush2.msra.mxu0 0.0
    %1948 = vmatprep.subr.mxu0 0.0
    %1949 = vmatpush2.msra.mxu0 0.0
    %1950 = vmatprep.mubr.f32.mxu0 0.0
    %v1951 = vand.u32 %v1379, 4294901760
    %v1952 = vsub.f32 %v1379, %v1951
    %1953 = vmatmul.mubr.f32.gmra.mxu0 %v1952
    %v1954 = vpop.f32.mrf.mxu0
    %v1955 = vadd.f32 %v1777, %v1954
    %v1956 = vpop.f32.mrf.mxu0
    %1957 = vmatprep.mubr.f32.mxu0 0.0
    %v1958 = vand.u32 %v1382, 4294901760
    %v1959 = vsub.f32 %v1382, %v1958
    %1960 = vmatmul.mubr.f32.gmra.mxu0 %v1959
    %v1961 = vpop.f32.mrf.mxu0
    %v1962 = vadd.f32 %v1783, %v1961
    %v1963 = vpop.f32.mrf.mxu0
    %1964 = vmatprep.mubr.f32.mxu0 0.0
    %v1965 = vand.u32 %v1385, 4294901760
    %v1966 = vsub.f32 %v1385, %v1965
    %1967 = vmatmul.mubr.f32.gmra.mxu0 %v1966
    %v1968 = vpop.f32.mrf.mxu0
    %v1969 = vadd.f32 %v1789, %v1968
    %v1970 = vpop.f32.mrf.mxu0
    %1971 = vmatprep.mubr.f32.mxu0 0.0
    %v1972 = vand.u32 %v1388, 4294901760
    %v1973 = vsub.f32 %v1388, %v1972
    %1974 = vmatmul.mubr.f32.gmra.mxu0 %v1973
    %v1975 = vpop.f32.mrf.mxu0
    %v1976 = vadd.f32 %v1795, %v1975
    %v1977 = vpop.f32.mrf.mxu0
    %1978 = vmatprep.mubr.f32.mxu0 0.0
    %v1979 = vand.u32 %v1391, 4294901760
    %v1980 = vsub.f32 %v1391, %v1979
    %1981 = vmatmul.mubr.f32.gmra.mxu0 %v1980
    %v1982 = vpop.f32.mrf.mxu0
    %v1983 = vadd.f32 %v1801, %v1982
    %v1984 = vpop.f32.mrf.mxu0
    %1985 = vmatprep.mubr.f32.mxu0 0.0
    %v1986 = vand.u32 %v1394, 4294901760
    %v1987 = vsub.f32 %v1394, %v1986
    %1988 = vmatmul.mubr.f32.gmra.mxu0 %v1987
    %v1989 = vpop.f32.mrf.mxu0
    %v1990 = vadd.f32 %v1807, %v1989
    %v1991 = vpop.f32.mrf.mxu0
    %1992 = vmatprep.mubr.f32.mxu0 0.0
    %v1993 = vand.u32 %v1397, 4294901760
    %v1994 = vsub.f32 %v1397, %v1993
    %1995 = vmatmul.mubr.f32.gmra.mxu0 %v1994
    %v1996 = vpop.f32.mrf.mxu0
    %v1997 = vadd.f32 %v1813, %v1996
    %v1998 = vpop.f32.mrf.mxu0
    %1999 = vmatprep.mubr.f32.mxu0 0.0
    %v2000 = vand.u32 %v1400, 4294901760
    %v2001 = vsub.f32 %v1400, %v2000
    %2002 = vmatmul.mubr.f32.gmra.mxu0 %v2001
    %v2003 = vpop.f32.mrf.mxu0
    %v2004 = vadd.f32 %v1819, %v2003
    %v2005 = vpop.f32.mrf.mxu0
    %2006 = vmatprep.mubr.f32.mxu0 0.0
    %v2007 = vand.u32 %v1403, 4294901760
    %v2008 = vsub.f32 %v1403, %v2007
    %2009 = vmatmul.mubr.f32.gmra.mxu0 %v2008
    %v2010 = vpop.f32.mrf.mxu0
    %v2011 = vadd.f32 %v1825, %v2010
    %v2012 = vpop.f32.mrf.mxu0
    %2013 = vmatprep.mubr.f32.mxu0 0.0
    %v2014 = vand.u32 %v1406, 4294901760
    %v2015 = vsub.f32 %v1406, %v2014
    %2016 = vmatmul.mubr.f32.gmra.mxu0 %v2015
    %v2017 = vpop.f32.mrf.mxu0
    %v2018 = vadd.f32 %v1831, %v2017
    %v2019 = vpop.f32.mrf.mxu0
    %2020 = vmatprep.mubr.f32.mxu0 0.0
    %v2021 = vand.u32 %v1409, 4294901760
    %v2022 = vsub.f32 %v1409, %v2021
    %2023 = vmatmul.mubr.f32.gmra.mxu0 %v2022
    %v2024 = vpop.f32.mrf.mxu0
    %v2025 = vadd.f32 %v1837, %v2024
    %v2026 = vpop.f32.mrf.mxu0
    %2027 = vmatprep.mubr.f32.mxu0 0.0
    %v2028 = vand.u32 %v1412, 4294901760
    %v2029 = vsub.f32 %v1412, %v2028
    %2030 = vmatmul.mubr.f32.gmra.mxu0 %v2029
    %v2031 = vpop.f32.mrf.mxu0
    %v2032 = vadd.f32 %v1843, %v2031
    %v2033 = vpop.f32.mrf.mxu0
    %2034 = vmatprep.mubr.f32.mxu0 0.0
    %v2035 = vand.u32 %v1415, 4294901760
    %v2036 = vsub.f32 %v1415, %v2035
    %2037 = vmatmul.mubr.f32.gmra.mxu0 %v2036
    %v2038 = vpop.f32.mrf.mxu0
    %v2039 = vadd.f32 %v1849, %v2038
    %v2040 = vpop.f32.mrf.mxu0
    %2041 = vmatprep.mubr.f32.mxu0 0.0
    %v2042 = vand.u32 %v1418, 4294901760
    %v2043 = vsub.f32 %v1418, %v2042
    %2044 = vmatmul.mubr.f32.gmra.mxu0 %v2043
    %v2045 = vpop.f32.mrf.mxu0
    %v2046 = vadd.f32 %v1855, %v2045
    %v2047 = vpop.f32.mrf.mxu0
    %2048 = vdwg.mxu0
    %2049 = vmatprep.subr.mxu0 0.0
    %2050 = vmatpush1.msra.mxu0 0.0
    %2051 = vmatprep.subr.mxu0 0.0
    %2052 = vmatpush1.msra.mxu0 0.0
    %2053 = vmatprep.subr.mxu0 0.0
    %v2054 = vand.u32 %v1278, 4294901760
    %2055 = vmatpush1.msra.mxu0 %v2054
    %2056 = vmatprep.subr.mxu0 0.0
    %v2057 = vand.u32 %v1277, 4294901760
    %2058 = vmatpush1.msra.mxu0 %v2057
    %2059 = vmatprep.subr.mxu0 0.0
    %v2060 = vand.u32 %v1276, 4294901760
    %2061 = vmatpush1.msra.mxu0 %v2060
    %2062 = vmatprep.subr.mxu0 0.0
    %v2063 = vand.u32 %v1275, 4294901760
    %2064 = vmatpush1.msra.mxu0 %v2063
    %2065 = vmatprep.subr.mxu0 0.0
    %v2066 = vand.u32 %v1274, 4294901760
    %2067 = vmatpush1.msra.mxu0 %v2066
    %2068 = vmatprep.subr.mxu0 0.0
    %v2069 = vand.u32 %v1273, 4294901760
    %2070 = vmatpush1.msra.mxu0 %v2069
    %2071 = vmatprep.subr.mxu0 0.0
    %v2072 = vand.u32 %v1272, 4294901760
    %2073 = vmatpush1.msra.mxu0 %v2072
    %2074 = vmatprep.subr.mxu0 0.0
    %v2075 = vand.u32 %v1271, 4294901760
    %2076 = vmatpush1.msra.mxu0 %v2075
    %2077 = vmatprep.subr.mxu0 0.0
    %v2078 = vand.u32 %v1270, 4294901760
    %2079 = vmatpush1.msra.mxu0 %v2078
    %2080 = vmatprep.subr.mxu0 0.0
    %v2081 = vand.u32 %v1269, 4294901760
    %2082 = vmatpush1.msra.mxu0 %v2081
    %2083 = vmatprep.subr.mxu0 0.0
    %v2084 = vand.u32 %v1268, 4294901760
    %2085 = vmatpush1.msra.mxu0 %v2084
    %2086 = vmatprep.subr.mxu0 0.0
    %v2087 = vand.u32 %v1267, 4294901760
    %2088 = vmatpush1.msra.mxu0 %v2087
    %2089 = vmatprep.subr.mxu0 0.0
    %v2090 = vand.u32 %v1266, 4294901760
    %2091 = vmatpush1.msra.mxu0 %v2090
    %2092 = vmatprep.subr.mxu0 0.0
    %v2093 = vand.u32 %v1265, 4294901760
    %2094 = vmatpush1.msra.mxu0 %v2093
    %2095 = vmatprep.subr.mxu0 0.0
    %2096 = vmatpush2.msra.mxu0 0.0
    %2097 = vmatprep.subr.mxu0 0.0
    %2098 = vmatpush2.msra.mxu0 0.0
    %2099 = vmatprep.subr.mxu0 0.0
    %2100 = vmatpush2.msra.mxu0 0.0
    %2101 = vmatprep.subr.mxu0 0.0
    %2102 = vmatpush2.msra.mxu0 0.0
    %2103 = vmatprep.subr.mxu0 0.0
    %2104 = vmatpush2.msra.mxu0 0.0
    %2105 = vmatprep.subr.mxu0 0.0
    %2106 = vmatpush2.msra.mxu0 0.0
    %2107 = vmatprep.subr.mxu0 0.0
    %2108 = vmatpush2.msra.mxu0 0.0
    %2109 = vmatprep.subr.mxu0 0.0
    %2110 = vmatpush2.msra.mxu0 0.0
    %2111 = vmatprep.subr.mxu0 0.0
    %2112 = vmatpush2.msra.mxu0 0.0
    %2113 = vmatprep.subr.mxu0 0.0
    %2114 = vmatpush2.msra.mxu0 0.0
    %2115 = vmatprep.subr.mxu0 0.0
    %2116 = vmatpush2.msra.mxu0 0.0
    %2117 = vmatprep.subr.mxu0 0.0
    %2118 = vmatpush2.msra.mxu0 0.0
    %2119 = vmatprep.subr.mxu0 0.0
    %2120 = vmatpush2.msra.mxu0 0.0
    %2121 = vmatprep.subr.mxu0 0.0
    %2122 = vmatpush2.msra.mxu0 0.0
    %2123 = vmatprep.subr.mxu0 0.0
    %2124 = vmatpush2.msra.mxu0 0.0
    %2125 = vmatprep.subr.mxu0 0.0
    %2126 = vmatpush2.msra.mxu0 0.0
    %2127 = vmatprep.mubr.f32.mxu0 0.0
    %v2128 = vand.u32 %v1379, 4294901760
    %v2129 = vsub.f32 %v1379, %v2128
    %v2130 = vand.u32 %v2129, 4294901760
    %2131 = vmatmul.mubr.f32.gmra.mxu0 %v2130
    %v2132 = vpop.f32.mrf.mxu0
    %v2133 = vadd.f32 %v1955, %v2132
    %v2134 = vpop.f32.mrf.mxu0
    %2135 = vmatprep.mubr.f32.mxu0 0.0
    %v2136 = vand.u32 %v1382, 4294901760
    %v2137 = vsub.f32 %v1382, %v2136
    %v2138 = vand.u32 %v2137, 4294901760
    %2139 = vmatmul.mubr.f32.gmra.mxu0 %v2138
    %v2140 = vpop.f32.mrf.mxu0
    %v2141 = vadd.f32 %v1962, %v2140
    %v2142 = vpop.f32.mrf.mxu0
    %2143 = vmatprep.mubr.f32.mxu0 0.0
    %v2144 = vand.u32 %v1385, 4294901760
    %v2145 = vsub.f32 %v1385, %v2144
    %v2146 = vand.u32 %v2145, 4294901760
    %2147 = vmatmul.mubr.f32.gmra.mxu0 %v2146
    %v2148 = vpop.f32.mrf.mxu0
    %v2149 = vadd.f32 %v1969, %v2148
    %v2150 = vpop.f32.mrf.mxu0
    %2151 = vmatprep.mubr.f32.mxu0 0.0
    %v2152 = vand.u32 %v1388, 4294901760
    %v2153 = vsub.f32 %v1388, %v2152
    %v2154 = vand.u32 %v2153, 4294901760
    %2155 = vmatmul.mubr.f32.gmra.mxu0 %v2154
    %v2156 = vpop.f32.mrf.mxu0
    %v2157 = vadd.f32 %v1976, %v2156
    %v2158 = vpop.f32.mrf.mxu0
    %2159 = vmatprep.mubr.f32.mxu0 0.0
    %v2160 = vand.u32 %v1391, 4294901760
    %v2161 = vsub.f32 %v1391, %v2160
    %v2162 = vand.u32 %v2161, 4294901760
    %2163 = vmatmul.mubr.f32.gmra.mxu0 %v2162
    %v2164 = vpop.f32.mrf.mxu0
    %v2165 = vadd.f32 %v1983, %v2164
    %v2166 = vpop.f32.mrf.mxu0
    %2167 = vmatprep.mubr.f32.mxu0 0.0
    %v2168 = vand.u32 %v1394, 4294901760
    %v2169 = vsub.f32 %v1394, %v2168
    %v2170 = vand.u32 %v2169, 4294901760
    %2171 = vmatmul.mubr.f32.gmra.mxu0 %v2170
    %v2172 = vpop.f32.mrf.mxu0
    %v2173 = vadd.f32 %v1990, %v2172
    %v2174 = vpop.f32.mrf.mxu0
    %2175 = vmatprep.mubr.f32.mxu0 0.0
    %v2176 = vand.u32 %v1397, 4294901760
    %v2177 = vsub.f32 %v1397, %v2176
    %v2178 = vand.u32 %v2177, 4294901760
    %2179 = vmatmul.mubr.f32.gmra.mxu0 %v2178
    %v2180 = vpop.f32.mrf.mxu0
    %v2181 = vadd.f32 %v1997, %v2180
    %v2182 = vpop.f32.mrf.mxu0
    %2183 = vmatprep.mubr.f32.mxu0 0.0
    %v2184 = vand.u32 %v1400, 4294901760
    %v2185 = vsub.f32 %v1400, %v2184
    %v2186 = vand.u32 %v2185, 4294901760
    %2187 = vmatmul.mubr.f32.gmra.mxu0 %v2186
    %v2188 = vpop.f32.mrf.mxu0
    %v2189 = vadd.f32 %v2004, %v2188
    %v2190 = vpop.f32.mrf.mxu0
    %2191 = vmatprep.mubr.f32.mxu0 0.0
    %v2192 = vand.u32 %v1403, 4294901760
    %v2193 = vsub.f32 %v1403, %v2192
    %v2194 = vand.u32 %v2193, 4294901760
    %2195 = vmatmul.mubr.f32.gmra.mxu0 %v2194
    %v2196 = vpop.f32.mrf.mxu0
    %v2197 = vadd.f32 %v2011, %v2196
    %v2198 = vpop.f32.mrf.mxu0
    %2199 = vmatprep.mubr.f32.mxu0 0.0
    %v2200 = vand.u32 %v1406, 4294901760
    %v2201 = vsub.f32 %v1406, %v2200
    %v2202 = vand.u32 %v2201, 4294901760
    %2203 = vmatmul.mubr.f32.gmra.mxu0 %v2202
    %v2204 = vpop.f32.mrf.mxu0
    %v2205 = vadd.f32 %v2018, %v2204
    %v2206 = vpop.f32.mrf.mxu0
    %2207 = vmatprep.mubr.f32.mxu0 0.0
    %v2208 = vand.u32 %v1409, 4294901760
    %v2209 = vsub.f32 %v1409, %v2208
    %v2210 = vand.u32 %v2209, 4294901760
    %2211 = vmatmul.mubr.f32.gmra.mxu0 %v2210
    %v2212 = vpop.f32.mrf.mxu0
    %v2213 = vadd.f32 %v2025, %v2212
    %v2214 = vpop.f32.mrf.mxu0
    %2215 = vmatprep.mubr.f32.mxu0 0.0
    %v2216 = vand.u32 %v1412, 4294901760
    %v2217 = vsub.f32 %v1412, %v2216
    %v2218 = vand.u32 %v2217, 4294901760
    %2219 = vmatmul.mubr.f32.gmra.mxu0 %v2218
    %v2220 = vpop.f32.mrf.mxu0
    %v2221 = vadd.f32 %v2032, %v2220
    %v2222 = vpop.f32.mrf.mxu0
    %2223 = vmatprep.mubr.f32.mxu0 0.0
    %v2224 = vand.u32 %v1415, 4294901760
    %v2225 = vsub.f32 %v1415, %v2224
    %v2226 = vand.u32 %v2225, 4294901760
    %2227 = vmatmul.mubr.f32.gmra.mxu0 %v2226
    %v2228 = vpop.f32.mrf.mxu0
    %v2229 = vadd.f32 %v2039, %v2228
    %v2230 = vpop.f32.mrf.mxu0
    %2231 = vmatprep.mubr.f32.mxu0 0.0
    %v2232 = vand.u32 %v1418, 4294901760
    %v2233 = vsub.f32 %v1418, %v2232
    %v2234 = vand.u32 %v2233, 4294901760
    %2235 = vmatmul.mubr.f32.gmra.mxu0 %v2234
    %v2236 = vpop.f32.mrf.mxu0
    %v2237 = vadd.f32 %v2046, %v2236
    %v2238 = vpop.f32.mrf.mxu0
    %2239 = vdwg.mxu0
    %2240 = vmatprep.subr.mxu0 0.0
    %2241 = vmatpush1.msra.mxu0 0.0
    %2242 = vmatprep.subr.mxu0 0.0
    %2243 = vmatpush1.msra.mxu0 0.0
    %2244 = vmatprep.subr.mxu0 0.0
    %v2245 = vand.u32 %v1278, 4294901760
    %v2246 = vsub.f32 %v1278, %v2245
    %v2247 = vand.u32 %v2246, 4294901760
    %2248 = vmatpush1.msra.mxu0 %v2247
    %2249 = vmatprep.subr.mxu0 0.0
    %v2250 = vand.u32 %v1277, 4294901760
    %v2251 = vsub.f32 %v1277, %v2250
    %v2252 = vand.u32 %v2251, 4294901760
    %2253 = vmatpush1.msra.mxu0 %v2252
    %2254 = vmatprep.subr.mxu0 0.0
    %v2255 = vand.u32 %v1276, 4294901760
    %v2256 = vsub.f32 %v1276, %v2255
    %v2257 = vand.u32 %v2256, 4294901760
    %2258 = vmatpush1.msra.mxu0 %v2257
    %2259 = vmatprep.subr.mxu0 0.0
    %v2260 = vand.u32 %v1275, 4294901760
    %v2261 = vsub.f32 %v1275, %v2260
    %v2262 = vand.u32 %v2261, 4294901760
    %2263 = vmatpush1.msra.mxu0 %v2262
    %2264 = vmatprep.subr.mxu0 0.0
    %v2265 = vand.u32 %v1274, 4294901760
    %v2266 = vsub.f32 %v1274, %v2265
    %v2267 = vand.u32 %v2266, 4294901760
    %2268 = vmatpush1.msra.mxu0 %v2267
    %2269 = vmatprep.subr.mxu0 0.0
    %v2270 = vand.u32 %v1273, 4294901760
    %v2271 = vsub.f32 %v1273, %v2270
    %v2272 = vand.u32 %v2271, 4294901760
    %2273 = vmatpush1.msra.mxu0 %v2272
    %2274 = vmatprep.subr.mxu0 0.0
    %v2275 = vand.u32 %v1272, 4294901760
    %v2276 = vsub.f32 %v1272, %v2275
    %v2277 = vand.u32 %v2276, 4294901760
    %2278 = vmatpush1.msra.mxu0 %v2277
    %2279 = vmatprep.subr.mxu0 0.0
    %v2280 = vand.u32 %v1271, 4294901760
    %v2281 = vsub.f32 %v1271, %v2280
    %v2282 = vand.u32 %v2281, 4294901760
    %2283 = vmatpush1.msra.mxu0 %v2282
    %2284 = vmatprep.subr.mxu0 0.0
    %v2285 = vand.u32 %v1270, 4294901760
    %v2286 = vsub.f32 %v1270, %v2285
    %v2287 = vand.u32 %v2286, 4294901760
    %2288 = vmatpush1.msra.mxu0 %v2287
    %2289 = vmatprep.subr.mxu0 0.0
    %v2290 = vand.u32 %v1269, 4294901760
    %v2291 = vsub.f32 %v1269, %v2290
    %v2292 = vand.u32 %v2291, 4294901760
    %2293 = vmatpush1.msra.mxu0 %v2292
    %2294 = vmatprep.subr.mxu0 0.0
    %v2295 = vand.u32 %v1268, 4294901760
    %v2296 = vsub.f32 %v1268, %v2295
    %v2297 = vand.u32 %v2296, 4294901760
    %2298 = vmatpush1.msra.mxu0 %v2297
    %2299 = vmatprep.subr.mxu0 0.0
    %v2300 = vand.u32 %v1267, 4294901760
    %v2301 = vsub.f32 %v1267, %v2300
    %v2302 = vand.u32 %v2301, 4294901760
    %2303 = vmatpush1.msra.mxu0 %v2302
    %2304 = vmatprep.subr.mxu0 0.0
    %v2305 = vand.u32 %v1266, 4294901760
    %v2306 = vsub.f32 %v1266, %v2305
    %v2307 = vand.u32 %v2306, 4294901760
    %2308 = vmatpush1.msra.mxu0 %v2307
    %2309 = vmatprep.subr.mxu0 0.0
    %v2310 = vand.u32 %v1265, 4294901760
    %v2311 = vsub.f32 %v1265, %v2310
    %v2312 = vand.u32 %v2311, 4294901760
    %2313 = vmatpush1.msra.mxu0 %v2312
    %2314 = vmatprep.subr.mxu0 0.0
    %2315 = vmatpush2.msra.mxu0 0.0
    %2316 = vmatprep.subr.mxu0 0.0
    %2317 = vmatpush2.msra.mxu0 0.0
    %2318 = vmatprep.subr.mxu0 0.0
    %2319 = vmatpush2.msra.mxu0 0.0
    %2320 = vmatprep.subr.mxu0 0.0
    %2321 = vmatpush2.msra.mxu0 0.0
    %2322 = vmatprep.subr.mxu0 0.0
    %2323 = vmatpush2.msra.mxu0 0.0
    %2324 = vmatprep.subr.mxu0 0.0
    %2325 = vmatpush2.msra.mxu0 0.0
    %2326 = vmatprep.subr.mxu0 0.0
    %2327 = vmatpush2.msra.mxu0 0.0
    %2328 = vmatprep.subr.mxu0 0.0
    %2329 = vmatpush2.msra.mxu0 0.0
    %2330 = vmatprep.subr.mxu0 0.0
    %2331 = vmatpush2.msra.mxu0 0.0
    %2332 = vmatprep.subr.mxu0 0.0
    %2333 = vmatpush2.msra.mxu0 0.0
    %2334 = vmatprep.subr.mxu0 0.0
    %2335 = vmatpush2.msra.mxu0 0.0
    %2336 = vmatprep.subr.mxu0 0.0
    %2337 = vmatpush2.msra.mxu0 0.0
    %2338 = vmatprep.subr.mxu0 0.0
    %2339 = vmatpush2.msra.mxu0 0.0
    %2340 = vmatprep.subr.mxu0 0.0
    %2341 = vmatpush2.msra.mxu0 0.0
    %2342 = vmatprep.subr.mxu0 0.0
    %2343 = vmatpush2.msra.mxu0 0.0
    %2344 = vmatprep.subr.mxu0 0.0
    %2345 = vmatpush2.msra.mxu0 0.0
    %2346 = vmatprep.mubr.f32.mxu0 0.0
    %v2347 = vand.u32 %v1379, 4294901760
    %2348 = vmatmul.mubr.f32.gmra.mxu0 %v2347
    %v2349 = vpop.f32.mrf.mxu0
    %v2350 = vadd.f32 %v2133, %v2349
    %v2351 = vpop.f32.mrf.mxu0
    %2352 = vmatprep.mubr.f32.mxu0 0.0
    %v2353 = vand.u32 %v1382, 4294901760
    %2354 = vmatmul.mubr.f32.gmra.mxu0 %v2353
    %v2355 = vpop.f32.mrf.mxu0
    %v2356 = vadd.f32 %v2141, %v2355
    %v2357 = vpop.f32.mrf.mxu0
    %2358 = vmatprep.mubr.f32.mxu0 0.0
    %v2359 = vand.u32 %v1385, 4294901760
    %2360 = vmatmul.mubr.f32.gmra.mxu0 %v2359
    %v2361 = vpop.f32.mrf.mxu0
    %v2362 = vadd.f32 %v2149, %v2361
    %v2363 = vpop.f32.mrf.mxu0
    %2364 = vmatprep.mubr.f32.mxu0 0.0
    %v2365 = vand.u32 %v1388, 4294901760
    %2366 = vmatmul.mubr.f32.gmra.mxu0 %v2365
    %v2367 = vpop.f32.mrf.mxu0
    %v2368 = vadd.f32 %v2157, %v2367
    %v2369 = vpop.f32.mrf.mxu0
    %2370 = vmatprep.mubr.f32.mxu0 0.0
    %v2371 = vand.u32 %v1391, 4294901760
    %2372 = vmatmul.mubr.f32.gmra.mxu0 %v2371
    %v2373 = vpop.f32.mrf.mxu0
    %v2374 = vadd.f32 %v2165, %v2373
    %v2375 = vpop.f32.mrf.mxu0
    %2376 = vmatprep.mubr.f32.mxu0 0.0
    %v2377 = vand.u32 %v1394, 4294901760
    %2378 = vmatmul.mubr.f32.gmra.mxu0 %v2377
    %v2379 = vpop.f32.mrf.mxu0
    %v2380 = vadd.f32 %v2173, %v2379
    %v2381 = vpop.f32.mrf.mxu0
    %2382 = vmatprep.mubr.f32.mxu0 0.0
    %v2383 = vand.u32 %v1397, 4294901760
    %2384 = vmatmul.mubr.f32.gmra.mxu0 %v2383
    %v2385 = vpop.f32.mrf.mxu0
    %v2386 = vadd.f32 %v2181, %v2385
    %v2387 = vpop.f32.mrf.mxu0
    %2388 = vmatprep.mubr.f32.mxu0 0.0
    %v2389 = vand.u32 %v1400, 4294901760
    %2390 = vmatmul.mubr.f32.gmra.mxu0 %v2389
    %v2391 = vpop.f32.mrf.mxu0
    %v2392 = vadd.f32 %v2189, %v2391
    %v2393 = vpop.f32.mrf.mxu0
    %2394 = vmatprep.mubr.f32.mxu0 0.0
    %v2395 = vand.u32 %v1403, 4294901760
    %2396 = vmatmul.mubr.f32.gmra.mxu0 %v2395
    %v2397 = vpop.f32.mrf.mxu0
    %v2398 = vadd.f32 %v2197, %v2397
    %v2399 = vpop.f32.mrf.mxu0
    %2400 = vmatprep.mubr.f32.mxu0 0.0
    %v2401 = vand.u32 %v1406, 4294901760
    %2402 = vmatmul.mubr.f32.gmra.mxu0 %v2401
    %v2403 = vpop.f32.mrf.mxu0
    %v2404 = vadd.f32 %v2205, %v2403
    %v2405 = vpop.f32.mrf.mxu0
    %2406 = vmatprep.mubr.f32.mxu0 0.0
    %v2407 = vand.u32 %v1409, 4294901760
    %2408 = vmatmul.mubr.f32.gmra.mxu0 %v2407
    %v2409 = vpop.f32.mrf.mxu0
    %v2410 = vadd.f32 %v2213, %v2409
    %v2411 = vpop.f32.mrf.mxu0
    %2412 = vmatprep.mubr.f32.mxu0 0.0
    %v2413 = vand.u32 %v1412, 4294901760
    %2414 = vmatmul.mubr.f32.gmra.mxu0 %v2413
    %v2415 = vpop.f32.mrf.mxu0
    %v2416 = vadd.f32 %v2221, %v2415
    %v2417 = vpop.f32.mrf.mxu0
    %2418 = vmatprep.mubr.f32.mxu0 0.0
    %v2419 = vand.u32 %v1415, 4294901760
    %2420 = vmatmul.mubr.f32.gmra.mxu0 %v2419
    %v2421 = vpop.f32.mrf.mxu0
    %v2422 = vadd.f32 %v2229, %v2421
    %v2423 = vpop.f32.mrf.mxu0
    %2424 = vmatprep.mubr.f32.mxu0 0.0
    %v2425 = vand.u32 %v1418, 4294901760
    %2426 = vmatmul.mubr.f32.gmra.mxu0 %v2425
    %v2427 = vpop.f32.mrf.mxu0
    %v2428 = vadd.f32 %v2237, %v2427
    %v2429 = vpop.f32.mrf.mxu0
    %2430 = vdwg.mxu0
    %2431 = vmatprep.subr.mxu0 0.0
    %2432 = vmatpush1.msra.mxu0 0.0
    %2433 = vmatprep.subr.mxu0 0.0
    %2434 = vmatpush1.msra.mxu0 0.0
    %2435 = vmatprep.subr.mxu0 0.0
    %v2436 = vand.u32 %v1278, 4294901760
    %2437 = vmatpush1.msra.mxu0 %v2436
    %2438 = vmatprep.subr.mxu0 0.0
    %v2439 = vand.u32 %v1277, 4294901760
    %2440 = vmatpush1.msra.mxu0 %v2439
    %2441 = vmatprep.subr.mxu0 0.0
    %v2442 = vand.u32 %v1276, 4294901760
    %2443 = vmatpush1.msra.mxu0 %v2442
    %2444 = vmatprep.subr.mxu0 0.0
    %v2445 = vand.u32 %v1275, 4294901760
    %2446 = vmatpush1.msra.mxu0 %v2445
    %2447 = vmatprep.subr.mxu0 0.0
    %v2448 = vand.u32 %v1274, 4294901760
    %2449 = vmatpush1.msra.mxu0 %v2448
    %2450 = vmatprep.subr.mxu0 0.0
    %v2451 = vand.u32 %v1273, 4294901760
    %2452 = vmatpush1.msra.mxu0 %v2451
    %2453 = vmatprep.subr.mxu0 0.0
    %v2454 = vand.u32 %v1272, 4294901760
    %2455 = vmatpush1.msra.mxu0 %v2454
    %2456 = vmatprep.subr.mxu0 0.0
    %v2457 = vand.u32 %v1271, 4294901760
    %2458 = vmatpush1.msra.mxu0 %v2457
    %2459 = vmatprep.subr.mxu0 0.0
    %v2460 = vand.u32 %v1270, 4294901760
    %2461 = vmatpush1.msra.mxu0 %v2460
    %2462 = vmatprep.subr.mxu0 0.0
    %v2463 = vand.u32 %v1269, 4294901760
    %2464 = vmatpush1.msra.mxu0 %v2463
    %2465 = vmatprep.subr.mxu0 0.0
    %v2466 = vand.u32 %v1268, 4294901760
    %2467 = vmatpush1.msra.mxu0 %v2466
    %2468 = vmatprep.subr.mxu0 0.0
    %v2469 = vand.u32 %v1267, 4294901760
    %2470 = vmatpush1.msra.mxu0 %v2469
    %2471 = vmatprep.subr.mxu0 0.0
    %v2472 = vand.u32 %v1266, 4294901760
    %2473 = vmatpush1.msra.mxu0 %v2472
    %2474 = vmatprep.subr.mxu0 0.0
    %v2475 = vand.u32 %v1265, 4294901760
    %2476 = vmatpush1.msra.mxu0 %v2475
    %2477 = vmatprep.subr.mxu0 0.0
    %2478 = vmatpush2.msra.mxu0 0.0
    %2479 = vmatprep.subr.mxu0 0.0
    %2480 = vmatpush2.msra.mxu0 0.0
    %2481 = vmatprep.subr.mxu0 0.0
    %2482 = vmatpush2.msra.mxu0 0.0
    %2483 = vmatprep.subr.mxu0 0.0
    %2484 = vmatpush2.msra.mxu0 0.0
    %2485 = vmatprep.subr.mxu0 0.0
    %2486 = vmatpush2.msra.mxu0 0.0
    %2487 = vmatprep.subr.mxu0 0.0
    %2488 = vmatpush2.msra.mxu0 0.0
    %2489 = vmatprep.subr.mxu0 0.0
    %2490 = vmatpush2.msra.mxu0 0.0
    %2491 = vmatprep.subr.mxu0 0.0
    %2492 = vmatpush2.msra.mxu0 0.0
    %2493 = vmatprep.subr.mxu0 0.0
    %2494 = vmatpush2.msra.mxu0 0.0
    %2495 = vmatprep.subr.mxu0 0.0
    %2496 = vmatpush2.msra.mxu0 0.0
    %2497 = vmatprep.subr.mxu0 0.0
    %2498 = vmatpush2.msra.mxu0 0.0
    %2499 = vmatprep.subr.mxu0 0.0
    %2500 = vmatpush2.msra.mxu0 0.0
    %2501 = vmatprep.subr.mxu0 0.0
    %2502 = vmatpush2.msra.mxu0 0.0
    %2503 = vmatprep.subr.mxu0 0.0
    %2504 = vmatpush2.msra.mxu0 0.0
    %2505 = vmatprep.subr.mxu0 0.0
    %2506 = vmatpush2.msra.mxu0 0.0
    %2507 = vmatprep.subr.mxu0 0.0
    %2508 = vmatpush2.msra.mxu0 0.0
    %2509 = vmatprep.mubr.f32.mxu0 0.0
    %v2510 = vand.u32 %v1379, 4294901760
    %2511 = vmatmul.mubr.f32.gmra.mxu0 %v2510
    %v2512 = vpop.f32.mrf.mxu0
    %v2513 = vadd.f32 %v2350, %v2512
    %v2514 = vpop.f32.mrf.mxu0
    %2515 = vmatprep.mubr.f32.mxu0 0.0
    %v2516 = vand.u32 %v1382, 4294901760
    %2517 = vmatmul.mubr.f32.gmra.mxu0 %v2516
    %v2518 = vpop.f32.mrf.mxu0
    %v2519 = vadd.f32 %v2356, %v2518
    %v2520 = vpop.f32.mrf.mxu0
    %2521 = vmatprep.mubr.f32.mxu0 0.0
    %v2522 = vand.u32 %v1385, 4294901760
    %2523 = vmatmul.mubr.f32.gmra.mxu0 %v2522
    %v2524 = vpop.f32.mrf.mxu0
    %v2525 = vadd.f32 %v2362, %v2524
    %v2526 = vpop.f32.mrf.mxu0
    %2527 = vmatprep.mubr.f32.mxu0 0.0
    %v2528 = vand.u32 %v1388, 4294901760
    %2529 = vmatmul.mubr.f32.gmra.mxu0 %v2528
    %v2530 = vpop.f32.mrf.mxu0
    %v2531 = vadd.f32 %v2368, %v2530
    %v2532 = vpop.f32.mrf.mxu0
    %2533 = vmatprep.mubr.f32.mxu0 0.0
    %v2534 = vand.u32 %v1391, 4294901760
    %2535 = vmatmul.mubr.f32.gmra.mxu0 %v2534
    %v2536 = vpop.f32.mrf.mxu0
    %v2537 = vadd.f32 %v2374, %v2536
    %v2538 = vpop.f32.mrf.mxu0
    %2539 = vmatprep.mubr.f32.mxu0 0.0
    %v2540 = vand.u32 %v1394, 4294901760
    %2541 = vmatmul.mubr.f32.gmra.mxu0 %v2540
    %v2542 = vpop.f32.mrf.mxu0
    %v2543 = vadd.f32 %v2380, %v2542
    %v2544 = vpop.f32.mrf.mxu0
    %2545 = vmatprep.mubr.f32.mxu0 0.0
    %v2546 = vand.u32 %v1397, 4294901760
    %2547 = vmatmul.mubr.f32.gmra.mxu0 %v2546
    %v2548 = vpop.f32.mrf.mxu0
    %v2549 = vadd.f32 %v2386, %v2548
    %v2550 = vpop.f32.mrf.mxu0
    %2551 = vmatprep.mubr.f32.mxu0 0.0
    %v2552 = vand.u32 %v1400, 4294901760
    %2553 = vmatmul.mubr.f32.gmra.mxu0 %v2552
    %v2554 = vpop.f32.mrf.mxu0
    %v2555 = vadd.f32 %v2392, %v2554
    %v2556 = vpop.f32.mrf.mxu0
    %2557 = vmatprep.mubr.f32.mxu0 0.0
    %v2558 = vand.u32 %v1403, 4294901760
    %2559 = vmatmul.mubr.f32.gmra.mxu0 %v2558
    %v2560 = vpop.f32.mrf.mxu0
    %v2561 = vadd.f32 %v2398, %v2560
    %v2562 = vpop.f32.mrf.mxu0
    %2563 = vmatprep.mubr.f32.mxu0 0.0
    %v2564 = vand.u32 %v1406, 4294901760
    %2565 = vmatmul.mubr.f32.gmra.mxu0 %v2564
    %v2566 = vpop.f32.mrf.mxu0
    %v2567 = vadd.f32 %v2404, %v2566
    %v2568 = vpop.f32.mrf.mxu0
    %2569 = vmatprep.mubr.f32.mxu0 0.0
    %v2570 = vand.u32 %v1409, 4294901760
    %2571 = vmatmul.mubr.f32.gmra.mxu0 %v2570
    %v2572 = vpop.f32.mrf.mxu0
    %v2573 = vadd.f32 %v2410, %v2572
    %v2574 = vpop.f32.mrf.mxu0
    %2575 = vmatprep.mubr.f32.mxu0 0.0
    %v2576 = vand.u32 %v1412, 4294901760
    %2577 = vmatmul.mubr.f32.gmra.mxu0 %v2576
    %v2578 = vpop.f32.mrf.mxu0
    %v2579 = vadd.f32 %v2416, %v2578
    %v2580 = vpop.f32.mrf.mxu0
    %2581 = vmatprep.mubr.f32.mxu0 0.0
    %v2582 = vand.u32 %v1415, 4294901760
    %2583 = vmatmul.mubr.f32.gmra.mxu0 %v2582
    %v2584 = vpop.f32.mrf.mxu0
    %v2585 = vadd.f32 %v2422, %v2584
    %v2586 = vpop.f32.mrf.mxu0
    %2587 = vmatprep.mubr.f32.mxu0 0.0
    %v2588 = vand.u32 %v1418, 4294901760
    %2589 = vmatmul.mubr.f32.gmra.mxu0 %v2588
    %v2590 = vpop.f32.mrf.mxu0
    %v2591 = vadd.f32 %v2428, %v2590
    %v2592 = vpop.f32.mrf.mxu0
    %2593 = vdwg.mxu0
    %vm2594 = vcmp.gt.f32.partialorder %v2513, 0.0
    %vm2595 = vcmp.gt.f32.partialorder %v2519, 0.0
    %vm2596 = vcmp.gt.f32.partialorder %v2525, 0.0
    %vm2597 = vcmp.gt.f32.partialorder %v2531, 0.0
    %vm2598 = vcmp.gt.f32.partialorder %v2537, 0.0
    %vm2599 = vcmp.gt.f32.partialorder %v2543, 0.0
    %vm2600 = vcmp.gt.f32.partialorder %v2549, 0.0
    %vm2601 = vcmp.gt.f32.partialorder %v2555, 0.0
    %vm2602 = vcmp.gt.f32.partialorder %v2561, 0.0
    %vm2603 = vcmp.gt.f32.partialorder %v2567, 0.0
    %vm2604 = vcmp.gt.f32.partialorder %v2573, 0.0
    %vm2605 = vcmp.gt.f32.partialorder %v2579, 0.0
    %vm2606 = vcmp.gt.f32.partialorder %v2585, 0.0
    %vm2607 = vcmp.gt.f32.partialorder %v2591, 0.0
    %v2608 = vmul.f32 %v2513, 0.3
    %v2609 = vmul.f32 %v2519, 0.3
    %v2610 = vmul.f32 %v2525, 0.3
    %v2611 = vmul.f32 %v2531, 0.3
    %v2612 = vmul.f32 %v2537, 0.3
    %v2613 = vmul.f32 %v2543, 0.3
    %v2614 = vmul.f32 %v2549, 0.3
    %v2615 = vmul.f32 %v2555, 0.3
    %v2616 = vmul.f32 %v2561, 0.3
    %v2617 = vmul.f32 %v2567, 0.3
    %v2618 = vmul.f32 %v2573, 0.3
    %v2619 = vmul.f32 %v2579, 0.3
    %v2620 = vmul.f32 %v2585, 0.3
    %v2621 = vmul.f32 %v2591, 0.3
    %v2622 = vsel %vm2594, %v2513, %v2608
    %v2623 = vsel %vm2595, %v2519, %v2609
    %v2624 = vsel %vm2596, %v2525, %v2610
    %v2625 = vsel %vm2597, %v2531, %v2611
    %v2626 = vsel %vm2598, %v2537, %v2612
    %v2627 = vsel %vm2599, %v2543, %v2613
    %v2628 = vsel %vm2600, %v2549, %v2614
    %v2629 = vsel %vm2601, %v2555, %v2615
    %v2630 = vsel %vm2602, %v2561, %v2616
    %v2631 = vsel %vm2603, %v2567, %v2617
    %v2632 = vsel %vm2604, %v2573, %v2618
    %v2633 = vsel %vm2605, %v2579, %v2619
    %v2634 = vsel %vm2606, %v2585, %v2620
    %v2635 = vsel %vm2607, %v2591, %v2621
    %v2636 = vld [vmem:[%s5] sm:$0xff]
    %v2637 = vld [vmem:[%s5 + $0x8] sm:$0xff]
    %v2638 = vld [vmem:[%s5 + $0x10] sm:$0xff]
    %v2639 = vld [vmem:[%s5 + $0x18] sm:$0xff]
    %v2640 = vld [vmem:[%s5 + $0x20] sm:$0xff]
    %v2641 = vld [vmem:[%s5 + $0x28] sm:$0xff]
    %v2642 = vld [vmem:[%s5 + $0x30] sm:$0xff]
    %v2643 = vld [vmem:[%s5 + $0x38] sm:$0xff]
    %v2644 = vld [vmem:[%s5 + $0x40] sm:$0xff]
    %v2645 = vld [vmem:[%s5 + $0x48] sm:$0xff]
    %v2646 = vld [vmem:[%s5 + $0x50] sm:$0xff]
    %v2647 = vld [vmem:[%s5 + $0x58] sm:$0xff]
    %v2648 = vld [vmem:[%s5 + $0x60] sm:$0xff]
    %v2649 = vld [vmem:[%s5 + $0x68] sm:$0xff]
    %v2650 = vld [vmem:[%s6] sm:$0xff]
    %v2651 = vld [vmem:[%s6 + $0x8] sm:$0xff]
    %v2652 = vld [vmem:[%s6 + $0x10] sm:$0xff]
    %v2653 = vld [vmem:[%s6 + $0x18] sm:$0xff]
    %v2654 = vld [vmem:[%s6 + $0x20] sm:$0xff]
    %v2655 = vld [vmem:[%s6 + $0x28] sm:$0xff]
    %v2656 = vld [vmem:[%s6 + $0x30] sm:$0xff]
    %v2657 = vld [vmem:[%s6 + $0x38] sm:$0xff]
    %v2658 = vld [vmem:[%s6 + $0x40] sm:$0xff]
    %v2659 = vld [vmem:[%s6 + $0x48] sm:$0xff]
    %v2660 = vld [vmem:[%s6 + $0x50] sm:$0xff]
    %v2661 = vld [vmem:[%s6 + $0x58] sm:$0xff]
    %v2662 = vld [vmem:[%s6 + $0x60] sm:$0xff]
    %v2663 = vld [vmem:[%s6 + $0x68] sm:$0xff]
    %2665 = vset.pattern.permute.xlu0 0
    %2666 = vperm.xlu0 %2665, %v2650
    %v2667 = vpop.permute.xlu0 %2666
    %2670 = vset.pattern.permute.xlu0 0
    %2671 = vperm.xlu0 %2670, %v2651
    %v2672 = vpop.permute.xlu0 %2671
    %2675 = vset.pattern.permute.xlu0 0
    %2676 = vperm.xlu0 %2675, %v2652
    %v2677 = vpop.permute.xlu0 %2676
    %2680 = vset.pattern.permute.xlu0 0
    %2681 = vperm.xlu0 %2680, %v2653
    %v2682 = vpop.permute.xlu0 %2681
    %2685 = vset.pattern.permute.xlu0 0
    %2686 = vperm.xlu0 %2685, %v2654
    %v2687 = vpop.permute.xlu0 %2686
    %2690 = vset.pattern.permute.xlu0 0
    %2691 = vperm.xlu0 %2690, %v2655
    %v2692 = vpop.permute.xlu0 %2691
    %2695 = vset.pattern.permute.xlu0 0
    %2696 = vperm.xlu0 %2695, %v2656
    %v2697 = vpop.permute.xlu0 %2696
    %2700 = vset.pattern.permute.xlu0 0
    %2701 = vperm.xlu0 %2700, %v2657
    %v2702 = vpop.permute.xlu0 %2701
    %2705 = vset.pattern.permute.xlu0 0
    %2706 = vperm.xlu0 %2705, %v2658
    %v2707 = vpop.permute.xlu0 %2706
    %2710 = vset.pattern.permute.xlu0 0
    %2711 = vperm.xlu0 %2710, %v2659
    %v2712 = vpop.permute.xlu0 %2711
    %2715 = vset.pattern.permute.xlu0 0
    %2716 = vperm.xlu0 %2715, %v2660
    %v2717 = vpop.permute.xlu0 %2716
    %2720 = vset.pattern.permute.xlu0 0
    %2721 = vperm.xlu0 %2720, %v2661
    %v2722 = vpop.permute.xlu0 %2721
    %2725 = vset.pattern.permute.xlu0 0
    %2726 = vperm.xlu0 %2725, %v2662
    %v2727 = vpop.permute.xlu0 %2726
    %2730 = vset.pattern.permute.xlu0 0
    %2731 = vperm.xlu0 %2730, %v2663
    %v2732 = vpop.permute.xlu0 %2731
    %v2735 = vsel %vm1377, %v2636, 0
    %v2738 = vsel %vm1377, %v2637, 0
    %v2741 = vsel %vm1377, %v2638, 0
    %v2744 = vsel %vm1377, %v2639, 0
    %v2747 = vsel %vm1377, %v2640, 0
    %v2750 = vsel %vm1377, %v2641, 0
    %v2753 = vsel %vm1377, %v2642, 0
    %v2756 = vsel %vm1377, %v2643, 0
    %v2759 = vsel %vm1377, %v2644, 0
    %v2762 = vsel %vm1377, %v2645, 0
    %v2765 = vsel %vm1377, %v2646, 0
    %v2768 = vsel %vm1377, %v2647, 0
    %v2771 = vsel %vm1377, %v2648, 0
    %v2774 = vsel %vm1377, %v2649, 0
    %2776 = vmatprep.subr.mxu0 0.0
    %2777 = vmatpush1.msra.mxu0 0.0
    %2778 = vmatprep.subr.mxu0 0.0
    %2779 = vmatpush1.msra.mxu0 0.0
    %2780 = vmatprep.subr.mxu0 0.0
    %v2781 = vand.u32 %v2635, 4294901760
    %2782 = vmatpush1.msra.mxu0 %v2781
    %2783 = vmatprep.subr.mxu0 0.0
    %v2784 = vand.u32 %v2634, 4294901760
    %2785 = vmatpush1.msra.mxu0 %v2784
    %2786 = vmatprep.subr.mxu0 0.0
    %v2787 = vand.u32 %v2633, 4294901760
    %2788 = vmatpush1.msra.mxu0 %v2787
    %2789 = vmatprep.subr.mxu0 0.0
    %v2790 = vand.u32 %v2632, 4294901760
    %2791 = vmatpush1.msra.mxu0 %v2790
    %2792 = vmatprep.subr.mxu0 0.0
    %v2793 = vand.u32 %v2631, 4294901760
    %2794 = vmatpush1.msra.mxu0 %v2793
    %2795 = vmatprep.subr.mxu0 0.0
    %v2796 = vand.u32 %v2630, 4294901760
    %2797 = vmatpush1.msra.mxu0 %v2796
    %2798 = vmatprep.subr.mxu0 0.0
    %v2799 = vand.u32 %v2629, 4294901760
    %2800 = vmatpush1.msra.mxu0 %v2799
    %2801 = vmatprep.subr.mxu0 0.0
    %v2802 = vand.u32 %v2628, 4294901760
    %2803 = vmatpush1.msra.mxu0 %v2802
    %2804 = vmatprep.subr.mxu0 0.0
    %v2805 = vand.u32 %v2627, 4294901760
    %2806 = vmatpush1.msra.mxu0 %v2805
    %2807 = vmatprep.subr.mxu0 0.0
    %v2808 = vand.u32 %v2626, 4294901760
    %2809 = vmatpush1.msra.mxu0 %v2808
    %2810 = vmatprep.subr.mxu0 0.0
    %v2811 = vand.u32 %v2625, 4294901760
    %2812 = vmatpush1.msra.mxu0 %v2811
    %2813 = vmatprep.subr.mxu0 0.0
    %v2814 = vand.u32 %v2624, 4294901760
    %2815 = vmatpush1.msra.mxu0 %v2814
    %2816 = vmatprep.subr.mxu0 0.0
    %v2817 = vand.u32 %v2623, 4294901760
    %2818 = vmatpush1.msra.mxu0 %v2817
    %2819 = vmatprep.subr.mxu0 0.0
    %v2820 = vand.u32 %v2622, 4294901760
    %2821 = vmatpush1.msra.mxu0 %v2820
    %2822 = vmatprep.subr.mxu0 0.0
    %2823 = vmatpush2.msra.mxu0 0.0
    %2824 = vmatprep.subr.mxu0 0.0
    %2825 = vmatpush2.msra.mxu0 0.0
    %2826 = vmatprep.subr.mxu0 0.0
    %2827 = vmatpush2.msra.mxu0 0.0
    %2828 = vmatprep.subr.mxu0 0.0
    %2829 = vmatpush2.msra.mxu0 0.0
    %2830 = vmatprep.subr.mxu0 0.0
    %2831 = vmatpush2.msra.mxu0 0.0
    %2832 = vmatprep.subr.mxu0 0.0
    %2833 = vmatpush2.msra.mxu0 0.0
    %2834 = vmatprep.subr.mxu0 0.0
    %2835 = vmatpush2.msra.mxu0 0.0
    %2836 = vmatprep.subr.mxu0 0.0
    %2837 = vmatpush2.msra.mxu0 0.0
    %2838 = vmatprep.subr.mxu0 0.0
    %2839 = vmatpush2.msra.mxu0 0.0
    %2840 = vmatprep.subr.mxu0 0.0
    %2841 = vmatpush2.msra.mxu0 0.0
    %2842 = vmatprep.subr.mxu0 0.0
    %2843 = vmatpush2.msra.mxu0 0.0
    %2844 = vmatprep.subr.mxu0 0.0
    %2845 = vmatpush2.msra.mxu0 0.0
    %2846 = vmatprep.subr.mxu0 0.0
    %2847 = vmatpush2.msra.mxu0 0.0
    %2848 = vmatprep.subr.mxu0 0.0
    %2849 = vmatpush2.msra.mxu0 0.0
    %2850 = vmatprep.subr.mxu0 0.0
    %2851 = vmatpush2.msra.mxu0 0.0
    %2852 = vmatprep.subr.mxu0 0.0
    %2853 = vmatpush2.msra.mxu0 0.0
    %2854 = vmatprep.mubr.f32.mxu0 0.0
    %v2855 = vand.u32 %v2735, 4294901760
    %v2856 = vsub.f32 %v2735, %v2855
    %v2857 = vand.u32 %v2856, 4294901760
    %v2858 = vsub.f32 %v2856, %v2857
    %v2859 = vand.u32 %v2858, 4294901760
    %2860 = vmatmul.mubr.f32.gmra.mxu0 %v2859
    %v2861 = vpop.f32.mrf.mxu0
    %v2862 = vadd.f32 %v2667, %v2861
    %v2863 = vpop.f32.mrf.mxu0
    %2864 = vmatprep.mubr.f32.mxu0 0.0
    %v2865 = vand.u32 %v2738, 4294901760
    %v2866 = vsub.f32 %v2738, %v2865
    %v2867 = vand.u32 %v2866, 4294901760
    %v2868 = vsub.f32 %v2866, %v2867
    %v2869 = vand.u32 %v2868, 4294901760
    %2870 = vmatmul.mubr.f32.gmra.mxu0 %v2869
    %v2871 = vpop.f32.mrf.mxu0
    %v2872 = vadd.f32 %v2672, %v2871
    %v2873 = vpop.f32.mrf.mxu0
    %2874 = vmatprep.mubr.f32.mxu0 0.0
    %v2875 = vand.u32 %v2741, 4294901760
    %v2876 = vsub.f32 %v2741, %v2875
    %v2877 = vand.u32 %v2876, 4294901760
    %v2878 = vsub.f32 %v2876, %v2877
    %v2879 = vand.u32 %v2878, 4294901760
    %2880 = vmatmul.mubr.f32.gmra.mxu0 %v2879
    %v2881 = vpop.f32.mrf.mxu0
    %v2882 = vadd.f32 %v2677, %v2881
    %v2883 = vpop.f32.mrf.mxu0
    %2884 = vmatprep.mubr.f32.mxu0 0.0
    %v2885 = vand.u32 %v2744, 4294901760
    %v2886 = vsub.f32 %v2744, %v2885
    %v2887 = vand.u32 %v2886, 4294901760
    %v2888 = vsub.f32 %v2886, %v2887
    %v2889 = vand.u32 %v2888, 4294901760
    %2890 = vmatmul.mubr.f32.gmra.mxu0 %v2889
    %v2891 = vpop.f32.mrf.mxu0
    %v2892 = vadd.f32 %v2682, %v2891
    %v2893 = vpop.f32.mrf.mxu0
    %2894 = vmatprep.mubr.f32.mxu0 0.0
    %v2895 = vand.u32 %v2747, 4294901760
    %v2896 = vsub.f32 %v2747, %v2895
    %v2897 = vand.u32 %v2896, 4294901760
    %v2898 = vsub.f32 %v2896, %v2897
    %v2899 = vand.u32 %v2898, 4294901760
    %2900 = vmatmul.mubr.f32.gmra.mxu0 %v2899
    %v2901 = vpop.f32.mrf.mxu0
    %v2902 = vadd.f32 %v2687, %v2901
    %v2903 = vpop.f32.mrf.mxu0
    %2904 = vmatprep.mubr.f32.mxu0 0.0
    %v2905 = vand.u32 %v2750, 4294901760
    %v2906 = vsub.f32 %v2750, %v2905
    %v2907 = vand.u32 %v2906, 4294901760
    %v2908 = vsub.f32 %v2906, %v2907
    %v2909 = vand.u32 %v2908, 4294901760
    %2910 = vmatmul.mubr.f32.gmra.mxu0 %v2909
    %v2911 = vpop.f32.mrf.mxu0
    %v2912 = vadd.f32 %v2692, %v2911
    %v2913 = vpop.f32.mrf.mxu0
    %2914 = vmatprep.mubr.f32.mxu0 0.0
    %v2915 = vand.u32 %v2753, 4294901760
    %v2916 = vsub.f32 %v2753, %v2915
    %v2917 = vand.u32 %v2916, 4294901760
    %v2918 = vsub.f32 %v2916, %v2917
    %v2919 = vand.u32 %v2918, 4294901760
    %2920 = vmatmul.mubr.f32.gmra.mxu0 %v2919
    %v2921 = vpop.f32.mrf.mxu0
    %v2922 = vadd.f32 %v2697, %v2921
    %v2923 = vpop.f32.mrf.mxu0
    %2924 = vmatprep.mubr.f32.mxu0 0.0
    %v2925 = vand.u32 %v2756, 4294901760
    %v2926 = vsub.f32 %v2756, %v2925
    %v2927 = vand.u32 %v2926, 4294901760
    %v2928 = vsub.f32 %v2926, %v2927
    %v2929 = vand.u32 %v2928, 4294901760
    %2930 = vmatmul.mubr.f32.gmra.mxu0 %v2929
    %v2931 = vpop.f32.mrf.mxu0
    %v2932 = vadd.f32 %v2702, %v2931
    %v2933 = vpop.f32.mrf.mxu0
    %2934 = vmatprep.mubr.f32.mxu0 0.0
    %v2935 = vand.u32 %v2759, 4294901760
    %v2936 = vsub.f32 %v2759, %v2935
    %v2937 = vand.u32 %v2936, 4294901760
    %v2938 = vsub.f32 %v2936, %v2937
    %v2939 = vand.u32 %v2938, 4294901760
    %2940 = vmatmul.mubr.f32.gmra.mxu0 %v2939
    %v2941 = vpop.f32.mrf.mxu0
    %v2942 = vadd.f32 %v2707, %v2941
    %v2943 = vpop.f32.mrf.mxu0
    %2944 = vmatprep.mubr.f32.mxu0 0.0
    %v2945 = vand.u32 %v2762, 4294901760
    %v2946 = vsub.f32 %v2762, %v2945
    %v2947 = vand.u32 %v2946, 4294901760
    %v2948 = vsub.f32 %v2946, %v2947
    %v2949 = vand.u32 %v2948, 4294901760
    %2950 = vmatmul.mubr.f32.gmra.mxu0 %v2949
    %v2951 = vpop.f32.mrf.mxu0
    %v2952 = vadd.f32 %v2712, %v2951
    %v2953 = vpop.f32.mrf.mxu0
    %2954 = vmatprep.mubr.f32.mxu0 0.0
    %v2955 = vand.u32 %v2765, 4294901760
    %v2956 = vsub.f32 %v2765, %v2955
    %v2957 = vand.u32 %v2956, 4294901760
    %v2958 = vsub.f32 %v2956, %v2957
    %v2959 = vand.u32 %v2958, 4294901760
    %2960 = vmatmul.mubr.f32.gmra.mxu0 %v2959
    %v2961 = vpop.f32.mrf.mxu0
    %v2962 = vadd.f32 %v2717, %v2961
    %v2963 = vpop.f32.mrf.mxu0
    %2964 = vmatprep.mubr.f32.mxu0 0.0
    %v2965 = vand.u32 %v2768, 4294901760
    %v2966 = vsub.f32 %v2768, %v2965
    %v2967 = vand.u32 %v2966, 4294901760
    %v2968 = vsub.f32 %v2966, %v2967
    %v2969 = vand.u32 %v2968, 4294901760
    %2970 = vmatmul.mubr.f32.gmra.mxu0 %v2969
    %v2971 = vpop.f32.mrf.mxu0
    %v2972 = vadd.f32 %v2722, %v2971
    %v2973 = vpop.f32.mrf.mxu0
    %2974 = vmatprep.mubr.f32.mxu0 0.0
    %v2975 = vand.u32 %v2771, 4294901760
    %v2976 = vsub.f32 %v2771, %v2975
    %v2977 = vand.u32 %v2976, 4294901760
    %v2978 = vsub.f32 %v2976, %v2977
    %v2979 = vand.u32 %v2978, 4294901760
    %2980 = vmatmul.mubr.f32.gmra.mxu0 %v2979
    %v2981 = vpop.f32.mrf.mxu0
    %v2982 = vadd.f32 %v2727, %v2981
    %v2983 = vpop.f32.mrf.mxu0
    %2984 = vmatprep.mubr.f32.mxu0 0.0
    %v2985 = vand.u32 %v2774, 4294901760
    %v2986 = vsub.f32 %v2774, %v2985
    %v2987 = vand.u32 %v2986, 4294901760
    %v2988 = vsub.f32 %v2986, %v2987
    %v2989 = vand.u32 %v2988, 4294901760
    %2990 = vmatmul.mubr.f32.gmra.mxu0 %v2989
    %v2991 = vpop.f32.mrf.mxu0
    %v2992 = vadd.f32 %v2732, %v2991
    %v2993 = vpop.f32.mrf.mxu0
    %2994 = vdwg.mxu0
    %2995 = vmatprep.subr.mxu0 0.0
    %2996 = vmatpush1.msra.mxu0 0.0
    %2997 = vmatprep.subr.mxu0 0.0
    %2998 = vmatpush1.msra.mxu0 0.0
    %2999 = vmatprep.subr.mxu0 0.0
    %v3000 = vand.u32 %v2635, 4294901760
    %v3001 = vsub.f32 %v2635, %v3000
    %v3002 = vand.u32 %v3001, 4294901760
    %v3003 = vsub.f32 %v3001, %v3002
    %v3004 = vand.u32 %v3003, 4294901760
    %3005 = vmatpush1.msra.mxu0 %v3004
    %3006 = vmatprep.subr.mxu0 0.0
    %v3007 = vand.u32 %v2634, 4294901760
    %v3008 = vsub.f32 %v2634, %v3007
    %v3009 = vand.u32 %v3008, 4294901760
    %v3010 = vsub.f32 %v3008, %v3009
    %v3011 = vand.u32 %v3010, 4294901760
    %3012 = vmatpush1.msra.mxu0 %v3011
    %3013 = vmatprep.subr.mxu0 0.0
    %v3014 = vand.u32 %v2633, 4294901760
    %v3015 = vsub.f32 %v2633, %v3014
    %v3016 = vand.u32 %v3015, 4294901760
    %v3017 = vsub.f32 %v3015, %v3016
    %v3018 = vand.u32 %v3017, 4294901760
    %3019 = vmatpush1.msra.mxu0 %v3018
    %3020 = vmatprep.subr.mxu0 0.0
    %v3021 = vand.u32 %v2632, 4294901760
    %v3022 = vsub.f32 %v2632, %v3021
    %v3023 = vand.u32 %v3022, 4294901760
    %v3024 = vsub.f32 %v3022, %v3023
    %v3025 = vand.u32 %v3024, 4294901760
    %3026 = vmatpush1.msra.mxu0 %v3025
    %3027 = vmatprep.subr.mxu0 0.0
    %v3028 = vand.u32 %v2631, 4294901760
    %v3029 = vsub.f32 %v2631, %v3028
    %v3030 = vand.u32 %v3029, 4294901760
    %v3031 = vsub.f32 %v3029, %v3030
    %v3032 = vand.u32 %v3031, 4294901760
    %3033 = vmatpush1.msra.mxu0 %v3032
    %3034 = vmatprep.subr.mxu0 0.0
    %v3035 = vand.u32 %v2630, 4294901760
    %v3036 = vsub.f32 %v2630, %v3035
    %v3037 = vand.u32 %v3036, 4294901760
    %v3038 = vsub.f32 %v3036, %v3037
    %v3039 = vand.u32 %v3038, 4294901760
    %3040 = vmatpush1.msra.mxu0 %v3039
    %3041 = vmatprep.subr.mxu0 0.0
    %v3042 = vand.u32 %v2629, 4294901760
    %v3043 = vsub.f32 %v2629, %v3042
    %v3044 = vand.u32 %v3043, 4294901760
    %v3045 = vsub.f32 %v3043, %v3044
    %v3046 = vand.u32 %v3045, 4294901760
    %3047 = vmatpush1.msra.mxu0 %v3046
    %3048 = vmatprep.subr.mxu0 0.0
    %v3049 = vand.u32 %v2628, 4294901760
    %v3050 = vsub.f32 %v2628, %v3049
    %v3051 = vand.u32 %v3050, 4294901760
    %v3052 = vsub.f32 %v3050, %v3051
    %v3053 = vand.u32 %v3052, 4294901760
    %3054 = vmatpush1.msra.mxu0 %v3053
    %3055 = vmatprep.subr.mxu0 0.0
    %v3056 = vand.u32 %v2627, 4294901760
    %v3057 = vsub.f32 %v2627, %v3056
    %v3058 = vand.u32 %v3057, 4294901760
    %v3059 = vsub.f32 %v3057, %v3058
    %v3060 = vand.u32 %v3059, 4294901760
    %3061 = vmatpush1.msra.mxu0 %v3060
    %3062 = vmatprep.subr.mxu0 0.0
    %v3063 = vand.u32 %v2626, 4294901760
    %v3064 = vsub.f32 %v2626, %v3063
    %v3065 = vand.u32 %v3064, 4294901760
    %v3066 = vsub.f32 %v3064, %v3065
    %v3067 = vand.u32 %v3066, 4294901760
    %3068 = vmatpush1.msra.mxu0 %v3067
    %3069 = vmatprep.subr.mxu0 0.0
    %v3070 = vand.u32 %v2625, 4294901760
    %v3071 = vsub.f32 %v2625, %v3070
    %v3072 = vand.u32 %v3071, 4294901760
    %v3073 = vsub.f32 %v3071, %v3072
    %v3074 = vand.u32 %v3073, 4294901760
    %3075 = vmatpush1.msra.mxu0 %v3074
    %3076 = vmatprep.subr.mxu0 0.0
    %v3077 = vand.u32 %v2624, 4294901760
    %v3078 = vsub.f32 %v2624, %v3077
    %v3079 = vand.u32 %v3078, 4294901760
    %v3080 = vsub.f32 %v3078, %v3079
    %v3081 = vand.u32 %v3080, 4294901760
    %3082 = vmatpush1.msra.mxu0 %v3081
    %3083 = vmatprep.subr.mxu0 0.0
    %v3084 = vand.u32 %v2623, 4294901760
    %v3085 = vsub.f32 %v2623, %v3084
    %v3086 = vand.u32 %v3085, 4294901760
    %v3087 = vsub.f32 %v3085, %v3086
    %v3088 = vand.u32 %v3087, 4294901760
    %3089 = vmatpush1.msra.mxu0 %v3088
    %3090 = vmatprep.subr.mxu0 0.0
    %v3091 = vand.u32 %v2622, 4294901760
    %v3092 = vsub.f32 %v2622, %v3091
    %v3093 = vand.u32 %v3092, 4294901760
    %v3094 = vsub.f32 %v3092, %v3093
    %v3095 = vand.u32 %v3094, 4294901760
    %3096 = vmatpush1.msra.mxu0 %v3095
    %3097 = vmatprep.subr.mxu0 0.0
    %3098 = vmatpush2.msra.mxu0 0.0
    %3099 = vmatprep.subr.mxu0 0.0
    %3100 = vmatpush2.msra.mxu0 0.0
    %3101 = vmatprep.subr.mxu0 0.0
    %3102 = vmatpush2.msra.mxu0 0.0
    %3103 = vmatprep.subr.mxu0 0.0
    %3104 = vmatpush2.msra.mxu0 0.0
    %3105 = vmatprep.subr.mxu0 0.0
    %3106 = vmatpush2.msra.mxu0 0.0
    %3107 = vmatprep.subr.mxu0 0.0
    %3108 = vmatpush2.msra.mxu0 0.0
    %3109 = vmatprep.subr.mxu0 0.0
    %3110 = vmatpush2.msra.mxu0 0.0
    %3111 = vmatprep.subr.mxu0 0.0
    %3112 = vmatpush2.msra.mxu0 0.0
    %3113 = vmatprep.subr.mxu0 0.0
    %3114 = vmatpush2.msra.mxu0 0.0
    %3115 = vmatprep.subr.mxu0 0.0
    %3116 = vmatpush2.msra.mxu0 0.0
    %3117 = vmatprep.subr.mxu0 0.0
    %3118 = vmatpush2.msra.mxu0 0.0
    %3119 = vmatprep.subr.mxu0 0.0
    %3120 = vmatpush2.msra.mxu0 0.0
    %3121 = vmatprep.subr.mxu0 0.0
    %3122 = vmatpush2.msra.mxu0 0.0
    %3123 = vmatprep.subr.mxu0 0.0
    %3124 = vmatpush2.msra.mxu0 0.0
    %3125 = vmatprep.subr.mxu0 0.0
    %3126 = vmatpush2.msra.mxu0 0.0
    %3127 = vmatprep.subr.mxu0 0.0
    %3128 = vmatpush2.msra.mxu0 0.0
    %3129 = vmatprep.mubr.f32.mxu0 0.0
    %v3130 = vand.u32 %v2735, 4294901760
    %3131 = vmatmul.mubr.f32.gmra.mxu0 %v3130
    %v3132 = vpop.f32.mrf.mxu0
    %v3133 = vadd.f32 %v2862, %v3132
    %v3134 = vpop.f32.mrf.mxu0
    %3135 = vmatprep.mubr.f32.mxu0 0.0
    %v3136 = vand.u32 %v2738, 4294901760
    %3137 = vmatmul.mubr.f32.gmra.mxu0 %v3136
    %v3138 = vpop.f32.mrf.mxu0
    %v3139 = vadd.f32 %v2872, %v3138
    %v3140 = vpop.f32.mrf.mxu0
    %3141 = vmatprep.mubr.f32.mxu0 0.0
    %v3142 = vand.u32 %v2741, 4294901760
    %3143 = vmatmul.mubr.f32.gmra.mxu0 %v3142
    %v3144 = vpop.f32.mrf.mxu0
    %v3145 = vadd.f32 %v2882, %v3144
    %v3146 = vpop.f32.mrf.mxu0
    %3147 = vmatprep.mubr.f32.mxu0 0.0
    %v3148 = vand.u32 %v2744, 4294901760
    %3149 = vmatmul.mubr.f32.gmra.mxu0 %v3148
    %v3150 = vpop.f32.mrf.mxu0
    %v3151 = vadd.f32 %v2892, %v3150
    %v3152 = vpop.f32.mrf.mxu0
    %3153 = vmatprep.mubr.f32.mxu0 0.0
    %v3154 = vand.u32 %v2747, 4294901760
    %3155 = vmatmul.mubr.f32.gmra.mxu0 %v3154
    %v3156 = vpop.f32.mrf.mxu0
    %v3157 = vadd.f32 %v2902, %v3156
    %v3158 = vpop.f32.mrf.mxu0
    %3159 = vmatprep.mubr.f32.mxu0 0.0
    %v3160 = vand.u32 %v2750, 4294901760
    %3161 = vmatmul.mubr.f32.gmra.mxu0 %v3160
    %v3162 = vpop.f32.mrf.mxu0
    %v3163 = vadd.f32 %v2912, %v3162
    %v3164 = vpop.f32.mrf.mxu0
    %3165 = vmatprep.mubr.f32.mxu0 0.0
    %v3166 = vand.u32 %v2753, 4294901760
    %3167 = vmatmul.mubr.f32.gmra.mxu0 %v3166
    %v3168 = vpop.f32.mrf.mxu0
    %v3169 = vadd.f32 %v2922, %v3168
    %v3170 = vpop.f32.mrf.mxu0
    %3171 = vmatprep.mubr.f32.mxu0 0.0
    %v3172 = vand.u32 %v2756, 4294901760
    %3173 = vmatmul.mubr.f32.gmra.mxu0 %v3172
    %v3174 = vpop.f32.mrf.mxu0
    %v3175 = vadd.f32 %v2932, %v3174
    %v3176 = vpop.f32.mrf.mxu0
    %3177 = vmatprep.mubr.f32.mxu0 0.0
    %v3178 = vand.u32 %v2759, 4294901760
    %3179 = vmatmul.mubr.f32.gmra.mxu0 %v3178
    %v3180 = vpop.f32.mrf.mxu0
    %v3181 = vadd.f32 %v2942, %v3180
    %v3182 = vpop.f32.mrf.mxu0
    %3183 = vmatprep.mubr.f32.mxu0 0.0
    %v3184 = vand.u32 %v2762, 4294901760
    %3185 = vmatmul.mubr.f32.gmra.mxu0 %v3184
    %v3186 = vpop.f32.mrf.mxu0
    %v3187 = vadd.f32 %v2952, %v3186
    %v3188 = vpop.f32.mrf.mxu0
    %3189 = vmatprep.mubr.f32.mxu0 0.0
    %v3190 = vand.u32 %v2765, 4294901760
    %3191 = vmatmul.mubr.f32.gmra.mxu0 %v3190
    %v3192 = vpop.f32.mrf.mxu0
    %v3193 = vadd.f32 %v2962, %v3192
    %v3194 = vpop.f32.mrf.mxu0
    %3195 = vmatprep.mubr.f32.mxu0 0.0
    %v3196 = vand.u32 %v2768, 4294901760
    %3197 = vmatmul.mubr.f32.gmra.mxu0 %v3196
    %v3198 = vpop.f32.mrf.mxu0
    %v3199 = vadd.f32 %v2972, %v3198
    %v3200 = vpop.f32.mrf.mxu0
    %3201 = vmatprep.mubr.f32.mxu0 0.0
    %v3202 = vand.u32 %v2771, 4294901760
    %3203 = vmatmul.mubr.f32.gmra.mxu0 %v3202
    %v3204 = vpop.f32.mrf.mxu0
    %v3205 = vadd.f32 %v2982, %v3204
    %v3206 = vpop.f32.mrf.mxu0
    %3207 = vmatprep.mubr.f32.mxu0 0.0
    %v3208 = vand.u32 %v2774, 4294901760
    %3209 = vmatmul.mubr.f32.gmra.mxu0 %v3208
    %v3210 = vpop.f32.mrf.mxu0
    %v3211 = vadd.f32 %v2992, %v3210
    %v3212 = vpop.f32.mrf.mxu0
    %3213 = vdwg.mxu0
    %3214 = vmatprep.subr.mxu0 0.0
    %3215 = vmatpush1.msra.mxu0 0.0
    %3216 = vmatprep.subr.mxu0 0.0
    %3217 = vmatpush1.msra.mxu0 0.0
    %3218 = vmatprep.subr.mxu0 0.0
    %v3219 = vand.u32 %v2635, 4294901760
    %v3220 = vsub.f32 %v2635, %v3219
    %3221 = vmatpush1.msra.mxu0 %v3220
    %3222 = vmatprep.subr.mxu0 0.0
    %v3223 = vand.u32 %v2634, 4294901760
    %v3224 = vsub.f32 %v2634, %v3223
    %3225 = vmatpush1.msra.mxu0 %v3224
    %3226 = vmatprep.subr.mxu0 0.0
    %v3227 = vand.u32 %v2633, 4294901760
    %v3228 = vsub.f32 %v2633, %v3227
    %3229 = vmatpush1.msra.mxu0 %v3228
    %3230 = vmatprep.subr.mxu0 0.0
    %v3231 = vand.u32 %v2632, 4294901760
    %v3232 = vsub.f32 %v2632, %v3231
    %3233 = vmatpush1.msra.mxu0 %v3232
    %3234 = vmatprep.subr.mxu0 0.0
    %v3235 = vand.u32 %v2631, 4294901760
    %v3236 = vsub.f32 %v2631, %v3235
    %3237 = vmatpush1.msra.mxu0 %v3236
    %3238 = vmatprep.subr.mxu0 0.0
    %v3239 = vand.u32 %v2630, 4294901760
    %v3240 = vsub.f32 %v2630, %v3239
    %3241 = vmatpush1.msra.mxu0 %v3240
    %3242 = vmatprep.subr.mxu0 0.0
    %v3243 = vand.u32 %v2629, 4294901760
    %v3244 = vsub.f32 %v2629, %v3243
    %3245 = vmatpush1.msra.mxu0 %v3244
    %3246 = vmatprep.subr.mxu0 0.0
    %v3247 = vand.u32 %v2628, 4294901760
    %v3248 = vsub.f32 %v2628, %v3247
    %3249 = vmatpush1.msra.mxu0 %v3248
    %3250 = vmatprep.subr.mxu0 0.0
    %v3251 = vand.u32 %v2627, 4294901760
    %v3252 = vsub.f32 %v2627, %v3251
    %3253 = vmatpush1.msra.mxu0 %v3252
    %3254 = vmatprep.subr.mxu0 0.0
    %v3255 = vand.u32 %v2626, 4294901760
    %v3256 = vsub.f32 %v2626, %v3255
    %3257 = vmatpush1.msra.mxu0 %v3256
    %3258 = vmatprep.subr.mxu0 0.0
    %v3259 = vand.u32 %v2625, 4294901760
    %v3260 = vsub.f32 %v2625, %v3259
    %3261 = vmatpush1.msra.mxu0 %v3260
    %3262 = vmatprep.subr.mxu0 0.0
    %v3263 = vand.u32 %v2624, 4294901760
    %v3264 = vsub.f32 %v2624, %v3263
    %3265 = vmatpush1.msra.mxu0 %v3264
    %3266 = vmatprep.subr.mxu0 0.0
    %v3267 = vand.u32 %v2623, 4294901760
    %v3268 = vsub.f32 %v2623, %v3267
    %3269 = vmatpush1.msra.mxu0 %v3268
    %3270 = vmatprep.subr.mxu0 0.0
    %v3271 = vand.u32 %v2622, 4294901760
    %v3272 = vsub.f32 %v2622, %v3271
    %3273 = vmatpush1.msra.mxu0 %v3272
    %3274 = vmatprep.subr.mxu0 0.0
    %3275 = vmatpush2.msra.mxu0 0.0
    %3276 = vmatprep.subr.mxu0 0.0
    %3277 = vmatpush2.msra.mxu0 0.0
    %3278 = vmatprep.subr.mxu0 0.0
    %3279 = vmatpush2.msra.mxu0 0.0
    %3280 = vmatprep.subr.mxu0 0.0
    %3281 = vmatpush2.msra.mxu0 0.0
    %3282 = vmatprep.subr.mxu0 0.0
    %3283 = vmatpush2.msra.mxu0 0.0
    %3284 = vmatprep.subr.mxu0 0.0
    %3285 = vmatpush2.msra.mxu0 0.0
    %3286 = vmatprep.subr.mxu0 0.0
    %3287 = vmatpush2.msra.mxu0 0.0
    %3288 = vmatprep.subr.mxu0 0.0
    %3289 = vmatpush2.msra.mxu0 0.0
    %3290 = vmatprep.subr.mxu0 0.0
    %3291 = vmatpush2.msra.mxu0 0.0
    %3292 = vmatprep.subr.mxu0 0.0
    %3293 = vmatpush2.msra.mxu0 0.0
    %3294 = vmatprep.subr.mxu0 0.0
    %3295 = vmatpush2.msra.mxu0 0.0
    %3296 = vmatprep.subr.mxu0 0.0
    %3297 = vmatpush2.msra.mxu0 0.0
    %3298 = vmatprep.subr.mxu0 0.0
    %3299 = vmatpush2.msra.mxu0 0.0
    %3300 = vmatprep.subr.mxu0 0.0
    %3301 = vmatpush2.msra.mxu0 0.0
    %3302 = vmatprep.subr.mxu0 0.0
    %3303 = vmatpush2.msra.mxu0 0.0
    %3304 = vmatprep.subr.mxu0 0.0
    %3305 = vmatpush2.msra.mxu0 0.0
    %3306 = vmatprep.mubr.f32.mxu0 0.0
    %v3307 = vand.u32 %v2735, 4294901760
    %v3308 = vsub.f32 %v2735, %v3307
    %3309 = vmatmul.mubr.f32.gmra.mxu0 %v3308
    %v3310 = vpop.f32.mrf.mxu0
    %v3311 = vadd.f32 %v3133, %v3310
    %v3312 = vpop.f32.mrf.mxu0
    %3313 = vmatprep.mubr.f32.mxu0 0.0
    %v3314 = vand.u32 %v2738, 4294901760
    %v3315 = vsub.f32 %v2738, %v3314
    %3316 = vmatmul.mubr.f32.gmra.mxu0 %v3315
    %v3317 = vpop.f32.mrf.mxu0
    %v3318 = vadd.f32 %v3139, %v3317
    %v3319 = vpop.f32.mrf.mxu0
    %3320 = vmatprep.mubr.f32.mxu0 0.0
    %v3321 = vand.u32 %v2741, 4294901760
    %v3322 = vsub.f32 %v2741, %v3321
    %3323 = vmatmul.mubr.f32.gmra.mxu0 %v3322
    %v3324 = vpop.f32.mrf.mxu0
    %v3325 = vadd.f32 %v3145, %v3324
    %v3326 = vpop.f32.mrf.mxu0
    %3327 = vmatprep.mubr.f32.mxu0 0.0
    %v3328 = vand.u32 %v2744, 4294901760
    %v3329 = vsub.f32 %v2744, %v3328
    %3330 = vmatmul.mubr.f32.gmra.mxu0 %v3329
    %v3331 = vpop.f32.mrf.mxu0
    %v3332 = vadd.f32 %v3151, %v3331
    %v3333 = vpop.f32.mrf.mxu0
    %3334 = vmatprep.mubr.f32.mxu0 0.0
    %v3335 = vand.u32 %v2747, 4294901760
    %v3336 = vsub.f32 %v2747, %v3335
    %3337 = vmatmul.mubr.f32.gmra.mxu0 %v3336
    %v3338 = vpop.f32.mrf.mxu0
    %v3339 = vadd.f32 %v3157, %v3338
    %v3340 = vpop.f32.mrf.mxu0
    %3341 = vmatprep.mubr.f32.mxu0 0.0
    %v3342 = vand.u32 %v2750, 4294901760
    %v3343 = vsub.f32 %v2750, %v3342
    %3344 = vmatmul.mubr.f32.gmra.mxu0 %v3343
    %v3345 = vpop.f32.mrf.mxu0
    %v3346 = vadd.f32 %v3163, %v3345
    %v3347 = vpop.f32.mrf.mxu0
    %3348 = vmatprep.mubr.f32.mxu0 0.0
    %v3349 = vand.u32 %v2753, 4294901760
    %v3350 = vsub.f32 %v2753, %v3349
    %3351 = vmatmul.mubr.f32.gmra.mxu0 %v3350
    %v3352 = vpop.f32.mrf.mxu0
    %v3353 = vadd.f32 %v3169, %v3352
    %v3354 = vpop.f32.mrf.mxu0
    %3355 = vmatprep.mubr.f32.mxu0 0.0
    %v3356 = vand.u32 %v2756, 4294901760
    %v3357 = vsub.f32 %v2756, %v3356
    %3358 = vmatmul.mubr.f32.gmra.mxu0 %v3357
    %v3359 = vpop.f32.mrf.mxu0
    %v3360 = vadd.f32 %v3175, %v3359
    %v3361 = vpop.f32.mrf.mxu0
    %3362 = vmatprep.mubr.f32.mxu0 0.0
    %v3363 = vand.u32 %v2759, 4294901760
    %v3364 = vsub.f32 %v2759, %v3363
    %3365 = vmatmul.mubr.f32.gmra.mxu0 %v3364
    %v3366 = vpop.f32.mrf.mxu0
    %v3367 = vadd.f32 %v3181, %v3366
    %v3368 = vpop.f32.mrf.mxu0
    %3369 = vmatprep.mubr.f32.mxu0 0.0
    %v3370 = vand.u32 %v2762, 4294901760
    %v3371 = vsub.f32 %v2762, %v3370
    %3372 = vmatmul.mubr.f32.gmra.mxu0 %v3371
    %v3373 = vpop.f32.mrf.mxu0
    %v3374 = vadd.f32 %v3187, %v3373
    %v3375 = vpop.f32.mrf.mxu0
    %3376 = vmatprep.mubr.f32.mxu0 0.0
    %v3377 = vand.u32 %v2765, 4294901760
    %v3378 = vsub.f32 %v2765, %v3377
    %3379 = vmatmul.mubr.f32.gmra.mxu0 %v3378
    %v3380 = vpop.f32.mrf.mxu0
    %v3381 = vadd.f32 %v3193, %v3380
    %v3382 = vpop.f32.mrf.mxu0
    %3383 = vmatprep.mubr.f32.mxu0 0.0
    %v3384 = vand.u32 %v2768, 4294901760
    %v3385 = vsub.f32 %v2768, %v3384
    %3386 = vmatmul.mubr.f32.gmra.mxu0 %v3385
    %v3387 = vpop.f32.mrf.mxu0
    %v3388 = vadd.f32 %v3199, %v3387
    %v3389 = vpop.f32.mrf.mxu0
    %3390 = vmatprep.mubr.f32.mxu0 0.0
    %v3391 = vand.u32 %v2771, 4294901760
    %v3392 = vsub.f32 %v2771, %v3391
    %3393 = vmatmul.mubr.f32.gmra.mxu0 %v3392
    %v3394 = vpop.f32.mrf.mxu0
    %v3395 = vadd.f32 %v3205, %v3394
    %v3396 = vpop.f32.mrf.mxu0
    %3397 = vmatprep.mubr.f32.mxu0 0.0
    %v3398 = vand.u32 %v2774, 4294901760
    %v3399 = vsub.f32 %v2774, %v3398
    %3400 = vmatmul.mubr.f32.gmra.mxu0 %v3399
    %v3401 = vpop.f32.mrf.mxu0
    %v3402 = vadd.f32 %v3211, %v3401
    %v3403 = vpop.f32.mrf.mxu0
    %3404 = vdwg.mxu0
    %3405 = vmatprep.subr.mxu0 0.0
    %3406 = vmatpush1.msra.mxu0 0.0
    %3407 = vmatprep.subr.mxu0 0.0
    %3408 = vmatpush1.msra.mxu0 0.0
    %3409 = vmatprep.subr.mxu0 0.0
    %v3410 = vand.u32 %v2635, 4294901760
    %3411 = vmatpush1.msra.mxu0 %v3410
    %3412 = vmatprep.subr.mxu0 0.0
    %v3413 = vand.u32 %v2634, 4294901760
    %3414 = vmatpush1.msra.mxu0 %v3413
    %3415 = vmatprep.subr.mxu0 0.0
    %v3416 = vand.u32 %v2633, 4294901760
    %3417 = vmatpush1.msra.mxu0 %v3416
    %3418 = vmatprep.subr.mxu0 0.0
    %v3419 = vand.u32 %v2632, 4294901760
    %3420 = vmatpush1.msra.mxu0 %v3419
    %3421 = vmatprep.subr.mxu0 0.0
    %v3422 = vand.u32 %v2631, 4294901760
    %3423 = vmatpush1.msra.mxu0 %v3422
    %3424 = vmatprep.subr.mxu0 0.0
    %v3425 = vand.u32 %v2630, 4294901760
    %3426 = vmatpush1.msra.mxu0 %v3425
    %3427 = vmatprep.subr.mxu0 0.0
    %v3428 = vand.u32 %v2629, 4294901760
    %3429 = vmatpush1.msra.mxu0 %v3428
    %3430 = vmatprep.subr.mxu0 0.0
    %v3431 = vand.u32 %v2628, 4294901760
    %3432 = vmatpush1.msra.mxu0 %v3431
    %3433 = vmatprep.subr.mxu0 0.0
    %v3434 = vand.u32 %v2627, 4294901760
    %3435 = vmatpush1.msra.mxu0 %v3434
    %3436 = vmatprep.subr.mxu0 0.0
    %v3437 = vand.u32 %v2626, 4294901760
    %3438 = vmatpush1.msra.mxu0 %v3437
    %3439 = vmatprep.subr.mxu0 0.0
    %v3440 = vand.u32 %v2625, 4294901760
    %3441 = vmatpush1.msra.mxu0 %v3440
    %3442 = vmatprep.subr.mxu0 0.0
    %v3443 = vand.u32 %v2624, 4294901760
    %3444 = vmatpush1.msra.mxu0 %v3443
    %3445 = vmatprep.subr.mxu0 0.0
    %v3446 = vand.u32 %v2623, 4294901760
    %3447 = vmatpush1.msra.mxu0 %v3446
    %3448 = vmatprep.subr.mxu0 0.0
    %v3449 = vand.u32 %v2622, 4294901760
    %3450 = vmatpush1.msra.mxu0 %v3449
    %3451 = vmatprep.subr.mxu0 0.0
    %3452 = vmatpush2.msra.mxu0 0.0
    %3453 = vmatprep.subr.mxu0 0.0
    %3454 = vmatpush2.msra.mxu0 0.0
    %3455 = vmatprep.subr.mxu0 0.0
    %3456 = vmatpush2.msra.mxu0 0.0
    %3457 = vmatprep.subr.mxu0 0.0
    %3458 = vmatpush2.msra.mxu0 0.0
    %3459 = vmatprep.subr.mxu0 0.0
    %3460 = vmatpush2.msra.mxu0 0.0
    %3461 = vmatprep.subr.mxu0 0.0
    %3462 = vmatpush2.msra.mxu0 0.0
    %3463 = vmatprep.subr.mxu0 0.0
    %3464 = vmatpush2.msra.mxu0 0.0
    %3465 = vmatprep.subr.mxu0 0.0
    %3466 = vmatpush2.msra.mxu0 0.0
    %3467 = vmatprep.subr.mxu0 0.0
    %3468 = vmatpush2.msra.mxu0 0.0
    %3469 = vmatprep.subr.mxu0 0.0
    %3470 = vmatpush2.msra.mxu0 0.0
    %3471 = vmatprep.subr.mxu0 0.0
    %3472 = vmatpush2.msra.mxu0 0.0
    %3473 = vmatprep.subr.mxu0 0.0
    %3474 = vmatpush2.msra.mxu0 0.0
    %3475 = vmatprep.subr.mxu0 0.0
    %3476 = vmatpush2.msra.mxu0 0.0
    %3477 = vmatprep.subr.mxu0 0.0
    %3478 = vmatpush2.msra.mxu0 0.0
    %3479 = vmatprep.subr.mxu0 0.0
    %3480 = vmatpush2.msra.mxu0 0.0
    %3481 = vmatprep.subr.mxu0 0.0
    %3482 = vmatpush2.msra.mxu0 0.0
    %3483 = vmatprep.mubr.f32.mxu0 0.0
    %v3484 = vand.u32 %v2735, 4294901760
    %v3485 = vsub.f32 %v2735, %v3484
    %v3486 = vand.u32 %v3485, 4294901760
    %3487 = vmatmul.mubr.f32.gmra.mxu0 %v3486
    %v3488 = vpop.f32.mrf.mxu0
    %v3489 = vadd.f32 %v3311, %v3488
    %v3490 = vpop.f32.mrf.mxu0
    %3491 = vmatprep.mubr.f32.mxu0 0.0
    %v3492 = vand.u32 %v2738, 4294901760
    %v3493 = vsub.f32 %v2738, %v3492
    %v3494 = vand.u32 %v3493, 4294901760
    %3495 = vmatmul.mubr.f32.gmra.mxu0 %v3494
    %v3496 = vpop.f32.mrf.mxu0
    %v3497 = vadd.f32 %v3318, %v3496
    %v3498 = vpop.f32.mrf.mxu0
    %3499 = vmatprep.mubr.f32.mxu0 0.0
    %v3500 = vand.u32 %v2741, 4294901760
    %v3501 = vsub.f32 %v2741, %v3500
    %v3502 = vand.u32 %v3501, 4294901760
    %3503 = vmatmul.mubr.f32.gmra.mxu0 %v3502
    %v3504 = vpop.f32.mrf.mxu0
    %v3505 = vadd.f32 %v3325, %v3504
    %v3506 = vpop.f32.mrf.mxu0
    %3507 = vmatprep.mubr.f32.mxu0 0.0
    %v3508 = vand.u32 %v2744, 4294901760
    %v3509 = vsub.f32 %v2744, %v3508
    %v3510 = vand.u32 %v3509, 4294901760
    %3511 = vmatmul.mubr.f32.gmra.mxu0 %v3510
    %v3512 = vpop.f32.mrf.mxu0
    %v3513 = vadd.f32 %v3332, %v3512
    %v3514 = vpop.f32.mrf.mxu0
    %3515 = vmatprep.mubr.f32.mxu0 0.0
    %v3516 = vand.u32 %v2747, 4294901760
    %v3517 = vsub.f32 %v2747, %v3516
    %v3518 = vand.u32 %v3517, 4294901760
    %3519 = vmatmul.mubr.f32.gmra.mxu0 %v3518
    %v3520 = vpop.f32.mrf.mxu0
    %v3521 = vadd.f32 %v3339, %v3520
    %v3522 = vpop.f32.mrf.mxu0
    %3523 = vmatprep.mubr.f32.mxu0 0.0
    %v3524 = vand.u32 %v2750, 4294901760
    %v3525 = vsub.f32 %v2750, %v3524
    %v3526 = vand.u32 %v3525, 4294901760
    %3527 = vmatmul.mubr.f32.gmra.mxu0 %v3526
    %v3528 = vpop.f32.mrf.mxu0
    %v3529 = vadd.f32 %v3346, %v3528
    %v3530 = vpop.f32.mrf.mxu0
    %3531 = vmatprep.mubr.f32.mxu0 0.0
    %v3532 = vand.u32 %v2753, 4294901760
    %v3533 = vsub.f32 %v2753, %v3532
    %v3534 = vand.u32 %v3533, 4294901760
    %3535 = vmatmul.mubr.f32.gmra.mxu0 %v3534
    %v3536 = vpop.f32.mrf.mxu0
    %v3537 = vadd.f32 %v3353, %v3536
    %v3538 = vpop.f32.mrf.mxu0
    %3539 = vmatprep.mubr.f32.mxu0 0.0
    %v3540 = vand.u32 %v2756, 4294901760
    %v3541 = vsub.f32 %v2756, %v3540
    %v3542 = vand.u32 %v3541, 4294901760
    %3543 = vmatmul.mubr.f32.gmra.mxu0 %v3542
    %v3544 = vpop.f32.mrf.mxu0
    %v3545 = vadd.f32 %v3360, %v3544
    %v3546 = vpop.f32.mrf.mxu0
    %3547 = vmatprep.mubr.f32.mxu0 0.0
    %v3548 = vand.u32 %v2759, 4294901760
    %v3549 = vsub.f32 %v2759, %v3548
    %v3550 = vand.u32 %v3549, 4294901760
    %3551 = vmatmul.mubr.f32.gmra.mxu0 %v3550
    %v3552 = vpop.f32.mrf.mxu0
    %v3553 = vadd.f32 %v3367, %v3552
    %v3554 = vpop.f32.mrf.mxu0
    %3555 = vmatprep.mubr.f32.mxu0 0.0
    %v3556 = vand.u32 %v2762, 4294901760
    %v3557 = vsub.f32 %v2762, %v3556
    %v3558 = vand.u32 %v3557, 4294901760
    %3559 = vmatmul.mubr.f32.gmra.mxu0 %v3558
    %v3560 = vpop.f32.mrf.mxu0
    %v3561 = vadd.f32 %v3374, %v3560
    %v3562 = vpop.f32.mrf.mxu0
    %3563 = vmatprep.mubr.f32.mxu0 0.0
    %v3564 = vand.u32 %v2765, 4294901760
    %v3565 = vsub.f32 %v2765, %v3564
    %v3566 = vand.u32 %v3565, 4294901760
    %3567 = vmatmul.mubr.f32.gmra.mxu0 %v3566
    %v3568 = vpop.f32.mrf.mxu0
    %v3569 = vadd.f32 %v3381, %v3568
    %v3570 = vpop.f32.mrf.mxu0
    %3571 = vmatprep.mubr.f32.mxu0 0.0
    %v3572 = vand.u32 %v2768, 4294901760
    %v3573 = vsub.f32 %v2768, %v3572
    %v3574 = vand.u32 %v3573, 4294901760
    %3575 = vmatmul.mubr.f32.gmra.mxu0 %v3574
    %v3576 = vpop.f32.mrf.mxu0
    %v3577 = vadd.f32 %v3388, %v3576
    %v3578 = vpop.f32.mrf.mxu0
    %3579 = vmatprep.mubr.f32.mxu0 0.0
    %v3580 = vand.u32 %v2771, 4294901760
    %v3581 = vsub.f32 %v2771, %v3580
    %v3582 = vand.u32 %v3581, 4294901760
    %3583 = vmatmul.mubr.f32.gmra.mxu0 %v3582
    %v3584 = vpop.f32.mrf.mxu0
    %v3585 = vadd.f32 %v3395, %v3584
    %v3586 = vpop.f32.mrf.mxu0
    %3587 = vmatprep.mubr.f32.mxu0 0.0
    %v3588 = vand.u32 %v2774, 4294901760
    %v3589 = vsub.f32 %v2774, %v3588
    %v3590 = vand.u32 %v3589, 4294901760
    %3591 = vmatmul.mubr.f32.gmra.mxu0 %v3590
    %v3592 = vpop.f32.mrf.mxu0
    %v3593 = vadd.f32 %v3402, %v3592
    %v3594 = vpop.f32.mrf.mxu0
    %3595 = vdwg.mxu0
    %3596 = vmatprep.subr.mxu0 0.0
    %3597 = vmatpush1.msra.mxu0 0.0
    %3598 = vmatprep.subr.mxu0 0.0
    %3599 = vmatpush1.msra.mxu0 0.0
    %3600 = vmatprep.subr.mxu0 0.0
    %v3601 = vand.u32 %v2635, 4294901760
    %v3602 = vsub.f32 %v2635, %v3601
    %v3603 = vand.u32 %v3602, 4294901760
    %3604 = vmatpush1.msra.mxu0 %v3603
    %3605 = vmatprep.subr.mxu0 0.0
    %v3606 = vand.u32 %v2634, 4294901760
    %v3607 = vsub.f32 %v2634, %v3606
    %v3608 = vand.u32 %v3607, 4294901760
    %3609 = vmatpush1.msra.mxu0 %v3608
    %3610 = vmatprep.subr.mxu0 0.0
    %v3611 = vand.u32 %v2633, 4294901760
    %v3612 = vsub.f32 %v2633, %v3611
    %v3613 = vand.u32 %v3612, 4294901760
    %3614 = vmatpush1.msra.mxu0 %v3613
    %3615 = vmatprep.subr.mxu0 0.0
    %v3616 = vand.u32 %v2632, 4294901760
    %v3617 = vsub.f32 %v2632, %v3616
    %v3618 = vand.u32 %v3617, 4294901760
    %3619 = vmatpush1.msra.mxu0 %v3618
    %3620 = vmatprep.subr.mxu0 0.0
    %v3621 = vand.u32 %v2631, 4294901760
    %v3622 = vsub.f32 %v2631, %v3621
    %v3623 = vand.u32 %v3622, 4294901760
    %3624 = vmatpush1.msra.mxu0 %v3623
    %3625 = vmatprep.subr.mxu0 0.0
    %v3626 = vand.u32 %v2630, 4294901760
    %v3627 = vsub.f32 %v2630, %v3626
    %v3628 = vand.u32 %v3627, 4294901760
    %3629 = vmatpush1.msra.mxu0 %v3628
    %3630 = vmatprep.subr.mxu0 0.0
    %v3631 = vand.u32 %v2629, 4294901760
    %v3632 = vsub.f32 %v2629, %v3631
    %v3633 = vand.u32 %v3632, 4294901760
    %3634 = vmatpush1.msra.mxu0 %v3633
    %3635 = vmatprep.subr.mxu0 0.0
    %v3636 = vand.u32 %v2628, 4294901760
    %v3637 = vsub.f32 %v2628, %v3636
    %v3638 = vand.u32 %v3637, 4294901760
    %3639 = vmatpush1.msra.mxu0 %v3638
    %3640 = vmatprep.subr.mxu0 0.0
    %v3641 = vand.u32 %v2627, 4294901760
    %v3642 = vsub.f32 %v2627, %v3641
    %v3643 = vand.u32 %v3642, 4294901760
    %3644 = vmatpush1.msra.mxu0 %v3643
    %3645 = vmatprep.subr.mxu0 0.0
    %v3646 = vand.u32 %v2626, 4294901760
    %v3647 = vsub.f32 %v2626, %v3646
    %v3648 = vand.u32 %v3647, 4294901760
    %3649 = vmatpush1.msra.mxu0 %v3648
    %3650 = vmatprep.subr.mxu0 0.0
    %v3651 = vand.u32 %v2625, 4294901760
    %v3652 = vsub.f32 %v2625, %v3651
    %v3653 = vand.u32 %v3652, 4294901760
    %3654 = vmatpush1.msra.mxu0 %v3653
    %3655 = vmatprep.subr.mxu0 0.0
    %v3656 = vand.u32 %v2624, 4294901760
    %v3657 = vsub.f32 %v2624, %v3656
    %v3658 = vand.u32 %v3657, 4294901760
    %3659 = vmatpush1.msra.mxu0 %v3658
    %3660 = vmatprep.subr.mxu0 0.0
    %v3661 = vand.u32 %v2623, 4294901760
    %v3662 = vsub.f32 %v2623, %v3661
    %v3663 = vand.u32 %v3662, 4294901760
    %3664 = vmatpush1.msra.mxu0 %v3663
    %3665 = vmatprep.subr.mxu0 0.0
    %v3666 = vand.u32 %v2622, 4294901760
    %v3667 = vsub.f32 %v2622, %v3666
    %v3668 = vand.u32 %v3667, 4294901760
    %3669 = vmatpush1.msra.mxu0 %v3668
    %3670 = vmatprep.subr.mxu0 0.0
    %3671 = vmatpush2.msra.mxu0 0.0
    %3672 = vmatprep.subr.mxu0 0.0
    %3673 = vmatpush2.msra.mxu0 0.0
    %3674 = vmatprep.subr.mxu0 0.0
    %3675 = vmatpush2.msra.mxu0 0.0
    %3676 = vmatprep.subr.mxu0 0.0
    %3677 = vmatpush2.msra.mxu0 0.0
    %3678 = vmatprep.subr.mxu0 0.0
    %3679 = vmatpush2.msra.mxu0 0.0
    %3680 = vmatprep.subr.mxu0 0.0
    %3681 = vmatpush2.msra.mxu0 0.0
    %3682 = vmatprep.subr.mxu0 0.0
    %3683 = vmatpush2.msra.mxu0 0.0
    %3684 = vmatprep.subr.mxu0 0.0
    %3685 = vmatpush2.msra.mxu0 0.0
    %3686 = vmatprep.subr.mxu0 0.0
    %3687 = vmatpush2.msra.mxu0 0.0
    %3688 = vmatprep.subr.mxu0 0.0
    %3689 = vmatpush2.msra.mxu0 0.0
    %3690 = vmatprep.subr.mxu0 0.0
    %3691 = vmatpush2.msra.mxu0 0.0
    %3692 = vmatprep.subr.mxu0 0.0
    %3693 = vmatpush2.msra.mxu0 0.0
    %3694 = vmatprep.subr.mxu0 0.0
    %3695 = vmatpush2.msra.mxu0 0.0
    %3696 = vmatprep.subr.mxu0 0.0
    %3697 = vmatpush2.msra.mxu0 0.0
    %3698 = vmatprep.subr.mxu0 0.0
    %3699 = vmatpush2.msra.mxu0 0.0
    %3700 = vmatprep.subr.mxu0 0.0
    %3701 = vmatpush2.msra.mxu0 0.0
    %3702 = vmatprep.mubr.f32.mxu0 0.0
    %v3703 = vand.u32 %v2735, 4294901760
    %3704 = vmatmul.mubr.f32.gmra.mxu0 %v3703
    %v3705 = vpop.f32.mrf.mxu0
    %v3706 = vadd.f32 %v3489, %v3705
    %v3707 = vpop.f32.mrf.mxu0
    %3708 = vmatprep.mubr.f32.mxu0 0.0
    %v3709 = vand.u32 %v2738, 4294901760
    %3710 = vmatmul.mubr.f32.gmra.mxu0 %v3709
    %v3711 = vpop.f32.mrf.mxu0
    %v3712 = vadd.f32 %v3497, %v3711
    %v3713 = vpop.f32.mrf.mxu0
    %3714 = vmatprep.mubr.f32.mxu0 0.0
    %v3715 = vand.u32 %v2741, 4294901760
    %3716 = vmatmul.mubr.f32.gmra.mxu0 %v3715
    %v3717 = vpop.f32.mrf.mxu0
    %v3718 = vadd.f32 %v3505, %v3717
    %v3719 = vpop.f32.mrf.mxu0
    %3720 = vmatprep.mubr.f32.mxu0 0.0
    %v3721 = vand.u32 %v2744, 4294901760
    %3722 = vmatmul.mubr.f32.gmra.mxu0 %v3721
    %v3723 = vpop.f32.mrf.mxu0
    %v3724 = vadd.f32 %v3513, %v3723
    %v3725 = vpop.f32.mrf.mxu0
    %3726 = vmatprep.mubr.f32.mxu0 0.0
    %v3727 = vand.u32 %v2747, 4294901760
    %3728 = vmatmul.mubr.f32.gmra.mxu0 %v3727
    %v3729 = vpop.f32.mrf.mxu0
    %v3730 = vadd.f32 %v3521, %v3729
    %v3731 = vpop.f32.mrf.mxu0
    %3732 = vmatprep.mubr.f32.mxu0 0.0
    %v3733 = vand.u32 %v2750, 4294901760
    %3734 = vmatmul.mubr.f32.gmra.mxu0 %v3733
    %v3735 = vpop.f32.mrf.mxu0
    %v3736 = vadd.f32 %v3529, %v3735
    %v3737 = vpop.f32.mrf.mxu0
    %3738 = vmatprep.mubr.f32.mxu0 0.0
    %v3739 = vand.u32 %v2753, 4294901760
    %3740 = vmatmul.mubr.f32.gmra.mxu0 %v3739
    %v3741 = vpop.f32.mrf.mxu0
    %v3742 = vadd.f32 %v3537, %v3741
    %v3743 = vpop.f32.mrf.mxu0
    %3744 = vmatprep.mubr.f32.mxu0 0.0
    %v3745 = vand.u32 %v2756, 4294901760
    %3746 = vmatmul.mubr.f32.gmra.mxu0 %v3745
    %v3747 = vpop.f32.mrf.mxu0
    %v3748 = vadd.f32 %v3545, %v3747
    %v3749 = vpop.f32.mrf.mxu0
    %3750 = vmatprep.mubr.f32.mxu0 0.0
    %v3751 = vand.u32 %v2759, 4294901760
    %3752 = vmatmul.mubr.f32.gmra.mxu0 %v3751
    %v3753 = vpop.f32.mrf.mxu0
    %v3754 = vadd.f32 %v3553, %v3753
    %v3755 = vpop.f32.mrf.mxu0
    %3756 = vmatprep.mubr.f32.mxu0 0.0
    %v3757 = vand.u32 %v2762, 4294901760
    %3758 = vmatmul.mubr.f32.gmra.mxu0 %v3757
    %v3759 = vpop.f32.mrf.mxu0
    %v3760 = vadd.f32 %v3561, %v3759
    %v3761 = vpop.f32.mrf.mxu0
    %3762 = vmatprep.mubr.f32.mxu0 0.0
    %v3763 = vand.u32 %v2765, 4294901760
    %3764 = vmatmul.mubr.f32.gmra.mxu0 %v3763
    %v3765 = vpop.f32.mrf.mxu0
    %v3766 = vadd.f32 %v3569, %v3765
    %v3767 = vpop.f32.mrf.mxu0
    %3768 = vmatprep.mubr.f32.mxu0 0.0
    %v3769 = vand.u32 %v2768, 4294901760
    %3770 = vmatmul.mubr.f32.gmra.mxu0 %v3769
    %v3771 = vpop.f32.mrf.mxu0
    %v3772 = vadd.f32 %v3577, %v3771
    %v3773 = vpop.f32.mrf.mxu0
    %3774 = vmatprep.mubr.f32.mxu0 0.0
    %v3775 = vand.u32 %v2771, 4294901760
    %3776 = vmatmul.mubr.f32.gmra.mxu0 %v3775
    %v3777 = vpop.f32.mrf.mxu0
    %v3778 = vadd.f32 %v3585, %v3777
    %v3779 = vpop.f32.mrf.mxu0
    %3780 = vmatprep.mubr.f32.mxu0 0.0
    %v3781 = vand.u32 %v2774, 4294901760
    %3782 = vmatmul.mubr.f32.gmra.mxu0 %v3781
    %v3783 = vpop.f32.mrf.mxu0
    %v3784 = vadd.f32 %v3593, %v3783
    %v3785 = vpop.f32.mrf.mxu0
    %3786 = vdwg.mxu0
    %3787 = vmatprep.subr.mxu0 0.0
    %3788 = vmatpush1.msra.mxu0 0.0
    %3789 = vmatprep.subr.mxu0 0.0
    %3790 = vmatpush1.msra.mxu0 0.0
    %3791 = vmatprep.subr.mxu0 0.0
    %v3792 = vand.u32 %v2635, 4294901760
    %3793 = vmatpush1.msra.mxu0 %v3792
    %3794 = vmatprep.subr.mxu0 0.0
    %v3795 = vand.u32 %v2634, 4294901760
    %3796 = vmatpush1.msra.mxu0 %v3795
    %3797 = vmatprep.subr.mxu0 0.0
    %v3798 = vand.u32 %v2633, 4294901760
    %3799 = vmatpush1.msra.mxu0 %v3798
    %3800 = vmatprep.subr.mxu0 0.0
    %v3801 = vand.u32 %v2632, 4294901760
    %3802 = vmatpush1.msra.mxu0 %v3801
    %3803 = vmatprep.subr.mxu0 0.0
    %v3804 = vand.u32 %v2631, 4294901760
    %3805 = vmatpush1.msra.mxu0 %v3804
    %3806 = vmatprep.subr.mxu0 0.0
    %v3807 = vand.u32 %v2630, 4294901760
    %3808 = vmatpush1.msra.mxu0 %v3807
    %3809 = vmatprep.subr.mxu0 0.0
    %v3810 = vand.u32 %v2629, 4294901760
    %3811 = vmatpush1.msra.mxu0 %v3810
    %3812 = vmatprep.subr.mxu0 0.0
    %v3813 = vand.u32 %v2628, 4294901760
    %3814 = vmatpush1.msra.mxu0 %v3813
    %3815 = vmatprep.subr.mxu0 0.0
    %v3816 = vand.u32 %v2627, 4294901760
    %3817 = vmatpush1.msra.mxu0 %v3816
    %3818 = vmatprep.subr.mxu0 0.0
    %v3819 = vand.u32 %v2626, 4294901760
    %3820 = vmatpush1.msra.mxu0 %v3819
    %3821 = vmatprep.subr.mxu0 0.0
    %v3822 = vand.u32 %v2625, 4294901760
    %3823 = vmatpush1.msra.mxu0 %v3822
    %3824 = vmatprep.subr.mxu0 0.0
    %v3825 = vand.u32 %v2624, 4294901760
    %3826 = vmatpush1.msra.mxu0 %v3825
    %3827 = vmatprep.subr.mxu0 0.0
    %v3828 = vand.u32 %v2623, 4294901760
    %3829 = vmatpush1.msra.mxu0 %v3828
    %3830 = vmatprep.subr.mxu0 0.0
    %v3831 = vand.u32 %v2622, 4294901760
    %3832 = vmatpush1.msra.mxu0 %v3831
    %3833 = vmatprep.subr.mxu0 0.0
    %3834 = vmatpush2.msra.mxu0 0.0
    %3835 = vmatprep.subr.mxu0 0.0
    %3836 = vmatpush2.msra.mxu0 0.0
    %3837 = vmatprep.subr.mxu0 0.0
    %3838 = vmatpush2.msra.mxu0 0.0
    %3839 = vmatprep.subr.mxu0 0.0
    %3840 = vmatpush2.msra.mxu0 0.0
    %3841 = vmatprep.subr.mxu0 0.0
    %3842 = vmatpush2.msra.mxu0 0.0
    %3843 = vmatprep.subr.mxu0 0.0
    %3844 = vmatpush2.msra.mxu0 0.0
    %3845 = vmatprep.subr.mxu0 0.0
    %3846 = vmatpush2.msra.mxu0 0.0
    %3847 = vmatprep.subr.mxu0 0.0
    %3848 = vmatpush2.msra.mxu0 0.0
    %3849 = vmatprep.subr.mxu0 0.0
    %3850 = vmatpush2.msra.mxu0 0.0
    %3851 = vmatprep.subr.mxu0 0.0
    %3852 = vmatpush2.msra.mxu0 0.0
    %3853 = vmatprep.subr.mxu0 0.0
    %3854 = vmatpush2.msra.mxu0 0.0
    %3855 = vmatprep.subr.mxu0 0.0
    %3856 = vmatpush2.msra.mxu0 0.0
    %3857 = vmatprep.subr.mxu0 0.0
    %3858 = vmatpush2.msra.mxu0 0.0
    %3859 = vmatprep.subr.mxu0 0.0
    %3860 = vmatpush2.msra.mxu0 0.0
    %3861 = vmatprep.subr.mxu0 0.0
    %3862 = vmatpush2.msra.mxu0 0.0
    %3863 = vmatprep.subr.mxu0 0.0
    %3864 = vmatpush2.msra.mxu0 0.0
    %3865 = vmatprep.mubr.f32.mxu0 0.0
    %v3866 = vand.u32 %v2735, 4294901760
    %3867 = vmatmul.mubr.f32.gmra.mxu0 %v3866
    %v3868 = vpop.f32.mrf.mxu0
    %v3869 = vadd.f32 %v3706, %v3868
    %v3870 = vpop.f32.mrf.mxu0
    %3871 = vmatprep.mubr.f32.mxu0 0.0
    %v3872 = vand.u32 %v2738, 4294901760
    %3873 = vmatmul.mubr.f32.gmra.mxu0 %v3872
    %v3874 = vpop.f32.mrf.mxu0
    %v3875 = vadd.f32 %v3712, %v3874
    %v3876 = vpop.f32.mrf.mxu0
    %3877 = vmatprep.mubr.f32.mxu0 0.0
    %v3878 = vand.u32 %v2741, 4294901760
    %3879 = vmatmul.mubr.f32.gmra.mxu0 %v3878
    %v3880 = vpop.f32.mrf.mxu0
    %v3881 = vadd.f32 %v3718, %v3880
    %v3882 = vpop.f32.mrf.mxu0
    %3883 = vmatprep.mubr.f32.mxu0 0.0
    %v3884 = vand.u32 %v2744, 4294901760
    %3885 = vmatmul.mubr.f32.gmra.mxu0 %v3884
    %v3886 = vpop.f32.mrf.mxu0
    %v3887 = vadd.f32 %v3724, %v3886
    %v3888 = vpop.f32.mrf.mxu0
    %3889 = vmatprep.mubr.f32.mxu0 0.0
    %v3890 = vand.u32 %v2747, 4294901760
    %3891 = vmatmul.mubr.f32.gmra.mxu0 %v3890
    %v3892 = vpop.f32.mrf.mxu0
    %v3893 = vadd.f32 %v3730, %v3892
    %v3894 = vpop.f32.mrf.mxu0
    %3895 = vmatprep.mubr.f32.mxu0 0.0
    %v3896 = vand.u32 %v2750, 4294901760
    %3897 = vmatmul.mubr.f32.gmra.mxu0 %v3896
    %v3898 = vpop.f32.mrf.mxu0
    %v3899 = vadd.f32 %v3736, %v3898
    %v3900 = vpop.f32.mrf.mxu0
    %3901 = vmatprep.mubr.f32.mxu0 0.0
    %v3902 = vand.u32 %v2753, 4294901760
    %3903 = vmatmul.mubr.f32.gmra.mxu0 %v3902
    %v3904 = vpop.f32.mrf.mxu0
    %v3905 = vadd.f32 %v3742, %v3904
    %v3906 = vpop.f32.mrf.mxu0
    %3907 = vmatprep.mubr.f32.mxu0 0.0
    %v3908 = vand.u32 %v2756, 4294901760
    %3909 = vmatmul.mubr.f32.gmra.mxu0 %v3908
    %v3910 = vpop.f32.mrf.mxu0
    %v3911 = vadd.f32 %v3748, %v3910
    %v3912 = vpop.f32.mrf.mxu0
    %3913 = vmatprep.mubr.f32.mxu0 0.0
    %v3914 = vand.u32 %v2759, 4294901760
    %3915 = vmatmul.mubr.f32.gmra.mxu0 %v3914
    %v3916 = vpop.f32.mrf.mxu0
    %v3917 = vadd.f32 %v3754, %v3916
    %v3918 = vpop.f32.mrf.mxu0
    %3919 = vmatprep.mubr.f32.mxu0 0.0
    %v3920 = vand.u32 %v2762, 4294901760
    %3921 = vmatmul.mubr.f32.gmra.mxu0 %v3920
    %v3922 = vpop.f32.mrf.mxu0
    %v3923 = vadd.f32 %v3760, %v3922
    %v3924 = vpop.f32.mrf.mxu0
    %3925 = vmatprep.mubr.f32.mxu0 0.0
    %v3926 = vand.u32 %v2765, 4294901760
    %3927 = vmatmul.mubr.f32.gmra.mxu0 %v3926
    %v3928 = vpop.f32.mrf.mxu0
    %v3929 = vadd.f32 %v3766, %v3928
    %v3930 = vpop.f32.mrf.mxu0
    %3931 = vmatprep.mubr.f32.mxu0 0.0
    %v3932 = vand.u32 %v2768, 4294901760
    %3933 = vmatmul.mubr.f32.gmra.mxu0 %v3932
    %v3934 = vpop.f32.mrf.mxu0
    %v3935 = vadd.f32 %v3772, %v3934
    %v3936 = vpop.f32.mrf.mxu0
    %3937 = vmatprep.mubr.f32.mxu0 0.0
    %v3938 = vand.u32 %v2771, 4294901760
    %3939 = vmatmul.mubr.f32.gmra.mxu0 %v3938
    %v3940 = vpop.f32.mrf.mxu0
    %v3941 = vadd.f32 %v3778, %v3940
    %v3942 = vpop.f32.mrf.mxu0
    %3943 = vmatprep.mubr.f32.mxu0 0.0
    %v3944 = vand.u32 %v2774, 4294901760
    %3945 = vmatmul.mubr.f32.gmra.mxu0 %v3944
    %v3946 = vpop.f32.mrf.mxu0
    %v3947 = vadd.f32 %v3784, %v3946
    %v3948 = vpop.f32.mrf.mxu0
    %3949 = vdwg.mxu0
    %vm3950 = vcmp.gt.f32.partialorder %v3869, 0.0
    %vm3951 = vcmp.gt.f32.partialorder %v3875, 0.0
    %vm3952 = vcmp.gt.f32.partialorder %v3881, 0.0
    %vm3953 = vcmp.gt.f32.partialorder %v3887, 0.0
    %vm3954 = vcmp.gt.f32.partialorder %v3893, 0.0
    %vm3955 = vcmp.gt.f32.partialorder %v3899, 0.0
    %vm3956 = vcmp.gt.f32.partialorder %v3905, 0.0
    %vm3957 = vcmp.gt.f32.partialorder %v3911, 0.0
    %vm3958 = vcmp.gt.f32.partialorder %v3917, 0.0
    %vm3959 = vcmp.gt.f32.partialorder %v3923, 0.0
    %vm3960 = vcmp.gt.f32.partialorder %v3929, 0.0
    %vm3961 = vcmp.gt.f32.partialorder %v3935, 0.0
    %vm3962 = vcmp.gt.f32.partialorder %v3941, 0.0
    %vm3963 = vcmp.gt.f32.partialorder %v3947, 0.0
    %v3964 = vmul.f32 %v3869, 0.3
    %v3965 = vmul.f32 %v3875, 0.3
    %v3966 = vmul.f32 %v3881, 0.3
    %v3967 = vmul.f32 %v3887, 0.3
    %v3968 = vmul.f32 %v3893, 0.3
    %v3969 = vmul.f32 %v3899, 0.3
    %v3970 = vmul.f32 %v3905, 0.3
    %v3971 = vmul.f32 %v3911, 0.3
    %v3972 = vmul.f32 %v3917, 0.3
    %v3973 = vmul.f32 %v3923, 0.3
    %v3974 = vmul.f32 %v3929, 0.3
    %v3975 = vmul.f32 %v3935, 0.3
    %v3976 = vmul.f32 %v3941, 0.3
    %v3977 = vmul.f32 %v3947, 0.3
    %v3978 = vsel %vm3950, %v3869, %v3964
    %v3979 = vsel %vm3951, %v3875, %v3965
    %v3980 = vsel %vm3952, %v3881, %v3966
    %v3981 = vsel %vm3953, %v3887, %v3967
    %v3982 = vsel %vm3954, %v3893, %v3968
    %v3983 = vsel %vm3955, %v3899, %v3969
    %v3984 = vsel %vm3956, %v3905, %v3970
    %v3985 = vsel %vm3957, %v3911, %v3971
    %v3986 = vsel %vm3958, %v3917, %v3972
    %v3987 = vsel %vm3959, %v3923, %v3973
    %v3988 = vsel %vm3960, %v3929, %v3974
    %v3989 = vsel %vm3961, %v3935, %v3975
    %v3990 = vsel %vm3962, %v3941, %v3976
    %v3991 = vsel %vm3963, %v3947, %v3977
    %v3992 = vld [vmem:[%s7] sm:$0xff]
    %v3993 = vld [vmem:[%s7 + $0x8] sm:$0xff]
    %v3994 = vld [vmem:[%s7 + $0x10] sm:$0xff]
    %v3995 = vld [vmem:[%s7 + $0x18] sm:$0xff]
    %v3996 = vld [vmem:[%s7 + $0x20] sm:$0xff]
    %v3997 = vld [vmem:[%s7 + $0x28] sm:$0xff]
    %v3998 = vld [vmem:[%s7 + $0x30] sm:$0xff]
    %v3999 = vld [vmem:[%s7 + $0x38] sm:$0xff]
    %v4000 = vld [vmem:[%s7 + $0x40] sm:$0xff]
    %v4001 = vld [vmem:[%s7 + $0x48] sm:$0xff]
    %v4002 = vld [vmem:[%s7 + $0x50] sm:$0xff]
    %v4003 = vld [vmem:[%s7 + $0x58] sm:$0xff]
    %v4004 = vld [vmem:[%s7 + $0x60] sm:$0xff]
    %v4005 = vld [vmem:[%s7 + $0x68] sm:$0xff]
    %v4006 = vld [vmem:[%s8] sm:$0xff]
    %v4007 = vld [vmem:[%s8 + $0x8] sm:$0xff]
    %v4008 = vld [vmem:[%s8 + $0x10] sm:$0xff]
    %v4009 = vld [vmem:[%s8 + $0x18] sm:$0xff]
    %v4010 = vld [vmem:[%s8 + $0x20] sm:$0xff]
    %v4011 = vld [vmem:[%s8 + $0x28] sm:$0xff]
    %v4012 = vld [vmem:[%s8 + $0x30] sm:$0xff]
    %v4013 = vld [vmem:[%s8 + $0x38] sm:$0xff]
    %v4014 = vld [vmem:[%s8 + $0x40] sm:$0xff]
    %v4015 = vld [vmem:[%s8 + $0x48] sm:$0xff]
    %v4016 = vld [vmem:[%s8 + $0x50] sm:$0xff]
    %v4017 = vld [vmem:[%s8 + $0x58] sm:$0xff]
    %v4018 = vld [vmem:[%s8 + $0x60] sm:$0xff]
    %v4019 = vld [vmem:[%s8 + $0x68] sm:$0xff]
    %4021 = vset.pattern.permute.xlu0 0
    %4022 = vperm.xlu0 %4021, %v4006
    %v4023 = vpop.permute.xlu0 %4022
    %4026 = vset.pattern.permute.xlu0 0
    %4027 = vperm.xlu0 %4026, %v4007
    %v4028 = vpop.permute.xlu0 %4027
    %4031 = vset.pattern.permute.xlu0 0
    %4032 = vperm.xlu0 %4031, %v4008
    %v4033 = vpop.permute.xlu0 %4032
    %4036 = vset.pattern.permute.xlu0 0
    %4037 = vperm.xlu0 %4036, %v4009
    %v4038 = vpop.permute.xlu0 %4037
    %4041 = vset.pattern.permute.xlu0 0
    %4042 = vperm.xlu0 %4041, %v4010
    %v4043 = vpop.permute.xlu0 %4042
    %4046 = vset.pattern.permute.xlu0 0
    %4047 = vperm.xlu0 %4046, %v4011
    %v4048 = vpop.permute.xlu0 %4047
    %4051 = vset.pattern.permute.xlu0 0
    %4052 = vperm.xlu0 %4051, %v4012
    %v4053 = vpop.permute.xlu0 %4052
    %4056 = vset.pattern.permute.xlu0 0
    %4057 = vperm.xlu0 %4056, %v4013
    %v4058 = vpop.permute.xlu0 %4057
    %4061 = vset.pattern.permute.xlu0 0
    %4062 = vperm.xlu0 %4061, %v4014
    %v4063 = vpop.permute.xlu0 %4062
    %4066 = vset.pattern.permute.xlu0 0
    %4067 = vperm.xlu0 %4066, %v4015
    %v4068 = vpop.permute.xlu0 %4067
    %4071 = vset.pattern.permute.xlu0 0
    %4072 = vperm.xlu0 %4071, %v4016
    %v4073 = vpop.permute.xlu0 %4072
    %4076 = vset.pattern.permute.xlu0 0
    %4077 = vperm.xlu0 %4076, %v4017
    %v4078 = vpop.permute.xlu0 %4077
    %4081 = vset.pattern.permute.xlu0 0
    %4082 = vperm.xlu0 %4081, %v4018
    %v4083 = vpop.permute.xlu0 %4082
    %4086 = vset.pattern.permute.xlu0 0
    %4087 = vperm.xlu0 %4086, %v4019
    %v4088 = vpop.permute.xlu0 %4087
    %v4091 = vsel %vm150, %v3992, 0
    %v4094 = vsel %vm150, %v3993, 0
    %v4097 = vsel %vm150, %v3994, 0
    %v4100 = vsel %vm150, %v3995, 0
    %v4103 = vsel %vm150, %v3996, 0
    %v4106 = vsel %vm150, %v3997, 0
    %v4109 = vsel %vm150, %v3998, 0
    %v4112 = vsel %vm150, %v3999, 0
    %v4115 = vsel %vm150, %v4000, 0
    %v4118 = vsel %vm150, %v4001, 0
    %v4121 = vsel %vm150, %v4002, 0
    %v4124 = vsel %vm150, %v4003, 0
    %v4127 = vsel %vm150, %v4004, 0
    %v4130 = vsel %vm150, %v4005, 0
    %4132 = vmatprep.subr.mxu0 0.0
    %4133 = vmatpush1.msra.mxu0 0.0
    %4134 = vmatprep.subr.mxu0 0.0
    %4135 = vmatpush1.msra.mxu0 0.0
    %4136 = vmatprep.subr.mxu0 0.0
    %4137 = vmatpush1.msra.mxu0 0.0
    %4138 = vmatprep.subr.mxu0 0.0
    %4139 = vmatpush1.msra.mxu0 0.0
    %4140 = vmatprep.subr.mxu0 0.0
    %4141 = vmatpush1.msra.mxu0 0.0
    %4142 = vmatprep.subr.mxu0 0.0
    %4143 = vmatpush1.msra.mxu0 0.0
    %4144 = vmatprep.subr.mxu0 0.0
    %4145 = vmatpush1.msra.mxu0 0.0
    %4146 = vmatprep.subr.mxu0 0.0
    %4147 = vmatpush1.msra.mxu0 0.0
    %4148 = vmatprep.subr.mxu0 0.0
    %4149 = vmatpush1.msra.mxu0 0.0
    %4150 = vmatprep.subr.mxu0 0.0
    %4151 = vmatpush1.msra.mxu0 0.0
    %4152 = vmatprep.subr.mxu0 0.0
    %4153 = vmatpush1.msra.mxu0 0.0
    %4154 = vmatprep.subr.mxu0 0.0
    %4155 = vmatpush1.msra.mxu0 0.0
    %4156 = vmatprep.subr.mxu0 0.0
    %v4157 = vand.u32 %v51, 4294901760
    %4158 = vmatpush1.msra.mxu0 %v4157
    %4159 = vmatprep.subr.mxu0 0.0
    %v4160 = vand.u32 %v50, 4294901760
    %4161 = vmatpush1.msra.mxu0 %v4160
    %4162 = vmatprep.subr.mxu0 0.0
    %v4163 = vand.u32 %v49, 4294901760
    %4164 = vmatpush1.msra.mxu0 %v4163
    %4165 = vmatprep.subr.mxu0 0.0
    %v4166 = vand.u32 %v48, 4294901760
    %4167 = vmatpush1.msra.mxu0 %v4166
    %4168 = vmatprep.subr.mxu0 0.0
    %4169 = vmatpush2.msra.mxu0 0.0
    %4170 = vmatprep.subr.mxu0 0.0
    %4171 = vmatpush2.msra.mxu0 0.0
    %4172 = vmatprep.subr.mxu0 0.0
    %4173 = vmatpush2.msra.mxu0 0.0
    %4174 = vmatprep.subr.mxu0 0.0
    %4175 = vmatpush2.msra.mxu0 0.0
    %4176 = vmatprep.subr.mxu0 0.0
    %4177 = vmatpush2.msra.mxu0 0.0
    %4178 = vmatprep.subr.mxu0 0.0
    %4179 = vmatpush2.msra.mxu0 0.0
    %4180 = vmatprep.subr.mxu0 0.0
    %4181 = vmatpush2.msra.mxu0 0.0
    %4182 = vmatprep.subr.mxu0 0.0
    %4183 = vmatpush2.msra.mxu0 0.0
    %4184 = vmatprep.subr.mxu0 0.0
    %4185 = vmatpush2.msra.mxu0 0.0
    %4186 = vmatprep.subr.mxu0 0.0
    %4187 = vmatpush2.msra.mxu0 0.0
    %4188 = vmatprep.subr.mxu0 0.0
    %4189 = vmatpush2.msra.mxu0 0.0
    %4190 = vmatprep.subr.mxu0 0.0
    %4191 = vmatpush2.msra.mxu0 0.0
    %4192 = vmatprep.subr.mxu0 0.0
    %4193 = vmatpush2.msra.mxu0 0.0
    %4194 = vmatprep.subr.mxu0 0.0
    %4195 = vmatpush2.msra.mxu0 0.0
    %4196 = vmatprep.subr.mxu0 0.0
    %4197 = vmatpush2.msra.mxu0 0.0
    %4198 = vmatprep.subr.mxu0 0.0
    %4199 = vmatpush2.msra.mxu0 0.0
    %4200 = vmatprep.mubr.f32.mxu0 0.0
    %v4201 = vand.u32 %v4091, 4294901760
    %v4202 = vsub.f32 %v4091, %v4201
    %v4203 = vand.u32 %v4202, 4294901760
    %v4204 = vsub.f32 %v4202, %v4203
    %v4205 = vand.u32 %v4204, 4294901760
    %4206 = vmatmul.mubr.f32.gmra.mxu0 %v4205
    %v4207 = vpop.f32.mrf.mxu0
    %v4208 = vadd.f32 %v4023, %v4207
    %v4209 = vpop.f32.mrf.mxu0
    %4210 = vmatprep.mubr.f32.mxu0 0.0
    %v4211 = vand.u32 %v4094, 4294901760
    %v4212 = vsub.f32 %v4094, %v4211
    %v4213 = vand.u32 %v4212, 4294901760
    %v4214 = vsub.f32 %v4212, %v4213
    %v4215 = vand.u32 %v4214, 4294901760
    %4216 = vmatmul.mubr.f32.gmra.mxu0 %v4215
    %v4217 = vpop.f32.mrf.mxu0
    %v4218 = vadd.f32 %v4028, %v4217
    %v4219 = vpop.f32.mrf.mxu0
    %4220 = vmatprep.mubr.f32.mxu0 0.0
    %v4221 = vand.u32 %v4097, 4294901760
    %v4222 = vsub.f32 %v4097, %v4221
    %v4223 = vand.u32 %v4222, 4294901760
    %v4224 = vsub.f32 %v4222, %v4223
    %v4225 = vand.u32 %v4224, 4294901760
    %4226 = vmatmul.mubr.f32.gmra.mxu0 %v4225
    %v4227 = vpop.f32.mrf.mxu0
    %v4228 = vadd.f32 %v4033, %v4227
    %v4229 = vpop.f32.mrf.mxu0
    %4230 = vmatprep.mubr.f32.mxu0 0.0
    %v4231 = vand.u32 %v4100, 4294901760
    %v4232 = vsub.f32 %v4100, %v4231
    %v4233 = vand.u32 %v4232, 4294901760
    %v4234 = vsub.f32 %v4232, %v4233
    %v4235 = vand.u32 %v4234, 4294901760
    %4236 = vmatmul.mubr.f32.gmra.mxu0 %v4235
    %v4237 = vpop.f32.mrf.mxu0
    %v4238 = vadd.f32 %v4038, %v4237
    %v4239 = vpop.f32.mrf.mxu0
    %4240 = vmatprep.mubr.f32.mxu0 0.0
    %v4241 = vand.u32 %v4103, 4294901760
    %v4242 = vsub.f32 %v4103, %v4241
    %v4243 = vand.u32 %v4242, 4294901760
    %v4244 = vsub.f32 %v4242, %v4243
    %v4245 = vand.u32 %v4244, 4294901760
    %4246 = vmatmul.mubr.f32.gmra.mxu0 %v4245
    %v4247 = vpop.f32.mrf.mxu0
    %v4248 = vadd.f32 %v4043, %v4247
    %v4249 = vpop.f32.mrf.mxu0
    %4250 = vmatprep.mubr.f32.mxu0 0.0
    %v4251 = vand.u32 %v4106, 4294901760
    %v4252 = vsub.f32 %v4106, %v4251
    %v4253 = vand.u32 %v4252, 4294901760
    %v4254 = vsub.f32 %v4252, %v4253
    %v4255 = vand.u32 %v4254, 4294901760
    %4256 = vmatmul.mubr.f32.gmra.mxu0 %v4255
    %v4257 = vpop.f32.mrf.mxu0
    %v4258 = vadd.f32 %v4048, %v4257
    %v4259 = vpop.f32.mrf.mxu0
    %4260 = vmatprep.mubr.f32.mxu0 0.0
    %v4261 = vand.u32 %v4109, 4294901760
    %v4262 = vsub.f32 %v4109, %v4261
    %v4263 = vand.u32 %v4262, 4294901760
    %v4264 = vsub.f32 %v4262, %v4263
    %v4265 = vand.u32 %v4264, 4294901760
    %4266 = vmatmul.mubr.f32.gmra.mxu0 %v4265
    %v4267 = vpop.f32.mrf.mxu0
    %v4268 = vadd.f32 %v4053, %v4267
    %v4269 = vpop.f32.mrf.mxu0
    %4270 = vmatprep.mubr.f32.mxu0 0.0
    %v4271 = vand.u32 %v4112, 4294901760
    %v4272 = vsub.f32 %v4112, %v4271
    %v4273 = vand.u32 %v4272, 4294901760
    %v4274 = vsub.f32 %v4272, %v4273
    %v4275 = vand.u32 %v4274, 4294901760
    %4276 = vmatmul.mubr.f32.gmra.mxu0 %v4275
    %v4277 = vpop.f32.mrf.mxu0
    %v4278 = vadd.f32 %v4058, %v4277
    %v4279 = vpop.f32.mrf.mxu0
    %4280 = vmatprep.mubr.f32.mxu0 0.0
    %v4281 = vand.u32 %v4115, 4294901760
    %v4282 = vsub.f32 %v4115, %v4281
    %v4283 = vand.u32 %v4282, 4294901760
    %v4284 = vsub.f32 %v4282, %v4283
    %v4285 = vand.u32 %v4284, 4294901760
    %4286 = vmatmul.mubr.f32.gmra.mxu0 %v4285
    %v4287 = vpop.f32.mrf.mxu0
    %v4288 = vadd.f32 %v4063, %v4287
    %v4289 = vpop.f32.mrf.mxu0
    %4290 = vmatprep.mubr.f32.mxu0 0.0
    %v4291 = vand.u32 %v4118, 4294901760
    %v4292 = vsub.f32 %v4118, %v4291
    %v4293 = vand.u32 %v4292, 4294901760
    %v4294 = vsub.f32 %v4292, %v4293
    %v4295 = vand.u32 %v4294, 4294901760
    %4296 = vmatmul.mubr.f32.gmra.mxu0 %v4295
    %v4297 = vpop.f32.mrf.mxu0
    %v4298 = vadd.f32 %v4068, %v4297
    %v4299 = vpop.f32.mrf.mxu0
    %4300 = vmatprep.mubr.f32.mxu0 0.0
    %v4301 = vand.u32 %v4121, 4294901760
    %v4302 = vsub.f32 %v4121, %v4301
    %v4303 = vand.u32 %v4302, 4294901760
    %v4304 = vsub.f32 %v4302, %v4303
    %v4305 = vand.u32 %v4304, 4294901760
    %4306 = vmatmul.mubr.f32.gmra.mxu0 %v4305
    %v4307 = vpop.f32.mrf.mxu0
    %v4308 = vadd.f32 %v4073, %v4307
    %v4309 = vpop.f32.mrf.mxu0
    %4310 = vmatprep.mubr.f32.mxu0 0.0
    %v4311 = vand.u32 %v4124, 4294901760
    %v4312 = vsub.f32 %v4124, %v4311
    %v4313 = vand.u32 %v4312, 4294901760
    %v4314 = vsub.f32 %v4312, %v4313
    %v4315 = vand.u32 %v4314, 4294901760
    %4316 = vmatmul.mubr.f32.gmra.mxu0 %v4315
    %v4317 = vpop.f32.mrf.mxu0
    %v4318 = vadd.f32 %v4078, %v4317
    %v4319 = vpop.f32.mrf.mxu0
    %4320 = vmatprep.mubr.f32.mxu0 0.0
    %v4321 = vand.u32 %v4127, 4294901760
    %v4322 = vsub.f32 %v4127, %v4321
    %v4323 = vand.u32 %v4322, 4294901760
    %v4324 = vsub.f32 %v4322, %v4323
    %v4325 = vand.u32 %v4324, 4294901760
    %4326 = vmatmul.mubr.f32.gmra.mxu0 %v4325
    %v4327 = vpop.f32.mrf.mxu0
    %v4328 = vadd.f32 %v4083, %v4327
    %v4329 = vpop.f32.mrf.mxu0
    %4330 = vmatprep.mubr.f32.mxu0 0.0
    %v4331 = vand.u32 %v4130, 4294901760
    %v4332 = vsub.f32 %v4130, %v4331
    %v4333 = vand.u32 %v4332, 4294901760
    %v4334 = vsub.f32 %v4332, %v4333
    %v4335 = vand.u32 %v4334, 4294901760
    %4336 = vmatmul.mubr.f32.gmra.mxu0 %v4335
    %v4337 = vpop.f32.mrf.mxu0
    %v4338 = vadd.f32 %v4088, %v4337
    %v4339 = vpop.f32.mrf.mxu0
    %4340 = vdwg.mxu0
    %4341 = vmatprep.subr.mxu0 0.0
    %4342 = vmatpush1.msra.mxu0 0.0
    %4343 = vmatprep.subr.mxu0 0.0
    %4344 = vmatpush1.msra.mxu0 0.0
    %4345 = vmatprep.subr.mxu0 0.0
    %4346 = vmatpush1.msra.mxu0 0.0
    %4347 = vmatprep.subr.mxu0 0.0
    %4348 = vmatpush1.msra.mxu0 0.0
    %4349 = vmatprep.subr.mxu0 0.0
    %4350 = vmatpush1.msra.mxu0 0.0
    %4351 = vmatprep.subr.mxu0 0.0
    %4352 = vmatpush1.msra.mxu0 0.0
    %4353 = vmatprep.subr.mxu0 0.0
    %4354 = vmatpush1.msra.mxu0 0.0
    %4355 = vmatprep.subr.mxu0 0.0
    %4356 = vmatpush1.msra.mxu0 0.0
    %4357 = vmatprep.subr.mxu0 0.0
    %4358 = vmatpush1.msra.mxu0 0.0
    %4359 = vmatprep.subr.mxu0 0.0
    %4360 = vmatpush1.msra.mxu0 0.0
    %4361 = vmatprep.subr.mxu0 0.0
    %4362 = vmatpush1.msra.mxu0 0.0
    %4363 = vmatprep.subr.mxu0 0.0
    %4364 = vmatpush1.msra.mxu0 0.0
    %4365 = vmatprep.subr.mxu0 0.0
    %v4366 = vand.u32 %v51, 4294901760
    %v4367 = vsub.f32 %v51, %v4366
    %v4368 = vand.u32 %v4367, 4294901760
    %v4369 = vsub.f32 %v4367, %v4368
    %v4370 = vand.u32 %v4369, 4294901760
    %4371 = vmatpush1.msra.mxu0 %v4370
    %4372 = vmatprep.subr.mxu0 0.0
    %v4373 = vand.u32 %v50, 4294901760
    %v4374 = vsub.f32 %v50, %v4373
    %v4375 = vand.u32 %v4374, 4294901760
    %v4376 = vsub.f32 %v4374, %v4375
    %v4377 = vand.u32 %v4376, 4294901760
    %4378 = vmatpush1.msra.mxu0 %v4377
    %4379 = vmatprep.subr.mxu0 0.0
    %v4380 = vand.u32 %v49, 4294901760
    %v4381 = vsub.f32 %v49, %v4380
    %v4382 = vand.u32 %v4381, 4294901760
    %v4383 = vsub.f32 %v4381, %v4382
    %v4384 = vand.u32 %v4383, 4294901760
    %4385 = vmatpush1.msra.mxu0 %v4384
    %4386 = vmatprep.subr.mxu0 0.0
    %v4387 = vand.u32 %v48, 4294901760
    %v4388 = vsub.f32 %v48, %v4387
    %v4389 = vand.u32 %v4388, 4294901760
    %v4390 = vsub.f32 %v4388, %v4389
    %v4391 = vand.u32 %v4390, 4294901760
    %4392 = vmatpush1.msra.mxu0 %v4391
    %4393 = vmatprep.subr.mxu0 0.0
    %4394 = vmatpush2.msra.mxu0 0.0
    %4395 = vmatprep.subr.mxu0 0.0
    %4396 = vmatpush2.msra.mxu0 0.0
    %4397 = vmatprep.subr.mxu0 0.0
    %4398 = vmatpush2.msra.mxu0 0.0
    %4399 = vmatprep.subr.mxu0 0.0
    %4400 = vmatpush2.msra.mxu0 0.0
    %4401 = vmatprep.subr.mxu0 0.0
    %4402 = vmatpush2.msra.mxu0 0.0
    %4403 = vmatprep.subr.mxu0 0.0
    %4404 = vmatpush2.msra.mxu0 0.0
    %4405 = vmatprep.subr.mxu0 0.0
    %4406 = vmatpush2.msra.mxu0 0.0
    %4407 = vmatprep.subr.mxu0 0.0
    %4408 = vmatpush2.msra.mxu0 0.0
    %4409 = vmatprep.subr.mxu0 0.0
    %4410 = vmatpush2.msra.mxu0 0.0
    %4411 = vmatprep.subr.mxu0 0.0
    %4412 = vmatpush2.msra.mxu0 0.0
    %4413 = vmatprep.subr.mxu0 0.0
    %4414 = vmatpush2.msra.mxu0 0.0
    %4415 = vmatprep.subr.mxu0 0.0
    %4416 = vmatpush2.msra.mxu0 0.0
    %4417 = vmatprep.subr.mxu0 0.0
    %4418 = vmatpush2.msra.mxu0 0.0
    %4419 = vmatprep.subr.mxu0 0.0
    %4420 = vmatpush2.msra.mxu0 0.0
    %4421 = vmatprep.subr.mxu0 0.0
    %4422 = vmatpush2.msra.mxu0 0.0
    %4423 = vmatprep.subr.mxu0 0.0
    %4424 = vmatpush2.msra.mxu0 0.0
    %4425 = vmatprep.mubr.f32.mxu0 0.0
    %v4426 = vand.u32 %v4091, 4294901760
    %4427 = vmatmul.mubr.f32.gmra.mxu0 %v4426
    %v4428 = vpop.f32.mrf.mxu0
    %v4429 = vadd.f32 %v4208, %v4428
    %v4430 = vpop.f32.mrf.mxu0
    %4431 = vmatprep.mubr.f32.mxu0 0.0
    %v4432 = vand.u32 %v4094, 4294901760
    %4433 = vmatmul.mubr.f32.gmra.mxu0 %v4432
    %v4434 = vpop.f32.mrf.mxu0
    %v4435 = vadd.f32 %v4218, %v4434
    %v4436 = vpop.f32.mrf.mxu0
    %4437 = vmatprep.mubr.f32.mxu0 0.0
    %v4438 = vand.u32 %v4097, 4294901760
    %4439 = vmatmul.mubr.f32.gmra.mxu0 %v4438
    %v4440 = vpop.f32.mrf.mxu0
    %v4441 = vadd.f32 %v4228, %v4440
    %v4442 = vpop.f32.mrf.mxu0
    %4443 = vmatprep.mubr.f32.mxu0 0.0
    %v4444 = vand.u32 %v4100, 4294901760
    %4445 = vmatmul.mubr.f32.gmra.mxu0 %v4444
    %v4446 = vpop.f32.mrf.mxu0
    %v4447 = vadd.f32 %v4238, %v4446
    %v4448 = vpop.f32.mrf.mxu0
    %4449 = vmatprep.mubr.f32.mxu0 0.0
    %v4450 = vand.u32 %v4103, 4294901760
    %4451 = vmatmul.mubr.f32.gmra.mxu0 %v4450
    %v4452 = vpop.f32.mrf.mxu0
    %v4453 = vadd.f32 %v4248, %v4452
    %v4454 = vpop.f32.mrf.mxu0
    %4455 = vmatprep.mubr.f32.mxu0 0.0
    %v4456 = vand.u32 %v4106, 4294901760
    %4457 = vmatmul.mubr.f32.gmra.mxu0 %v4456
    %v4458 = vpop.f32.mrf.mxu0
    %v4459 = vadd.f32 %v4258, %v4458
    %v4460 = vpop.f32.mrf.mxu0
    %4461 = vmatprep.mubr.f32.mxu0 0.0
    %v4462 = vand.u32 %v4109, 4294901760
    %4463 = vmatmul.mubr.f32.gmra.mxu0 %v4462
    %v4464 = vpop.f32.mrf.mxu0
    %v4465 = vadd.f32 %v4268, %v4464
    %v4466 = vpop.f32.mrf.mxu0
    %4467 = vmatprep.mubr.f32.mxu0 0.0
    %v4468 = vand.u32 %v4112, 4294901760
    %4469 = vmatmul.mubr.f32.gmra.mxu0 %v4468
    %v4470 = vpop.f32.mrf.mxu0
    %v4471 = vadd.f32 %v4278, %v4470
    %v4472 = vpop.f32.mrf.mxu0
    %4473 = vmatprep.mubr.f32.mxu0 0.0
    %v4474 = vand.u32 %v4115, 4294901760
    %4475 = vmatmul.mubr.f32.gmra.mxu0 %v4474
    %v4476 = vpop.f32.mrf.mxu0
    %v4477 = vadd.f32 %v4288, %v4476
    %v4478 = vpop.f32.mrf.mxu0
    %4479 = vmatprep.mubr.f32.mxu0 0.0
    %v4480 = vand.u32 %v4118, 4294901760
    %4481 = vmatmul.mubr.f32.gmra.mxu0 %v4480
    %v4482 = vpop.f32.mrf.mxu0
    %v4483 = vadd.f32 %v4298, %v4482
    %v4484 = vpop.f32.mrf.mxu0
    %4485 = vmatprep.mubr.f32.mxu0 0.0
    %v4486 = vand.u32 %v4121, 4294901760
    %4487 = vmatmul.mubr.f32.gmra.mxu0 %v4486
    %v4488 = vpop.f32.mrf.mxu0
    %v4489 = vadd.f32 %v4308, %v4488
    %v4490 = vpop.f32.mrf.mxu0
    %4491 = vmatprep.mubr.f32.mxu0 0.0
    %v4492 = vand.u32 %v4124, 4294901760
    %4493 = vmatmul.mubr.f32.gmra.mxu0 %v4492
    %v4494 = vpop.f32.mrf.mxu0
    %v4495 = vadd.f32 %v4318, %v4494
    %v4496 = vpop.f32.mrf.mxu0
    %4497 = vmatprep.mubr.f32.mxu0 0.0
    %v4498 = vand.u32 %v4127, 4294901760
    %4499 = vmatmul.mubr.f32.gmra.mxu0 %v4498
    %v4500 = vpop.f32.mrf.mxu0
    %v4501 = vadd.f32 %v4328, %v4500
    %v4502 = vpop.f32.mrf.mxu0
    %4503 = vmatprep.mubr.f32.mxu0 0.0
    %v4504 = vand.u32 %v4130, 4294901760
    %4505 = vmatmul.mubr.f32.gmra.mxu0 %v4504
    %v4506 = vpop.f32.mrf.mxu0
    %v4507 = vadd.f32 %v4338, %v4506
    %v4508 = vpop.f32.mrf.mxu0
    %4509 = vdwg.mxu0
    %4510 = vmatprep.subr.mxu0 0.0
    %4511 = vmatpush1.msra.mxu0 0.0
    %4512 = vmatprep.subr.mxu0 0.0
    %4513 = vmatpush1.msra.mxu0 0.0
    %4514 = vmatprep.subr.mxu0 0.0
    %4515 = vmatpush1.msra.mxu0 0.0
    %4516 = vmatprep.subr.mxu0 0.0
    %4517 = vmatpush1.msra.mxu0 0.0
    %4518 = vmatprep.subr.mxu0 0.0
    %4519 = vmatpush1.msra.mxu0 0.0
    %4520 = vmatprep.subr.mxu0 0.0
    %4521 = vmatpush1.msra.mxu0 0.0
    %4522 = vmatprep.subr.mxu0 0.0
    %4523 = vmatpush1.msra.mxu0 0.0
    %4524 = vmatprep.subr.mxu0 0.0
    %4525 = vmatpush1.msra.mxu0 0.0
    %4526 = vmatprep.subr.mxu0 0.0
    %4527 = vmatpush1.msra.mxu0 0.0
    %4528 = vmatprep.subr.mxu0 0.0
    %4529 = vmatpush1.msra.mxu0 0.0
    %4530 = vmatprep.subr.mxu0 0.0
    %4531 = vmatpush1.msra.mxu0 0.0
    %4532 = vmatprep.subr.mxu0 0.0
    %4533 = vmatpush1.msra.mxu0 0.0
    %4534 = vmatprep.subr.mxu0 0.0
    %v4535 = vand.u32 %v51, 4294901760
    %v4536 = vsub.f32 %v51, %v4535
    %4537 = vmatpush1.msra.mxu0 %v4536
    %4538 = vmatprep.subr.mxu0 0.0
    %v4539 = vand.u32 %v50, 4294901760
    %v4540 = vsub.f32 %v50, %v4539
    %4541 = vmatpush1.msra.mxu0 %v4540
    %4542 = vmatprep.subr.mxu0 0.0
    %v4543 = vand.u32 %v49, 4294901760
    %v4544 = vsub.f32 %v49, %v4543
    %4545 = vmatpush1.msra.mxu0 %v4544
    %4546 = vmatprep.subr.mxu0 0.0
    %v4547 = vand.u32 %v48, 4294901760
    %v4548 = vsub.f32 %v48, %v4547
    %4549 = vmatpush1.msra.mxu0 %v4548
    %4550 = vmatprep.subr.mxu0 0.0
    %4551 = vmatpush2.msra.mxu0 0.0
    %4552 = vmatprep.subr.mxu0 0.0
    %4553 = vmatpush2.msra.mxu0 0.0
    %4554 = vmatprep.subr.mxu0 0.0
    %4555 = vmatpush2.msra.mxu0 0.0
    %4556 = vmatprep.subr.mxu0 0.0
    %4557 = vmatpush2.msra.mxu0 0.0
    %4558 = vmatprep.subr.mxu0 0.0
    %4559 = vmatpush2.msra.mxu0 0.0
    %4560 = vmatprep.subr.mxu0 0.0
    %4561 = vmatpush2.msra.mxu0 0.0
    %4562 = vmatprep.subr.mxu0 0.0
    %4563 = vmatpush2.msra.mxu0 0.0
    %4564 = vmatprep.subr.mxu0 0.0
    %4565 = vmatpush2.msra.mxu0 0.0
    %4566 = vmatprep.subr.mxu0 0.0
    %4567 = vmatpush2.msra.mxu0 0.0
    %4568 = vmatprep.subr.mxu0 0.0
    %4569 = vmatpush2.msra.mxu0 0.0
    %4570 = vmatprep.subr.mxu0 0.0
    %4571 = vmatpush2.msra.mxu0 0.0
    %4572 = vmatprep.subr.mxu0 0.0
    %4573 = vmatpush2.msra.mxu0 0.0
    %4574 = vmatprep.subr.mxu0 0.0
    %4575 = vmatpush2.msra.mxu0 0.0
    %4576 = vmatprep.subr.mxu0 0.0
    %4577 = vmatpush2.msra.mxu0 0.0
    %4578 = vmatprep.subr.mxu0 0.0
    %4579 = vmatpush2.msra.mxu0 0.0
    %4580 = vmatprep.subr.mxu0 0.0
    %4581 = vmatpush2.msra.mxu0 0.0
    %4582 = vmatprep.mubr.f32.mxu0 0.0
    %v4583 = vand.u32 %v4091, 4294901760
    %v4584 = vsub.f32 %v4091, %v4583
    %4585 = vmatmul.mubr.f32.gmra.mxu0 %v4584
    %v4586 = vpop.f32.mrf.mxu0
    %v4587 = vadd.f32 %v4429, %v4586
    %v4588 = vpop.f32.mrf.mxu0
    %4589 = vmatprep.mubr.f32.mxu0 0.0
    %v4590 = vand.u32 %v4094, 4294901760
    %v4591 = vsub.f32 %v4094, %v4590
    %4592 = vmatmul.mubr.f32.gmra.mxu0 %v4591
    %v4593 = vpop.f32.mrf.mxu0
    %v4594 = vadd.f32 %v4435, %v4593
    %v4595 = vpop.f32.mrf.mxu0
    %4596 = vmatprep.mubr.f32.mxu0 0.0
    %v4597 = vand.u32 %v4097, 4294901760
    %v4598 = vsub.f32 %v4097, %v4597
    %4599 = vmatmul.mubr.f32.gmra.mxu0 %v4598
    %v4600 = vpop.f32.mrf.mxu0
    %v4601 = vadd.f32 %v4441, %v4600
    %v4602 = vpop.f32.mrf.mxu0
    %4603 = vmatprep.mubr.f32.mxu0 0.0
    %v4604 = vand.u32 %v4100, 4294901760
    %v4605 = vsub.f32 %v4100, %v4604
    %4606 = vmatmul.mubr.f32.gmra.mxu0 %v4605
    %v4607 = vpop.f32.mrf.mxu0
    %v4608 = vadd.f32 %v4447, %v4607
    %v4609 = vpop.f32.mrf.mxu0
    %4610 = vmatprep.mubr.f32.mxu0 0.0
    %v4611 = vand.u32 %v4103, 4294901760
    %v4612 = vsub.f32 %v4103, %v4611
    %4613 = vmatmul.mubr.f32.gmra.mxu0 %v4612
    %v4614 = vpop.f32.mrf.mxu0
    %v4615 = vadd.f32 %v4453, %v4614
    %v4616 = vpop.f32.mrf.mxu0
    %4617 = vmatprep.mubr.f32.mxu0 0.0
    %v4618 = vand.u32 %v4106, 4294901760
    %v4619 = vsub.f32 %v4106, %v4618
    %4620 = vmatmul.mubr.f32.gmra.mxu0 %v4619
    %v4621 = vpop.f32.mrf.mxu0
    %v4622 = vadd.f32 %v4459, %v4621
    %v4623 = vpop.f32.mrf.mxu0
    %4624 = vmatprep.mubr.f32.mxu0 0.0
    %v4625 = vand.u32 %v4109, 4294901760
    %v4626 = vsub.f32 %v4109, %v4625
    %4627 = vmatmul.mubr.f32.gmra.mxu0 %v4626
    %v4628 = vpop.f32.mrf.mxu0
    %v4629 = vadd.f32 %v4465, %v4628
    %v4630 = vpop.f32.mrf.mxu0
    %4631 = vmatprep.mubr.f32.mxu0 0.0
    %v4632 = vand.u32 %v4112, 4294901760
    %v4633 = vsub.f32 %v4112, %v4632
    %4634 = vmatmul.mubr.f32.gmra.mxu0 %v4633
    %v4635 = vpop.f32.mrf.mxu0
    %v4636 = vadd.f32 %v4471, %v4635
    %v4637 = vpop.f32.mrf.mxu0
    %4638 = vmatprep.mubr.f32.mxu0 0.0
    %v4639 = vand.u32 %v4115, 4294901760
    %v4640 = vsub.f32 %v4115, %v4639
    %4641 = vmatmul.mubr.f32.gmra.mxu0 %v4640
    %v4642 = vpop.f32.mrf.mxu0
    %v4643 = vadd.f32 %v4477, %v4642
    %v4644 = vpop.f32.mrf.mxu0
    %4645 = vmatprep.mubr.f32.mxu0 0.0
    %v4646 = vand.u32 %v4118, 4294901760
    %v4647 = vsub.f32 %v4118, %v4646
    %4648 = vmatmul.mubr.f32.gmra.mxu0 %v4647
    %v4649 = vpop.f32.mrf.mxu0
    %v4650 = vadd.f32 %v4483, %v4649
    %v4651 = vpop.f32.mrf.mxu0
    %4652 = vmatprep.mubr.f32.mxu0 0.0
    %v4653 = vand.u32 %v4121, 4294901760
    %v4654 = vsub.f32 %v4121, %v4653
    %4655 = vmatmul.mubr.f32.gmra.mxu0 %v4654
    %v4656 = vpop.f32.mrf.mxu0
    %v4657 = vadd.f32 %v4489, %v4656
    %v4658 = vpop.f32.mrf.mxu0
    %4659 = vmatprep.mubr.f32.mxu0 0.0
    %v4660 = vand.u32 %v4124, 4294901760
    %v4661 = vsub.f32 %v4124, %v4660
    %4662 = vmatmul.mubr.f32.gmra.mxu0 %v4661
    %v4663 = vpop.f32.mrf.mxu0
    %v4664 = vadd.f32 %v4495, %v4663
    %v4665 = vpop.f32.mrf.mxu0
    %4666 = vmatprep.mubr.f32.mxu0 0.0
    %v4667 = vand.u32 %v4127, 4294901760
    %v4668 = vsub.f32 %v4127, %v4667
    %4669 = vmatmul.mubr.f32.gmra.mxu0 %v4668
    %v4670 = vpop.f32.mrf.mxu0
    %v4671 = vadd.f32 %v4501, %v4670
    %v4672 = vpop.f32.mrf.mxu0
    %4673 = vmatprep.mubr.f32.mxu0 0.0
    %v4674 = vand.u32 %v4130, 4294901760
    %v4675 = vsub.f32 %v4130, %v4674
    %4676 = vmatmul.mubr.f32.gmra.mxu0 %v4675
    %v4677 = vpop.f32.mrf.mxu0
    %v4678 = vadd.f32 %v4507, %v4677
    %v4679 = vpop.f32.mrf.mxu0
    %4680 = vdwg.mxu0
    %4681 = vmatprep.subr.mxu0 0.0
    %4682 = vmatpush1.msra.mxu0 0.0
    %4683 = vmatprep.subr.mxu0 0.0
    %4684 = vmatpush1.msra.mxu0 0.0
    %4685 = vmatprep.subr.mxu0 0.0
    %4686 = vmatpush1.msra.mxu0 0.0
    %4687 = vmatprep.subr.mxu0 0.0
    %4688 = vmatpush1.msra.mxu0 0.0
    %4689 = vmatprep.subr.mxu0 0.0
    %4690 = vmatpush1.msra.mxu0 0.0
    %4691 = vmatprep.subr.mxu0 0.0
    %4692 = vmatpush1.msra.mxu0 0.0
    %4693 = vmatprep.subr.mxu0 0.0
    %4694 = vmatpush1.msra.mxu0 0.0
    %4695 = vmatprep.subr.mxu0 0.0
    %4696 = vmatpush1.msra.mxu0 0.0
    %4697 = vmatprep.subr.mxu0 0.0
    %4698 = vmatpush1.msra.mxu0 0.0
    %4699 = vmatprep.subr.mxu0 0.0
    %4700 = vmatpush1.msra.mxu0 0.0
    %4701 = vmatprep.subr.mxu0 0.0
    %4702 = vmatpush1.msra.mxu0 0.0
    %4703 = vmatprep.subr.mxu0 0.0
    %4704 = vmatpush1.msra.mxu0 0.0
    %4705 = vmatprep.subr.mxu0 0.0
    %v4706 = vand.u32 %v51, 4294901760
    %4707 = vmatpush1.msra.mxu0 %v4706
    %4708 = vmatprep.subr.mxu0 0.0
    %v4709 = vand.u32 %v50, 4294901760
    %4710 = vmatpush1.msra.mxu0 %v4709
    %4711 = vmatprep.subr.mxu0 0.0
    %v4712 = vand.u32 %v49, 4294901760
    %4713 = vmatpush1.msra.mxu0 %v4712
    %4714 = vmatprep.subr.mxu0 0.0
    %v4715 = vand.u32 %v48, 4294901760
    %4716 = vmatpush1.msra.mxu0 %v4715
    %4717 = vmatprep.subr.mxu0 0.0
    %4718 = vmatpush2.msra.mxu0 0.0
    %4719 = vmatprep.subr.mxu0 0.0
    %4720 = vmatpush2.msra.mxu0 0.0
    %4721 = vmatprep.subr.mxu0 0.0
    %4722 = vmatpush2.msra.mxu0 0.0
    %4723 = vmatprep.subr.mxu0 0.0
    %4724 = vmatpush2.msra.mxu0 0.0
    %4725 = vmatprep.subr.mxu0 0.0
    %4726 = vmatpush2.msra.mxu0 0.0
    %4727 = vmatprep.subr.mxu0 0.0
    %4728 = vmatpush2.msra.mxu0 0.0
    %4729 = vmatprep.subr.mxu0 0.0
    %4730 = vmatpush2.msra.mxu0 0.0
    %4731 = vmatprep.subr.mxu0 0.0
    %4732 = vmatpush2.msra.mxu0 0.0
    %4733 = vmatprep.subr.mxu0 0.0
    %4734 = vmatpush2.msra.mxu0 0.0
    %4735 = vmatprep.subr.mxu0 0.0
    %4736 = vmatpush2.msra.mxu0 0.0
    %4737 = vmatprep.subr.mxu0 0.0
    %4738 = vmatpush2.msra.mxu0 0.0
    %4739 = vmatprep.subr.mxu0 0.0
    %4740 = vmatpush2.msra.mxu0 0.0
    %4741 = vmatprep.subr.mxu0 0.0
    %4742 = vmatpush2.msra.mxu0 0.0
    %4743 = vmatprep.subr.mxu0 0.0
    %4744 = vmatpush2.msra.mxu0 0.0
    %4745 = vmatprep.subr.mxu0 0.0
    %4746 = vmatpush2.msra.mxu0 0.0
    %4747 = vmatprep.subr.mxu0 0.0
    %4748 = vmatpush2.msra.mxu0 0.0
    %4749 = vmatprep.mubr.f32.mxu0 0.0
    %v4750 = vand.u32 %v4091, 4294901760
    %v4751 = vsub.f32 %v4091, %v4750
    %v4752 = vand.u32 %v4751, 4294901760
    %4753 = vmatmul.mubr.f32.gmra.mxu0 %v4752
    %v4754 = vpop.f32.mrf.mxu0
    %v4755 = vadd.f32 %v4587, %v4754
    %v4756 = vpop.f32.mrf.mxu0
    %4757 = vmatprep.mubr.f32.mxu0 0.0
    %v4758 = vand.u32 %v4094, 4294901760
    %v4759 = vsub.f32 %v4094, %v4758
    %v4760 = vand.u32 %v4759, 4294901760
    %4761 = vmatmul.mubr.f32.gmra.mxu0 %v4760
    %v4762 = vpop.f32.mrf.mxu0
    %v4763 = vadd.f32 %v4594, %v4762
    %v4764 = vpop.f32.mrf.mxu0
    %4765 = vmatprep.mubr.f32.mxu0 0.0
    %v4766 = vand.u32 %v4097, 4294901760
    %v4767 = vsub.f32 %v4097, %v4766
    %v4768 = vand.u32 %v4767, 4294901760
    %4769 = vmatmul.mubr.f32.gmra.mxu0 %v4768
    %v4770 = vpop.f32.mrf.mxu0
    %v4771 = vadd.f32 %v4601, %v4770
    %v4772 = vpop.f32.mrf.mxu0
    %4773 = vmatprep.mubr.f32.mxu0 0.0
    %v4774 = vand.u32 %v4100, 4294901760
    %v4775 = vsub.f32 %v4100, %v4774
    %v4776 = vand.u32 %v4775, 4294901760
    %4777 = vmatmul.mubr.f32.gmra.mxu0 %v4776
    %v4778 = vpop.f32.mrf.mxu0
    %v4779 = vadd.f32 %v4608, %v4778
    %v4780 = vpop.f32.mrf.mxu0
    %4781 = vmatprep.mubr.f32.mxu0 0.0
    %v4782 = vand.u32 %v4103, 4294901760
    %v4783 = vsub.f32 %v4103, %v4782
    %v4784 = vand.u32 %v4783, 4294901760
    %4785 = vmatmul.mubr.f32.gmra.mxu0 %v4784
    %v4786 = vpop.f32.mrf.mxu0
    %v4787 = vadd.f32 %v4615, %v4786
    %v4788 = vpop.f32.mrf.mxu0
    %4789 = vmatprep.mubr.f32.mxu0 0.0
    %v4790 = vand.u32 %v4106, 4294901760
    %v4791 = vsub.f32 %v4106, %v4790
    %v4792 = vand.u32 %v4791, 4294901760
    %4793 = vmatmul.mubr.f32.gmra.mxu0 %v4792
    %v4794 = vpop.f32.mrf.mxu0
    %v4795 = vadd.f32 %v4622, %v4794
    %v4796 = vpop.f32.mrf.mxu0
    %4797 = vmatprep.mubr.f32.mxu0 0.0
    %v4798 = vand.u32 %v4109, 4294901760
    %v4799 = vsub.f32 %v4109, %v4798
    %v4800 = vand.u32 %v4799, 4294901760
    %4801 = vmatmul.mubr.f32.gmra.mxu0 %v4800
    %v4802 = vpop.f32.mrf.mxu0
    %v4803 = vadd.f32 %v4629, %v4802
    %v4804 = vpop.f32.mrf.mxu0
    %4805 = vmatprep.mubr.f32.mxu0 0.0
    %v4806 = vand.u32 %v4112, 4294901760
    %v4807 = vsub.f32 %v4112, %v4806
    %v4808 = vand.u32 %v4807, 4294901760
    %4809 = vmatmul.mubr.f32.gmra.mxu0 %v4808
    %v4810 = vpop.f32.mrf.mxu0
    %v4811 = vadd.f32 %v4636, %v4810
    %v4812 = vpop.f32.mrf.mxu0
    %4813 = vmatprep.mubr.f32.mxu0 0.0
    %v4814 = vand.u32 %v4115, 4294901760
    %v4815 = vsub.f32 %v4115, %v4814
    %v4816 = vand.u32 %v4815, 4294901760
    %4817 = vmatmul.mubr.f32.gmra.mxu0 %v4816
    %v4818 = vpop.f32.mrf.mxu0
    %v4819 = vadd.f32 %v4643, %v4818
    %v4820 = vpop.f32.mrf.mxu0
    %4821 = vmatprep.mubr.f32.mxu0 0.0
    %v4822 = vand.u32 %v4118, 4294901760
    %v4823 = vsub.f32 %v4118, %v4822
    %v4824 = vand.u32 %v4823, 4294901760
    %4825 = vmatmul.mubr.f32.gmra.mxu0 %v4824
    %v4826 = vpop.f32.mrf.mxu0
    %v4827 = vadd.f32 %v4650, %v4826
    %v4828 = vpop.f32.mrf.mxu0
    %4829 = vmatprep.mubr.f32.mxu0 0.0
    %v4830 = vand.u32 %v4121, 4294901760
    %v4831 = vsub.f32 %v4121, %v4830
    %v4832 = vand.u32 %v4831, 4294901760
    %4833 = vmatmul.mubr.f32.gmra.mxu0 %v4832
    %v4834 = vpop.f32.mrf.mxu0
    %v4835 = vadd.f32 %v4657, %v4834
    %v4836 = vpop.f32.mrf.mxu0
    %4837 = vmatprep.mubr.f32.mxu0 0.0
    %v4838 = vand.u32 %v4124, 4294901760
    %v4839 = vsub.f32 %v4124, %v4838
    %v4840 = vand.u32 %v4839, 4294901760
    %4841 = vmatmul.mubr.f32.gmra.mxu0 %v4840
    %v4842 = vpop.f32.mrf.mxu0
    %v4843 = vadd.f32 %v4664, %v4842
    %v4844 = vpop.f32.mrf.mxu0
    %4845 = vmatprep.mubr.f32.mxu0 0.0
    %v4846 = vand.u32 %v4127, 4294901760
    %v4847 = vsub.f32 %v4127, %v4846
    %v4848 = vand.u32 %v4847, 4294901760
    %4849 = vmatmul.mubr.f32.gmra.mxu0 %v4848
    %v4850 = vpop.f32.mrf.mxu0
    %v4851 = vadd.f32 %v4671, %v4850
    %v4852 = vpop.f32.mrf.mxu0
    %4853 = vmatprep.mubr.f32.mxu0 0.0
    %v4854 = vand.u32 %v4130, 4294901760
    %v4855 = vsub.f32 %v4130, %v4854
    %v4856 = vand.u32 %v4855, 4294901760
    %4857 = vmatmul.mubr.f32.gmra.mxu0 %v4856
    %v4858 = vpop.f32.mrf.mxu0
    %v4859 = vadd.f32 %v4678, %v4858
    %v4860 = vpop.f32.mrf.mxu0
    %4861 = vdwg.mxu0
    %4862 = vmatprep.subr.mxu0 0.0
    %4863 = vmatpush1.msra.mxu0 0.0
    %4864 = vmatprep.subr.mxu0 0.0
    %4865 = vmatpush1.msra.mxu0 0.0
    %4866 = vmatprep.subr.mxu0 0.0
    %4867 = vmatpush1.msra.mxu0 0.0
    %4868 = vmatprep.subr.mxu0 0.0
    %4869 = vmatpush1.msra.mxu0 0.0
    %4870 = vmatprep.subr.mxu0 0.0
    %4871 = vmatpush1.msra.mxu0 0.0
    %4872 = vmatprep.subr.mxu0 0.0
    %4873 = vmatpush1.msra.mxu0 0.0
    %4874 = vmatprep.subr.mxu0 0.0
    %4875 = vmatpush1.msra.mxu0 0.0
    %4876 = vmatprep.subr.mxu0 0.0
    %4877 = vmatpush1.msra.mxu0 0.0
    %4878 = vmatprep.subr.mxu0 0.0
    %4879 = vmatpush1.msra.mxu0 0.0
    %4880 = vmatprep.subr.mxu0 0.0
    %4881 = vmatpush1.msra.mxu0 0.0
    %4882 = vmatprep.subr.mxu0 0.0
    %4883 = vmatpush1.msra.mxu0 0.0
    %4884 = vmatprep.subr.mxu0 0.0
    %4885 = vmatpush1.msra.mxu0 0.0
    %4886 = vmatprep.subr.mxu0 0.0
    %v4887 = vand.u32 %v51, 4294901760
    %v4888 = vsub.f32 %v51, %v4887
    %v4889 = vand.u32 %v4888, 4294901760
    %4890 = vmatpush1.msra.mxu0 %v4889
    %4891 = vmatprep.subr.mxu0 0.0
    %v4892 = vand.u32 %v50, 4294901760
    %v4893 = vsub.f32 %v50, %v4892
    %v4894 = vand.u32 %v4893, 4294901760
    %4895 = vmatpush1.msra.mxu0 %v4894
    %4896 = vmatprep.subr.mxu0 0.0
    %v4897 = vand.u32 %v49, 4294901760
    %v4898 = vsub.f32 %v49, %v4897
    %v4899 = vand.u32 %v4898, 4294901760
    %4900 = vmatpush1.msra.mxu0 %v4899
    %4901 = vmatprep.subr.mxu0 0.0
    %v4902 = vand.u32 %v48, 4294901760
    %v4903 = vsub.f32 %v48, %v4902
    %v4904 = vand.u32 %v4903, 4294901760
    %4905 = vmatpush1.msra.mxu0 %v4904
    %4906 = vmatprep.subr.mxu0 0.0
    %4907 = vmatpush2.msra.mxu0 0.0
    %4908 = vmatprep.subr.mxu0 0.0
    %4909 = vmatpush2.msra.mxu0 0.0
    %4910 = vmatprep.subr.mxu0 0.0
    %4911 = vmatpush2.msra.mxu0 0.0
    %4912 = vmatprep.subr.mxu0 0.0
    %4913 = vmatpush2.msra.mxu0 0.0
    %4914 = vmatprep.subr.mxu0 0.0
    %4915 = vmatpush2.msra.mxu0 0.0
    %4916 = vmatprep.subr.mxu0 0.0
    %4917 = vmatpush2.msra.mxu0 0.0
    %4918 = vmatprep.subr.mxu0 0.0
    %4919 = vmatpush2.msra.mxu0 0.0
    %4920 = vmatprep.subr.mxu0 0.0
    %4921 = vmatpush2.msra.mxu0 0.0
    %4922 = vmatprep.subr.mxu0 0.0
    %4923 = vmatpush2.msra.mxu0 0.0
    %4924 = vmatprep.subr.mxu0 0.0
    %4925 = vmatpush2.msra.mxu0 0.0
    %4926 = vmatprep.subr.mxu0 0.0
    %4927 = vmatpush2.msra.mxu0 0.0
    %4928 = vmatprep.subr.mxu0 0.0
    %4929 = vmatpush2.msra.mxu0 0.0
    %4930 = vmatprep.subr.mxu0 0.0
    %4931 = vmatpush2.msra.mxu0 0.0
    %4932 = vmatprep.subr.mxu0 0.0
    %4933 = vmatpush2.msra.mxu0 0.0
    %4934 = vmatprep.subr.mxu0 0.0
    %4935 = vmatpush2.msra.mxu0 0.0
    %4936 = vmatprep.subr.mxu0 0.0
    %4937 = vmatpush2.msra.mxu0 0.0
    %4938 = vmatprep.mubr.f32.mxu0 0.0
    %v4939 = vand.u32 %v4091, 4294901760
    %4940 = vmatmul.mubr.f32.gmra.mxu0 %v4939
    %v4941 = vpop.f32.mrf.mxu0
    %v4942 = vadd.f32 %v4755, %v4941
    %v4943 = vpop.f32.mrf.mxu0
    %4944 = vmatprep.mubr.f32.mxu0 0.0
    %v4945 = vand.u32 %v4094, 4294901760
    %4946 = vmatmul.mubr.f32.gmra.mxu0 %v4945
    %v4947 = vpop.f32.mrf.mxu0
    %v4948 = vadd.f32 %v4763, %v4947
    %v4949 = vpop.f32.mrf.mxu0
    %4950 = vmatprep.mubr.f32.mxu0 0.0
    %v4951 = vand.u32 %v4097, 4294901760
    %4952 = vmatmul.mubr.f32.gmra.mxu0 %v4951
    %v4953 = vpop.f32.mrf.mxu0
    %v4954 = vadd.f32 %v4771, %v4953
    %v4955 = vpop.f32.mrf.mxu0
    %4956 = vmatprep.mubr.f32.mxu0 0.0
    %v4957 = vand.u32 %v4100, 4294901760
    %4958 = vmatmul.mubr.f32.gmra.mxu0 %v4957
    %v4959 = vpop.f32.mrf.mxu0
    %v4960 = vadd.f32 %v4779, %v4959
    %v4961 = vpop.f32.mrf.mxu0
    %4962 = vmatprep.mubr.f32.mxu0 0.0
    %v4963 = vand.u32 %v4103, 4294901760
    %4964 = vmatmul.mubr.f32.gmra.mxu0 %v4963
    %v4965 = vpop.f32.mrf.mxu0
    %v4966 = vadd.f32 %v4787, %v4965
    %v4967 = vpop.f32.mrf.mxu0
    %4968 = vmatprep.mubr.f32.mxu0 0.0
    %v4969 = vand.u32 %v4106, 4294901760
    %4970 = vmatmul.mubr.f32.gmra.mxu0 %v4969
    %v4971 = vpop.f32.mrf.mxu0
    %v4972 = vadd.f32 %v4795, %v4971
    %v4973 = vpop.f32.mrf.mxu0
    %4974 = vmatprep.mubr.f32.mxu0 0.0
    %v4975 = vand.u32 %v4109, 4294901760
    %4976 = vmatmul.mubr.f32.gmra.mxu0 %v4975
    %v4977 = vpop.f32.mrf.mxu0
    %v4978 = vadd.f32 %v4803, %v4977
    %v4979 = vpop.f32.mrf.mxu0
    %4980 = vmatprep.mubr.f32.mxu0 0.0
    %v4981 = vand.u32 %v4112, 4294901760
    %4982 = vmatmul.mubr.f32.gmra.mxu0 %v4981
    %v4983 = vpop.f32.mrf.mxu0
    %v4984 = vadd.f32 %v4811, %v4983
    %v4985 = vpop.f32.mrf.mxu0
    %4986 = vmatprep.mubr.f32.mxu0 0.0
    %v4987 = vand.u32 %v4115, 4294901760
    %4988 = vmatmul.mubr.f32.gmra.mxu0 %v4987
    %v4989 = vpop.f32.mrf.mxu0
    %v4990 = vadd.f32 %v4819, %v4989
    %v4991 = vpop.f32.mrf.mxu0
    %4992 = vmatprep.mubr.f32.mxu0 0.0
    %v4993 = vand.u32 %v4118, 4294901760
    %4994 = vmatmul.mubr.f32.gmra.mxu0 %v4993
    %v4995 = vpop.f32.mrf.mxu0
    %v4996 = vadd.f32 %v4827, %v4995
    %v4997 = vpop.f32.mrf.mxu0
    %4998 = vmatprep.mubr.f32.mxu0 0.0
    %v4999 = vand.u32 %v4121, 4294901760
    %5000 = vmatmul.mubr.f32.gmra.mxu0 %v4999
    %v5001 = vpop.f32.mrf.mxu0
    %v5002 = vadd.f32 %v4835, %v5001
    %v5003 = vpop.f32.mrf.mxu0
    %5004 = vmatprep.mubr.f32.mxu0 0.0
    %v5005 = vand.u32 %v4124, 4294901760
    %5006 = vmatmul.mubr.f32.gmra.mxu0 %v5005
    %v5007 = vpop.f32.mrf.mxu0
    %v5008 = vadd.f32 %v4843, %v5007
    %v5009 = vpop.f32.mrf.mxu0
    %5010 = vmatprep.mubr.f32.mxu0 0.0
    %v5011 = vand.u32 %v4127, 4294901760
    %5012 = vmatmul.mubr.f32.gmra.mxu0 %v5011
    %v5013 = vpop.f32.mrf.mxu0
    %v5014 = vadd.f32 %v4851, %v5013
    %v5015 = vpop.f32.mrf.mxu0
    %5016 = vmatprep.mubr.f32.mxu0 0.0
    %v5017 = vand.u32 %v4130, 4294901760
    %5018 = vmatmul.mubr.f32.gmra.mxu0 %v5017
    %v5019 = vpop.f32.mrf.mxu0
    %v5020 = vadd.f32 %v4859, %v5019
    %v5021 = vpop.f32.mrf.mxu0
    %5022 = vdwg.mxu0
    %5023 = vmatprep.subr.mxu0 0.0
    %5024 = vmatpush1.msra.mxu0 0.0
    %5025 = vmatprep.subr.mxu0 0.0
    %5026 = vmatpush1.msra.mxu0 0.0
    %5027 = vmatprep.subr.mxu0 0.0
    %5028 = vmatpush1.msra.mxu0 0.0
    %5029 = vmatprep.subr.mxu0 0.0
    %5030 = vmatpush1.msra.mxu0 0.0
    %5031 = vmatprep.subr.mxu0 0.0
    %5032 = vmatpush1.msra.mxu0 0.0
    %5033 = vmatprep.subr.mxu0 0.0
    %5034 = vmatpush1.msra.mxu0 0.0
    %5035 = vmatprep.subr.mxu0 0.0
    %5036 = vmatpush1.msra.mxu0 0.0
    %5037 = vmatprep.subr.mxu0 0.0
    %5038 = vmatpush1.msra.mxu0 0.0
    %5039 = vmatprep.subr.mxu0 0.0
    %5040 = vmatpush1.msra.mxu0 0.0
    %5041 = vmatprep.subr.mxu0 0.0
    %5042 = vmatpush1.msra.mxu0 0.0
    %5043 = vmatprep.subr.mxu0 0.0
    %5044 = vmatpush1.msra.mxu0 0.0
    %5045 = vmatprep.subr.mxu0 0.0
    %5046 = vmatpush1.msra.mxu0 0.0
    %5047 = vmatprep.subr.mxu0 0.0
    %v5048 = vand.u32 %v51, 4294901760
    %5049 = vmatpush1.msra.mxu0 %v5048
    %5050 = vmatprep.subr.mxu0 0.0
    %v5051 = vand.u32 %v50, 4294901760
    %5052 = vmatpush1.msra.mxu0 %v5051
    %5053 = vmatprep.subr.mxu0 0.0
    %v5054 = vand.u32 %v49, 4294901760
    %5055 = vmatpush1.msra.mxu0 %v5054
    %5056 = vmatprep.subr.mxu0 0.0
    %v5057 = vand.u32 %v48, 4294901760
    %5058 = vmatpush1.msra.mxu0 %v5057
    %5059 = vmatprep.subr.mxu0 0.0
    %5060 = vmatpush2.msra.mxu0 0.0
    %5061 = vmatprep.subr.mxu0 0.0
    %5062 = vmatpush2.msra.mxu0 0.0
    %5063 = vmatprep.subr.mxu0 0.0
    %5064 = vmatpush2.msra.mxu0 0.0
    %5065 = vmatprep.subr.mxu0 0.0
    %5066 = vmatpush2.msra.mxu0 0.0
    %5067 = vmatprep.subr.mxu0 0.0
    %5068 = vmatpush2.msra.mxu0 0.0
    %5069 = vmatprep.subr.mxu0 0.0
    %5070 = vmatpush2.msra.mxu0 0.0
    %5071 = vmatprep.subr.mxu0 0.0
    %5072 = vmatpush2.msra.mxu0 0.0
    %5073 = vmatprep.subr.mxu0 0.0
    %5074 = vmatpush2.msra.mxu0 0.0
    %5075 = vmatprep.subr.mxu0 0.0
    %5076 = vmatpush2.msra.mxu0 0.0
    %5077 = vmatprep.subr.mxu0 0.0
    %5078 = vmatpush2.msra.mxu0 0.0
    %5079 = vmatprep.subr.mxu0 0.0
    %5080 = vmatpush2.msra.mxu0 0.0
    %5081 = vmatprep.subr.mxu0 0.0
    %5082 = vmatpush2.msra.mxu0 0.0
    %5083 = vmatprep.subr.mxu0 0.0
    %5084 = vmatpush2.msra.mxu0 0.0
    %5085 = vmatprep.subr.mxu0 0.0
    %5086 = vmatpush2.msra.mxu0 0.0
    %5087 = vmatprep.subr.mxu0 0.0
    %5088 = vmatpush2.msra.mxu0 0.0
    %5089 = vmatprep.subr.mxu0 0.0
    %5090 = vmatpush2.msra.mxu0 0.0
    %5091 = vmatprep.mubr.f32.mxu0 0.0
    %v5092 = vand.u32 %v4091, 4294901760
    %5093 = vmatmul.mubr.f32.gmra.mxu0 %v5092
    %v5094 = vpop.f32.mrf.mxu0
    %v5095 = vadd.f32 %v4942, %v5094
    %v5096 = vpop.f32.mrf.mxu0
    %5097 = vmatprep.mubr.f32.mxu0 0.0
    %v5098 = vand.u32 %v4094, 4294901760
    %5099 = vmatmul.mubr.f32.gmra.mxu0 %v5098
    %v5100 = vpop.f32.mrf.mxu0
    %v5101 = vadd.f32 %v4948, %v5100
    %v5102 = vpop.f32.mrf.mxu0
    %5103 = vmatprep.mubr.f32.mxu0 0.0
    %v5104 = vand.u32 %v4097, 4294901760
    %5105 = vmatmul.mubr.f32.gmra.mxu0 %v5104
    %v5106 = vpop.f32.mrf.mxu0
    %v5107 = vadd.f32 %v4954, %v5106
    %v5108 = vpop.f32.mrf.mxu0
    %5109 = vmatprep.mubr.f32.mxu0 0.0
    %v5110 = vand.u32 %v4100, 4294901760
    %5111 = vmatmul.mubr.f32.gmra.mxu0 %v5110
    %v5112 = vpop.f32.mrf.mxu0
    %v5113 = vadd.f32 %v4960, %v5112
    %v5114 = vpop.f32.mrf.mxu0
    %5115 = vmatprep.mubr.f32.mxu0 0.0
    %v5116 = vand.u32 %v4103, 4294901760
    %5117 = vmatmul.mubr.f32.gmra.mxu0 %v5116
    %v5118 = vpop.f32.mrf.mxu0
    %v5119 = vadd.f32 %v4966, %v5118
    %v5120 = vpop.f32.mrf.mxu0
    %5121 = vmatprep.mubr.f32.mxu0 0.0
    %v5122 = vand.u32 %v4106, 4294901760
    %5123 = vmatmul.mubr.f32.gmra.mxu0 %v5122
    %v5124 = vpop.f32.mrf.mxu0
    %v5125 = vadd.f32 %v4972, %v5124
    %v5126 = vpop.f32.mrf.mxu0
    %5127 = vmatprep.mubr.f32.mxu0 0.0
    %v5128 = vand.u32 %v4109, 4294901760
    %5129 = vmatmul.mubr.f32.gmra.mxu0 %v5128
    %v5130 = vpop.f32.mrf.mxu0
    %v5131 = vadd.f32 %v4978, %v5130
    %v5132 = vpop.f32.mrf.mxu0
    %5133 = vmatprep.mubr.f32.mxu0 0.0
    %v5134 = vand.u32 %v4112, 4294901760
    %5135 = vmatmul.mubr.f32.gmra.mxu0 %v5134
    %v5136 = vpop.f32.mrf.mxu0
    %v5137 = vadd.f32 %v4984, %v5136
    %v5138 = vpop.f32.mrf.mxu0
    %5139 = vmatprep.mubr.f32.mxu0 0.0
    %v5140 = vand.u32 %v4115, 4294901760
    %5141 = vmatmul.mubr.f32.gmra.mxu0 %v5140
    %v5142 = vpop.f32.mrf.mxu0
    %v5143 = vadd.f32 %v4990, %v5142
    %v5144 = vpop.f32.mrf.mxu0
    %5145 = vmatprep.mubr.f32.mxu0 0.0
    %v5146 = vand.u32 %v4118, 4294901760
    %5147 = vmatmul.mubr.f32.gmra.mxu0 %v5146
    %v5148 = vpop.f32.mrf.mxu0
    %v5149 = vadd.f32 %v4996, %v5148
    %v5150 = vpop.f32.mrf.mxu0
    %5151 = vmatprep.mubr.f32.mxu0 0.0
    %v5152 = vand.u32 %v4121, 4294901760
    %5153 = vmatmul.mubr.f32.gmra.mxu0 %v5152
    %v5154 = vpop.f32.mrf.mxu0
    %v5155 = vadd.f32 %v5002, %v5154
    %v5156 = vpop.f32.mrf.mxu0
    %5157 = vmatprep.mubr.f32.mxu0 0.0
    %v5158 = vand.u32 %v4124, 4294901760
    %5159 = vmatmul.mubr.f32.gmra.mxu0 %v5158
    %v5160 = vpop.f32.mrf.mxu0
    %v5161 = vadd.f32 %v5008, %v5160
    %v5162 = vpop.f32.mrf.mxu0
    %5163 = vmatprep.mubr.f32.mxu0 0.0
    %v5164 = vand.u32 %v4127, 4294901760
    %5165 = vmatmul.mubr.f32.gmra.mxu0 %v5164
    %v5166 = vpop.f32.mrf.mxu0
    %v5167 = vadd.f32 %v5014, %v5166
    %v5168 = vpop.f32.mrf.mxu0
    %5169 = vmatprep.mubr.f32.mxu0 0.0
    %v5170 = vand.u32 %v4130, 4294901760
    %5171 = vmatmul.mubr.f32.gmra.mxu0 %v5170
    %v5172 = vpop.f32.mrf.mxu0
    %v5173 = vadd.f32 %v5020, %v5172
    %v5174 = vpop.f32.mrf.mxu0
    %5175 = vdwg.mxu0
    %vm5176 = vcmp.gt.f32.partialorder %v5095, 0.0
    %vm5177 = vcmp.gt.f32.partialorder %v5101, 0.0
    %vm5178 = vcmp.gt.f32.partialorder %v5107, 0.0
    %vm5179 = vcmp.gt.f32.partialorder %v5113, 0.0
    %vm5180 = vcmp.gt.f32.partialorder %v5119, 0.0
    %vm5181 = vcmp.gt.f32.partialorder %v5125, 0.0
    %vm5182 = vcmp.gt.f32.partialorder %v5131, 0.0
    %vm5183 = vcmp.gt.f32.partialorder %v5137, 0.0
    %vm5184 = vcmp.gt.f32.partialorder %v5143, 0.0
    %vm5185 = vcmp.gt.f32.partialorder %v5149, 0.0
    %vm5186 = vcmp.gt.f32.partialorder %v5155, 0.0
    %vm5187 = vcmp.gt.f32.partialorder %v5161, 0.0
    %vm5188 = vcmp.gt.f32.partialorder %v5167, 0.0
    %vm5189 = vcmp.gt.f32.partialorder %v5173, 0.0
    %v5190 = vmul.f32 %v5095, 0.3
    %v5191 = vmul.f32 %v5101, 0.3
    %v5192 = vmul.f32 %v5107, 0.3
    %v5193 = vmul.f32 %v5113, 0.3
    %v5194 = vmul.f32 %v5119, 0.3
    %v5195 = vmul.f32 %v5125, 0.3
    %v5196 = vmul.f32 %v5131, 0.3
    %v5197 = vmul.f32 %v5137, 0.3
    %v5198 = vmul.f32 %v5143, 0.3
    %v5199 = vmul.f32 %v5149, 0.3
    %v5200 = vmul.f32 %v5155, 0.3
    %v5201 = vmul.f32 %v5161, 0.3
    %v5202 = vmul.f32 %v5167, 0.3
    %v5203 = vmul.f32 %v5173, 0.3
    %v5204 = vsel %vm5176, %v5095, %v5190
    %v5205 = vsel %vm5177, %v5101, %v5191
    %v5206 = vsel %vm5178, %v5107, %v5192
    %v5207 = vsel %vm5179, %v5113, %v5193
    %v5208 = vsel %vm5180, %v5119, %v5194
    %v5209 = vsel %vm5181, %v5125, %v5195
    %v5210 = vsel %vm5182, %v5131, %v5196
    %v5211 = vsel %vm5183, %v5137, %v5197
    %v5212 = vsel %vm5184, %v5143, %v5198
    %v5213 = vsel %vm5185, %v5149, %v5199
    %v5214 = vsel %vm5186, %v5155, %v5200
    %v5215 = vsel %vm5187, %v5161, %v5201
    %v5216 = vsel %vm5188, %v5167, %v5202
    %v5217 = vsel %vm5189, %v5173, %v5203
    %v5218 = vld [vmem:[%s9] sm:$0xff]
    %v5219 = vld [vmem:[%s9 + $0x8] sm:$0xff]
    %v5220 = vld [vmem:[%s9 + $0x10] sm:$0xff]
    %v5221 = vld [vmem:[%s9 + $0x18] sm:$0xff]
    %v5222 = vld [vmem:[%s9 + $0x20] sm:$0xff]
    %v5223 = vld [vmem:[%s9 + $0x28] sm:$0xff]
    %v5224 = vld [vmem:[%s9 + $0x30] sm:$0xff]
    %v5225 = vld [vmem:[%s9 + $0x38] sm:$0xff]
    %v5226 = vld [vmem:[%s9 + $0x40] sm:$0xff]
    %v5227 = vld [vmem:[%s9 + $0x48] sm:$0xff]
    %v5228 = vld [vmem:[%s9 + $0x50] sm:$0xff]
    %v5229 = vld [vmem:[%s9 + $0x58] sm:$0xff]
    %v5230 = vld [vmem:[%s9 + $0x60] sm:$0xff]
    %v5231 = vld [vmem:[%s9 + $0x68] sm:$0xff]
    %v5232 = vld [vmem:[%s10] sm:$0xff]
    %v5233 = vld [vmem:[%s10 + $0x8] sm:$0xff]
    %v5234 = vld [vmem:[%s10 + $0x10] sm:$0xff]
    %v5235 = vld [vmem:[%s10 + $0x18] sm:$0xff]
    %v5236 = vld [vmem:[%s10 + $0x20] sm:$0xff]
    %v5237 = vld [vmem:[%s10 + $0x28] sm:$0xff]
    %v5238 = vld [vmem:[%s10 + $0x30] sm:$0xff]
    %v5239 = vld [vmem:[%s10 + $0x38] sm:$0xff]
    %v5240 = vld [vmem:[%s10 + $0x40] sm:$0xff]
    %v5241 = vld [vmem:[%s10 + $0x48] sm:$0xff]
    %v5242 = vld [vmem:[%s10 + $0x50] sm:$0xff]
    %v5243 = vld [vmem:[%s10 + $0x58] sm:$0xff]
    %v5244 = vld [vmem:[%s10 + $0x60] sm:$0xff]
    %v5245 = vld [vmem:[%s10 + $0x68] sm:$0xff]
    %5247 = vset.pattern.permute.xlu0 0
    %5248 = vperm.xlu0 %5247, %v5232
    %v5249 = vpop.permute.xlu0 %5248
    %5252 = vset.pattern.permute.xlu0 0
    %5253 = vperm.xlu0 %5252, %v5233
    %v5254 = vpop.permute.xlu0 %5253
    %5257 = vset.pattern.permute.xlu0 0
    %5258 = vperm.xlu0 %5257, %v5234
    %v5259 = vpop.permute.xlu0 %5258
    %5262 = vset.pattern.permute.xlu0 0
    %5263 = vperm.xlu0 %5262, %v5235
    %v5264 = vpop.permute.xlu0 %5263
    %5267 = vset.pattern.permute.xlu0 0
    %5268 = vperm.xlu0 %5267, %v5236
    %v5269 = vpop.permute.xlu0 %5268
    %5272 = vset.pattern.permute.xlu0 0
    %5273 = vperm.xlu0 %5272, %v5237
    %v5274 = vpop.permute.xlu0 %5273
    %5277 = vset.pattern.permute.xlu0 0
    %5278 = vperm.xlu0 %5277, %v5238
    %v5279 = vpop.permute.xlu0 %5278
    %5282 = vset.pattern.permute.xlu0 0
    %5283 = vperm.xlu0 %5282, %v5239
    %v5284 = vpop.permute.xlu0 %5283
    %5287 = vset.pattern.permute.xlu0 0
    %5288 = vperm.xlu0 %5287, %v5240
    %v5289 = vpop.permute.xlu0 %5288
    %5292 = vset.pattern.permute.xlu0 0
    %5293 = vperm.xlu0 %5292, %v5241
    %v5294 = vpop.permute.xlu0 %5293
    %5297 = vset.pattern.permute.xlu0 0
    %5298 = vperm.xlu0 %5297, %v5242
    %v5299 = vpop.permute.xlu0 %5298
    %5302 = vset.pattern.permute.xlu0 0
    %5303 = vperm.xlu0 %5302, %v5243
    %v5304 = vpop.permute.xlu0 %5303
    %5307 = vset.pattern.permute.xlu0 0
    %5308 = vperm.xlu0 %5307, %v5244
    %v5309 = vpop.permute.xlu0 %5308
    %5312 = vset.pattern.permute.xlu0 0
    %5313 = vperm.xlu0 %5312, %v5245
    %v5314 = vpop.permute.xlu0 %5313
    %v5317 = vsel %vm1377, %v5218, 0
    %v5320 = vsel %vm1377, %v5219, 0
    %v5323 = vsel %vm1377, %v5220, 0
    %v5326 = vsel %vm1377, %v5221, 0
    %v5329 = vsel %vm1377, %v5222, 0
    %v5332 = vsel %vm1377, %v5223, 0
    %v5335 = vsel %vm1377, %v5224, 0
    %v5338 = vsel %vm1377, %v5225, 0
    %v5341 = vsel %vm1377, %v5226, 0
    %v5344 = vsel %vm1377, %v5227, 0
    %v5347 = vsel %vm1377, %v5228, 0
    %v5350 = vsel %vm1377, %v5229, 0
    %v5353 = vsel %vm1377, %v5230, 0
    %v5356 = vsel %vm1377, %v5231, 0
    %5358 = vmatprep.subr.mxu0 0.0
    %5359 = vmatpush1.msra.mxu0 0.0
    %5360 = vmatprep.subr.mxu0 0.0
    %5361 = vmatpush1.msra.mxu0 0.0
    %5362 = vmatprep.subr.mxu0 0.0
    %v5363 = vand.u32 %v5217, 4294901760
    %5364 = vmatpush1.msra.mxu0 %v5363
    %5365 = vmatprep.subr.mxu0 0.0
    %v5366 = vand.u32 %v5216, 4294901760
    %5367 = vmatpush1.msra.mxu0 %v5366
    %5368 = vmatprep.subr.mxu0 0.0
    %v5369 = vand.u32 %v5215, 4294901760
    %5370 = vmatpush1.msra.mxu0 %v5369
    %5371 = vmatprep.subr.mxu0 0.0
    %v5372 = vand.u32 %v5214, 4294901760
    %5373 = vmatpush1.msra.mxu0 %v5372
    %5374 = vmatprep.subr.mxu0 0.0
    %v5375 = vand.u32 %v5213, 4294901760
    %5376 = vmatpush1.msra.mxu0 %v5375
    %5377 = vmatprep.subr.mxu0 0.0
    %v5378 = vand.u32 %v5212, 4294901760
    %5379 = vmatpush1.msra.mxu0 %v5378
    %5380 = vmatprep.subr.mxu0 0.0
    %v5381 = vand.u32 %v5211, 4294901760
    %5382 = vmatpush1.msra.mxu0 %v5381
    %5383 = vmatprep.subr.mxu0 0.0
    %v5384 = vand.u32 %v5210, 4294901760
    %5385 = vmatpush1.msra.mxu0 %v5384
    %5386 = vmatprep.subr.mxu0 0.0
    %v5387 = vand.u32 %v5209, 4294901760
    %5388 = vmatpush1.msra.mxu0 %v5387
    %5389 = vmatprep.subr.mxu0 0.0
    %v5390 = vand.u32 %v5208, 4294901760
    %5391 = vmatpush1.msra.mxu0 %v5390
    %5392 = vmatprep.subr.mxu0 0.0
    %v5393 = vand.u32 %v5207, 4294901760
    %5394 = vmatpush1.msra.mxu0 %v5393
    %5395 = vmatprep.subr.mxu0 0.0
    %v5396 = vand.u32 %v5206, 4294901760
    %5397 = vmatpush1.msra.mxu0 %v5396
    %5398 = vmatprep.subr.mxu0 0.0
    %v5399 = vand.u32 %v5205, 4294901760
    %5400 = vmatpush1.msra.mxu0 %v5399
    %5401 = vmatprep.subr.mxu0 0.0
    %v5402 = vand.u32 %v5204, 4294901760
    %5403 = vmatpush1.msra.mxu0 %v5402
    %5404 = vmatprep.subr.mxu0 0.0
    %5405 = vmatpush2.msra.mxu0 0.0
    %5406 = vmatprep.subr.mxu0 0.0
    %5407 = vmatpush2.msra.mxu0 0.0
    %5408 = vmatprep.subr.mxu0 0.0
    %5409 = vmatpush2.msra.mxu0 0.0
    %5410 = vmatprep.subr.mxu0 0.0
    %5411 = vmatpush2.msra.mxu0 0.0
    %5412 = vmatprep.subr.mxu0 0.0
    %5413 = vmatpush2.msra.mxu0 0.0
    %5414 = vmatprep.subr.mxu0 0.0
    %5415 = vmatpush2.msra.mxu0 0.0
    %5416 = vmatprep.subr.mxu0 0.0
    %5417 = vmatpush2.msra.mxu0 0.0
    %5418 = vmatprep.subr.mxu0 0.0
    %5419 = vmatpush2.msra.mxu0 0.0
    %5420 = vmatprep.subr.mxu0 0.0
    %5421 = vmatpush2.msra.mxu0 0.0
    %5422 = vmatprep.subr.mxu0 0.0
    %5423 = vmatpush2.msra.mxu0 0.0
    %5424 = vmatprep.subr.mxu0 0.0
    %5425 = vmatpush2.msra.mxu0 0.0
    %5426 = vmatprep.subr.mxu0 0.0
    %5427 = vmatpush2.msra.mxu0 0.0
    %5428 = vmatprep.subr.mxu0 0.0
    %5429 = vmatpush2.msra.mxu0 0.0
    %5430 = vmatprep.subr.mxu0 0.0
    %5431 = vmatpush2.msra.mxu0 0.0
    %5432 = vmatprep.subr.mxu0 0.0
    %5433 = vmatpush2.msra.mxu0 0.0
    %5434 = vmatprep.subr.mxu0 0.0
    %5435 = vmatpush2.msra.mxu0 0.0
    %5436 = vmatprep.mubr.f32.mxu0 0.0
    %v5437 = vand.u32 %v5317, 4294901760
    %v5438 = vsub.f32 %v5317, %v5437
    %v5439 = vand.u32 %v5438, 4294901760
    %v5440 = vsub.f32 %v5438, %v5439
    %v5441 = vand.u32 %v5440, 4294901760
    %5442 = vmatmul.mubr.f32.gmra.mxu0 %v5441
    %v5443 = vpop.f32.mrf.mxu0
    %v5444 = vadd.f32 %v5249, %v5443
    %v5445 = vpop.f32.mrf.mxu0
    %5446 = vmatprep.mubr.f32.mxu0 0.0
    %v5447 = vand.u32 %v5320, 4294901760
    %v5448 = vsub.f32 %v5320, %v5447
    %v5449 = vand.u32 %v5448, 4294901760
    %v5450 = vsub.f32 %v5448, %v5449
    %v5451 = vand.u32 %v5450, 4294901760
    %5452 = vmatmul.mubr.f32.gmra.mxu0 %v5451
    %v5453 = vpop.f32.mrf.mxu0
    %v5454 = vadd.f32 %v5254, %v5453
    %v5455 = vpop.f32.mrf.mxu0
    %5456 = vmatprep.mubr.f32.mxu0 0.0
    %v5457 = vand.u32 %v5323, 4294901760
    %v5458 = vsub.f32 %v5323, %v5457
    %v5459 = vand.u32 %v5458, 4294901760
    %v5460 = vsub.f32 %v5458, %v5459
    %v5461 = vand.u32 %v5460, 4294901760
    %5462 = vmatmul.mubr.f32.gmra.mxu0 %v5461
    %v5463 = vpop.f32.mrf.mxu0
    %v5464 = vadd.f32 %v5259, %v5463
    %v5465 = vpop.f32.mrf.mxu0
    %5466 = vmatprep.mubr.f32.mxu0 0.0
    %v5467 = vand.u32 %v5326, 4294901760
    %v5468 = vsub.f32 %v5326, %v5467
    %v5469 = vand.u32 %v5468, 4294901760
    %v5470 = vsub.f32 %v5468, %v5469
    %v5471 = vand.u32 %v5470, 4294901760
    %5472 = vmatmul.mubr.f32.gmra.mxu0 %v5471
    %v5473 = vpop.f32.mrf.mxu0
    %v5474 = vadd.f32 %v5264, %v5473
    %v5475 = vpop.f32.mrf.mxu0
    %5476 = vmatprep.mubr.f32.mxu0 0.0
    %v5477 = vand.u32 %v5329, 4294901760
    %v5478 = vsub.f32 %v5329, %v5477
    %v5479 = vand.u32 %v5478, 4294901760
    %v5480 = vsub.f32 %v5478, %v5479
    %v5481 = vand.u32 %v5480, 4294901760
    %5482 = vmatmul.mubr.f32.gmra.mxu0 %v5481
    %v5483 = vpop.f32.mrf.mxu0
    %v5484 = vadd.f32 %v5269, %v5483
    %v5485 = vpop.f32.mrf.mxu0
    %5486 = vmatprep.mubr.f32.mxu0 0.0
    %v5487 = vand.u32 %v5332, 4294901760
    %v5488 = vsub.f32 %v5332, %v5487
    %v5489 = vand.u32 %v5488, 4294901760
    %v5490 = vsub.f32 %v5488, %v5489
    %v5491 = vand.u32 %v5490, 4294901760
    %5492 = vmatmul.mubr.f32.gmra.mxu0 %v5491
    %v5493 = vpop.f32.mrf.mxu0
    %v5494 = vadd.f32 %v5274, %v5493
    %v5495 = vpop.f32.mrf.mxu0
    %5496 = vmatprep.mubr.f32.mxu0 0.0
    %v5497 = vand.u32 %v5335, 4294901760
    %v5498 = vsub.f32 %v5335, %v5497
    %v5499 = vand.u32 %v5498, 4294901760
    %v5500 = vsub.f32 %v5498, %v5499
    %v5501 = vand.u32 %v5500, 4294901760
    %5502 = vmatmul.mubr.f32.gmra.mxu0 %v5501
    %v5503 = vpop.f32.mrf.mxu0
    %v5504 = vadd.f32 %v5279, %v5503
    %v5505 = vpop.f32.mrf.mxu0
    %5506 = vmatprep.mubr.f32.mxu0 0.0
    %v5507 = vand.u32 %v5338, 4294901760
    %v5508 = vsub.f32 %v5338, %v5507
    %v5509 = vand.u32 %v5508, 4294901760
    %v5510 = vsub.f32 %v5508, %v5509
    %v5511 = vand.u32 %v5510, 4294901760
    %5512 = vmatmul.mubr.f32.gmra.mxu0 %v5511
    %v5513 = vpop.f32.mrf.mxu0
    %v5514 = vadd.f32 %v5284, %v5513
    %v5515 = vpop.f32.mrf.mxu0
    %5516 = vmatprep.mubr.f32.mxu0 0.0
    %v5517 = vand.u32 %v5341, 4294901760
    %v5518 = vsub.f32 %v5341, %v5517
    %v5519 = vand.u32 %v5518, 4294901760
    %v5520 = vsub.f32 %v5518, %v5519
    %v5521 = vand.u32 %v5520, 4294901760
    %5522 = vmatmul.mubr.f32.gmra.mxu0 %v5521
    %v5523 = vpop.f32.mrf.mxu0
    %v5524 = vadd.f32 %v5289, %v5523
    %v5525 = vpop.f32.mrf.mxu0
    %5526 = vmatprep.mubr.f32.mxu0 0.0
    %v5527 = vand.u32 %v5344, 4294901760
    %v5528 = vsub.f32 %v5344, %v5527
    %v5529 = vand.u32 %v5528, 4294901760
    %v5530 = vsub.f32 %v5528, %v5529
    %v5531 = vand.u32 %v5530, 4294901760
    %5532 = vmatmul.mubr.f32.gmra.mxu0 %v5531
    %v5533 = vpop.f32.mrf.mxu0
    %v5534 = vadd.f32 %v5294, %v5533
    %v5535 = vpop.f32.mrf.mxu0
    %5536 = vmatprep.mubr.f32.mxu0 0.0
    %v5537 = vand.u32 %v5347, 4294901760
    %v5538 = vsub.f32 %v5347, %v5537
    %v5539 = vand.u32 %v5538, 4294901760
    %v5540 = vsub.f32 %v5538, %v5539
    %v5541 = vand.u32 %v5540, 4294901760
    %5542 = vmatmul.mubr.f32.gmra.mxu0 %v5541
    %v5543 = vpop.f32.mrf.mxu0
    %v5544 = vadd.f32 %v5299, %v5543
    %v5545 = vpop.f32.mrf.mxu0
    %5546 = vmatprep.mubr.f32.mxu0 0.0
    %v5547 = vand.u32 %v5350, 4294901760
    %v5548 = vsub.f32 %v5350, %v5547
    %v5549 = vand.u32 %v5548, 4294901760
    %v5550 = vsub.f32 %v5548, %v5549
    %v5551 = vand.u32 %v5550, 4294901760
    %5552 = vmatmul.mubr.f32.gmra.mxu0 %v5551
    %v5553 = vpop.f32.mrf.mxu0
    %v5554 = vadd.f32 %v5304, %v5553
    %v5555 = vpop.f32.mrf.mxu0
    %5556 = vmatprep.mubr.f32.mxu0 0.0
    %v5557 = vand.u32 %v5353, 4294901760
    %v5558 = vsub.f32 %v5353, %v5557
    %v5559 = vand.u32 %v5558, 4294901760
    %v5560 = vsub.f32 %v5558, %v5559
    %v5561 = vand.u32 %v5560, 4294901760
    %5562 = vmatmul.mubr.f32.gmra.mxu0 %v5561
    %v5563 = vpop.f32.mrf.mxu0
    %v5564 = vadd.f32 %v5309, %v5563
    %v5565 = vpop.f32.mrf.mxu0
    %5566 = vmatprep.mubr.f32.mxu0 0.0
    %v5567 = vand.u32 %v5356, 4294901760
    %v5568 = vsub.f32 %v5356, %v5567
    %v5569 = vand.u32 %v5568, 4294901760
    %v5570 = vsub.f32 %v5568, %v5569
    %v5571 = vand.u32 %v5570, 4294901760
    %5572 = vmatmul.mubr.f32.gmra.mxu0 %v5571
    %v5573 = vpop.f32.mrf.mxu0
    %v5574 = vadd.f32 %v5314, %v5573
    %v5575 = vpop.f32.mrf.mxu0
    %5576 = vdwg.mxu0
    %5577 = vmatprep.subr.mxu0 0.0
    %5578 = vmatpush1.msra.mxu0 0.0
    %5579 = vmatprep.subr.mxu0 0.0
    %5580 = vmatpush1.msra.mxu0 0.0
    %5581 = vmatprep.subr.mxu0 0.0
    %v5582 = vand.u32 %v5217, 4294901760
    %v5583 = vsub.f32 %v5217, %v5582
    %v5584 = vand.u32 %v5583, 4294901760
    %v5585 = vsub.f32 %v5583, %v5584
    %v5586 = vand.u32 %v5585, 4294901760
    %5587 = vmatpush1.msra.mxu0 %v5586
    %5588 = vmatprep.subr.mxu0 0.0
    %v5589 = vand.u32 %v5216, 4294901760
    %v5590 = vsub.f32 %v5216, %v5589
    %v5591 = vand.u32 %v5590, 4294901760
    %v5592 = vsub.f32 %v5590, %v5591
    %v5593 = vand.u32 %v5592, 4294901760
    %5594 = vmatpush1.msra.mxu0 %v5593
    %5595 = vmatprep.subr.mxu0 0.0
    %v5596 = vand.u32 %v5215, 4294901760
    %v5597 = vsub.f32 %v5215, %v5596
    %v5598 = vand.u32 %v5597, 4294901760
    %v5599 = vsub.f32 %v5597, %v5598
    %v5600 = vand.u32 %v5599, 4294901760
    %5601 = vmatpush1.msra.mxu0 %v5600
    %5602 = vmatprep.subr.mxu0 0.0
    %v5603 = vand.u32 %v5214, 4294901760
    %v5604 = vsub.f32 %v5214, %v5603
    %v5605 = vand.u32 %v5604, 4294901760
    %v5606 = vsub.f32 %v5604, %v5605
    %v5607 = vand.u32 %v5606, 4294901760
    %5608 = vmatpush1.msra.mxu0 %v5607
    %5609 = vmatprep.subr.mxu0 0.0
    %v5610 = vand.u32 %v5213, 4294901760
    %v5611 = vsub.f32 %v5213, %v5610
    %v5612 = vand.u32 %v5611, 4294901760
    %v5613 = vsub.f32 %v5611, %v5612
    %v5614 = vand.u32 %v5613, 4294901760
    %5615 = vmatpush1.msra.mxu0 %v5614
    %5616 = vmatprep.subr.mxu0 0.0
    %v5617 = vand.u32 %v5212, 4294901760
    %v5618 = vsub.f32 %v5212, %v5617
    %v5619 = vand.u32 %v5618, 4294901760
    %v5620 = vsub.f32 %v5618, %v5619
    %v5621 = vand.u32 %v5620, 4294901760
    %5622 = vmatpush1.msra.mxu0 %v5621
    %5623 = vmatprep.subr.mxu0 0.0
    %v5624 = vand.u32 %v5211, 4294901760
    %v5625 = vsub.f32 %v5211, %v5624
    %v5626 = vand.u32 %v5625, 4294901760
    %v5627 = vsub.f32 %v5625, %v5626
    %v5628 = vand.u32 %v5627, 4294901760
    %5629 = vmatpush1.msra.mxu0 %v5628
    %5630 = vmatprep.subr.mxu0 0.0
    %v5631 = vand.u32 %v5210, 4294901760
    %v5632 = vsub.f32 %v5210, %v5631
    %v5633 = vand.u32 %v5632, 4294901760
    %v5634 = vsub.f32 %v5632, %v5633
    %v5635 = vand.u32 %v5634, 4294901760
    %5636 = vmatpush1.msra.mxu0 %v5635
    %5637 = vmatprep.subr.mxu0 0.0
    %v5638 = vand.u32 %v5209, 4294901760
    %v5639 = vsub.f32 %v5209, %v5638
    %v5640 = vand.u32 %v5639, 4294901760
    %v5641 = vsub.f32 %v5639, %v5640
    %v5642 = vand.u32 %v5641, 4294901760
    %5643 = vmatpush1.msra.mxu0 %v5642
    %5644 = vmatprep.subr.mxu0 0.0
    %v5645 = vand.u32 %v5208, 4294901760
    %v5646 = vsub.f32 %v5208, %v5645
    %v5647 = vand.u32 %v5646, 4294901760
    %v5648 = vsub.f32 %v5646, %v5647
    %v5649 = vand.u32 %v5648, 4294901760
    %5650 = vmatpush1.msra.mxu0 %v5649
    %5651 = vmatprep.subr.mxu0 0.0
    %v5652 = vand.u32 %v5207, 4294901760
    %v5653 = vsub.f32 %v5207, %v5652
    %v5654 = vand.u32 %v5653, 4294901760
    %v5655 = vsub.f32 %v5653, %v5654
    %v5656 = vand.u32 %v5655, 4294901760
    %5657 = vmatpush1.msra.mxu0 %v5656
    %5658 = vmatprep.subr.mxu0 0.0
    %v5659 = vand.u32 %v5206, 4294901760
    %v5660 = vsub.f32 %v5206, %v5659
    %v5661 = vand.u32 %v5660, 4294901760
    %v5662 = vsub.f32 %v5660, %v5661
    %v5663 = vand.u32 %v5662, 4294901760
    %5664 = vmatpush1.msra.mxu0 %v5663
    %5665 = vmatprep.subr.mxu0 0.0
    %v5666 = vand.u32 %v5205, 4294901760
    %v5667 = vsub.f32 %v5205, %v5666
    %v5668 = vand.u32 %v5667, 4294901760
    %v5669 = vsub.f32 %v5667, %v5668
    %v5670 = vand.u32 %v5669, 4294901760
    %5671 = vmatpush1.msra.mxu0 %v5670
    %5672 = vmatprep.subr.mxu0 0.0
    %v5673 = vand.u32 %v5204, 4294901760
    %v5674 = vsub.f32 %v5204, %v5673
    %v5675 = vand.u32 %v5674, 4294901760
    %v5676 = vsub.f32 %v5674, %v5675
    %v5677 = vand.u32 %v5676, 4294901760
    %5678 = vmatpush1.msra.mxu0 %v5677
    %5679 = vmatprep.subr.mxu0 0.0
    %5680 = vmatpush2.msra.mxu0 0.0
    %5681 = vmatprep.subr.mxu0 0.0
    %5682 = vmatpush2.msra.mxu0 0.0
    %5683 = vmatprep.subr.mxu0 0.0
    %5684 = vmatpush2.msra.mxu0 0.0
    %5685 = vmatprep.subr.mxu0 0.0
    %5686 = vmatpush2.msra.mxu0 0.0
    %5687 = vmatprep.subr.mxu0 0.0
    %5688 = vmatpush2.msra.mxu0 0.0
    %5689 = vmatprep.subr.mxu0 0.0
    %5690 = vmatpush2.msra.mxu0 0.0
    %5691 = vmatprep.subr.mxu0 0.0
    %5692 = vmatpush2.msra.mxu0 0.0
    %5693 = vmatprep.subr.mxu0 0.0
    %5694 = vmatpush2.msra.mxu0 0.0
    %5695 = vmatprep.subr.mxu0 0.0
    %5696 = vmatpush2.msra.mxu0 0.0
    %5697 = vmatprep.subr.mxu0 0.0
    %5698 = vmatpush2.msra.mxu0 0.0
    %5699 = vmatprep.subr.mxu0 0.0
    %5700 = vmatpush2.msra.mxu0 0.0
    %5701 = vmatprep.subr.mxu0 0.0
    %5702 = vmatpush2.msra.mxu0 0.0
    %5703 = vmatprep.subr.mxu0 0.0
    %5704 = vmatpush2.msra.mxu0 0.0
    %5705 = vmatprep.subr.mxu0 0.0
    %5706 = vmatpush2.msra.mxu0 0.0
    %5707 = vmatprep.subr.mxu0 0.0
    %5708 = vmatpush2.msra.mxu0 0.0
    %5709 = vmatprep.subr.mxu0 0.0
    %5710 = vmatpush2.msra.mxu0 0.0
    %5711 = vmatprep.mubr.f32.mxu0 0.0
    %v5712 = vand.u32 %v5317, 4294901760
    %5713 = vmatmul.mubr.f32.gmra.mxu0 %v5712
    %v5714 = vpop.f32.mrf.mxu0
    %v5715 = vadd.f32 %v5444, %v5714
    %v5716 = vpop.f32.mrf.mxu0
    %5717 = vmatprep.mubr.f32.mxu0 0.0
    %v5718 = vand.u32 %v5320, 4294901760
    %5719 = vmatmul.mubr.f32.gmra.mxu0 %v5718
    %v5720 = vpop.f32.mrf.mxu0
    %v5721 = vadd.f32 %v5454, %v5720
    %v5722 = vpop.f32.mrf.mxu0
    %5723 = vmatprep.mubr.f32.mxu0 0.0
    %v5724 = vand.u32 %v5323, 4294901760
    %5725 = vmatmul.mubr.f32.gmra.mxu0 %v5724
    %v5726 = vpop.f32.mrf.mxu0
    %v5727 = vadd.f32 %v5464, %v5726
    %v5728 = vpop.f32.mrf.mxu0
    %5729 = vmatprep.mubr.f32.mxu0 0.0
    %v5730 = vand.u32 %v5326, 4294901760
    %5731 = vmatmul.mubr.f32.gmra.mxu0 %v5730
    %v5732 = vpop.f32.mrf.mxu0
    %v5733 = vadd.f32 %v5474, %v5732
    %v5734 = vpop.f32.mrf.mxu0
    %5735 = vmatprep.mubr.f32.mxu0 0.0
    %v5736 = vand.u32 %v5329, 4294901760
    %5737 = vmatmul.mubr.f32.gmra.mxu0 %v5736
    %v5738 = vpop.f32.mrf.mxu0
    %v5739 = vadd.f32 %v5484, %v5738
    %v5740 = vpop.f32.mrf.mxu0
    %5741 = vmatprep.mubr.f32.mxu0 0.0
    %v5742 = vand.u32 %v5332, 4294901760
    %5743 = vmatmul.mubr.f32.gmra.mxu0 %v5742
    %v5744 = vpop.f32.mrf.mxu0
    %v5745 = vadd.f32 %v5494, %v5744
    %v5746 = vpop.f32.mrf.mxu0
    %5747 = vmatprep.mubr.f32.mxu0 0.0
    %v5748 = vand.u32 %v5335, 4294901760
    %5749 = vmatmul.mubr.f32.gmra.mxu0 %v5748
    %v5750 = vpop.f32.mrf.mxu0
    %v5751 = vadd.f32 %v5504, %v5750
    %v5752 = vpop.f32.mrf.mxu0
    %5753 = vmatprep.mubr.f32.mxu0 0.0
    %v5754 = vand.u32 %v5338, 4294901760
    %5755 = vmatmul.mubr.f32.gmra.mxu0 %v5754
    %v5756 = vpop.f32.mrf.mxu0
    %v5757 = vadd.f32 %v5514, %v5756
    %v5758 = vpop.f32.mrf.mxu0
    %5759 = vmatprep.mubr.f32.mxu0 0.0
    %v5760 = vand.u32 %v5341, 4294901760
    %5761 = vmatmul.mubr.f32.gmra.mxu0 %v5760
    %v5762 = vpop.f32.mrf.mxu0
    %v5763 = vadd.f32 %v5524, %v5762
    %v5764 = vpop.f32.mrf.mxu0
    %5765 = vmatprep.mubr.f32.mxu0 0.0
    %v5766 = vand.u32 %v5344, 4294901760
    %5767 = vmatmul.mubr.f32.gmra.mxu0 %v5766
    %v5768 = vpop.f32.mrf.mxu0
    %v5769 = vadd.f32 %v5534, %v5768
    %v5770 = vpop.f32.mrf.mxu0
    %5771 = vmatprep.mubr.f32.mxu0 0.0
    %v5772 = vand.u32 %v5347, 4294901760
    %5773 = vmatmul.mubr.f32.gmra.mxu0 %v5772
    %v5774 = vpop.f32.mrf.mxu0
    %v5775 = vadd.f32 %v5544, %v5774
    %v5776 = vpop.f32.mrf.mxu0
    %5777 = vmatprep.mubr.f32.mxu0 0.0
    %v5778 = vand.u32 %v5350, 4294901760
    %5779 = vmatmul.mubr.f32.gmra.mxu0 %v5778
    %v5780 = vpop.f32.mrf.mxu0
    %v5781 = vadd.f32 %v5554, %v5780
    %v5782 = vpop.f32.mrf.mxu0
    %5783 = vmatprep.mubr.f32.mxu0 0.0
    %v5784 = vand.u32 %v5353, 4294901760
    %5785 = vmatmul.mubr.f32.gmra.mxu0 %v5784
    %v5786 = vpop.f32.mrf.mxu0
    %v5787 = vadd.f32 %v5564, %v5786
    %v5788 = vpop.f32.mrf.mxu0
    %5789 = vmatprep.mubr.f32.mxu0 0.0
    %v5790 = vand.u32 %v5356, 4294901760
    %5791 = vmatmul.mubr.f32.gmra.mxu0 %v5790
    %v5792 = vpop.f32.mrf.mxu0
    %v5793 = vadd.f32 %v5574, %v5792
    %v5794 = vpop.f32.mrf.mxu0
    %5795 = vdwg.mxu0
    %5796 = vmatprep.subr.mxu0 0.0
    %5797 = vmatpush1.msra.mxu0 0.0
    %5798 = vmatprep.subr.mxu0 0.0
    %5799 = vmatpush1.msra.mxu0 0.0
    %5800 = vmatprep.subr.mxu0 0.0
    %v5801 = vand.u32 %v5217, 4294901760
    %v5802 = vsub.f32 %v5217, %v5801
    %5803 = vmatpush1.msra.mxu0 %v5802
    %5804 = vmatprep.subr.mxu0 0.0
    %v5805 = vand.u32 %v5216, 4294901760
    %v5806 = vsub.f32 %v5216, %v5805
    %5807 = vmatpush1.msra.mxu0 %v5806
    %5808 = vmatprep.subr.mxu0 0.0
    %v5809 = vand.u32 %v5215, 4294901760
    %v5810 = vsub.f32 %v5215, %v5809
    %5811 = vmatpush1.msra.mxu0 %v5810
    %5812 = vmatprep.subr.mxu0 0.0
    %v5813 = vand.u32 %v5214, 4294901760
    %v5814 = vsub.f32 %v5214, %v5813
    %5815 = vmatpush1.msra.mxu0 %v5814
    %5816 = vmatprep.subr.mxu0 0.0
    %v5817 = vand.u32 %v5213, 4294901760
    %v5818 = vsub.f32 %v5213, %v5817
    %5819 = vmatpush1.msra.mxu0 %v5818
    %5820 = vmatprep.subr.mxu0 0.0
    %v5821 = vand.u32 %v5212, 4294901760
    %v5822 = vsub.f32 %v5212, %v5821
    %5823 = vmatpush1.msra.mxu0 %v5822
    %5824 = vmatprep.subr.mxu0 0.0
    %v5825 = vand.u32 %v5211, 4294901760
    %v5826 = vsub.f32 %v5211, %v5825
    %5827 = vmatpush1.msra.mxu0 %v5826
    %5828 = vmatprep.subr.mxu0 0.0
    %v5829 = vand.u32 %v5210, 4294901760
    %v5830 = vsub.f32 %v5210, %v5829
    %5831 = vmatpush1.msra.mxu0 %v5830
    %5832 = vmatprep.subr.mxu0 0.0
    %v5833 = vand.u32 %v5209, 4294901760
    %v5834 = vsub.f32 %v5209, %v5833
    %5835 = vmatpush1.msra.mxu0 %v5834
    %5836 = vmatprep.subr.mxu0 0.0
    %v5837 = vand.u32 %v5208, 4294901760
    %v5838 = vsub.f32 %v5208, %v5837
    %5839 = vmatpush1.msra.mxu0 %v5838
    %5840 = vmatprep.subr.mxu0 0.0
    %v5841 = vand.u32 %v5207, 4294901760
    %v5842 = vsub.f32 %v5207, %v5841
    %5843 = vmatpush1.msra.mxu0 %v5842
    %5844 = vmatprep.subr.mxu0 0.0
    %v5845 = vand.u32 %v5206, 4294901760
    %v5846 = vsub.f32 %v5206, %v5845
    %5847 = vmatpush1.msra.mxu0 %v5846
    %5848 = vmatprep.subr.mxu0 0.0
    %v5849 = vand.u32 %v5205, 4294901760
    %v5850 = vsub.f32 %v5205, %v5849
    %5851 = vmatpush1.msra.mxu0 %v5850
    %5852 = vmatprep.subr.mxu0 0.0
    %v5853 = vand.u32 %v5204, 4294901760
    %v5854 = vsub.f32 %v5204, %v5853
    %5855 = vmatpush1.msra.mxu0 %v5854
    %5856 = vmatprep.subr.mxu0 0.0
    %5857 = vmatpush2.msra.mxu0 0.0
    %5858 = vmatprep.subr.mxu0 0.0
    %5859 = vmatpush2.msra.mxu0 0.0
    %5860 = vmatprep.subr.mxu0 0.0
    %5861 = vmatpush2.msra.mxu0 0.0
    %5862 = vmatprep.subr.mxu0 0.0
    %5863 = vmatpush2.msra.mxu0 0.0
    %5864 = vmatprep.subr.mxu0 0.0
    %5865 = vmatpush2.msra.mxu0 0.0
    %5866 = vmatprep.subr.mxu0 0.0
    %5867 = vmatpush2.msra.mxu0 0.0
    %5868 = vmatprep.subr.mxu0 0.0
    %5869 = vmatpush2.msra.mxu0 0.0
    %5870 = vmatprep.subr.mxu0 0.0
    %5871 = vmatpush2.msra.mxu0 0.0
    %5872 = vmatprep.subr.mxu0 0.0
    %5873 = vmatpush2.msra.mxu0 0.0
    %5874 = vmatprep.subr.mxu0 0.0
    %5875 = vmatpush2.msra.mxu0 0.0
    %5876 = vmatprep.subr.mxu0 0.0
    %5877 = vmatpush2.msra.mxu0 0.0
    %5878 = vmatprep.subr.mxu0 0.0
    %5879 = vmatpush2.msra.mxu0 0.0
    %5880 = vmatprep.subr.mxu0 0.0
    %5881 = vmatpush2.msra.mxu0 0.0
    %5882 = vmatprep.subr.mxu0 0.0
    %5883 = vmatpush2.msra.mxu0 0.0
    %5884 = vmatprep.subr.mxu0 0.0
    %5885 = vmatpush2.msra.mxu0 0.0
    %5886 = vmatprep.subr.mxu0 0.0
    %5887 = vmatpush2.msra.mxu0 0.0
    %5888 = vmatprep.mubr.f32.mxu0 0.0
    %v5889 = vand.u32 %v5317, 4294901760
    %v5890 = vsub.f32 %v5317, %v5889
    %5891 = vmatmul.mubr.f32.gmra.mxu0 %v5890
    %v5892 = vpop.f32.mrf.mxu0
    %v5893 = vadd.f32 %v5715, %v5892
    %v5894 = vpop.f32.mrf.mxu0
    %5895 = vmatprep.mubr.f32.mxu0 0.0
    %v5896 = vand.u32 %v5320, 4294901760
    %v5897 = vsub.f32 %v5320, %v5896
    %5898 = vmatmul.mubr.f32.gmra.mxu0 %v5897
    %v5899 = vpop.f32.mrf.mxu0
    %v5900 = vadd.f32 %v5721, %v5899
    %v5901 = vpop.f32.mrf.mxu0
    %5902 = vmatprep.mubr.f32.mxu0 0.0
    %v5903 = vand.u32 %v5323, 4294901760
    %v5904 = vsub.f32 %v5323, %v5903
    %5905 = vmatmul.mubr.f32.gmra.mxu0 %v5904
    %v5906 = vpop.f32.mrf.mxu0
    %v5907 = vadd.f32 %v5727, %v5906
    %v5908 = vpop.f32.mrf.mxu0
    %5909 = vmatprep.mubr.f32.mxu0 0.0
    %v5910 = vand.u32 %v5326, 4294901760
    %v5911 = vsub.f32 %v5326, %v5910
    %5912 = vmatmul.mubr.f32.gmra.mxu0 %v5911
    %v5913 = vpop.f32.mrf.mxu0
    %v5914 = vadd.f32 %v5733, %v5913
    %v5915 = vpop.f32.mrf.mxu0
    %5916 = vmatprep.mubr.f32.mxu0 0.0
    %v5917 = vand.u32 %v5329, 4294901760
    %v5918 = vsub.f32 %v5329, %v5917
    %5919 = vmatmul.mubr.f32.gmra.mxu0 %v5918
    %v5920 = vpop.f32.mrf.mxu0
    %v5921 = vadd.f32 %v5739, %v5920
    %v5922 = vpop.f32.mrf.mxu0
    %5923 = vmatprep.mubr.f32.mxu0 0.0
    %v5924 = vand.u32 %v5332, 4294901760
    %v5925 = vsub.f32 %v5332, %v5924
    %5926 = vmatmul.mubr.f32.gmra.mxu0 %v5925
    %v5927 = vpop.f32.mrf.mxu0
    %v5928 = vadd.f32 %v5745, %v5927
    %v5929 = vpop.f32.mrf.mxu0
    %5930 = vmatprep.mubr.f32.mxu0 0.0
    %v5931 = vand.u32 %v5335, 4294901760
    %v5932 = vsub.f32 %v5335, %v5931
    %5933 = vmatmul.mubr.f32.gmra.mxu0 %v5932
    %v5934 = vpop.f32.mrf.mxu0
    %v5935 = vadd.f32 %v5751, %v5934
    %v5936 = vpop.f32.mrf.mxu0
    %5937 = vmatprep.mubr.f32.mxu0 0.0
    %v5938 = vand.u32 %v5338, 4294901760
    %v5939 = vsub.f32 %v5338, %v5938
    %5940 = vmatmul.mubr.f32.gmra.mxu0 %v5939
    %v5941 = vpop.f32.mrf.mxu0
    %v5942 = vadd.f32 %v5757, %v5941
    %v5943 = vpop.f32.mrf.mxu0
    %5944 = vmatprep.mubr.f32.mxu0 0.0
    %v5945 = vand.u32 %v5341, 4294901760
    %v5946 = vsub.f32 %v5341, %v5945
    %5947 = vmatmul.mubr.f32.gmra.mxu0 %v5946
    %v5948 = vpop.f32.mrf.mxu0
    %v5949 = vadd.f32 %v5763, %v5948
    %v5950 = vpop.f32.mrf.mxu0
    %5951 = vmatprep.mubr.f32.mxu0 0.0
    %v5952 = vand.u32 %v5344, 4294901760
    %v5953 = vsub.f32 %v5344, %v5952
    %5954 = vmatmul.mubr.f32.gmra.mxu0 %v5953
    %v5955 = vpop.f32.mrf.mxu0
    %v5956 = vadd.f32 %v5769, %v5955
    %v5957 = vpop.f32.mrf.mxu0
    %5958 = vmatprep.mubr.f32.mxu0 0.0
    %v5959 = vand.u32 %v5347, 4294901760
    %v5960 = vsub.f32 %v5347, %v5959
    %5961 = vmatmul.mubr.f32.gmra.mxu0 %v5960
    %v5962 = vpop.f32.mrf.mxu0
    %v5963 = vadd.f32 %v5775, %v5962
    %v5964 = vpop.f32.mrf.mxu0
    %5965 = vmatprep.mubr.f32.mxu0 0.0
    %v5966 = vand.u32 %v5350, 4294901760
    %v5967 = vsub.f32 %v5350, %v5966
    %5968 = vmatmul.mubr.f32.gmra.mxu0 %v5967
    %v5969 = vpop.f32.mrf.mxu0
    %v5970 = vadd.f32 %v5781, %v5969
    %v5971 = vpop.f32.mrf.mxu0
    %5972 = vmatprep.mubr.f32.mxu0 0.0
    %v5973 = vand.u32 %v5353, 4294901760
    %v5974 = vsub.f32 %v5353, %v5973
    %5975 = vmatmul.mubr.f32.gmra.mxu0 %v5974
    %v5976 = vpop.f32.mrf.mxu0
    %v5977 = vadd.f32 %v5787, %v5976
    %v5978 = vpop.f32.mrf.mxu0
    %5979 = vmatprep.mubr.f32.mxu0 0.0
    %v5980 = vand.u32 %v5356, 4294901760
    %v5981 = vsub.f32 %v5356, %v5980
    %5982 = vmatmul.mubr.f32.gmra.mxu0 %v5981
    %v5983 = vpop.f32.mrf.mxu0
    %v5984 = vadd.f32 %v5793, %v5983
    %v5985 = vpop.f32.mrf.mxu0
    %5986 = vdwg.mxu0
    %5987 = vmatprep.subr.mxu0 0.0
    %5988 = vmatpush1.msra.mxu0 0.0
    %5989 = vmatprep.subr.mxu0 0.0
    %5990 = vmatpush1.msra.mxu0 0.0
    %5991 = vmatprep.subr.mxu0 0.0
    %v5992 = vand.u32 %v5217, 4294901760
    %5993 = vmatpush1.msra.mxu0 %v5992
    %5994 = vmatprep.subr.mxu0 0.0
    %v5995 = vand.u32 %v5216, 4294901760
    %5996 = vmatpush1.msra.mxu0 %v5995
    %5997 = vmatprep.subr.mxu0 0.0
    %v5998 = vand.u32 %v5215, 4294901760
    %5999 = vmatpush1.msra.mxu0 %v5998
    %6000 = vmatprep.subr.mxu0 0.0
    %v6001 = vand.u32 %v5214, 4294901760
    %6002 = vmatpush1.msra.mxu0 %v6001
    %6003 = vmatprep.subr.mxu0 0.0
    %v6004 = vand.u32 %v5213, 4294901760
    %6005 = vmatpush1.msra.mxu0 %v6004
    %6006 = vmatprep.subr.mxu0 0.0
    %v6007 = vand.u32 %v5212, 4294901760
    %6008 = vmatpush1.msra.mxu0 %v6007
    %6009 = vmatprep.subr.mxu0 0.0
    %v6010 = vand.u32 %v5211, 4294901760
    %6011 = vmatpush1.msra.mxu0 %v6010
    %6012 = vmatprep.subr.mxu0 0.0
    %v6013 = vand.u32 %v5210, 4294901760
    %6014 = vmatpush1.msra.mxu0 %v6013
    %6015 = vmatprep.subr.mxu0 0.0
    %v6016 = vand.u32 %v5209, 4294901760
    %6017 = vmatpush1.msra.mxu0 %v6016
    %6018 = vmatprep.subr.mxu0 0.0
    %v6019 = vand.u32 %v5208, 4294901760
    %6020 = vmatpush1.msra.mxu0 %v6019
    %6021 = vmatprep.subr.mxu0 0.0
    %v6022 = vand.u32 %v5207, 4294901760
    %6023 = vmatpush1.msra.mxu0 %v6022
    %6024 = vmatprep.subr.mxu0 0.0
    %v6025 = vand.u32 %v5206, 4294901760
    %6026 = vmatpush1.msra.mxu0 %v6025
    %6027 = vmatprep.subr.mxu0 0.0
    %v6028 = vand.u32 %v5205, 4294901760
    %6029 = vmatpush1.msra.mxu0 %v6028
    %6030 = vmatprep.subr.mxu0 0.0
    %v6031 = vand.u32 %v5204, 4294901760
    %6032 = vmatpush1.msra.mxu0 %v6031
    %6033 = vmatprep.subr.mxu0 0.0
    %6034 = vmatpush2.msra.mxu0 0.0
    %6035 = vmatprep.subr.mxu0 0.0
    %6036 = vmatpush2.msra.mxu0 0.0
    %6037 = vmatprep.subr.mxu0 0.0
    %6038 = vmatpush2.msra.mxu0 0.0
    %6039 = vmatprep.subr.mxu0 0.0
    %6040 = vmatpush2.msra.mxu0 0.0
    %6041 = vmatprep.subr.mxu0 0.0
    %6042 = vmatpush2.msra.mxu0 0.0
    %6043 = vmatprep.subr.mxu0 0.0
    %6044 = vmatpush2.msra.mxu0 0.0
    %6045 = vmatprep.subr.mxu0 0.0
    %6046 = vmatpush2.msra.mxu0 0.0
    %6047 = vmatprep.subr.mxu0 0.0
    %6048 = vmatpush2.msra.mxu0 0.0
    %6049 = vmatprep.subr.mxu0 0.0
    %6050 = vmatpush2.msra.mxu0 0.0
    %6051 = vmatprep.subr.mxu0 0.0
    %6052 = vmatpush2.msra.mxu0 0.0
    %6053 = vmatprep.subr.mxu0 0.0
    %6054 = vmatpush2.msra.mxu0 0.0
    %6055 = vmatprep.subr.mxu0 0.0
    %6056 = vmatpush2.msra.mxu0 0.0
    %6057 = vmatprep.subr.mxu0 0.0
    %6058 = vmatpush2.msra.mxu0 0.0
    %6059 = vmatprep.subr.mxu0 0.0
    %6060 = vmatpush2.msra.mxu0 0.0
    %6061 = vmatprep.subr.mxu0 0.0
    %6062 = vmatpush2.msra.mxu0 0.0
    %6063 = vmatprep.subr.mxu0 0.0
    %6064 = vmatpush2.msra.mxu0 0.0
    %6065 = vmatprep.mubr.f32.mxu0 0.0
    %v6066 = vand.u32 %v5317, 4294901760
    %v6067 = vsub.f32 %v5317, %v6066
    %v6068 = vand.u32 %v6067, 4294901760
    %6069 = vmatmul.mubr.f32.gmra.mxu0 %v6068
    %v6070 = vpop.f32.mrf.mxu0
    %v6071 = vadd.f32 %v5893, %v6070
    %v6072 = vpop.f32.mrf.mxu0
    %6073 = vmatprep.mubr.f32.mxu0 0.0
    %v6074 = vand.u32 %v5320, 4294901760
    %v6075 = vsub.f32 %v5320, %v6074
    %v6076 = vand.u32 %v6075, 4294901760
    %6077 = vmatmul.mubr.f32.gmra.mxu0 %v6076
    %v6078 = vpop.f32.mrf.mxu0
    %v6079 = vadd.f32 %v5900, %v6078
    %v6080 = vpop.f32.mrf.mxu0
    %6081 = vmatprep.mubr.f32.mxu0 0.0
    %v6082 = vand.u32 %v5323, 4294901760
    %v6083 = vsub.f32 %v5323, %v6082
    %v6084 = vand.u32 %v6083, 4294901760
    %6085 = vmatmul.mubr.f32.gmra.mxu0 %v6084
    %v6086 = vpop.f32.mrf.mxu0
    %v6087 = vadd.f32 %v5907, %v6086
    %v6088 = vpop.f32.mrf.mxu0
    %6089 = vmatprep.mubr.f32.mxu0 0.0
    %v6090 = vand.u32 %v5326, 4294901760
    %v6091 = vsub.f32 %v5326, %v6090
    %v6092 = vand.u32 %v6091, 4294901760
    %6093 = vmatmul.mubr.f32.gmra.mxu0 %v6092
    %v6094 = vpop.f32.mrf.mxu0
    %v6095 = vadd.f32 %v5914, %v6094
    %v6096 = vpop.f32.mrf.mxu0
    %6097 = vmatprep.mubr.f32.mxu0 0.0
    %v6098 = vand.u32 %v5329, 4294901760
    %v6099 = vsub.f32 %v5329, %v6098
    %v6100 = vand.u32 %v6099, 4294901760
    %6101 = vmatmul.mubr.f32.gmra.mxu0 %v6100
    %v6102 = vpop.f32.mrf.mxu0
    %v6103 = vadd.f32 %v5921, %v6102
    %v6104 = vpop.f32.mrf.mxu0
    %6105 = vmatprep.mubr.f32.mxu0 0.0
    %v6106 = vand.u32 %v5332, 4294901760
    %v6107 = vsub.f32 %v5332, %v6106
    %v6108 = vand.u32 %v6107, 4294901760
    %6109 = vmatmul.mubr.f32.gmra.mxu0 %v6108
    %v6110 = vpop.f32.mrf.mxu0
    %v6111 = vadd.f32 %v5928, %v6110
    %v6112 = vpop.f32.mrf.mxu0
    %6113 = vmatprep.mubr.f32.mxu0 0.0
    %v6114 = vand.u32 %v5335, 4294901760
    %v6115 = vsub.f32 %v5335, %v6114
    %v6116 = vand.u32 %v6115, 4294901760
    %6117 = vmatmul.mubr.f32.gmra.mxu0 %v6116
    %v6118 = vpop.f32.mrf.mxu0
    %v6119 = vadd.f32 %v5935, %v6118
    %v6120 = vpop.f32.mrf.mxu0
    %6121 = vmatprep.mubr.f32.mxu0 0.0
    %v6122 = vand.u32 %v5338, 4294901760
    %v6123 = vsub.f32 %v5338, %v6122
    %v6124 = vand.u32 %v6123, 4294901760
    %6125 = vmatmul.mubr.f32.gmra.mxu0 %v6124
    %v6126 = vpop.f32.mrf.mxu0
    %v6127 = vadd.f32 %v5942, %v6126
    %v6128 = vpop.f32.mrf.mxu0
    %6129 = vmatprep.mubr.f32.mxu0 0.0
    %v6130 = vand.u32 %v5341, 4294901760
    %v6131 = vsub.f32 %v5341, %v6130
    %v6132 = vand.u32 %v6131, 4294901760
    %6133 = vmatmul.mubr.f32.gmra.mxu0 %v6132
    %v6134 = vpop.f32.mrf.mxu0
    %v6135 = vadd.f32 %v5949, %v6134
    %v6136 = vpop.f32.mrf.mxu0
    %6137 = vmatprep.mubr.f32.mxu0 0.0
    %v6138 = vand.u32 %v5344, 4294901760
    %v6139 = vsub.f32 %v5344, %v6138
    %v6140 = vand.u32 %v6139, 4294901760
    %6141 = vmatmul.mubr.f32.gmra.mxu0 %v6140
    %v6142 = vpop.f32.mrf.mxu0
    %v6143 = vadd.f32 %v5956, %v6142
    %v6144 = vpop.f32.mrf.mxu0
    %6145 = vmatprep.mubr.f32.mxu0 0.0
    %v6146 = vand.u32 %v5347, 4294901760
    %v6147 = vsub.f32 %v5347, %v6146
    %v6148 = vand.u32 %v6147, 4294901760
    %6149 = vmatmul.mubr.f32.gmra.mxu0 %v6148
    %v6150 = vpop.f32.mrf.mxu0
    %v6151 = vadd.f32 %v5963, %v6150
    %v6152 = vpop.f32.mrf.mxu0
    %6153 = vmatprep.mubr.f32.mxu0 0.0
    %v6154 = vand.u32 %v5350, 4294901760
    %v6155 = vsub.f32 %v5350, %v6154
    %v6156 = vand.u32 %v6155, 4294901760
    %6157 = vmatmul.mubr.f32.gmra.mxu0 %v6156
    %v6158 = vpop.f32.mrf.mxu0
    %v6159 = vadd.f32 %v5970, %v6158
    %v6160 = vpop.f32.mrf.mxu0
    %6161 = vmatprep.mubr.f32.mxu0 0.0
    %v6162 = vand.u32 %v5353, 4294901760
    %v6163 = vsub.f32 %v5353, %v6162
    %v6164 = vand.u32 %v6163, 4294901760
    %6165 = vmatmul.mubr.f32.gmra.mxu0 %v6164
    %v6166 = vpop.f32.mrf.mxu0
    %v6167 = vadd.f32 %v5977, %v6166
    %v6168 = vpop.f32.mrf.mxu0
    %6169 = vmatprep.mubr.f32.mxu0 0.0
    %v6170 = vand.u32 %v5356, 4294901760
    %v6171 = vsub.f32 %v5356, %v6170
    %v6172 = vand.u32 %v6171, 4294901760
    %6173 = vmatmul.mubr.f32.gmra.mxu0 %v6172
    %v6174 = vpop.f32.mrf.mxu0
    %v6175 = vadd.f32 %v5984, %v6174
    %v6176 = vpop.f32.mrf.mxu0
    %6177 = vdwg.mxu0
    %6178 = vmatprep.subr.mxu0 0.0
    %6179 = vmatpush1.msra.mxu0 0.0
    %6180 = vmatprep.subr.mxu0 0.0
    %6181 = vmatpush1.msra.mxu0 0.0
    %6182 = vmatprep.subr.mxu0 0.0
    %v6183 = vand.u32 %v5217, 4294901760
    %v6184 = vsub.f32 %v5217, %v6183
    %v6185 = vand.u32 %v6184, 4294901760
    %6186 = vmatpush1.msra.mxu0 %v6185
    %6187 = vmatprep.subr.mxu0 0.0
    %v6188 = vand.u32 %v5216, 4294901760
    %v6189 = vsub.f32 %v5216, %v6188
    %v6190 = vand.u32 %v6189, 4294901760
    %6191 = vmatpush1.msra.mxu0 %v6190
    %6192 = vmatprep.subr.mxu0 0.0
    %v6193 = vand.u32 %v5215, 4294901760
    %v6194 = vsub.f32 %v5215, %v6193
    %v6195 = vand.u32 %v6194, 4294901760
    %6196 = vmatpush1.msra.mxu0 %v6195
    %6197 = vmatprep.subr.mxu0 0.0
    %v6198 = vand.u32 %v5214, 4294901760
    %v6199 = vsub.f32 %v5214, %v6198
    %v6200 = vand.u32 %v6199, 4294901760
    %6201 = vmatpush1.msra.mxu0 %v6200
    %6202 = vmatprep.subr.mxu0 0.0
    %v6203 = vand.u32 %v5213, 4294901760
    %v6204 = vsub.f32 %v5213, %v6203
    %v6205 = vand.u32 %v6204, 4294901760
    %6206 = vmatpush1.msra.mxu0 %v6205
    %6207 = vmatprep.subr.mxu0 0.0
    %v6208 = vand.u32 %v5212, 4294901760
    %v6209 = vsub.f32 %v5212, %v6208
    %v6210 = vand.u32 %v6209, 4294901760
    %6211 = vmatpush1.msra.mxu0 %v6210
    %6212 = vmatprep.subr.mxu0 0.0
    %v6213 = vand.u32 %v5211, 4294901760
    %v6214 = vsub.f32 %v5211, %v6213
    %v6215 = vand.u32 %v6214, 4294901760
    %6216 = vmatpush1.msra.mxu0 %v6215
    %6217 = vmatprep.subr.mxu0 0.0
    %v6218 = vand.u32 %v5210, 4294901760
    %v6219 = vsub.f32 %v5210, %v6218
    %v6220 = vand.u32 %v6219, 4294901760
    %6221 = vmatpush1.msra.mxu0 %v6220
    %6222 = vmatprep.subr.mxu0 0.0
    %v6223 = vand.u32 %v5209, 4294901760
    %v6224 = vsub.f32 %v5209, %v6223
    %v6225 = vand.u32 %v6224, 4294901760
    %6226 = vmatpush1.msra.mxu0 %v6225
    %6227 = vmatprep.subr.mxu0 0.0
    %v6228 = vand.u32 %v5208, 4294901760
    %v6229 = vsub.f32 %v5208, %v6228
    %v6230 = vand.u32 %v6229, 4294901760
    %6231 = vmatpush1.msra.mxu0 %v6230
    %6232 = vmatprep.subr.mxu0 0.0
    %v6233 = vand.u32 %v5207, 4294901760
    %v6234 = vsub.f32 %v5207, %v6233
    %v6235 = vand.u32 %v6234, 4294901760
    %6236 = vmatpush1.msra.mxu0 %v6235
    %6237 = vmatprep.subr.mxu0 0.0
    %v6238 = vand.u32 %v5206, 4294901760
    %v6239 = vsub.f32 %v5206, %v6238
    %v6240 = vand.u32 %v6239, 4294901760
    %6241 = vmatpush1.msra.mxu0 %v6240
    %6242 = vmatprep.subr.mxu0 0.0
    %v6243 = vand.u32 %v5205, 4294901760
    %v6244 = vsub.f32 %v5205, %v6243
    %v6245 = vand.u32 %v6244, 4294901760
    %6246 = vmatpush1.msra.mxu0 %v6245
    %6247 = vmatprep.subr.mxu0 0.0
    %v6248 = vand.u32 %v5204, 4294901760
    %v6249 = vsub.f32 %v5204, %v6248
    %v6250 = vand.u32 %v6249, 4294901760
    %6251 = vmatpush1.msra.mxu0 %v6250
    %6252 = vmatprep.subr.mxu0 0.0
    %6253 = vmatpush2.msra.mxu0 0.0
    %6254 = vmatprep.subr.mxu0 0.0
    %6255 = vmatpush2.msra.mxu0 0.0
    %6256 = vmatprep.subr.mxu0 0.0
    %6257 = vmatpush2.msra.mxu0 0.0
    %6258 = vmatprep.subr.mxu0 0.0
    %6259 = vmatpush2.msra.mxu0 0.0
    %6260 = vmatprep.subr.mxu0 0.0
    %6261 = vmatpush2.msra.mxu0 0.0
    %6262 = vmatprep.subr.mxu0 0.0
    %6263 = vmatpush2.msra.mxu0 0.0
    %6264 = vmatprep.subr.mxu0 0.0
    %6265 = vmatpush2.msra.mxu0 0.0
    %6266 = vmatprep.subr.mxu0 0.0
    %6267 = vmatpush2.msra.mxu0 0.0
    %6268 = vmatprep.subr.mxu0 0.0
    %6269 = vmatpush2.msra.mxu0 0.0
    %6270 = vmatprep.subr.mxu0 0.0
    %6271 = vmatpush2.msra.mxu0 0.0
    %6272 = vmatprep.subr.mxu0 0.0
    %6273 = vmatpush2.msra.mxu0 0.0
    %6274 = vmatprep.subr.mxu0 0.0
    %6275 = vmatpush2.msra.mxu0 0.0
    %6276 = vmatprep.subr.mxu0 0.0
    %6277 = vmatpush2.msra.mxu0 0.0
    %6278 = vmatprep.subr.mxu0 0.0
    %6279 = vmatpush2.msra.mxu0 0.0
    %6280 = vmatprep.subr.mxu0 0.0
    %6281 = vmatpush2.msra.mxu0 0.0
    %6282 = vmatprep.subr.mxu0 0.0
    %6283 = vmatpush2.msra.mxu0 0.0
    %6284 = vmatprep.mubr.f32.mxu0 0.0
    %v6285 = vand.u32 %v5317, 4294901760
    %6286 = vmatmul.mubr.f32.gmra.mxu0 %v6285
    %v6287 = vpop.f32.mrf.mxu0
    %v6288 = vadd.f32 %v6071, %v6287
    %v6289 = vpop.f32.mrf.mxu0
    %6290 = vmatprep.mubr.f32.mxu0 0.0
    %v6291 = vand.u32 %v5320, 4294901760
    %6292 = vmatmul.mubr.f32.gmra.mxu0 %v6291
    %v6293 = vpop.f32.mrf.mxu0
    %v6294 = vadd.f32 %v6079, %v6293
    %v6295 = vpop.f32.mrf.mxu0
    %6296 = vmatprep.mubr.f32.mxu0 0.0
    %v6297 = vand.u32 %v5323, 4294901760
    %6298 = vmatmul.mubr.f32.gmra.mxu0 %v6297
    %v6299 = vpop.f32.mrf.mxu0
    %v6300 = vadd.f32 %v6087, %v6299
    %v6301 = vpop.f32.mrf.mxu0
    %6302 = vmatprep.mubr.f32.mxu0 0.0
    %v6303 = vand.u32 %v5326, 4294901760
    %6304 = vmatmul.mubr.f32.gmra.mxu0 %v6303
    %v6305 = vpop.f32.mrf.mxu0
    %v6306 = vadd.f32 %v6095, %v6305
    %v6307 = vpop.f32.mrf.mxu0
    %6308 = vmatprep.mubr.f32.mxu0 0.0
    %v6309 = vand.u32 %v5329, 4294901760
    %6310 = vmatmul.mubr.f32.gmra.mxu0 %v6309
    %v6311 = vpop.f32.mrf.mxu0
    %v6312 = vadd.f32 %v6103, %v6311
    %v6313 = vpop.f32.mrf.mxu0
    %6314 = vmatprep.mubr.f32.mxu0 0.0
    %v6315 = vand.u32 %v5332, 4294901760
    %6316 = vmatmul.mubr.f32.gmra.mxu0 %v6315
    %v6317 = vpop.f32.mrf.mxu0
    %v6318 = vadd.f32 %v6111, %v6317
    %v6319 = vpop.f32.mrf.mxu0
    %6320 = vmatprep.mubr.f32.mxu0 0.0
    %v6321 = vand.u32 %v5335, 4294901760
    %6322 = vmatmul.mubr.f32.gmra.mxu0 %v6321
    %v6323 = vpop.f32.mrf.mxu0
    %v6324 = vadd.f32 %v6119, %v6323
    %v6325 = vpop.f32.mrf.mxu0
    %6326 = vmatprep.mubr.f32.mxu0 0.0
    %v6327 = vand.u32 %v5338, 4294901760
    %6328 = vmatmul.mubr.f32.gmra.mxu0 %v6327
    %v6329 = vpop.f32.mrf.mxu0
    %v6330 = vadd.f32 %v6127, %v6329
    %v6331 = vpop.f32.mrf.mxu0
    %6332 = vmatprep.mubr.f32.mxu0 0.0
    %v6333 = vand.u32 %v5341, 4294901760
    %6334 = vmatmul.mubr.f32.gmra.mxu0 %v6333
    %v6335 = vpop.f32.mrf.mxu0
    %v6336 = vadd.f32 %v6135, %v6335
    %v6337 = vpop.f32.mrf.mxu0
    %6338 = vmatprep.mubr.f32.mxu0 0.0
    %v6339 = vand.u32 %v5344, 4294901760
    %6340 = vmatmul.mubr.f32.gmra.mxu0 %v6339
    %v6341 = vpop.f32.mrf.mxu0
    %v6342 = vadd.f32 %v6143, %v6341
    %v6343 = vpop.f32.mrf.mxu0
    %6344 = vmatprep.mubr.f32.mxu0 0.0
    %v6345 = vand.u32 %v5347, 4294901760
    %6346 = vmatmul.mubr.f32.gmra.mxu0 %v6345
    %v6347 = vpop.f32.mrf.mxu0
    %v6348 = vadd.f32 %v6151, %v6347
    %v6349 = vpop.f32.mrf.mxu0
    %6350 = vmatprep.mubr.f32.mxu0 0.0
    %v6351 = vand.u32 %v5350, 4294901760
    %6352 = vmatmul.mubr.f32.gmra.mxu0 %v6351
    %v6353 = vpop.f32.mrf.mxu0
    %v6354 = vadd.f32 %v6159, %v6353
    %v6355 = vpop.f32.mrf.mxu0
    %6356 = vmatprep.mubr.f32.mxu0 0.0
    %v6357 = vand.u32 %v5353, 4294901760
    %6358 = vmatmul.mubr.f32.gmra.mxu0 %v6357
    %v6359 = vpop.f32.mrf.mxu0
    %v6360 = vadd.f32 %v6167, %v6359
    %v6361 = vpop.f32.mrf.mxu0
    %6362 = vmatprep.mubr.f32.mxu0 0.0
    %v6363 = vand.u32 %v5356, 4294901760
    %6364 = vmatmul.mubr.f32.gmra.mxu0 %v6363
    %v6365 = vpop.f32.mrf.mxu0
    %v6366 = vadd.f32 %v6175, %v6365
    %v6367 = vpop.f32.mrf.mxu0
    %6368 = vdwg.mxu0
    %6369 = vmatprep.subr.mxu0 0.0
    %6370 = vmatpush1.msra.mxu0 0.0
    %6371 = vmatprep.subr.mxu0 0.0
    %6372 = vmatpush1.msra.mxu0 0.0
    %6373 = vmatprep.subr.mxu0 0.0
    %v6374 = vand.u32 %v5217, 4294901760
    %6375 = vmatpush1.msra.mxu0 %v6374
    %6376 = vmatprep.subr.mxu0 0.0
    %v6377 = vand.u32 %v5216, 4294901760
    %6378 = vmatpush1.msra.mxu0 %v6377
    %6379 = vmatprep.subr.mxu0 0.0
    %v6380 = vand.u32 %v5215, 4294901760
    %6381 = vmatpush1.msra.mxu0 %v6380
    %6382 = vmatprep.subr.mxu0 0.0
    %v6383 = vand.u32 %v5214, 4294901760
    %6384 = vmatpush1.msra.mxu0 %v6383
    %6385 = vmatprep.subr.mxu0 0.0
    %v6386 = vand.u32 %v5213, 4294901760
    %6387 = vmatpush1.msra.mxu0 %v6386
    %6388 = vmatprep.subr.mxu0 0.0
    %v6389 = vand.u32 %v5212, 4294901760
    %6390 = vmatpush1.msra.mxu0 %v6389
    %6391 = vmatprep.subr.mxu0 0.0
    %v6392 = vand.u32 %v5211, 4294901760
    %6393 = vmatpush1.msra.mxu0 %v6392
    %6394 = vmatprep.subr.mxu0 0.0
    %v6395 = vand.u32 %v5210, 4294901760
    %6396 = vmatpush1.msra.mxu0 %v6395
    %6397 = vmatprep.subr.mxu0 0.0
    %v6398 = vand.u32 %v5209, 4294901760
    %6399 = vmatpush1.msra.mxu0 %v6398
    %6400 = vmatprep.subr.mxu0 0.0
    %v6401 = vand.u32 %v5208, 4294901760
    %6402 = vmatpush1.msra.mxu0 %v6401
    %6403 = vmatprep.subr.mxu0 0.0
    %v6404 = vand.u32 %v5207, 4294901760
    %6405 = vmatpush1.msra.mxu0 %v6404
    %6406 = vmatprep.subr.mxu0 0.0
    %v6407 = vand.u32 %v5206, 4294901760
    %6408 = vmatpush1.msra.mxu0 %v6407
    %6409 = vmatprep.subr.mxu0 0.0
    %v6410 = vand.u32 %v5205, 4294901760
    %6411 = vmatpush1.msra.mxu0 %v6410
    %6412 = vmatprep.subr.mxu0 0.0
    %v6413 = vand.u32 %v5204, 4294901760
    %6414 = vmatpush1.msra.mxu0 %v6413
    %6415 = vmatprep.subr.mxu0 0.0
    %6416 = vmatpush2.msra.mxu0 0.0
    %6417 = vmatprep.subr.mxu0 0.0
    %6418 = vmatpush2.msra.mxu0 0.0
    %6419 = vmatprep.subr.mxu0 0.0
    %6420 = vmatpush2.msra.mxu0 0.0
    %6421 = vmatprep.subr.mxu0 0.0
    %6422 = vmatpush2.msra.mxu0 0.0
    %6423 = vmatprep.subr.mxu0 0.0
    %6424 = vmatpush2.msra.mxu0 0.0
    %6425 = vmatprep.subr.mxu0 0.0
    %6426 = vmatpush2.msra.mxu0 0.0
    %6427 = vmatprep.subr.mxu0 0.0
    %6428 = vmatpush2.msra.mxu0 0.0
    %6429 = vmatprep.subr.mxu0 0.0
    %6430 = vmatpush2.msra.mxu0 0.0
    %6431 = vmatprep.subr.mxu0 0.0
    %6432 = vmatpush2.msra.mxu0 0.0
    %6433 = vmatprep.subr.mxu0 0.0
    %6434 = vmatpush2.msra.mxu0 0.0
    %6435 = vmatprep.subr.mxu0 0.0
    %6436 = vmatpush2.msra.mxu0 0.0
    %6437 = vmatprep.subr.mxu0 0.0
    %6438 = vmatpush2.msra.mxu0 0.0
    %6439 = vmatprep.subr.mxu0 0.0
    %6440 = vmatpush2.msra.mxu0 0.0
    %6441 = vmatprep.subr.mxu0 0.0
    %6442 = vmatpush2.msra.mxu0 0.0
    %6443 = vmatprep.subr.mxu0 0.0
    %6444 = vmatpush2.msra.mxu0 0.0
    %6445 = vmatprep.subr.mxu0 0.0
    %6446 = vmatpush2.msra.mxu0 0.0
    %6447 = vmatprep.mubr.f32.mxu0 0.0
    %v6448 = vand.u32 %v5317, 4294901760
    %6449 = vmatmul.mubr.f32.gmra.mxu0 %v6448
    %v6450 = vpop.f32.mrf.mxu0
    %v6451 = vadd.f32 %v6288, %v6450
    %v6452 = vpop.f32.mrf.mxu0
    %6453 = vmatprep.mubr.f32.mxu0 0.0
    %v6454 = vand.u32 %v5320, 4294901760
    %6455 = vmatmul.mubr.f32.gmra.mxu0 %v6454
    %v6456 = vpop.f32.mrf.mxu0
    %v6457 = vadd.f32 %v6294, %v6456
    %v6458 = vpop.f32.mrf.mxu0
    %6459 = vmatprep.mubr.f32.mxu0 0.0
    %v6460 = vand.u32 %v5323, 4294901760
    %6461 = vmatmul.mubr.f32.gmra.mxu0 %v6460
    %v6462 = vpop.f32.mrf.mxu0
    %v6463 = vadd.f32 %v6300, %v6462
    %v6464 = vpop.f32.mrf.mxu0
    %6465 = vmatprep.mubr.f32.mxu0 0.0
    %v6466 = vand.u32 %v5326, 4294901760
    %6467 = vmatmul.mubr.f32.gmra.mxu0 %v6466
    %v6468 = vpop.f32.mrf.mxu0
    %v6469 = vadd.f32 %v6306, %v6468
    %v6470 = vpop.f32.mrf.mxu0
    %6471 = vmatprep.mubr.f32.mxu0 0.0
    %v6472 = vand.u32 %v5329, 4294901760
    %6473 = vmatmul.mubr.f32.gmra.mxu0 %v6472
    %v6474 = vpop.f32.mrf.mxu0
    %v6475 = vadd.f32 %v6312, %v6474
    %v6476 = vpop.f32.mrf.mxu0
    %6477 = vmatprep.mubr.f32.mxu0 0.0
    %v6478 = vand.u32 %v5332, 4294901760
    %6479 = vmatmul.mubr.f32.gmra.mxu0 %v6478
    %v6480 = vpop.f32.mrf.mxu0
    %v6481 = vadd.f32 %v6318, %v6480
    %v6482 = vpop.f32.mrf.mxu0
    %6483 = vmatprep.mubr.f32.mxu0 0.0
    %v6484 = vand.u32 %v5335, 4294901760
    %6485 = vmatmul.mubr.f32.gmra.mxu0 %v6484
    %v6486 = vpop.f32.mrf.mxu0
    %v6487 = vadd.f32 %v6324, %v6486
    %v6488 = vpop.f32.mrf.mxu0
    %6489 = vmatprep.mubr.f32.mxu0 0.0
    %v6490 = vand.u32 %v5338, 4294901760
    %6491 = vmatmul.mubr.f32.gmra.mxu0 %v6490
    %v6492 = vpop.f32.mrf.mxu0
    %v6493 = vadd.f32 %v6330, %v6492
    %v6494 = vpop.f32.mrf.mxu0
    %6495 = vmatprep.mubr.f32.mxu0 0.0
    %v6496 = vand.u32 %v5341, 4294901760
    %6497 = vmatmul.mubr.f32.gmra.mxu0 %v6496
    %v6498 = vpop.f32.mrf.mxu0
    %v6499 = vadd.f32 %v6336, %v6498
    %v6500 = vpop.f32.mrf.mxu0
    %6501 = vmatprep.mubr.f32.mxu0 0.0
    %v6502 = vand.u32 %v5344, 4294901760
    %6503 = vmatmul.mubr.f32.gmra.mxu0 %v6502
    %v6504 = vpop.f32.mrf.mxu0
    %v6505 = vadd.f32 %v6342, %v6504
    %v6506 = vpop.f32.mrf.mxu0
    %6507 = vmatprep.mubr.f32.mxu0 0.0
    %v6508 = vand.u32 %v5347, 4294901760
    %6509 = vmatmul.mubr.f32.gmra.mxu0 %v6508
    %v6510 = vpop.f32.mrf.mxu0
    %v6511 = vadd.f32 %v6348, %v6510
    %v6512 = vpop.f32.mrf.mxu0
    %6513 = vmatprep.mubr.f32.mxu0 0.0
    %v6514 = vand.u32 %v5350, 4294901760
    %6515 = vmatmul.mubr.f32.gmra.mxu0 %v6514
    %v6516 = vpop.f32.mrf.mxu0
    %v6517 = vadd.f32 %v6354, %v6516
    %v6518 = vpop.f32.mrf.mxu0
    %6519 = vmatprep.mubr.f32.mxu0 0.0
    %v6520 = vand.u32 %v5353, 4294901760
    %6521 = vmatmul.mubr.f32.gmra.mxu0 %v6520
    %v6522 = vpop.f32.mrf.mxu0
    %v6523 = vadd.f32 %v6360, %v6522
    %v6524 = vpop.f32.mrf.mxu0
    %6525 = vmatprep.mubr.f32.mxu0 0.0
    %v6526 = vand.u32 %v5356, 4294901760
    %6527 = vmatmul.mubr.f32.gmra.mxu0 %v6526
    %v6528 = vpop.f32.mrf.mxu0
    %v6529 = vadd.f32 %v6366, %v6528
    %v6530 = vpop.f32.mrf.mxu0
    %6531 = vdwg.mxu0
    %vm6532 = vcmp.gt.f32.partialorder %v6451, 0.0
    %vm6533 = vcmp.gt.f32.partialorder %v6457, 0.0
    %vm6534 = vcmp.gt.f32.partialorder %v6463, 0.0
    %vm6535 = vcmp.gt.f32.partialorder %v6469, 0.0
    %vm6536 = vcmp.gt.f32.partialorder %v6475, 0.0
    %vm6537 = vcmp.gt.f32.partialorder %v6481, 0.0
    %vm6538 = vcmp.gt.f32.partialorder %v6487, 0.0
    %vm6539 = vcmp.gt.f32.partialorder %v6493, 0.0
    %vm6540 = vcmp.gt.f32.partialorder %v6499, 0.0
    %vm6541 = vcmp.gt.f32.partialorder %v6505, 0.0
    %vm6542 = vcmp.gt.f32.partialorder %v6511, 0.0
    %vm6543 = vcmp.gt.f32.partialorder %v6517, 0.0
    %vm6544 = vcmp.gt.f32.partialorder %v6523, 0.0
    %vm6545 = vcmp.gt.f32.partialorder %v6529, 0.0
    %v6546 = vmul.f32 %v6451, 0.3
    %v6547 = vmul.f32 %v6457, 0.3
    %v6548 = vmul.f32 %v6463, 0.3
    %v6549 = vmul.f32 %v6469, 0.3
    %v6550 = vmul.f32 %v6475, 0.3
    %v6551 = vmul.f32 %v6481, 0.3
    %v6552 = vmul.f32 %v6487, 0.3
    %v6553 = vmul.f32 %v6493, 0.3
    %v6554 = vmul.f32 %v6499, 0.3
    %v6555 = vmul.f32 %v6505, 0.3
    %v6556 = vmul.f32 %v6511, 0.3
    %v6557 = vmul.f32 %v6517, 0.3
    %v6558 = vmul.f32 %v6523, 0.3
    %v6559 = vmul.f32 %v6529, 0.3
    %v6560 = vsel %vm6532, %v6451, %v6546
    %v6561 = vsel %vm6533, %v6457, %v6547
    %v6562 = vsel %vm6534, %v6463, %v6548
    %v6563 = vsel %vm6535, %v6469, %v6549
    %v6564 = vsel %vm6536, %v6475, %v6550
    %v6565 = vsel %vm6537, %v6481, %v6551
    %v6566 = vsel %vm6538, %v6487, %v6552
    %v6567 = vsel %vm6539, %v6493, %v6553
    %v6568 = vsel %vm6540, %v6499, %v6554
    %v6569 = vsel %vm6541, %v6505, %v6555
    %v6570 = vsel %vm6542, %v6511, %v6556
    %v6571 = vsel %vm6543, %v6517, %v6557
    %v6572 = vsel %vm6544, %v6523, %v6558
    %v6573 = vsel %vm6545, %v6529, %v6559
    %v6574 = vld [vmem:[%s11] sm:$0xff]
    %v6575 = vld [vmem:[%s11 + $0x8] sm:$0xff]
    %v6576 = vld [vmem:[%s11 + $0x10] sm:$0xff]
    %v6577 = vld [vmem:[%s11 + $0x18] sm:$0xff]
    %v6578 = vld [vmem:[%s12] sm:$0xff]
    %v6579 = vld [vmem:[%s12 + $0x8] sm:$0xff]
    %v6580 = vld [vmem:[%s12 + $0x10] sm:$0xff]
    %v6581 = vld [vmem:[%s12 + $0x18] sm:$0xff]
    %v6583 = vsel %vm1377, %v6578, 0
    %v6586 = vsel %vm1377, %v6579, 0
    %v6589 = vsel %vm1377, %v6580, 0
    %v6592 = vsel %vm1377, %v6581, 0
    %6594 = vmatprep.subr.mxu0 0.0
    %6595 = vmatpush1.msra.mxu0 0.0
    %6596 = vmatprep.subr.mxu0 0.0
    %6597 = vmatpush1.msra.mxu0 0.0
    %6598 = vmatprep.subr.mxu0 0.0
    %v6599 = vand.u32 %v6573, 4294901760
    %6600 = vmatpush1.msra.mxu0 %v6599
    %6601 = vmatprep.subr.mxu0 0.0
    %v6602 = vand.u32 %v6572, 4294901760
    %6603 = vmatpush1.msra.mxu0 %v6602
    %6604 = vmatprep.subr.mxu0 0.0
    %v6605 = vand.u32 %v6571, 4294901760
    %6606 = vmatpush1.msra.mxu0 %v6605
    %6607 = vmatprep.subr.mxu0 0.0
    %v6608 = vand.u32 %v6570, 4294901760
    %6609 = vmatpush1.msra.mxu0 %v6608
    %6610 = vmatprep.subr.mxu0 0.0
    %v6611 = vand.u32 %v6569, 4294901760
    %6612 = vmatpush1.msra.mxu0 %v6611
    %6613 = vmatprep.subr.mxu0 0.0
    %v6614 = vand.u32 %v6568, 4294901760
    %6615 = vmatpush1.msra.mxu0 %v6614
    %6616 = vmatprep.subr.mxu0 0.0
    %v6617 = vand.u32 %v6567, 4294901760
    %6618 = vmatpush1.msra.mxu0 %v6617
    %6619 = vmatprep.subr.mxu0 0.0
    %v6620 = vand.u32 %v6566, 4294901760
    %6621 = vmatpush1.msra.mxu0 %v6620
    %6622 = vmatprep.subr.mxu0 0.0
    %v6623 = vand.u32 %v6565, 4294901760
    %6624 = vmatpush1.msra.mxu0 %v6623
    %6625 = vmatprep.subr.mxu0 0.0
    %v6626 = vand.u32 %v6564, 4294901760
    %6627 = vmatpush1.msra.mxu0 %v6626
    %6628 = vmatprep.subr.mxu0 0.0
    %v6629 = vand.u32 %v6563, 4294901760
    %6630 = vmatpush1.msra.mxu0 %v6629
    %6631 = vmatprep.subr.mxu0 0.0
    %v6632 = vand.u32 %v6562, 4294901760
    %6633 = vmatpush1.msra.mxu0 %v6632
    %6634 = vmatprep.subr.mxu0 0.0
    %v6635 = vand.u32 %v6561, 4294901760
    %6636 = vmatpush1.msra.mxu0 %v6635
    %6637 = vmatprep.subr.mxu0 0.0
    %v6638 = vand.u32 %v6560, 4294901760
    %6639 = vmatpush1.msra.mxu0 %v6638
    %6640 = vmatprep.subr.mxu0 0.0
    %6641 = vmatpush2.msra.mxu0 0.0
    %6642 = vmatprep.subr.mxu0 0.0
    %6643 = vmatpush2.msra.mxu0 0.0
    %6644 = vmatprep.subr.mxu0 0.0
    %6645 = vmatpush2.msra.mxu0 0.0
    %6646 = vmatprep.subr.mxu0 0.0
    %6647 = vmatpush2.msra.mxu0 0.0
    %6648 = vmatprep.subr.mxu0 0.0
    %6649 = vmatpush2.msra.mxu0 0.0
    %6650 = vmatprep.subr.mxu0 0.0
    %6651 = vmatpush2.msra.mxu0 0.0
    %6652 = vmatprep.subr.mxu0 0.0
    %6653 = vmatpush2.msra.mxu0 0.0
    %6654 = vmatprep.subr.mxu0 0.0
    %6655 = vmatpush2.msra.mxu0 0.0
    %6656 = vmatprep.subr.mxu0 0.0
    %6657 = vmatpush2.msra.mxu0 0.0
    %6658 = vmatprep.subr.mxu0 0.0
    %6659 = vmatpush2.msra.mxu0 0.0
    %6660 = vmatprep.subr.mxu0 0.0
    %6661 = vmatpush2.msra.mxu0 0.0
    %6662 = vmatprep.subr.mxu0 0.0
    %6663 = vmatpush2.msra.mxu0 0.0
    %6664 = vmatprep.subr.mxu0 0.0
    %6665 = vmatpush2.msra.mxu0 0.0
    %6666 = vmatprep.subr.mxu0 0.0
    %6667 = vmatpush2.msra.mxu0 0.0
    %6668 = vmatprep.subr.mxu0 0.0
    %6669 = vmatpush2.msra.mxu0 0.0
    %6670 = vmatprep.subr.mxu0 0.0
    %6671 = vmatpush2.msra.mxu0 0.0
    %6672 = vmatprep.mubr.f32.mxu0 0.0
    %v6673 = vand.u32 %v6583, 4294901760
    %v6674 = vsub.f32 %v6583, %v6673
    %v6675 = vand.u32 %v6674, 4294901760
    %v6676 = vsub.f32 %v6674, %v6675
    %v6677 = vand.u32 %v6676, 4294901760
    %6678 = vmatmul.mubr.f32.gmra.mxu0 %v6677
    %v6679 = vpop.f32.mrf.mxu0
    %v6680 = vadd.f32 0.0, %v6679
    %v6681 = vpop.f32.mrf.mxu0
    %6682 = vmatprep.mubr.f32.mxu0 0.0
    %v6683 = vand.u32 %v6586, 4294901760
    %v6684 = vsub.f32 %v6586, %v6683
    %v6685 = vand.u32 %v6684, 4294901760
    %v6686 = vsub.f32 %v6684, %v6685
    %v6687 = vand.u32 %v6686, 4294901760
    %6688 = vmatmul.mubr.f32.gmra.mxu0 %v6687
    %v6689 = vpop.f32.mrf.mxu0
    %v6690 = vadd.f32 0.0, %v6689
    %v6691 = vpop.f32.mrf.mxu0
    %6692 = vmatprep.mubr.f32.mxu0 0.0
    %v6693 = vand.u32 %v6589, 4294901760
    %v6694 = vsub.f32 %v6589, %v6693
    %v6695 = vand.u32 %v6694, 4294901760
    %v6696 = vsub.f32 %v6694, %v6695
    %v6697 = vand.u32 %v6696, 4294901760
    %6698 = vmatmul.mubr.f32.gmra.mxu0 %v6697
    %v6699 = vpop.f32.mrf.mxu0
    %v6700 = vadd.f32 0.0, %v6699
    %v6701 = vpop.f32.mrf.mxu0
    %6702 = vmatprep.mubr.f32.mxu0 0.0
    %v6703 = vand.u32 %v6592, 4294901760
    %v6704 = vsub.f32 %v6592, %v6703
    %v6705 = vand.u32 %v6704, 4294901760
    %v6706 = vsub.f32 %v6704, %v6705
    %v6707 = vand.u32 %v6706, 4294901760
    %6708 = vmatmul.mubr.f32.gmra.mxu0 %v6707
    %v6709 = vpop.f32.mrf.mxu0
    %v6710 = vadd.f32 0.0, %v6709
    %v6711 = vpop.f32.mrf.mxu0
    %6712 = vdwg.mxu0
    %6713 = vmatprep.subr.mxu0 0.0
    %6714 = vmatpush1.msra.mxu0 0.0
    %6715 = vmatprep.subr.mxu0 0.0
    %6716 = vmatpush1.msra.mxu0 0.0
    %6717 = vmatprep.subr.mxu0 0.0
    %v6718 = vand.u32 %v6573, 4294901760
    %v6719 = vsub.f32 %v6573, %v6718
    %v6720 = vand.u32 %v6719, 4294901760
    %v6721 = vsub.f32 %v6719, %v6720
    %v6722 = vand.u32 %v6721, 4294901760
    %6723 = vmatpush1.msra.mxu0 %v6722
    %6724 = vmatprep.subr.mxu0 0.0
    %v6725 = vand.u32 %v6572, 4294901760
    %v6726 = vsub.f32 %v6572, %v6725
    %v6727 = vand.u32 %v6726, 4294901760
    %v6728 = vsub.f32 %v6726, %v6727
    %v6729 = vand.u32 %v6728, 4294901760
    %6730 = vmatpush1.msra.mxu0 %v6729
    %6731 = vmatprep.subr.mxu0 0.0
    %v6732 = vand.u32 %v6571, 4294901760
    %v6733 = vsub.f32 %v6571, %v6732
    %v6734 = vand.u32 %v6733, 4294901760
    %v6735 = vsub.f32 %v6733, %v6734
    %v6736 = vand.u32 %v6735, 4294901760
    %6737 = vmatpush1.msra.mxu0 %v6736
    %6738 = vmatprep.subr.mxu0 0.0
    %v6739 = vand.u32 %v6570, 4294901760
    %v6740 = vsub.f32 %v6570, %v6739
    %v6741 = vand.u32 %v6740, 4294901760
    %v6742 = vsub.f32 %v6740, %v6741
    %v6743 = vand.u32 %v6742, 4294901760
    %6744 = vmatpush1.msra.mxu0 %v6743
    %6745 = vmatprep.subr.mxu0 0.0
    %v6746 = vand.u32 %v6569, 4294901760
    %v6747 = vsub.f32 %v6569, %v6746
    %v6748 = vand.u32 %v6747, 4294901760
    %v6749 = vsub.f32 %v6747, %v6748
    %v6750 = vand.u32 %v6749, 4294901760
    %6751 = vmatpush1.msra.mxu0 %v6750
    %6752 = vmatprep.subr.mxu0 0.0
    %v6753 = vand.u32 %v6568, 4294901760
    %v6754 = vsub.f32 %v6568, %v6753
    %v6755 = vand.u32 %v6754, 4294901760
    %v6756 = vsub.f32 %v6754, %v6755
    %v6757 = vand.u32 %v6756, 4294901760
    %6758 = vmatpush1.msra.mxu0 %v6757
    %6759 = vmatprep.subr.mxu0 0.0
    %v6760 = vand.u32 %v6567, 4294901760
    %v6761 = vsub.f32 %v6567, %v6760
    %v6762 = vand.u32 %v6761, 4294901760
    %v6763 = vsub.f32 %v6761, %v6762
    %v6764 = vand.u32 %v6763, 4294901760
    %6765 = vmatpush1.msra.mxu0 %v6764
    %6766 = vmatprep.subr.mxu0 0.0
    %v6767 = vand.u32 %v6566, 4294901760
    %v6768 = vsub.f32 %v6566, %v6767
    %v6769 = vand.u32 %v6768, 4294901760
    %v6770 = vsub.f32 %v6768, %v6769
    %v6771 = vand.u32 %v6770, 4294901760
    %6772 = vmatpush1.msra.mxu0 %v6771
    %6773 = vmatprep.subr.mxu0 0.0
    %v6774 = vand.u32 %v6565, 4294901760
    %v6775 = vsub.f32 %v6565, %v6774
    %v6776 = vand.u32 %v6775, 4294901760
    %v6777 = vsub.f32 %v6775, %v6776
    %v6778 = vand.u32 %v6777, 4294901760
    %6779 = vmatpush1.msra.mxu0 %v6778
    %6780 = vmatprep.subr.mxu0 0.0
    %v6781 = vand.u32 %v6564, 4294901760
    %v6782 = vsub.f32 %v6564, %v6781
    %v6783 = vand.u32 %v6782, 4294901760
    %v6784 = vsub.f32 %v6782, %v6783
    %v6785 = vand.u32 %v6784, 4294901760
    %6786 = vmatpush1.msra.mxu0 %v6785
    %6787 = vmatprep.subr.mxu0 0.0
    %v6788 = vand.u32 %v6563, 4294901760
    %v6789 = vsub.f32 %v6563, %v6788
    %v6790 = vand.u32 %v6789, 4294901760
    %v6791 = vsub.f32 %v6789, %v6790
    %v6792 = vand.u32 %v6791, 4294901760
    %6793 = vmatpush1.msra.mxu0 %v6792
    %6794 = vmatprep.subr.mxu0 0.0
    %v6795 = vand.u32 %v6562, 4294901760
    %v6796 = vsub.f32 %v6562, %v6795
    %v6797 = vand.u32 %v6796, 4294901760
    %v6798 = vsub.f32 %v6796, %v6797
    %v6799 = vand.u32 %v6798, 4294901760
    %6800 = vmatpush1.msra.mxu0 %v6799
    %6801 = vmatprep.subr.mxu0 0.0
    %v6802 = vand.u32 %v6561, 4294901760
    %v6803 = vsub.f32 %v6561, %v6802
    %v6804 = vand.u32 %v6803, 4294901760
    %v6805 = vsub.f32 %v6803, %v6804
    %v6806 = vand.u32 %v6805, 4294901760
    %6807 = vmatpush1.msra.mxu0 %v6806
    %6808 = vmatprep.subr.mxu0 0.0
    %v6809 = vand.u32 %v6560, 4294901760
    %v6810 = vsub.f32 %v6560, %v6809
    %v6811 = vand.u32 %v6810, 4294901760
    %v6812 = vsub.f32 %v6810, %v6811
    %v6813 = vand.u32 %v6812, 4294901760
    %6814 = vmatpush1.msra.mxu0 %v6813
    %6815 = vmatprep.subr.mxu0 0.0
    %6816 = vmatpush2.msra.mxu0 0.0
    %6817 = vmatprep.subr.mxu0 0.0
    %6818 = vmatpush2.msra.mxu0 0.0
    %6819 = vmatprep.subr.mxu0 0.0
    %6820 = vmatpush2.msra.mxu0 0.0
    %6821 = vmatprep.subr.mxu0 0.0
    %6822 = vmatpush2.msra.mxu0 0.0
    %6823 = vmatprep.subr.mxu0 0.0
    %6824 = vmatpush2.msra.mxu0 0.0
    %6825 = vmatprep.subr.mxu0 0.0
    %6826 = vmatpush2.msra.mxu0 0.0
    %6827 = vmatprep.subr.mxu0 0.0
    %6828 = vmatpush2.msra.mxu0 0.0
    %6829 = vmatprep.subr.mxu0 0.0
    %6830 = vmatpush2.msra.mxu0 0.0
    %6831 = vmatprep.subr.mxu0 0.0
    %6832 = vmatpush2.msra.mxu0 0.0
    %6833 = vmatprep.subr.mxu0 0.0
    %6834 = vmatpush2.msra.mxu0 0.0
    %6835 = vmatprep.subr.mxu0 0.0
    %6836 = vmatpush2.msra.mxu0 0.0
    %6837 = vmatprep.subr.mxu0 0.0
    %6838 = vmatpush2.msra.mxu0 0.0
    %6839 = vmatprep.subr.mxu0 0.0
    %6840 = vmatpush2.msra.mxu0 0.0
    %6841 = vmatprep.subr.mxu0 0.0
    %6842 = vmatpush2.msra.mxu0 0.0
    %6843 = vmatprep.subr.mxu0 0.0
    %6844 = vmatpush2.msra.mxu0 0.0
    %6845 = vmatprep.subr.mxu0 0.0
    %6846 = vmatpush2.msra.mxu0 0.0
    %6847 = vmatprep.mubr.f32.mxu0 0.0
    %v6848 = vand.u32 %v6583, 4294901760
    %6849 = vmatmul.mubr.f32.gmra.mxu0 %v6848
    %v6850 = vpop.f32.mrf.mxu0
    %v6851 = vadd.f32 %v6680, %v6850
    %v6852 = vpop.f32.mrf.mxu0
    %6853 = vmatprep.mubr.f32.mxu0 0.0
    %v6854 = vand.u32 %v6586, 4294901760
    %6855 = vmatmul.mubr.f32.gmra.mxu0 %v6854
    %v6856 = vpop.f32.mrf.mxu0
    %v6857 = vadd.f32 %v6690, %v6856
    %v6858 = vpop.f32.mrf.mxu0
    %6859 = vmatprep.mubr.f32.mxu0 0.0
    %v6860 = vand.u32 %v6589, 4294901760
    %6861 = vmatmul.mubr.f32.gmra.mxu0 %v6860
    %v6862 = vpop.f32.mrf.mxu0
    %v6863 = vadd.f32 %v6700, %v6862
    %v6864 = vpop.f32.mrf.mxu0
    %6865 = vmatprep.mubr.f32.mxu0 0.0
    %v6866 = vand.u32 %v6592, 4294901760
    %6867 = vmatmul.mubr.f32.gmra.mxu0 %v6866
    %v6868 = vpop.f32.mrf.mxu0
    %v6869 = vadd.f32 %v6710, %v6868
    %v6870 = vpop.f32.mrf.mxu0
    %6871 = vdwg.mxu0
    %6872 = vmatprep.subr.mxu0 0.0
    %6873 = vmatpush1.msra.mxu0 0.0
    %6874 = vmatprep.subr.mxu0 0.0
    %6875 = vmatpush1.msra.mxu0 0.0
    %6876 = vmatprep.subr.mxu0 0.0
    %v6877 = vand.u32 %v6573, 4294901760
    %v6878 = vsub.f32 %v6573, %v6877
    %6879 = vmatpush1.msra.mxu0 %v6878
    %6880 = vmatprep.subr.mxu0 0.0
    %v6881 = vand.u32 %v6572, 4294901760
    %v6882 = vsub.f32 %v6572, %v6881
    %6883 = vmatpush1.msra.mxu0 %v6882
    %6884 = vmatprep.subr.mxu0 0.0
    %v6885 = vand.u32 %v6571, 4294901760
    %v6886 = vsub.f32 %v6571, %v6885
    %6887 = vmatpush1.msra.mxu0 %v6886
    %6888 = vmatprep.subr.mxu0 0.0
    %v6889 = vand.u32 %v6570, 4294901760
    %v6890 = vsub.f32 %v6570, %v6889
    %6891 = vmatpush1.msra.mxu0 %v6890
    %6892 = vmatprep.subr.mxu0 0.0
    %v6893 = vand.u32 %v6569, 4294901760
    %v6894 = vsub.f32 %v6569, %v6893
    %6895 = vmatpush1.msra.mxu0 %v6894
    %6896 = vmatprep.subr.mxu0 0.0
    %v6897 = vand.u32 %v6568, 4294901760
    %v6898 = vsub.f32 %v6568, %v6897
    %6899 = vmatpush1.msra.mxu0 %v6898
    %6900 = vmatprep.subr.mxu0 0.0
    %v6901 = vand.u32 %v6567, 4294901760
    %v6902 = vsub.f32 %v6567, %v6901
    %6903 = vmatpush1.msra.mxu0 %v6902
    %6904 = vmatprep.subr.mxu0 0.0
    %v6905 = vand.u32 %v6566, 4294901760
    %v6906 = vsub.f32 %v6566, %v6905
    %6907 = vmatpush1.msra.mxu0 %v6906
    %6908 = vmatprep.subr.mxu0 0.0
    %v6909 = vand.u32 %v6565, 4294901760
    %v6910 = vsub.f32 %v6565, %v6909
    %6911 = vmatpush1.msra.mxu0 %v6910
    %6912 = vmatprep.subr.mxu0 0.0
    %v6913 = vand.u32 %v6564, 4294901760
    %v6914 = vsub.f32 %v6564, %v6913
    %6915 = vmatpush1.msra.mxu0 %v6914
    %6916 = vmatprep.subr.mxu0 0.0
    %v6917 = vand.u32 %v6563, 4294901760
    %v6918 = vsub.f32 %v6563, %v6917
    %6919 = vmatpush1.msra.mxu0 %v6918
    %6920 = vmatprep.subr.mxu0 0.0
    %v6921 = vand.u32 %v6562, 4294901760
    %v6922 = vsub.f32 %v6562, %v6921
    %6923 = vmatpush1.msra.mxu0 %v6922
    %6924 = vmatprep.subr.mxu0 0.0
    %v6925 = vand.u32 %v6561, 4294901760
    %v6926 = vsub.f32 %v6561, %v6925
    %6927 = vmatpush1.msra.mxu0 %v6926
    %6928 = vmatprep.subr.mxu0 0.0
    %v6929 = vand.u32 %v6560, 4294901760
    %v6930 = vsub.f32 %v6560, %v6929
    %6931 = vmatpush1.msra.mxu0 %v6930
    %6932 = vmatprep.subr.mxu0 0.0
    %6933 = vmatpush2.msra.mxu0 0.0
    %6934 = vmatprep.subr.mxu0 0.0
    %6935 = vmatpush2.msra.mxu0 0.0
    %6936 = vmatprep.subr.mxu0 0.0
    %6937 = vmatpush2.msra.mxu0 0.0
    %6938 = vmatprep.subr.mxu0 0.0
    %6939 = vmatpush2.msra.mxu0 0.0
    %6940 = vmatprep.subr.mxu0 0.0
    %6941 = vmatpush2.msra.mxu0 0.0
    %6942 = vmatprep.subr.mxu0 0.0
    %6943 = vmatpush2.msra.mxu0 0.0
    %6944 = vmatprep.subr.mxu0 0.0
    %6945 = vmatpush2.msra.mxu0 0.0
    %6946 = vmatprep.subr.mxu0 0.0
    %6947 = vmatpush2.msra.mxu0 0.0
    %6948 = vmatprep.subr.mxu0 0.0
    %6949 = vmatpush2.msra.mxu0 0.0
    %6950 = vmatprep.subr.mxu0 0.0
    %6951 = vmatpush2.msra.mxu0 0.0
    %6952 = vmatprep.subr.mxu0 0.0
    %6953 = vmatpush2.msra.mxu0 0.0
    %6954 = vmatprep.subr.mxu0 0.0
    %6955 = vmatpush2.msra.mxu0 0.0
    %6956 = vmatprep.subr.mxu0 0.0
    %6957 = vmatpush2.msra.mxu0 0.0
    %6958 = vmatprep.subr.mxu0 0.0
    %6959 = vmatpush2.msra.mxu0 0.0
    %6960 = vmatprep.subr.mxu0 0.0
    %6961 = vmatpush2.msra.mxu0 0.0
    %6962 = vmatprep.subr.mxu0 0.0
    %6963 = vmatpush2.msra.mxu0 0.0
    %6964 = vmatprep.mubr.f32.mxu0 0.0
    %v6965 = vand.u32 %v6583, 4294901760
    %v6966 = vsub.f32 %v6583, %v6965
    %6967 = vmatmul.mubr.f32.gmra.mxu0 %v6966
    %v6968 = vpop.f32.mrf.mxu0
    %v6969 = vadd.f32 %v6851, %v6968
    %v6970 = vpop.f32.mrf.mxu0
    %6971 = vmatprep.mubr.f32.mxu0 0.0
    %v6972 = vand.u32 %v6586, 4294901760
    %v6973 = vsub.f32 %v6586, %v6972
    %6974 = vmatmul.mubr.f32.gmra.mxu0 %v6973
    %v6975 = vpop.f32.mrf.mxu0
    %v6976 = vadd.f32 %v6857, %v6975
    %v6977 = vpop.f32.mrf.mxu0
    %6978 = vmatprep.mubr.f32.mxu0 0.0
    %v6979 = vand.u32 %v6589, 4294901760
    %v6980 = vsub.f32 %v6589, %v6979
    %6981 = vmatmul.mubr.f32.gmra.mxu0 %v6980
    %v6982 = vpop.f32.mrf.mxu0
    %v6983 = vadd.f32 %v6863, %v6982
    %v6984 = vpop.f32.mrf.mxu0
    %6985 = vmatprep.mubr.f32.mxu0 0.0
    %v6986 = vand.u32 %v6592, 4294901760
    %v6987 = vsub.f32 %v6592, %v6986
    %6988 = vmatmul.mubr.f32.gmra.mxu0 %v6987
    %v6989 = vpop.f32.mrf.mxu0
    %v6990 = vadd.f32 %v6869, %v6989
    %v6991 = vpop.f32.mrf.mxu0
    %6992 = vdwg.mxu0
    %6993 = vmatprep.subr.mxu0 0.0
    %6994 = vmatpush1.msra.mxu0 0.0
    %6995 = vmatprep.subr.mxu0 0.0
    %6996 = vmatpush1.msra.mxu0 0.0
    %6997 = vmatprep.subr.mxu0 0.0
    %v6998 = vand.u32 %v6573, 4294901760
    %6999 = vmatpush1.msra.mxu0 %v6998
    %7000 = vmatprep.subr.mxu0 0.0
    %v7001 = vand.u32 %v6572, 4294901760
    %7002 = vmatpush1.msra.mxu0 %v7001
    %7003 = vmatprep.subr.mxu0 0.0
    %v7004 = vand.u32 %v6571, 4294901760
    %7005 = vmatpush1.msra.mxu0 %v7004
    %7006 = vmatprep.subr.mxu0 0.0
    %v7007 = vand.u32 %v6570, 4294901760
    %7008 = vmatpush1.msra.mxu0 %v7007
    %7009 = vmatprep.subr.mxu0 0.0
    %v7010 = vand.u32 %v6569, 4294901760
    %7011 = vmatpush1.msra.mxu0 %v7010
    %7012 = vmatprep.subr.mxu0 0.0
    %v7013 = vand.u32 %v6568, 4294901760
    %7014 = vmatpush1.msra.mxu0 %v7013
    %7015 = vmatprep.subr.mxu0 0.0
    %v7016 = vand.u32 %v6567, 4294901760
    %7017 = vmatpush1.msra.mxu0 %v7016
    %7018 = vmatprep.subr.mxu0 0.0
    %v7019 = vand.u32 %v6566, 4294901760
    %7020 = vmatpush1.msra.mxu0 %v7019
    %7021 = vmatprep.subr.mxu0 0.0
    %v7022 = vand.u32 %v6565, 4294901760
    %7023 = vmatpush1.msra.mxu0 %v7022
    %7024 = vmatprep.subr.mxu0 0.0
    %v7025 = vand.u32 %v6564, 4294901760
    %7026 = vmatpush1.msra.mxu0 %v7025
    %7027 = vmatprep.subr.mxu0 0.0
    %v7028 = vand.u32 %v6563, 4294901760
    %7029 = vmatpush1.msra.mxu0 %v7028
    %7030 = vmatprep.subr.mxu0 0.0
    %v7031 = vand.u32 %v6562, 4294901760
    %7032 = vmatpush1.msra.mxu0 %v7031
    %7033 = vmatprep.subr.mxu0 0.0
    %v7034 = vand.u32 %v6561, 4294901760
    %7035 = vmatpush1.msra.mxu0 %v7034
    %7036 = vmatprep.subr.mxu0 0.0
    %v7037 = vand.u32 %v6560, 4294901760
    %7038 = vmatpush1.msra.mxu0 %v7037
    %7039 = vmatprep.subr.mxu0 0.0
    %7040 = vmatpush2.msra.mxu0 0.0
    %7041 = vmatprep.subr.mxu0 0.0
    %7042 = vmatpush2.msra.mxu0 0.0
    %7043 = vmatprep.subr.mxu0 0.0
    %7044 = vmatpush2.msra.mxu0 0.0
    %7045 = vmatprep.subr.mxu0 0.0
    %7046 = vmatpush2.msra.mxu0 0.0
    %7047 = vmatprep.subr.mxu0 0.0
    %7048 = vmatpush2.msra.mxu0 0.0
    %7049 = vmatprep.subr.mxu0 0.0
    %7050 = vmatpush2.msra.mxu0 0.0
    %7051 = vmatprep.subr.mxu0 0.0
    %7052 = vmatpush2.msra.mxu0 0.0
    %7053 = vmatprep.subr.mxu0 0.0
    %7054 = vmatpush2.msra.mxu0 0.0
    %7055 = vmatprep.subr.mxu0 0.0
    %7056 = vmatpush2.msra.mxu0 0.0
    %7057 = vmatprep.subr.mxu0 0.0
    %7058 = vmatpush2.msra.mxu0 0.0
    %7059 = vmatprep.subr.mxu0 0.0
    %7060 = vmatpush2.msra.mxu0 0.0
    %7061 = vmatprep.subr.mxu0 0.0
    %7062 = vmatpush2.msra.mxu0 0.0
    %7063 = vmatprep.subr.mxu0 0.0
    %7064 = vmatpush2.msra.mxu0 0.0
    %7065 = vmatprep.subr.mxu0 0.0
    %7066 = vmatpush2.msra.mxu0 0.0
    %7067 = vmatprep.subr.mxu0 0.0
    %7068 = vmatpush2.msra.mxu0 0.0
    %7069 = vmatprep.subr.mxu0 0.0
    %7070 = vmatpush2.msra.mxu0 0.0
    %7071 = vmatprep.mubr.f32.mxu0 0.0
    %v7072 = vand.u32 %v6583, 4294901760
    %v7073 = vsub.f32 %v6583, %v7072
    %v7074 = vand.u32 %v7073, 4294901760
    %7075 = vmatmul.mubr.f32.gmra.mxu0 %v7074
    %v7076 = vpop.f32.mrf.mxu0
    %v7077 = vadd.f32 %v6969, %v7076
    %v7078 = vpop.f32.mrf.mxu0
    %7079 = vmatprep.mubr.f32.mxu0 0.0
    %v7080 = vand.u32 %v6586, 4294901760
    %v7081 = vsub.f32 %v6586, %v7080
    %v7082 = vand.u32 %v7081, 4294901760
    %7083 = vmatmul.mubr.f32.gmra.mxu0 %v7082
    %v7084 = vpop.f32.mrf.mxu0
    %v7085 = vadd.f32 %v6976, %v7084
    %v7086 = vpop.f32.mrf.mxu0
    %7087 = vmatprep.mubr.f32.mxu0 0.0
    %v7088 = vand.u32 %v6589, 4294901760
    %v7089 = vsub.f32 %v6589, %v7088
    %v7090 = vand.u32 %v7089, 4294901760
    %7091 = vmatmul.mubr.f32.gmra.mxu0 %v7090
    %v7092 = vpop.f32.mrf.mxu0
    %v7093 = vadd.f32 %v6983, %v7092
    %v7094 = vpop.f32.mrf.mxu0
    %7095 = vmatprep.mubr.f32.mxu0 0.0
    %v7096 = vand.u32 %v6592, 4294901760
    %v7097 = vsub.f32 %v6592, %v7096
    %v7098 = vand.u32 %v7097, 4294901760
    %7099 = vmatmul.mubr.f32.gmra.mxu0 %v7098
    %v7100 = vpop.f32.mrf.mxu0
    %v7101 = vadd.f32 %v6990, %v7100
    %v7102 = vpop.f32.mrf.mxu0
    %7103 = vdwg.mxu0
    %7104 = vmatprep.subr.mxu0 0.0
    %7105 = vmatpush1.msra.mxu0 0.0
    %7106 = vmatprep.subr.mxu0 0.0
    %7107 = vmatpush1.msra.mxu0 0.0
    %7108 = vmatprep.subr.mxu0 0.0
    %v7109 = vand.u32 %v6573, 4294901760
    %v7110 = vsub.f32 %v6573, %v7109
    %v7111 = vand.u32 %v7110, 4294901760
    %7112 = vmatpush1.msra.mxu0 %v7111
    %7113 = vmatprep.subr.mxu0 0.0
    %v7114 = vand.u32 %v6572, 4294901760
    %v7115 = vsub.f32 %v6572, %v7114
    %v7116 = vand.u32 %v7115, 4294901760
    %7117 = vmatpush1.msra.mxu0 %v7116
    %7118 = vmatprep.subr.mxu0 0.0
    %v7119 = vand.u32 %v6571, 4294901760
    %v7120 = vsub.f32 %v6571, %v7119
    %v7121 = vand.u32 %v7120, 4294901760
    %7122 = vmatpush1.msra.mxu0 %v7121
    %7123 = vmatprep.subr.mxu0 0.0
    %v7124 = vand.u32 %v6570, 4294901760
    %v7125 = vsub.f32 %v6570, %v7124
    %v7126 = vand.u32 %v7125, 4294901760
    %7127 = vmatpush1.msra.mxu0 %v7126
    %7128 = vmatprep.subr.mxu0 0.0
    %v7129 = vand.u32 %v6569, 4294901760
    %v7130 = vsub.f32 %v6569, %v7129
    %v7131 = vand.u32 %v7130, 4294901760
    %7132 = vmatpush1.msra.mxu0 %v7131
    %7133 = vmatprep.subr.mxu0 0.0
    %v7134 = vand.u32 %v6568, 4294901760
    %v7135 = vsub.f32 %v6568, %v7134
    %v7136 = vand.u32 %v7135, 4294901760
    %7137 = vmatpush1.msra.mxu0 %v7136
    %7138 = vmatprep.subr.mxu0 0.0
    %v7139 = vand.u32 %v6567, 4294901760
    %v7140 = vsub.f32 %v6567, %v7139
    %v7141 = vand.u32 %v7140, 4294901760
    %7142 = vmatpush1.msra.mxu0 %v7141
    %7143 = vmatprep.subr.mxu0 0.0
    %v7144 = vand.u32 %v6566, 4294901760
    %v7145 = vsub.f32 %v6566, %v7144
    %v7146 = vand.u32 %v7145, 4294901760
    %7147 = vmatpush1.msra.mxu0 %v7146
    %7148 = vmatprep.subr.mxu0 0.0
    %v7149 = vand.u32 %v6565, 4294901760
    %v7150 = vsub.f32 %v6565, %v7149
    %v7151 = vand.u32 %v7150, 4294901760
    %7152 = vmatpush1.msra.mxu0 %v7151
    %7153 = vmatprep.subr.mxu0 0.0
    %v7154 = vand.u32 %v6564, 4294901760
    %v7155 = vsub.f32 %v6564, %v7154
    %v7156 = vand.u32 %v7155, 4294901760
    %7157 = vmatpush1.msra.mxu0 %v7156
    %7158 = vmatprep.subr.mxu0 0.0
    %v7159 = vand.u32 %v6563, 4294901760
    %v7160 = vsub.f32 %v6563, %v7159
    %v7161 = vand.u32 %v7160, 4294901760
    %7162 = vmatpush1.msra.mxu0 %v7161
    %7163 = vmatprep.subr.mxu0 0.0
    %v7164 = vand.u32 %v6562, 4294901760
    %v7165 = vsub.f32 %v6562, %v7164
    %v7166 = vand.u32 %v7165, 4294901760
    %7167 = vmatpush1.msra.mxu0 %v7166
    %7168 = vmatprep.subr.mxu0 0.0
    %v7169 = vand.u32 %v6561, 4294901760
    %v7170 = vsub.f32 %v6561, %v7169
    %v7171 = vand.u32 %v7170, 4294901760
    %7172 = vmatpush1.msra.mxu0 %v7171
    %7173 = vmatprep.subr.mxu0 0.0
    %v7174 = vand.u32 %v6560, 4294901760
    %v7175 = vsub.f32 %v6560, %v7174
    %v7176 = vand.u32 %v7175, 4294901760
    %7177 = vmatpush1.msra.mxu0 %v7176
    %7178 = vmatprep.subr.mxu0 0.0
    %7179 = vmatpush2.msra.mxu0 0.0
    %7180 = vmatprep.subr.mxu0 0.0
    %7181 = vmatpush2.msra.mxu0 0.0
    %7182 = vmatprep.subr.mxu0 0.0
    %7183 = vmatpush2.msra.mxu0 0.0
    %7184 = vmatprep.subr.mxu0 0.0
    %7185 = vmatpush2.msra.mxu0 0.0
    %7186 = vmatprep.subr.mxu0 0.0
    %7187 = vmatpush2.msra.mxu0 0.0
    %7188 = vmatprep.subr.mxu0 0.0
    %7189 = vmatpush2.msra.mxu0 0.0
    %7190 = vmatprep.subr.mxu0 0.0
    %7191 = vmatpush2.msra.mxu0 0.0
    %7192 = vmatprep.subr.mxu0 0.0
    %7193 = vmatpush2.msra.mxu0 0.0
    %7194 = vmatprep.subr.mxu0 0.0
    %7195 = vmatpush2.msra.mxu0 0.0
    %7196 = vmatprep.subr.mxu0 0.0
    %7197 = vmatpush2.msra.mxu0 0.0
    %7198 = vmatprep.subr.mxu0 0.0
    %7199 = vmatpush2.msra.mxu0 0.0
    %7200 = vmatprep.subr.mxu0 0.0
    %7201 = vmatpush2.msra.mxu0 0.0
    %7202 = vmatprep.subr.mxu0 0.0
    %7203 = vmatpush2.msra.mxu0 0.0
    %7204 = vmatprep.subr.mxu0 0.0
    %7205 = vmatpush2.msra.mxu0 0.0
    %7206 = vmatprep.subr.mxu0 0.0
    %7207 = vmatpush2.msra.mxu0 0.0
    %7208 = vmatprep.subr.mxu0 0.0
    %7209 = vmatpush2.msra.mxu0 0.0
    %7210 = vmatprep.mubr.f32.mxu0 0.0
    %v7211 = vand.u32 %v6583, 4294901760
    %7212 = vmatmul.mubr.f32.gmra.mxu0 %v7211
    %v7213 = vpop.f32.mrf.mxu0
    %v7214 = vadd.f32 %v7077, %v7213
    %v7215 = vpop.f32.mrf.mxu0
    %7216 = vmatprep.mubr.f32.mxu0 0.0
    %v7217 = vand.u32 %v6586, 4294901760
    %7218 = vmatmul.mubr.f32.gmra.mxu0 %v7217
    %v7219 = vpop.f32.mrf.mxu0
    %v7220 = vadd.f32 %v7085, %v7219
    %v7221 = vpop.f32.mrf.mxu0
    %7222 = vmatprep.mubr.f32.mxu0 0.0
    %v7223 = vand.u32 %v6589, 4294901760
    %7224 = vmatmul.mubr.f32.gmra.mxu0 %v7223
    %v7225 = vpop.f32.mrf.mxu0
    %v7226 = vadd.f32 %v7093, %v7225
    %v7227 = vpop.f32.mrf.mxu0
    %7228 = vmatprep.mubr.f32.mxu0 0.0
    %v7229 = vand.u32 %v6592, 4294901760
    %7230 = vmatmul.mubr.f32.gmra.mxu0 %v7229
    %v7231 = vpop.f32.mrf.mxu0
    %v7232 = vadd.f32 %v7101, %v7231
    %v7233 = vpop.f32.mrf.mxu0
    %7234 = vdwg.mxu0
    %7235 = vmatprep.subr.mxu0 0.0
    %7236 = vmatpush1.msra.mxu0 0.0
    %7237 = vmatprep.subr.mxu0 0.0
    %7238 = vmatpush1.msra.mxu0 0.0
    %7239 = vmatprep.subr.mxu0 0.0
    %v7240 = vand.u32 %v6573, 4294901760
    %7241 = vmatpush1.msra.mxu0 %v7240
    %7242 = vmatprep.subr.mxu0 0.0
    %v7243 = vand.u32 %v6572, 4294901760
    %7244 = vmatpush1.msra.mxu0 %v7243
    %7245 = vmatprep.subr.mxu0 0.0
    %v7246 = vand.u32 %v6571, 4294901760
    %7247 = vmatpush1.msra.mxu0 %v7246
    %7248 = vmatprep.subr.mxu0 0.0
    %v7249 = vand.u32 %v6570, 4294901760
    %7250 = vmatpush1.msra.mxu0 %v7249
    %7251 = vmatprep.subr.mxu0 0.0
    %v7252 = vand.u32 %v6569, 4294901760
    %7253 = vmatpush1.msra.mxu0 %v7252
    %7254 = vmatprep.subr.mxu0 0.0
    %v7255 = vand.u32 %v6568, 4294901760
    %7256 = vmatpush1.msra.mxu0 %v7255
    %7257 = vmatprep.subr.mxu0 0.0
    %v7258 = vand.u32 %v6567, 4294901760
    %7259 = vmatpush1.msra.mxu0 %v7258
    %7260 = vmatprep.subr.mxu0 0.0
    %v7261 = vand.u32 %v6566, 4294901760
    %7262 = vmatpush1.msra.mxu0 %v7261
    %7263 = vmatprep.subr.mxu0 0.0
    %v7264 = vand.u32 %v6565, 4294901760
    %7265 = vmatpush1.msra.mxu0 %v7264
    %7266 = vmatprep.subr.mxu0 0.0
    %v7267 = vand.u32 %v6564, 4294901760
    %7268 = vmatpush1.msra.mxu0 %v7267
    %7269 = vmatprep.subr.mxu0 0.0
    %v7270 = vand.u32 %v6563, 4294901760
    %7271 = vmatpush1.msra.mxu0 %v7270
    %7272 = vmatprep.subr.mxu0 0.0
    %v7273 = vand.u32 %v6562, 4294901760
    %7274 = vmatpush1.msra.mxu0 %v7273
    %7275 = vmatprep.subr.mxu0 0.0
    %v7276 = vand.u32 %v6561, 4294901760
    %7277 = vmatpush1.msra.mxu0 %v7276
    %7278 = vmatprep.subr.mxu0 0.0
    %v7279 = vand.u32 %v6560, 4294901760
    %7280 = vmatpush1.msra.mxu0 %v7279
    %7281 = vmatprep.subr.mxu0 0.0
    %7282 = vmatpush2.msra.mxu0 0.0
    %7283 = vmatprep.subr.mxu0 0.0
    %7284 = vmatpush2.msra.mxu0 0.0
    %7285 = vmatprep.subr.mxu0 0.0
    %7286 = vmatpush2.msra.mxu0 0.0
    %7287 = vmatprep.subr.mxu0 0.0
    %7288 = vmatpush2.msra.mxu0 0.0
    %7289 = vmatprep.subr.mxu0 0.0
    %7290 = vmatpush2.msra.mxu0 0.0
    %7291 = vmatprep.subr.mxu0 0.0
    %7292 = vmatpush2.msra.mxu0 0.0
    %7293 = vmatprep.subr.mxu0 0.0
    %7294 = vmatpush2.msra.mxu0 0.0
    %7295 = vmatprep.subr.mxu0 0.0
    %7296 = vmatpush2.msra.mxu0 0.0
    %7297 = vmatprep.subr.mxu0 0.0
    %7298 = vmatpush2.msra.mxu0 0.0
    %7299 = vmatprep.subr.mxu0 0.0
    %7300 = vmatpush2.msra.mxu0 0.0
    %7301 = vmatprep.subr.mxu0 0.0
    %7302 = vmatpush2.msra.mxu0 0.0
    %7303 = vmatprep.subr.mxu0 0.0
    %7304 = vmatpush2.msra.mxu0 0.0
    %7305 = vmatprep.subr.mxu0 0.0
    %7306 = vmatpush2.msra.mxu0 0.0
    %7307 = vmatprep.subr.mxu0 0.0
    %7308 = vmatpush2.msra.mxu0 0.0
    %7309 = vmatprep.subr.mxu0 0.0
    %7310 = vmatpush2.msra.mxu0 0.0
    %7311 = vmatprep.subr.mxu0 0.0
    %7312 = vmatpush2.msra.mxu0 0.0
    %7313 = vmatprep.mubr.f32.mxu0 0.0
    %v7314 = vand.u32 %v6583, 4294901760
    %7315 = vmatmul.mubr.f32.gmra.mxu0 %v7314
    %v7316 = vpop.f32.mrf.mxu0
    %v7317 = vadd.f32 %v7214, %v7316
    %v7318 = vpop.f32.mrf.mxu0
    %7319 = vmatprep.mubr.f32.mxu0 0.0
    %v7320 = vand.u32 %v6586, 4294901760
    %7321 = vmatmul.mubr.f32.gmra.mxu0 %v7320
    %v7322 = vpop.f32.mrf.mxu0
    %v7323 = vadd.f32 %v7220, %v7322
    %v7324 = vpop.f32.mrf.mxu0
    %7325 = vmatprep.mubr.f32.mxu0 0.0
    %v7326 = vand.u32 %v6589, 4294901760
    %7327 = vmatmul.mubr.f32.gmra.mxu0 %v7326
    %v7328 = vpop.f32.mrf.mxu0
    %v7329 = vadd.f32 %v7226, %v7328
    %v7330 = vpop.f32.mrf.mxu0
    %7331 = vmatprep.mubr.f32.mxu0 0.0
    %v7332 = vand.u32 %v6592, 4294901760
    %7333 = vmatmul.mubr.f32.gmra.mxu0 %v7332
    %v7334 = vpop.f32.mrf.mxu0
    %v7335 = vadd.f32 %v7232, %v7334
    %v7336 = vpop.f32.mrf.mxu0
    %7337 = vdwg.mxu0
    %v7339 = vsel %vm1377, %v6574, 0
    %v7342 = vsel %vm1377, %v6575, 0
    %v7345 = vsel %vm1377, %v6576, 0
    %v7348 = vsel %vm1377, %v6577, 0
    %7350 = vmatprep.subr.mxu0 0.0
    %7351 = vmatpush1.msra.mxu0 0.0
    %7352 = vmatprep.subr.mxu0 0.0
    %7353 = vmatpush1.msra.mxu0 0.0
    %7354 = vmatprep.subr.mxu0 0.0
    %v7355 = vand.u32 %v3991, 4294901760
    %7356 = vmatpush1.msra.mxu0 %v7355
    %7357 = vmatprep.subr.mxu0 0.0
    %v7358 = vand.u32 %v3990, 4294901760
    %7359 = vmatpush1.msra.mxu0 %v7358
    %7360 = vmatprep.subr.mxu0 0.0
    %v7361 = vand.u32 %v3989, 4294901760
    %7362 = vmatpush1.msra.mxu0 %v7361
    %7363 = vmatprep.subr.mxu0 0.0
    %v7364 = vand.u32 %v3988, 4294901760
    %7365 = vmatpush1.msra.mxu0 %v7364
    %7366 = vmatprep.subr.mxu0 0.0
    %v7367 = vand.u32 %v3987, 4294901760
    %7368 = vmatpush1.msra.mxu0 %v7367
    %7369 = vmatprep.subr.mxu0 0.0
    %v7370 = vand.u32 %v3986, 4294901760
    %7371 = vmatpush1.msra.mxu0 %v7370
    %7372 = vmatprep.subr.mxu0 0.0
    %v7373 = vand.u32 %v3985, 4294901760
    %7374 = vmatpush1.msra.mxu0 %v7373
    %7375 = vmatprep.subr.mxu0 0.0
    %v7376 = vand.u32 %v3984, 4294901760
    %7377 = vmatpush1.msra.mxu0 %v7376
    %7378 = vmatprep.subr.mxu0 0.0
    %v7379 = vand.u32 %v3983, 4294901760
    %7380 = vmatpush1.msra.mxu0 %v7379
    %7381 = vmatprep.subr.mxu0 0.0
    %v7382 = vand.u32 %v3982, 4294901760
    %7383 = vmatpush1.msra.mxu0 %v7382
    %7384 = vmatprep.subr.mxu0 0.0
    %v7385 = vand.u32 %v3981, 4294901760
    %7386 = vmatpush1.msra.mxu0 %v7385
    %7387 = vmatprep.subr.mxu0 0.0
    %v7388 = vand.u32 %v3980, 4294901760
    %7389 = vmatpush1.msra.mxu0 %v7388
    %7390 = vmatprep.subr.mxu0 0.0
    %v7391 = vand.u32 %v3979, 4294901760
    %7392 = vmatpush1.msra.mxu0 %v7391
    %7393 = vmatprep.subr.mxu0 0.0
    %v7394 = vand.u32 %v3978, 4294901760
    %7395 = vmatpush1.msra.mxu0 %v7394
    %7396 = vmatprep.subr.mxu0 0.0
    %7397 = vmatpush2.msra.mxu0 0.0
    %7398 = vmatprep.subr.mxu0 0.0
    %7399 = vmatpush2.msra.mxu0 0.0
    %7400 = vmatprep.subr.mxu0 0.0
    %7401 = vmatpush2.msra.mxu0 0.0
    %7402 = vmatprep.subr.mxu0 0.0
    %7403 = vmatpush2.msra.mxu0 0.0
    %7404 = vmatprep.subr.mxu0 0.0
    %7405 = vmatpush2.msra.mxu0 0.0
    %7406 = vmatprep.subr.mxu0 0.0
    %7407 = vmatpush2.msra.mxu0 0.0
    %7408 = vmatprep.subr.mxu0 0.0
    %7409 = vmatpush2.msra.mxu0 0.0
    %7410 = vmatprep.subr.mxu0 0.0
    %7411 = vmatpush2.msra.mxu0 0.0
    %7412 = vmatprep.subr.mxu0 0.0
    %7413 = vmatpush2.msra.mxu0 0.0
    %7414 = vmatprep.subr.mxu0 0.0
    %7415 = vmatpush2.msra.mxu0 0.0
    %7416 = vmatprep.subr.mxu0 0.0
    %7417 = vmatpush2.msra.mxu0 0.0
    %7418 = vmatprep.subr.mxu0 0.0
    %7419 = vmatpush2.msra.mxu0 0.0
    %7420 = vmatprep.subr.mxu0 0.0
    %7421 = vmatpush2.msra.mxu0 0.0
    %7422 = vmatprep.subr.mxu0 0.0
    %7423 = vmatpush2.msra.mxu0 0.0
    %7424 = vmatprep.subr.mxu0 0.0
    %7425 = vmatpush2.msra.mxu0 0.0
    %7426 = vmatprep.subr.mxu0 0.0
    %7427 = vmatpush2.msra.mxu0 0.0
    %7428 = vmatprep.mubr.f32.mxu0 0.0
    %v7429 = vand.u32 %v7339, 4294901760
    %v7430 = vsub.f32 %v7339, %v7429
    %v7431 = vand.u32 %v7430, 4294901760
    %v7432 = vsub.f32 %v7430, %v7431
    %v7433 = vand.u32 %v7432, 4294901760
    %7434 = vmatmul.mubr.f32.gmra.mxu0 %v7433
    %v7435 = vpop.f32.mrf.mxu0
    %v7436 = vadd.f32 %v7317, %v7435
    %v7437 = vpop.f32.mrf.mxu0
    %7438 = vmatprep.mubr.f32.mxu0 0.0
    %v7439 = vand.u32 %v7342, 4294901760
    %v7440 = vsub.f32 %v7342, %v7439
    %v7441 = vand.u32 %v7440, 4294901760
    %v7442 = vsub.f32 %v7440, %v7441
    %v7443 = vand.u32 %v7442, 4294901760
    %7444 = vmatmul.mubr.f32.gmra.mxu0 %v7443
    %v7445 = vpop.f32.mrf.mxu0
    %v7446 = vadd.f32 %v7323, %v7445
    %v7447 = vpop.f32.mrf.mxu0
    %7448 = vmatprep.mubr.f32.mxu0 0.0
    %v7449 = vand.u32 %v7345, 4294901760
    %v7450 = vsub.f32 %v7345, %v7449
    %v7451 = vand.u32 %v7450, 4294901760
    %v7452 = vsub.f32 %v7450, %v7451
    %v7453 = vand.u32 %v7452, 4294901760
    %7454 = vmatmul.mubr.f32.gmra.mxu0 %v7453
    %v7455 = vpop.f32.mrf.mxu0
    %v7456 = vadd.f32 %v7329, %v7455
    %v7457 = vpop.f32.mrf.mxu0
    %7458 = vmatprep.mubr.f32.mxu0 0.0
    %v7459 = vand.u32 %v7348, 4294901760
    %v7460 = vsub.f32 %v7348, %v7459
    %v7461 = vand.u32 %v7460, 4294901760
    %v7462 = vsub.f32 %v7460, %v7461
    %v7463 = vand.u32 %v7462, 4294901760
    %7464 = vmatmul.mubr.f32.gmra.mxu0 %v7463
    %v7465 = vpop.f32.mrf.mxu0
    %v7466 = vadd.f32 %v7335, %v7465
    %v7467 = vpop.f32.mrf.mxu0
    %7468 = vdwg.mxu0
    %7469 = vmatprep.subr.mxu0 0.0
    %7470 = vmatpush1.msra.mxu0 0.0
    %7471 = vmatprep.subr.mxu0 0.0
    %7472 = vmatpush1.msra.mxu0 0.0
    %7473 = vmatprep.subr.mxu0 0.0
    %v7474 = vand.u32 %v3991, 4294901760
    %v7475 = vsub.f32 %v3991, %v7474
    %v7476 = vand.u32 %v7475, 4294901760
    %v7477 = vsub.f32 %v7475, %v7476
    %v7478 = vand.u32 %v7477, 4294901760
    %7479 = vmatpush1.msra.mxu0 %v7478
    %7480 = vmatprep.subr.mxu0 0.0
    %v7481 = vand.u32 %v3990, 4294901760
    %v7482 = vsub.f32 %v3990, %v7481
    %v7483 = vand.u32 %v7482, 4294901760
    %v7484 = vsub.f32 %v7482, %v7483
    %v7485 = vand.u32 %v7484, 4294901760
    %7486 = vmatpush1.msra.mxu0 %v7485
    %7487 = vmatprep.subr.mxu0 0.0
    %v7488 = vand.u32 %v3989, 4294901760
    %v7489 = vsub.f32 %v3989, %v7488
    %v7490 = vand.u32 %v7489, 4294901760
    %v7491 = vsub.f32 %v7489, %v7490
    %v7492 = vand.u32 %v7491, 4294901760
    %7493 = vmatpush1.msra.mxu0 %v7492
    %7494 = vmatprep.subr.mxu0 0.0
    %v7495 = vand.u32 %v3988, 4294901760
    %v7496 = vsub.f32 %v3988, %v7495
    %v7497 = vand.u32 %v7496, 4294901760
    %v7498 = vsub.f32 %v7496, %v7497
    %v7499 = vand.u32 %v7498, 4294901760
    %7500 = vmatpush1.msra.mxu0 %v7499
    %7501 = vmatprep.subr.mxu0 0.0
    %v7502 = vand.u32 %v3987, 4294901760
    %v7503 = vsub.f32 %v3987, %v7502
    %v7504 = vand.u32 %v7503, 4294901760
    %v7505 = vsub.f32 %v7503, %v7504
    %v7506 = vand.u32 %v7505, 4294901760
    %7507 = vmatpush1.msra.mxu0 %v7506
    %7508 = vmatprep.subr.mxu0 0.0
    %v7509 = vand.u32 %v3986, 4294901760
    %v7510 = vsub.f32 %v3986, %v7509
    %v7511 = vand.u32 %v7510, 4294901760
    %v7512 = vsub.f32 %v7510, %v7511
    %v7513 = vand.u32 %v7512, 4294901760
    %7514 = vmatpush1.msra.mxu0 %v7513
    %7515 = vmatprep.subr.mxu0 0.0
    %v7516 = vand.u32 %v3985, 4294901760
    %v7517 = vsub.f32 %v3985, %v7516
    %v7518 = vand.u32 %v7517, 4294901760
    %v7519 = vsub.f32 %v7517, %v7518
    %v7520 = vand.u32 %v7519, 4294901760
    %7521 = vmatpush1.msra.mxu0 %v7520
    %7522 = vmatprep.subr.mxu0 0.0
    %v7523 = vand.u32 %v3984, 4294901760
    %v7524 = vsub.f32 %v3984, %v7523
    %v7525 = vand.u32 %v7524, 4294901760
    %v7526 = vsub.f32 %v7524, %v7525
    %v7527 = vand.u32 %v7526, 4294901760
    %7528 = vmatpush1.msra.mxu0 %v7527
    %7529 = vmatprep.subr.mxu0 0.0
    %v7530 = vand.u32 %v3983, 4294901760
    %v7531 = vsub.f32 %v3983, %v7530
    %v7532 = vand.u32 %v7531, 4294901760
    %v7533 = vsub.f32 %v7531, %v7532
    %v7534 = vand.u32 %v7533, 4294901760
    %7535 = vmatpush1.msra.mxu0 %v7534
    %7536 = vmatprep.subr.mxu0 0.0
    %v7537 = vand.u32 %v3982, 4294901760
    %v7538 = vsub.f32 %v3982, %v7537
    %v7539 = vand.u32 %v7538, 4294901760
    %v7540 = vsub.f32 %v7538, %v7539
    %v7541 = vand.u32 %v7540, 4294901760
    %7542 = vmatpush1.msra.mxu0 %v7541
    %7543 = vmatprep.subr.mxu0 0.0
    %v7544 = vand.u32 %v3981, 4294901760
    %v7545 = vsub.f32 %v3981, %v7544
    %v7546 = vand.u32 %v7545, 4294901760
    %v7547 = vsub.f32 %v7545, %v7546
    %v7548 = vand.u32 %v7547, 4294901760
    %7549 = vmatpush1.msra.mxu0 %v7548
    %7550 = vmatprep.subr.mxu0 0.0
    %v7551 = vand.u32 %v3980, 4294901760
    %v7552 = vsub.f32 %v3980, %v7551
    %v7553 = vand.u32 %v7552, 4294901760
    %v7554 = vsub.f32 %v7552, %v7553
    %v7555 = vand.u32 %v7554, 4294901760
    %7556 = vmatpush1.msra.mxu0 %v7555
    %7557 = vmatprep.subr.mxu0 0.0
    %v7558 = vand.u32 %v3979, 4294901760
    %v7559 = vsub.f32 %v3979, %v7558
    %v7560 = vand.u32 %v7559, 4294901760
    %v7561 = vsub.f32 %v7559, %v7560
    %v7562 = vand.u32 %v7561, 4294901760
    %7563 = vmatpush1.msra.mxu0 %v7562
    %7564 = vmatprep.subr.mxu0 0.0
    %v7565 = vand.u32 %v3978, 4294901760
    %v7566 = vsub.f32 %v3978, %v7565
    %v7567 = vand.u32 %v7566, 4294901760
    %v7568 = vsub.f32 %v7566, %v7567
    %v7569 = vand.u32 %v7568, 4294901760
    %7570 = vmatpush1.msra.mxu0 %v7569
    %7571 = vmatprep.subr.mxu0 0.0
    %7572 = vmatpush2.msra.mxu0 0.0
    %7573 = vmatprep.subr.mxu0 0.0
    %7574 = vmatpush2.msra.mxu0 0.0
    %7575 = vmatprep.subr.mxu0 0.0
    %7576 = vmatpush2.msra.mxu0 0.0
    %7577 = vmatprep.subr.mxu0 0.0
    %7578 = vmatpush2.msra.mxu0 0.0
    %7579 = vmatprep.subr.mxu0 0.0
    %7580 = vmatpush2.msra.mxu0 0.0
    %7581 = vmatprep.subr.mxu0 0.0
    %7582 = vmatpush2.msra.mxu0 0.0
    %7583 = vmatprep.subr.mxu0 0.0
    %7584 = vmatpush2.msra.mxu0 0.0
    %7585 = vmatprep.subr.mxu0 0.0
    %7586 = vmatpush2.msra.mxu0 0.0
    %7587 = vmatprep.subr.mxu0 0.0
    %7588 = vmatpush2.msra.mxu0 0.0
    %7589 = vmatprep.subr.mxu0 0.0
    %7590 = vmatpush2.msra.mxu0 0.0
    %7591 = vmatprep.subr.mxu0 0.0
    %7592 = vmatpush2.msra.mxu0 0.0
    %7593 = vmatprep.subr.mxu0 0.0
    %7594 = vmatpush2.msra.mxu0 0.0
    %7595 = vmatprep.subr.mxu0 0.0
    %7596 = vmatpush2.msra.mxu0 0.0
    %7597 = vmatprep.subr.mxu0 0.0
    %7598 = vmatpush2.msra.mxu0 0.0
    %7599 = vmatprep.subr.mxu0 0.0
    %7600 = vmatpush2.msra.mxu0 0.0
    %7601 = vmatprep.subr.mxu0 0.0
    %7602 = vmatpush2.msra.mxu0 0.0
    %7603 = vmatprep.mubr.f32.mxu0 0.0
    %v7604 = vand.u32 %v7339, 4294901760
    %7605 = vmatmul.mubr.f32.gmra.mxu0 %v7604
    %v7606 = vpop.f32.mrf.mxu0
    %v7607 = vadd.f32 %v7436, %v7606
    %v7608 = vpop.f32.mrf.mxu0
    %7609 = vmatprep.mubr.f32.mxu0 0.0
    %v7610 = vand.u32 %v7342, 4294901760
    %7611 = vmatmul.mubr.f32.gmra.mxu0 %v7610
    %v7612 = vpop.f32.mrf.mxu0
    %v7613 = vadd.f32 %v7446, %v7612
    %v7614 = vpop.f32.mrf.mxu0
    %7615 = vmatprep.mubr.f32.mxu0 0.0
    %v7616 = vand.u32 %v7345, 4294901760
    %7617 = vmatmul.mubr.f32.gmra.mxu0 %v7616
    %v7618 = vpop.f32.mrf.mxu0
    %v7619 = vadd.f32 %v7456, %v7618
    %v7620 = vpop.f32.mrf.mxu0
    %7621 = vmatprep.mubr.f32.mxu0 0.0
    %v7622 = vand.u32 %v7348, 4294901760
    %7623 = vmatmul.mubr.f32.gmra.mxu0 %v7622
    %v7624 = vpop.f32.mrf.mxu0
    %v7625 = vadd.f32 %v7466, %v7624
    %v7626 = vpop.f32.mrf.mxu0
    %7627 = vdwg.mxu0
    %7628 = vmatprep.subr.mxu0 0.0
    %7629 = vmatpush1.msra.mxu0 0.0
    %7630 = vmatprep.subr.mxu0 0.0
    %7631 = vmatpush1.msra.mxu0 0.0
    %7632 = vmatprep.subr.mxu0 0.0
    %v7633 = vand.u32 %v3991, 4294901760
    %v7634 = vsub.f32 %v3991, %v7633
    %7635 = vmatpush1.msra.mxu0 %v7634
    %7636 = vmatprep.subr.mxu0 0.0
    %v7637 = vand.u32 %v3990, 4294901760
    %v7638 = vsub.f32 %v3990, %v7637
    %7639 = vmatpush1.msra.mxu0 %v7638
    %7640 = vmatprep.subr.mxu0 0.0
    %v7641 = vand.u32 %v3989, 4294901760
    %v7642 = vsub.f32 %v3989, %v7641
    %7643 = vmatpush1.msra.mxu0 %v7642
    %7644 = vmatprep.subr.mxu0 0.0
    %v7645 = vand.u32 %v3988, 4294901760
    %v7646 = vsub.f32 %v3988, %v7645
    %7647 = vmatpush1.msra.mxu0 %v7646
    %7648 = vmatprep.subr.mxu0 0.0
    %v7649 = vand.u32 %v3987, 4294901760
    %v7650 = vsub.f32 %v3987, %v7649
    %7651 = vmatpush1.msra.mxu0 %v7650
    %7652 = vmatprep.subr.mxu0 0.0
    %v7653 = vand.u32 %v3986, 4294901760
    %v7654 = vsub.f32 %v3986, %v7653
    %7655 = vmatpush1.msra.mxu0 %v7654
    %7656 = vmatprep.subr.mxu0 0.0
    %v7657 = vand.u32 %v3985, 4294901760
    %v7658 = vsub.f32 %v3985, %v7657
    %7659 = vmatpush1.msra.mxu0 %v7658
    %7660 = vmatprep.subr.mxu0 0.0
    %v7661 = vand.u32 %v3984, 4294901760
    %v7662 = vsub.f32 %v3984, %v7661
    %7663 = vmatpush1.msra.mxu0 %v7662
    %7664 = vmatprep.subr.mxu0 0.0
    %v7665 = vand.u32 %v3983, 4294901760
    %v7666 = vsub.f32 %v3983, %v7665
    %7667 = vmatpush1.msra.mxu0 %v7666
    %7668 = vmatprep.subr.mxu0 0.0
    %v7669 = vand.u32 %v3982, 4294901760
    %v7670 = vsub.f32 %v3982, %v7669
    %7671 = vmatpush1.msra.mxu0 %v7670
    %7672 = vmatprep.subr.mxu0 0.0
    %v7673 = vand.u32 %v3981, 4294901760
    %v7674 = vsub.f32 %v3981, %v7673
    %7675 = vmatpush1.msra.mxu0 %v7674
    %7676 = vmatprep.subr.mxu0 0.0
    %v7677 = vand.u32 %v3980, 4294901760
    %v7678 = vsub.f32 %v3980, %v7677
    %7679 = vmatpush1.msra.mxu0 %v7678
    %7680 = vmatprep.subr.mxu0 0.0
    %v7681 = vand.u32 %v3979, 4294901760
    %v7682 = vsub.f32 %v3979, %v7681
    %7683 = vmatpush1.msra.mxu0 %v7682
    %7684 = vmatprep.subr.mxu0 0.0
    %v7685 = vand.u32 %v3978, 4294901760
    %v7686 = vsub.f32 %v3978, %v7685
    %7687 = vmatpush1.msra.mxu0 %v7686
    %7688 = vmatprep.subr.mxu0 0.0
    %7689 = vmatpush2.msra.mxu0 0.0
    %7690 = vmatprep.subr.mxu0 0.0
    %7691 = vmatpush2.msra.mxu0 0.0
    %7692 = vmatprep.subr.mxu0 0.0
    %7693 = vmatpush2.msra.mxu0 0.0
    %7694 = vmatprep.subr.mxu0 0.0
    %7695 = vmatpush2.msra.mxu0 0.0
    %7696 = vmatprep.subr.mxu0 0.0
    %7697 = vmatpush2.msra.mxu0 0.0
    %7698 = vmatprep.subr.mxu0 0.0
    %7699 = vmatpush2.msra.mxu0 0.0
    %7700 = vmatprep.subr.mxu0 0.0
    %7701 = vmatpush2.msra.mxu0 0.0
    %7702 = vmatprep.subr.mxu0 0.0
    %7703 = vmatpush2.msra.mxu0 0.0
    %7704 = vmatprep.subr.mxu0 0.0
    %7705 = vmatpush2.msra.mxu0 0.0
    %7706 = vmatprep.subr.mxu0 0.0
    %7707 = vmatpush2.msra.mxu0 0.0
    %7708 = vmatprep.subr.mxu0 0.0
    %7709 = vmatpush2.msra.mxu0 0.0
    %7710 = vmatprep.subr.mxu0 0.0
    %7711 = vmatpush2.msra.mxu0 0.0
    %7712 = vmatprep.subr.mxu0 0.0
    %7713 = vmatpush2.msra.mxu0 0.0
    %7714 = vmatprep.subr.mxu0 0.0
    %7715 = vmatpush2.msra.mxu0 0.0
    %7716 = vmatprep.subr.mxu0 0.0
    %7717 = vmatpush2.msra.mxu0 0.0
    %7718 = vmatprep.subr.mxu0 0.0
    %7719 = vmatpush2.msra.mxu0 0.0
    %7720 = vmatprep.mubr.f32.mxu0 0.0
    %v7721 = vand.u32 %v7339, 4294901760
    %v7722 = vsub.f32 %v7339, %v7721
    %7723 = vmatmul.mubr.f32.gmra.mxu0 %v7722
    %v7724 = vpop.f32.mrf.mxu0
    %v7725 = vadd.f32 %v7607, %v7724
    %v7726 = vpop.f32.mrf.mxu0
    %7727 = vmatprep.mubr.f32.mxu0 0.0
    %v7728 = vand.u32 %v7342, 4294901760
    %v7729 = vsub.f32 %v7342, %v7728
    %7730 = vmatmul.mubr.f32.gmra.mxu0 %v7729
    %v7731 = vpop.f32.mrf.mxu0
    %v7732 = vadd.f32 %v7613, %v7731
    %v7733 = vpop.f32.mrf.mxu0
    %7734 = vmatprep.mubr.f32.mxu0 0.0
    %v7735 = vand.u32 %v7345, 4294901760
    %v7736 = vsub.f32 %v7345, %v7735
    %7737 = vmatmul.mubr.f32.gmra.mxu0 %v7736
    %v7738 = vpop.f32.mrf.mxu0
    %v7739 = vadd.f32 %v7619, %v7738
    %v7740 = vpop.f32.mrf.mxu0
    %7741 = vmatprep.mubr.f32.mxu0 0.0
    %v7742 = vand.u32 %v7348, 4294901760
    %v7743 = vsub.f32 %v7348, %v7742
    %7744 = vmatmul.mubr.f32.gmra.mxu0 %v7743
    %v7745 = vpop.f32.mrf.mxu0
    %v7746 = vadd.f32 %v7625, %v7745
    %v7747 = vpop.f32.mrf.mxu0
    %7748 = vdwg.mxu0
    %7749 = vmatprep.subr.mxu0 0.0
    %7750 = vmatpush1.msra.mxu0 0.0
    %7751 = vmatprep.subr.mxu0 0.0
    %7752 = vmatpush1.msra.mxu0 0.0
    %7753 = vmatprep.subr.mxu0 0.0
    %v7754 = vand.u32 %v3991, 4294901760
    %7755 = vmatpush1.msra.mxu0 %v7754
    %7756 = vmatprep.subr.mxu0 0.0
    %v7757 = vand.u32 %v3990, 4294901760
    %7758 = vmatpush1.msra.mxu0 %v7757
    %7759 = vmatprep.subr.mxu0 0.0
    %v7760 = vand.u32 %v3989, 4294901760
    %7761 = vmatpush1.msra.mxu0 %v7760
    %7762 = vmatprep.subr.mxu0 0.0
    %v7763 = vand.u32 %v3988, 4294901760
    %7764 = vmatpush1.msra.mxu0 %v7763
    %7765 = vmatprep.subr.mxu0 0.0
    %v7766 = vand.u32 %v3987, 4294901760
    %7767 = vmatpush1.msra.mxu0 %v7766
    %7768 = vmatprep.subr.mxu0 0.0
    %v7769 = vand.u32 %v3986, 4294901760
    %7770 = vmatpush1.msra.mxu0 %v7769
    %7771 = vmatprep.subr.mxu0 0.0
    %v7772 = vand.u32 %v3985, 4294901760
    %7773 = vmatpush1.msra.mxu0 %v7772
    %7774 = vmatprep.subr.mxu0 0.0
    %v7775 = vand.u32 %v3984, 4294901760
    %7776 = vmatpush1.msra.mxu0 %v7775
    %7777 = vmatprep.subr.mxu0 0.0
    %v7778 = vand.u32 %v3983, 4294901760
    %7779 = vmatpush1.msra.mxu0 %v7778
    %7780 = vmatprep.subr.mxu0 0.0
    %v7781 = vand.u32 %v3982, 4294901760
    %7782 = vmatpush1.msra.mxu0 %v7781
    %7783 = vmatprep.subr.mxu0 0.0
    %v7784 = vand.u32 %v3981, 4294901760
    %7785 = vmatpush1.msra.mxu0 %v7784
    %7786 = vmatprep.subr.mxu0 0.0
    %v7787 = vand.u32 %v3980, 4294901760
    %7788 = vmatpush1.msra.mxu0 %v7787
    %7789 = vmatprep.subr.mxu0 0.0
    %v7790 = vand.u32 %v3979, 4294901760
    %7791 = vmatpush1.msra.mxu0 %v7790
    %7792 = vmatprep.subr.mxu0 0.0
    %v7793 = vand.u32 %v3978, 4294901760
    %7794 = vmatpush1.msra.mxu0 %v7793
    %7795 = vmatprep.subr.mxu0 0.0
    %7796 = vmatpush2.msra.mxu0 0.0
    %7797 = vmatprep.subr.mxu0 0.0
    %7798 = vmatpush2.msra.mxu0 0.0
    %7799 = vmatprep.subr.mxu0 0.0
    %7800 = vmatpush2.msra.mxu0 0.0
    %7801 = vmatprep.subr.mxu0 0.0
    %7802 = vmatpush2.msra.mxu0 0.0
    %7803 = vmatprep.subr.mxu0 0.0
    %7804 = vmatpush2.msra.mxu0 0.0
    %7805 = vmatprep.subr.mxu0 0.0
    %7806 = vmatpush2.msra.mxu0 0.0
    %7807 = vmatprep.subr.mxu0 0.0
    %7808 = vmatpush2.msra.mxu0 0.0
    %7809 = vmatprep.subr.mxu0 0.0
    %7810 = vmatpush2.msra.mxu0 0.0
    %7811 = vmatprep.subr.mxu0 0.0
    %7812 = vmatpush2.msra.mxu0 0.0
    %7813 = vmatprep.subr.mxu0 0.0
    %7814 = vmatpush2.msra.mxu0 0.0
    %7815 = vmatprep.subr.mxu0 0.0
    %7816 = vmatpush2.msra.mxu0 0.0
    %7817 = vmatprep.subr.mxu0 0.0
    %7818 = vmatpush2.msra.mxu0 0.0
    %7819 = vmatprep.subr.mxu0 0.0
    %7820 = vmatpush2.msra.mxu0 0.0
    %7821 = vmatprep.subr.mxu0 0.0
    %7822 = vmatpush2.msra.mxu0 0.0
    %7823 = vmatprep.subr.mxu0 0.0
    %7824 = vmatpush2.msra.mxu0 0.0
    %7825 = vmatprep.subr.mxu0 0.0
    %7826 = vmatpush2.msra.mxu0 0.0
    %7827 = vmatprep.mubr.f32.mxu0 0.0
    %v7828 = vand.u32 %v7339, 4294901760
    %v7829 = vsub.f32 %v7339, %v7828
    %v7830 = vand.u32 %v7829, 4294901760
    %7831 = vmatmul.mubr.f32.gmra.mxu0 %v7830
    %v7832 = vpop.f32.mrf.mxu0
    %v7833 = vadd.f32 %v7725, %v7832
    %v7834 = vpop.f32.mrf.mxu0
    %7835 = vmatprep.mubr.f32.mxu0 0.0
    %v7836 = vand.u32 %v7342, 4294901760
    %v7837 = vsub.f32 %v7342, %v7836
    %v7838 = vand.u32 %v7837, 4294901760
    %7839 = vmatmul.mubr.f32.gmra.mxu0 %v7838
    %v7840 = vpop.f32.mrf.mxu0
    %v7841 = vadd.f32 %v7732, %v7840
    %v7842 = vpop.f32.mrf.mxu0
    %7843 = vmatprep.mubr.f32.mxu0 0.0
    %v7844 = vand.u32 %v7345, 4294901760
    %v7845 = vsub.f32 %v7345, %v7844
    %v7846 = vand.u32 %v7845, 4294901760
    %7847 = vmatmul.mubr.f32.gmra.mxu0 %v7846
    %v7848 = vpop.f32.mrf.mxu0
    %v7849 = vadd.f32 %v7739, %v7848
    %v7850 = vpop.f32.mrf.mxu0
    %7851 = vmatprep.mubr.f32.mxu0 0.0
    %v7852 = vand.u32 %v7348, 4294901760
    %v7853 = vsub.f32 %v7348, %v7852
    %v7854 = vand.u32 %v7853, 4294901760
    %7855 = vmatmul.mubr.f32.gmra.mxu0 %v7854
    %v7856 = vpop.f32.mrf.mxu0
    %v7857 = vadd.f32 %v7746, %v7856
    %v7858 = vpop.f32.mrf.mxu0
    %7859 = vdwg.mxu0
    %7860 = vmatprep.subr.mxu0 0.0
    %7861 = vmatpush1.msra.mxu0 0.0
    %7862 = vmatprep.subr.mxu0 0.0
    %7863 = vmatpush1.msra.mxu0 0.0
    %7864 = vmatprep.subr.mxu0 0.0
    %v7865 = vand.u32 %v3991, 4294901760
    %v7866 = vsub.f32 %v3991, %v7865
    %v7867 = vand.u32 %v7866, 4294901760
    %7868 = vmatpush1.msra.mxu0 %v7867
    %7869 = vmatprep.subr.mxu0 0.0
    %v7870 = vand.u32 %v3990, 4294901760
    %v7871 = vsub.f32 %v3990, %v7870
    %v7872 = vand.u32 %v7871, 4294901760
    %7873 = vmatpush1.msra.mxu0 %v7872
    %7874 = vmatprep.subr.mxu0 0.0
    %v7875 = vand.u32 %v3989, 4294901760
    %v7876 = vsub.f32 %v3989, %v7875
    %v7877 = vand.u32 %v7876, 4294901760
    %7878 = vmatpush1.msra.mxu0 %v7877
    %7879 = vmatprep.subr.mxu0 0.0
    %v7880 = vand.u32 %v3988, 4294901760
    %v7881 = vsub.f32 %v3988, %v7880
    %v7882 = vand.u32 %v7881, 4294901760
    %7883 = vmatpush1.msra.mxu0 %v7882
    %7884 = vmatprep.subr.mxu0 0.0
    %v7885 = vand.u32 %v3987, 4294901760
    %v7886 = vsub.f32 %v3987, %v7885
    %v7887 = vand.u32 %v7886, 4294901760
    %7888 = vmatpush1.msra.mxu0 %v7887
    %7889 = vmatprep.subr.mxu0 0.0
    %v7890 = vand.u32 %v3986, 4294901760
    %v7891 = vsub.f32 %v3986, %v7890
    %v7892 = vand.u32 %v7891, 4294901760
    %7893 = vmatpush1.msra.mxu0 %v7892
    %7894 = vmatprep.subr.mxu0 0.0
    %v7895 = vand.u32 %v3985, 4294901760
    %v7896 = vsub.f32 %v3985, %v7895
    %v7897 = vand.u32 %v7896, 4294901760
    %7898 = vmatpush1.msra.mxu0 %v7897
    %7899 = vmatprep.subr.mxu0 0.0
    %v7900 = vand.u32 %v3984, 4294901760
    %v7901 = vsub.f32 %v3984, %v7900
    %v7902 = vand.u32 %v7901, 4294901760
    %7903 = vmatpush1.msra.mxu0 %v7902
    %7904 = vmatprep.subr.mxu0 0.0
    %v7905 = vand.u32 %v3983, 4294901760
    %v7906 = vsub.f32 %v3983, %v7905
    %v7907 = vand.u32 %v7906, 4294901760
    %7908 = vmatpush1.msra.mxu0 %v7907
    %7909 = vmatprep.subr.mxu0 0.0
    %v7910 = vand.u32 %v3982, 4294901760
    %v7911 = vsub.f32 %v3982, %v7910
    %v7912 = vand.u32 %v7911, 4294901760
    %7913 = vmatpush1.msra.mxu0 %v7912
    %7914 = vmatprep.subr.mxu0 0.0
    %v7915 = vand.u32 %v3981, 4294901760
    %v7916 = vsub.f32 %v3981, %v7915
    %v7917 = vand.u32 %v7916, 4294901760
    %7918 = vmatpush1.msra.mxu0 %v7917
    %7919 = vmatprep.subr.mxu0 0.0
    %v7920 = vand.u32 %v3980, 4294901760
    %v7921 = vsub.f32 %v3980, %v7920
    %v7922 = vand.u32 %v7921, 4294901760
    %7923 = vmatpush1.msra.mxu0 %v7922
    %7924 = vmatprep.subr.mxu0 0.0
    %v7925 = vand.u32 %v3979, 4294901760
    %v7926 = vsub.f32 %v3979, %v7925
    %v7927 = vand.u32 %v7926, 4294901760
    %7928 = vmatpush1.msra.mxu0 %v7927
    %7929 = vmatprep.subr.mxu0 0.0
    %v7930 = vand.u32 %v3978, 4294901760
    %v7931 = vsub.f32 %v3978, %v7930
    %v7932 = vand.u32 %v7931, 4294901760
    %7933 = vmatpush1.msra.mxu0 %v7932
    %7934 = vmatprep.subr.mxu0 0.0
    %7935 = vmatpush2.msra.mxu0 0.0
    %7936 = vmatprep.subr.mxu0 0.0
    %7937 = vmatpush2.msra.mxu0 0.0
    %7938 = vmatprep.subr.mxu0 0.0
    %7939 = vmatpush2.msra.mxu0 0.0
    %7940 = vmatprep.subr.mxu0 0.0
    %7941 = vmatpush2.msra.mxu0 0.0
    %7942 = vmatprep.subr.mxu0 0.0
    %7943 = vmatpush2.msra.mxu0 0.0
    %7944 = vmatprep.subr.mxu0 0.0
    %7945 = vmatpush2.msra.mxu0 0.0
    %7946 = vmatprep.subr.mxu0 0.0
    %7947 = vmatpush2.msra.mxu0 0.0
    %7948 = vmatprep.subr.mxu0 0.0
    %7949 = vmatpush2.msra.mxu0 0.0
    %7950 = vmatprep.subr.mxu0 0.0
    %7951 = vmatpush2.msra.mxu0 0.0
    %7952 = vmatprep.subr.mxu0 0.0
    %7953 = vmatpush2.msra.mxu0 0.0
    %7954 = vmatprep.subr.mxu0 0.0
    %7955 = vmatpush2.msra.mxu0 0.0
    %7956 = vmatprep.subr.mxu0 0.0
    %7957 = vmatpush2.msra.mxu0 0.0
    %7958 = vmatprep.subr.mxu0 0.0
    %7959 = vmatpush2.msra.mxu0 0.0
    %7960 = vmatprep.subr.mxu0 0.0
    %7961 = vmatpush2.msra.mxu0 0.0
    %7962 = vmatprep.subr.mxu0 0.0
    %7963 = vmatpush2.msra.mxu0 0.0
    %7964 = vmatprep.subr.mxu0 0.0
    %7965 = vmatpush2.msra.mxu0 0.0
    %7966 = vmatprep.mubr.f32.mxu0 0.0
    %v7967 = vand.u32 %v7339, 4294901760
    %7968 = vmatmul.mubr.f32.gmra.mxu0 %v7967
    %v7969 = vpop.f32.mrf.mxu0
    %v7970 = vadd.f32 %v7833, %v7969
    %v7971 = vpop.f32.mrf.mxu0
    %7972 = vmatprep.mubr.f32.mxu0 0.0
    %v7973 = vand.u32 %v7342, 4294901760
    %7974 = vmatmul.mubr.f32.gmra.mxu0 %v7973
    %v7975 = vpop.f32.mrf.mxu0
    %v7976 = vadd.f32 %v7841, %v7975
    %v7977 = vpop.f32.mrf.mxu0
    %7978 = vmatprep.mubr.f32.mxu0 0.0
    %v7979 = vand.u32 %v7345, 4294901760
    %7980 = vmatmul.mubr.f32.gmra.mxu0 %v7979
    %v7981 = vpop.f32.mrf.mxu0
    %v7982 = vadd.f32 %v7849, %v7981
    %v7983 = vpop.f32.mrf.mxu0
    %7984 = vmatprep.mubr.f32.mxu0 0.0
    %v7985 = vand.u32 %v7348, 4294901760
    %7986 = vmatmul.mubr.f32.gmra.mxu0 %v7985
    %v7987 = vpop.f32.mrf.mxu0
    %v7988 = vadd.f32 %v7857, %v7987
    %v7989 = vpop.f32.mrf.mxu0
    %7990 = vdwg.mxu0
    %7991 = vmatprep.subr.mxu0 0.0
    %7992 = vmatpush1.msra.mxu0 0.0
    %7993 = vmatprep.subr.mxu0 0.0
    %7994 = vmatpush1.msra.mxu0 0.0
    %7995 = vmatprep.subr.mxu0 0.0
    %v7996 = vand.u32 %v3991, 4294901760
    %7997 = vmatpush1.msra.mxu0 %v7996
    %7998 = vmatprep.subr.mxu0 0.0
    %v7999 = vand.u32 %v3990, 4294901760
    %8000 = vmatpush1.msra.mxu0 %v7999
    %8001 = vmatprep.subr.mxu0 0.0
    %v8002 = vand.u32 %v3989, 4294901760
    %8003 = vmatpush1.msra.mxu0 %v8002
    %8004 = vmatprep.subr.mxu0 0.0
    %v8005 = vand.u32 %v3988, 4294901760
    %8006 = vmatpush1.msra.mxu0 %v8005
    %8007 = vmatprep.subr.mxu0 0.0
    %v8008 = vand.u32 %v3987, 4294901760
    %8009 = vmatpush1.msra.mxu0 %v8008
    %8010 = vmatprep.subr.mxu0 0.0
    %v8011 = vand.u32 %v3986, 4294901760
    %8012 = vmatpush1.msra.mxu0 %v8011
    %8013 = vmatprep.subr.mxu0 0.0
    %v8014 = vand.u32 %v3985, 4294901760
    %8015 = vmatpush1.msra.mxu0 %v8014
    %8016 = vmatprep.subr.mxu0 0.0
    %v8017 = vand.u32 %v3984, 4294901760
    %8018 = vmatpush1.msra.mxu0 %v8017
    %8019 = vmatprep.subr.mxu0 0.0
    %v8020 = vand.u32 %v3983, 4294901760
    %8021 = vmatpush1.msra.mxu0 %v8020
    %8022 = vmatprep.subr.mxu0 0.0
    %v8023 = vand.u32 %v3982, 4294901760
    %8024 = vmatpush1.msra.mxu0 %v8023
    %8025 = vmatprep.subr.mxu0 0.0
    %v8026 = vand.u32 %v3981, 4294901760
    %8027 = vmatpush1.msra.mxu0 %v8026
    %8028 = vmatprep.subr.mxu0 0.0
    %v8029 = vand.u32 %v3980, 4294901760
    %8030 = vmatpush1.msra.mxu0 %v8029
    %8031 = vmatprep.subr.mxu0 0.0
    %v8032 = vand.u32 %v3979, 4294901760
    %8033 = vmatpush1.msra.mxu0 %v8032
    %8034 = vmatprep.subr.mxu0 0.0
    %v8035 = vand.u32 %v3978, 4294901760
    %8036 = vmatpush1.msra.mxu0 %v8035
    %8037 = vmatprep.subr.mxu0 0.0
    %8038 = vmatpush2.msra.mxu0 0.0
    %8039 = vmatprep.subr.mxu0 0.0
    %8040 = vmatpush2.msra.mxu0 0.0
    %8041 = vmatprep.subr.mxu0 0.0
    %8042 = vmatpush2.msra.mxu0 0.0
    %8043 = vmatprep.subr.mxu0 0.0
    %8044 = vmatpush2.msra.mxu0 0.0
    %8045 = vmatprep.subr.mxu0 0.0
    %8046 = vmatpush2.msra.mxu0 0.0
    %8047 = vmatprep.subr.mxu0 0.0
    %8048 = vmatpush2.msra.mxu0 0.0
    %8049 = vmatprep.subr.mxu0 0.0
    %8050 = vmatpush2.msra.mxu0 0.0
    %8051 = vmatprep.subr.mxu0 0.0
    %8052 = vmatpush2.msra.mxu0 0.0
    %8053 = vmatprep.subr.mxu0 0.0
    %8054 = vmatpush2.msra.mxu0 0.0
    %8055 = vmatprep.subr.mxu0 0.0
    %8056 = vmatpush2.msra.mxu0 0.0
    %8057 = vmatprep.subr.mxu0 0.0
    %8058 = vmatpush2.msra.mxu0 0.0
    %8059 = vmatprep.subr.mxu0 0.0
    %8060 = vmatpush2.msra.mxu0 0.0
    %8061 = vmatprep.subr.mxu0 0.0
    %8062 = vmatpush2.msra.mxu0 0.0
    %8063 = vmatprep.subr.mxu0 0.0
    %8064 = vmatpush2.msra.mxu0 0.0
    %8065 = vmatprep.subr.mxu0 0.0
    %8066 = vmatpush2.msra.mxu0 0.0
    %8067 = vmatprep.subr.mxu0 0.0
    %8068 = vmatpush2.msra.mxu0 0.0
    %8069 = vmatprep.mubr.f32.mxu0 0.0
    %v8070 = vand.u32 %v7339, 4294901760
    %8071 = vmatmul.mubr.f32.gmra.mxu0 %v8070
    %v8072 = vpop.f32.mrf.mxu0
    %v8073 = vadd.f32 %v7970, %v8072
    %v8074 = vpop.f32.mrf.mxu0
    %8075 = vmatprep.mubr.f32.mxu0 0.0
    %v8076 = vand.u32 %v7342, 4294901760
    %8077 = vmatmul.mubr.f32.gmra.mxu0 %v8076
    %v8078 = vpop.f32.mrf.mxu0
    %v8079 = vadd.f32 %v7976, %v8078
    %v8080 = vpop.f32.mrf.mxu0
    %8081 = vmatprep.mubr.f32.mxu0 0.0
    %v8082 = vand.u32 %v7345, 4294901760
    %8083 = vmatmul.mubr.f32.gmra.mxu0 %v8082
    %v8084 = vpop.f32.mrf.mxu0
    %v8085 = vadd.f32 %v7982, %v8084
    %v8086 = vpop.f32.mrf.mxu0
    %8087 = vmatprep.mubr.f32.mxu0 0.0
    %v8088 = vand.u32 %v7348, 4294901760
    %8089 = vmatmul.mubr.f32.gmra.mxu0 %v8088
    %v8090 = vpop.f32.mrf.mxu0
    %v8091 = vadd.f32 %v7988, %v8090
    %v8092 = vpop.f32.mrf.mxu0
    %8093 = vdwg.mxu0
    %v8094 = vld [vmem:[%s13] sm:$0xff]
    %v8095 = vld [vmem:[%s13 + $0x8] sm:$0xff]
    %v8096 = vld [vmem:[%s13 + $0x10] sm:$0xff]
    %v8097 = vld [vmem:[%s13 + $0x18] sm:$0xff]
    %8099 = vset.pattern.permute.xlu0 0
    %8100 = vperm.xlu0 %8099, %v8094
    %v8101 = vpop.permute.xlu0 %8100
    %8104 = vset.pattern.permute.xlu0 0
    %8105 = vperm.xlu0 %8104, %v8095
    %v8106 = vpop.permute.xlu0 %8105
    %8109 = vset.pattern.permute.xlu0 0
    %8110 = vperm.xlu0 %8109, %v8096
    %v8111 = vpop.permute.xlu0 %8110
    %8114 = vset.pattern.permute.xlu0 0
    %8115 = vperm.xlu0 %8114, %v8097
    %v8116 = vpop.permute.xlu0 %8115
    %v8118 = vadd.f32 %v8073, %v8101
    %v8119 = vadd.f32 %v8079, %v8106
    %v8120 = vadd.f32 %v8085, %v8111
    %v8121 = vadd.f32 %v8091, %v8116
    %vm8122 = vcmp.gt.f32.partialorder %v8118, 0.0
    %vm8123 = vcmp.gt.f32.partialorder %v8119, 0.0
    %vm8124 = vcmp.gt.f32.partialorder %v8120, 0.0
    %vm8125 = vcmp.gt.f32.partialorder %v8121, 0.0
    %v8126 = vmul.f32 %v8118, 0.3
    %v8127 = vmul.f32 %v8119, 0.3
    %v8128 = vmul.f32 %v8120, 0.3
    %v8129 = vmul.f32 %v8121, 0.3
    %v8130 = vsel %vm8122, %v8118, %v8126
    %v8131 = vsel %vm8123, %v8119, %v8127
    %v8132 = vsel %vm8124, %v8120, %v8128
    %v8133 = vsel %vm8125, %v8121, %v8129
    %8134 = vst.msk [vmem:[#allocation2] sm:$0xff] %vm150, %v8130
    %8135 = vst.msk [vmem:[#allocation2 + $0x8] sm:$0xff] %vm150, %v8131
    %8136 = vst.msk [vmem:[#allocation2 + $0x10] sm:$0xff] %vm150, %v8132
    %8137 = vst.msk [vmem:[#allocation2 + $0x18] sm:$0xff] %vm150, %v8133
    // Predicated region
    $region58: #{tpu_custom_call.1} parent=1 // pred_check
      _
    $region59: #{tpu_custom_call.1} parent=1 // pred_check_branch
      %8139 = sbr.rel (0) target = $region61
    $region60: #{tpu_custom_call.1} parent=1 // pred_region
      %s8141 = ssub.s32 512, 512
      %8142 = vsyncadd [#allocation3], %s8141
      %s8143 = sshll.u32 [#allocation2], 4
      %s8144 = int_to_ptr.vmem [resolvable:$true] %s8143
      %8149 = dma.vmem_to_hbm [thread:$0]  %s8144, 512, %s14, [#allocation3], 128, 128, 8
    $region61: #{tpu_custom_call.1} parent=1 // pred_fallthru
      _
    // Predicated region
    $region62: #{tpu_custom_call.1} parent=1 // pred_check
      _
    $region63: #{tpu_custom_call.1} parent=1 // pred_check_branch
      %8151 = sbr.rel (0) target = $region65
    $region64: #{tpu_custom_call.1} parent=1 // pred_region
      %8152 = dma.done [#allocation3], 512
    $region65: #{tpu_custom_call.1} parent=1 // pred_fallthru
      _
    %8153 = vsyncpa [#allocation3], 1

</llo_original>
